<compile_context>
chip_gen: v7x
topology: tpu7x:2x2x1
jax: 0.10.0
libtpu: 0.0.40
codegen_flags: <defaults>
</compile_context>

<pallas_src>
import jax
import jax.numpy as jnp
from jax.experimental import pallas as pl
from jax.experimental.pallas import tpu as pltpu

# ---- small synthetic config (stands in for the HF config) ----
B, C, S = 2, 4, 8            # batch, num_choices (= args.num_classes), seq_len
H, NH, NL, I = 32, 2, 2, 64  # hidden, num_heads, num_layers, intermediate
HD = H // NH
N = B * C                    # flattened rows (= TN: single row block)
LANE = 128                   # lane-dense classifier output width
IMAX = max(3 * H, I)         # packed per-layer vector width
VOCAB, MAX_POS, TYPE_VOCAB = 100, 16, 2
LN_EPS = 1e-12
NEG_INF = -1e9


# ----------------------------- kernel -----------------------------

def _layernorm(x, g, b):
    # f32 LayerNorm (keep VPU/EUP math in f32 -- v5e has no bf16 VALU/EUP)
    mu = jnp.mean(x, axis=-1, keepdims=True)
    var = jnp.mean(jnp.square(x - mu), axis=-1, keepdims=True)
    return (x - mu) * jax.lax.rsqrt(var + LN_EPS) * g + b


def fused_bert_kernel(emb_ref, bias_ref, eg_ref, eb_ref,
                      wqkv_ref, wo_ref, w1_ref, w2_ref, vecs_ref,
                      wp_ref, bp_ref, wc_ref, bc_ref,
                      logits_ref):
    R = N * S
    BH = N * NH

    # embedding LayerNorm -> flat (R, H) activation kept in registers/VMEM values
    x2d = _layernorm(emb_ref[...], eg_ref[...], eb_ref[...]).reshape(R, H)
    bias = bias_ref[...]                                  # (N*NH, 1, S) additive key mask

    # static layer loop (NL = 2): all weights VMEM-resident, no per-layer grid steps / DMA
    for l in range(NL):
        # packed per-layer vectors: rows = [bqkv, bo, ln1_g, ln1_b, b1, b2, ln2_g, ln2_b]
        v8 = vecs_ref[l]                                  # (8, IMAX) f32

        # ---------------- self-attention ----------------
        # fused QKV projection: one (R, H) @ (H, 3H) bf16 MXU matmul.
        # Q columns were pre-scaled by 1/sqrt(HD) at init (scale fold), so no per-layer multiply.
        qkv = jnp.dot(x2d.astype(jnp.bfloat16), wqkv_ref[l],
                      preferred_element_type=jnp.float32) + v8[0:1, 0:3 * H]     # (R, 3H) f32

        # merge (rows, heads) into ONE batch dim: (N, S, NH, 3HD) -> (N*NH, S, 3HD)
        t = jnp.transpose(qkv.reshape(N, S, NH, 3 * HD), (0, 2, 1, 3))
        t = t.reshape(BH, S, 3 * HD).astype(jnp.bfloat16)
        q = t[:, :, 0:HD]                                 # already scaled
        k = t[:, :, HD:2 * HD]
        v = t[:, :, 2 * HD:3 * HD]

        # one batched score einsum + one batched context einsum for all heads
        s = jnp.einsum('bqd,bkd->bqk', q, k,
                       preferred_element_type=jnp.float32) + bias                # (N*NH, S, S) f32
        s = s - jnp.max(s, axis=-1, keepdims=True)
        p = jnp.exp(s)
        p = p * pl.reciprocal(jnp.sum(p, axis=-1, keepdims=True), approx=True)
        ctx = jnp.einsum('bqk,bkd->bqd', p.astype(jnp.bfloat16), v,
                         preferred_element_type=jnp.float32)                     # (N*NH, S, HD)

        # merge heads back to (R, H) (columns head-major, matching wo row layout)
        ctx2d = jnp.transpose(ctx.reshape(N, NH, S, HD), (0, 2, 1, 3)).reshape(R, H)
        attn = jnp.dot(ctx2d.astype(jnp.bfloat16), wo_ref[l],
                       preferred_element_type=jnp.float32) + v8[1:2, 0:H]
        x1 = _layernorm(x2d + attn, v8[2:3, 0:H], v8[3:4, 0:H])

        # ---------------- feed-forward ----------------
        # TODO(synk): tanh-approx GELU; HF BERT default "gelu" is erf-based (~1e-3 deviation).
        hmid = jax.nn.gelu(
            jnp.dot(x1.astype(jnp.bfloat16), w1_ref[l],
                    preferred_element_type=jnp.float32) + v8[4:5, 0:I],
            approximate=True)
        ff = jnp.dot(hmid.astype(jnp.bfloat16), w2_ref[l],
                     preferred_element_type=jnp.float32) + v8[5:6, 0:H]
        x2d = _layernorm(x1 + ff, v8[6:7, 0:H], v8[7:8, 0:H])

    # ---------------- pooler + classifier ----------------
    cls = x2d.reshape(N, S, H)[:, 0, :]                   # CLS token, (N, H)
    pooled = jnp.tanh(jnp.dot(cls.astype(jnp.bfloat16), wp_ref[...],
                              preferred_element_type=jnp.float32) + bp_ref[...])
    # classifier weight padded to 128 lanes -> unmasked lane-dense (N, 128) store; column 0 is the logit
    logits_ref[...] = jnp.dot(pooled.astype(jnp.bfloat16), wc_ref[...],
                              preferred_element_type=jnp.float32) + bc_ref[...]


# ------------------------------- parameters -------------------------------

def init_params(key):
    std = 0.02
    scale = 1.0 / (HD ** 0.5)
    ks = iter(jax.random.split(key, 12))

    def w(shape, dtype=jnp.float32):
        return (jax.random.normal(next(ks), shape, jnp.float32) * std).astype(dtype)

    # fused QKV weight, columns grouped per head: [q_h | k_h | v_h] for h = 0..NH-1,
    # with the 1/sqrt(HD) attention scale folded into the Q columns (done once, here).
    wqkv = jax.random.normal(next(ks), (NL, H, NH, 3, HD), jnp.float32) * std
    wqkv = wqkv.at[:, :, :, 0, :].multiply(scale)
    wqkv = wqkv.reshape(NL, H, 3 * H).astype(jnp.bfloat16)

    # packed per-layer vectors (one streamable block instead of 8 tiny arrays):
    # rows = [bqkv, bo, ln1_g, ln1_b, b1, b2, ln2_g, ln2_b]; biases zero, LN gammas one.
    vecs = jnp.zeros((NL, 8, IMAX), jnp.float32)
    vecs = vecs.at[:, 2, :H].set(1.0)   # ln1 gamma
    vecs = vecs.at[:, 6, :H].set(1.0)   # ln2 gamma

    cls_w = jax.random.normal(next(ks), (H, 1), jnp.float32) * std
    cls_w_pad = jnp.zeros((H, LANE), jnp.float32).at[:, 0:1].set(cls_w).astype(jnp.bfloat16)

    return {
        'word_emb': w((VOCAB, H)),
        'pos_emb':  w((MAX_POS, H)),
        'type_emb': w((TYPE_VOCAB, H)),
        'emb_ln_g': jnp.ones((1, H), jnp.float32),
        'emb_ln_b': jnp.zeros((1, H), jnp.float32),
        'wqkv': wqkv,                       # (NL, H, 3H) bf16, head-grouped, Q pre-scaled
        'wo':   w((NL, H, H), jnp.bfloat16),
        'w1':   w((NL, H, I), jnp.bfloat16),
        'w2':   w((NL, I, H), jnp.bfloat16),
        'vecs': vecs,                       # (NL, 8, IMAX) packed biases / LN params
        'pooler_w': w((H, H), jnp.bfloat16),
        'pooler_b': jnp.zeros((1, H), jnp.float32),
        'cls_w_pad': cls_w_pad,             # (H, 128) lane-padded classifier weight
        'cls_b_pad': jnp.zeros((1, LANE), jnp.float32),
    }


# -------------------------------- forward --------------------------------

def multiple_choice_forward(params, input_ids, attention_mask, token_type_ids):
    b, c, s = input_ids.shape
    n = b * c
    ids = input_ids.reshape(n, s)
    mask = attention_mask.reshape(n, s).astype(jnp.float32)
    types = token_type_ids.reshape(n, s)
    pos = jnp.arange(s)

    # TODO(synk): embedding-table gathers stay in JAX glue (data-dependent gather; tables are tiny).
    emb = (params['word_emb'][ids]
           + params['pos_emb'][pos][None, :, :]
           + params['type_emb'][types]).astype(jnp.float32)            # (N, S, H)

    # additive key mask, replicated per head once (kernel uses a merged (row, head) batch dim)
    attn_bias = jnp.repeat((1.0 - mask) * NEG_INF, NH, axis=0)[:, None, :]   # (N*NH, 1, S)

    # single pallas_call: no grid, everything (weights + activations) VMEM-resident
    logits_pad = pl.pallas_call(
        fused_bert_kernel,
        out_shape=jax.ShapeDtypeStruct((n, LANE), jnp.float32),
        compiler_params=pltpu.CompilerParams(vmem_limit_bytes=32 * 1024 * 1024),
    )(emb, attn_bias,
      params['emb_ln_g'], params['emb_ln_b'],
      params['wqkv'], params['wo'], params['w1'], params['w2'], params['vecs'],
      params['pooler_w'], params['pooler_b'], params['cls_w_pad'], params['cls_b_pad'])

    logits = logits_pad[:, 0]                                           # real logit is column 0
    return logits.reshape(b, c)                                         # (batch, num_choices)


# ---------------------------------- main ----------------------------------

if __name__ == "__main__":
    key = jax.random.PRNGKey(0)
    kp, ki = jax.random.split(key, 2)

    params = init_params(kp)

    input_ids = jax.random.randint(ki, (B, C, S), 0, VOCAB, dtype=jnp.int32)
    # valid tokens followed by padding (last 2 positions padded)
    attention_mask = jnp.concatenate(
        [jnp.ones((B, C, S - 2), jnp.int32), jnp.zeros((B, C, 2), jnp.int32)], axis=-1)
    token_type_ids = jnp.concatenate(
        [jnp.zeros((B, C, S // 2), jnp.int32), jnp.ones((B, C, S - S // 2), jnp.int32)], axis=-1)

    fwd = jax.jit(multiple_choice_forward)
    logits = fwd(params, input_ids, attention_mask, token_type_ids)
    logits = jax.block_until_ready(logits)

    assert logits.shape == (B, C) and logits.dtype == jnp.float32
    print("KERNEL_OK")
</pallas_src>

<mosaic_0001>
module attributes {stable_mosaic.version = 11 : i64} {
  func.func @fused_bert_kernel(%arg0: memref<8x8x32xf32, #tpu.memory_space<vmem>>, %arg1: memref<16x1x8xf32, #tpu.memory_space<vmem>>, %arg2: memref<1x32xf32, #tpu.memory_space<vmem>>, %arg3: memref<1x32xf32, #tpu.memory_space<vmem>>, %arg4: memref<2x32x96xbf16, #tpu.memory_space<vmem>>, %arg5: memref<2x32x32xbf16, #tpu.memory_space<vmem>>, %arg6: memref<2x32x64xbf16, #tpu.memory_space<vmem>>, %arg7: memref<2x64x32xbf16, #tpu.memory_space<vmem>>, %arg8: memref<2x8x96xf32, #tpu.memory_space<vmem>>, %arg9: memref<32x32xbf16, #tpu.memory_space<vmem>>, %arg10: memref<1x32xf32, #tpu.memory_space<vmem>>, %arg11: memref<32x128xbf16, #tpu.memory_space<vmem>>, %arg12: memref<1x128xf32, #tpu.memory_space<vmem>>, %arg13: memref<8x128xf32, #tpu.memory_space<vmem>>) attributes {dimension_semantics = [], scalar_prefetch = 0 : i64, scratch_operands = 0 : i64, tpu.core_type = #tpu.core_type<tc>} {
    %c0 = arith.constant 0 : index
    %c0_0 = arith.constant 0 : index
    %c0_1 = arith.constant 0 : index
    %0 = vector.load %arg0[%c0, %c0_0, %c0_1] : memref<8x8x32xf32, #tpu.memory_space<vmem>>, vector<8x8x32xf32>
    %c0_2 = arith.constant 0 : index
    %c0_3 = arith.constant 0 : index
    %1 = vector.load %arg2[%c0_2, %c0_3] : memref<1x32xf32, #tpu.memory_space<vmem>>, vector<1x32xf32>
    %c0_4 = arith.constant 0 : index
    %c0_5 = arith.constant 0 : index
    %2 = vector.load %arg3[%c0_4, %c0_5] : memref<1x32xf32, #tpu.memory_space<vmem>>, vector<1x32xf32>
    %cst = arith.constant dense<0.000000e+00> : vector<8x8xf32>
    %3 = vector.multi_reduction <add>, %0, %cst [2] : vector<8x8x32xf32> to vector<8x8xf32>
    %4 = vector.shape_cast %3 : vector<8x8xf32> to vector<8x8x1xf32>
    %cst_6 = arith.constant 3.200000e+01 : f32
    %5 = vector.broadcast %cst_6 : f32 to vector<8x8x1xf32>
    %6 = arith.divf %4, %5 : vector<8x8x1xf32>
    %7 = vector.broadcast %6 : vector<8x8x1xf32> to vector<8x8x32xf32>
    %8 = arith.subf %0, %7 : vector<8x8x32xf32>
    %9 = arith.mulf %8, %8 : vector<8x8x32xf32>
    %cst_7 = arith.constant dense<0.000000e+00> : vector<8x8xf32>
    %10 = vector.multi_reduction <add>, %9, %cst_7 [2] : vector<8x8x32xf32> to vector<8x8xf32>
    %11 = vector.shape_cast %10 : vector<8x8xf32> to vector<8x8x1xf32>
    %cst_8 = arith.constant 3.200000e+01 : f32
    %12 = vector.broadcast %cst_8 : f32 to vector<8x8x1xf32>
    %13 = arith.divf %11, %12 : vector<8x8x1xf32>
    %14 = vector.broadcast %6 : vector<8x8x1xf32> to vector<8x8x32xf32>
    %15 = arith.subf %0, %14 : vector<8x8x32xf32>
    %cst_9 = arith.constant 9.99999996E-13 : f32
    %16 = vector.broadcast %cst_9 : f32 to vector<8x8x1xf32>
    %17 = arith.addf %13, %16 : vector<8x8x1xf32>
    %18 = math.rsqrt %17 : vector<8x8x1xf32>
    %19 = vector.broadcast %18 : vector<8x8x1xf32> to vector<8x8x32xf32>
    %20 = arith.mulf %15, %19 : vector<8x8x32xf32>
    %21 = vector.shape_cast %1 : vector<1x32xf32> to vector<1x1x32xf32>
    %22 = vector.broadcast %21 : vector<1x1x32xf32> to vector<8x8x32xf32>
    %23 = arith.mulf %20, %22 : vector<8x8x32xf32>
    %24 = vector.shape_cast %2 : vector<1x32xf32> to vector<1x1x32xf32>
    %25 = vector.broadcast %24 : vector<1x1x32xf32> to vector<8x8x32xf32>
    %26 = arith.addf %23, %25 : vector<8x8x32xf32>
    %27 = vector.shape_cast %26 : vector<8x8x32xf32> to vector<64x32xf32>
    %c0_10 = arith.constant 0 : index
    %c0_11 = arith.constant 0 : index
    %c0_12 = arith.constant 0 : index
    %28 = vector.load %arg1[%c0_10, %c0_11, %c0_12] : memref<16x1x8xf32, #tpu.memory_space<vmem>>, vector<16x1x8xf32>
    %c0_13 = arith.constant 0 : index
    %c0_14 = arith.constant 0 : index
    %c0_15 = arith.constant 0 : index
    %29 = vector.load %arg8[%c0_13, %c0_14, %c0_15] : memref<2x8x96xf32, #tpu.memory_space<vmem>>, vector<1x8x96xf32>
    %30 = vector.shape_cast %29 : vector<1x8x96xf32> to vector<8x96xf32>
    %31 = arith.truncf %27 : vector<64x32xf32> to vector<64x32xbf16>
    %c0_16 = arith.constant 0 : index
    %c0_17 = arith.constant 0 : index
    %c0_18 = arith.constant 0 : index
    %32 = vector.load %arg4[%c0_16, %c0_17, %c0_18] : memref<2x32x96xbf16, #tpu.memory_space<vmem>>, vector<1x32x96xbf16>
    %33 = vector.shape_cast %32 : vector<1x32x96xbf16> to vector<32x96xbf16>
    %cst_19 = arith.constant dense<0.000000e+00> : vector<64x96xf32>
    %34 = tpu.matmul %31, %33, %cst_19 {dimension_numbers = #tpu.dot_dimension_numbers<[1], [0], [0], [1], [0, 0, 1, 1], [], []>} : vector<64x32xbf16>, vector<32x96xbf16>, vector<64x96xf32> -> vector<64x96xf32>
    %35 = vector.extract_strided_slice %30 {offsets = [0, 0], sizes = [1, 96], strides = [1, 1]} : vector<8x96xf32> to vector<1x96xf32>
    %36 = vector.broadcast %35 : vector<1x96xf32> to vector<64x96xf32>
    %37 = arith.addf %34, %36 : vector<64x96xf32>
    %38 = vector.shape_cast %37 : vector<64x96xf32> to vector<8x8x2x48xf32>
    %39 = tpu.transpose %38, [0, 2, 1, 3] : vector<8x8x2x48xf32> -> vector<8x2x8x48xf32>
    %40 = vector.shape_cast %39 : vector<8x2x8x48xf32> to vector<16x8x48xf32>
    %41 = arith.truncf %40 : vector<16x8x48xf32> to vector<16x8x48xbf16>
    %42 = vector.extract_strided_slice %41 {offsets = [0, 0, 0], sizes = [16, 8, 16], strides = [1, 1, 1]} : vector<16x8x48xbf16> to vector<16x8x16xbf16>
    %43 = vector.extract_strided_slice %41 {offsets = [0, 0, 16], sizes = [16, 8, 16], strides = [1, 1, 1]} : vector<16x8x48xbf16> to vector<16x8x16xbf16>
    %44 = vector.extract_strided_slice %41 {offsets = [0, 0, 32], sizes = [16, 8, 16], strides = [1, 1, 1]} : vector<16x8x48xbf16> to vector<16x8x16xbf16>
    "tpu.trace_start"() <{level = 10 : i32, message = "bqd,bkd->bqk"}> : () -> ()
    %cst_20 = arith.constant dense<0.000000e+00> : vector<16x8x8xf32>
    %45 = tpu.matmul %42, %43, %cst_20 {dimension_numbers = #tpu.dot_dimension_numbers<[2], [2], [1], [1], [0, 0, 0, 1, 1, 1], [0], [0]>} : vector<16x8x16xbf16>, vector<16x8x16xbf16>, vector<16x8x8xf32> -> vector<16x8x8xf32>
    "tpu.trace_stop"() : () -> ()
    %46 = vector.broadcast %28 : vector<16x1x8xf32> to vector<16x8x8xf32>
    %47 = arith.addf %45, %46 : vector<16x8x8xf32>
    %cst_21 = arith.constant dense<0xFF800000> : vector<16x8xf32>
    %48 = vector.multi_reduction <maximumf>, %47, %cst_21 [2] : vector<16x8x8xf32> to vector<16x8xf32>
    %49 = vector.shape_cast %48 : vector<16x8xf32> to vector<16x8x1xf32>
    %50 = vector.broadcast %49 : vector<16x8x1xf32> to vector<16x8x8xf32>
    %51 = arith.subf %47, %50 : vector<16x8x8xf32>
    %52 = math.exp %51 : vector<16x8x8xf32>
    %cst_22 = arith.constant dense<0.000000e+00> : vector<16x8xf32>
    %53 = vector.multi_reduction <add>, %52, %cst_22 [2] : vector<16x8x8xf32> to vector<16x8xf32>
    %54 = vector.shape_cast %53 : vector<16x8xf32> to vector<16x8x1xf32>
    %55 = tpu.reciprocal %54 {approx = true} : vector<16x8x1xf32> -> vector<16x8x1xf32>
    %56 = vector.broadcast %55 : vector<16x8x1xf32> to vector<16x8x8xf32>
    %57 = arith.mulf %52, %56 : vector<16x8x8xf32>
    %58 = arith.truncf %57 : vector<16x8x8xf32> to vector<16x8x8xbf16>
    "tpu.trace_start"() <{level = 10 : i32, message = "bqk,bkd->bqd"}> : () -> ()
    %cst_23 = arith.constant dense<0.000000e+00> : vector<16x8x16xf32>
    %59 = tpu.matmul %58, %44, %cst_23 {dimension_numbers = #tpu.dot_dimension_numbers<[2], [1], [1], [2], [0, 0, 0, 1, 1, 2], [0], [0]>} : vector<16x8x8xbf16>, vector<16x8x16xbf16>, vector<16x8x16xf32> -> vector<16x8x16xf32>
    "tpu.trace_stop"() : () -> ()
    %60 = vector.shape_cast %59 : vector<16x8x16xf32> to vector<8x2x8x16xf32>
    %61 = tpu.transpose %60, [0, 2, 1, 3] : vector<8x2x8x16xf32> -> vector<8x8x2x16xf32>
    %62 = vector.shape_cast %61 : vector<8x8x2x16xf32> to vector<64x32xf32>
    %63 = arith.truncf %62 : vector<64x32xf32> to vector<64x32xbf16>
    %c0_24 = arith.constant 0 : index
    %c0_25 = arith.constant 0 : index
    %c0_26 = arith.constant 0 : index
    %64 = vector.load %arg5[%c0_24, %c0_25, %c0_26] : memref<2x32x32xbf16, #tpu.memory_space<vmem>>, vector<1x32x32xbf16>
    %65 = vector.shape_cast %64 : vector<1x32x32xbf16> to vector<32x32xbf16>
    %cst_27 = arith.constant dense<0.000000e+00> : vector<64x32xf32>
    %66 = tpu.matmul %63, %65, %cst_27 {dimension_numbers = #tpu.dot_dimension_numbers<[1], [0], [0], [1], [0, 0, 1, 1], [], []>} : vector<64x32xbf16>, vector<32x32xbf16>, vector<64x32xf32> -> vector<64x32xf32>
    %67 = vector.extract_strided_slice %30 {offsets = [1, 0], sizes = [1, 32], strides = [1, 1]} : vector<8x96xf32> to vector<1x32xf32>
    %68 = vector.broadcast %67 : vector<1x32xf32> to vector<64x32xf32>
    %69 = arith.addf %66, %68 : vector<64x32xf32>
    %70 = arith.addf %27, %69 : vector<64x32xf32>
    %71 = vector.extract_strided_slice %30 {offsets = [2, 0], sizes = [1, 32], strides = [1, 1]} : vector<8x96xf32> to vector<1x32xf32>
    %72 = vector.extract_strided_slice %30 {offsets = [3, 0], sizes = [1, 32], strides = [1, 1]} : vector<8x96xf32> to vector<1x32xf32>
    %cst_28 = arith.constant dense<0.000000e+00> : vector<64xf32>
    %73 = vector.multi_reduction <add>, %70, %cst_28 [1] : vector<64x32xf32> to vector<64xf32>
    %74 = vector.shape_cast %73 : vector<64xf32> to vector<64x1xf32>
    %cst_29 = arith.constant 3.200000e+01 : f32
    %75 = vector.broadcast %cst_29 : f32 to vector<64x1xf32>
    %76 = arith.divf %74, %75 : vector<64x1xf32>
    %77 = vector.broadcast %76 : vector<64x1xf32> to vector<64x32xf32>
    %78 = arith.subf %70, %77 : vector<64x32xf32>
    %79 = arith.mulf %78, %78 : vector<64x32xf32>
    %cst_30 = arith.constant dense<0.000000e+00> : vector<64xf32>
    %80 = vector.multi_reduction <add>, %79, %cst_30 [1] : vector<64x32xf32> to vector<64xf32>
    %81 = vector.shape_cast %80 : vector<64xf32> to vector<64x1xf32>
    %cst_31 = arith.constant 3.200000e+01 : f32
    %82 = vector.broadcast %cst_31 : f32 to vector<64x1xf32>
    %83 = arith.divf %81, %82 : vector<64x1xf32>
    %84 = vector.broadcast %76 : vector<64x1xf32> to vector<64x32xf32>
    %85 = arith.subf %70, %84 : vector<64x32xf32>
    %cst_32 = arith.constant 9.99999996E-13 : f32
    %86 = vector.broadcast %cst_32 : f32 to vector<64x1xf32>
    %87 = arith.addf %83, %86 : vector<64x1xf32>
    %88 = math.rsqrt %87 : vector<64x1xf32>
    %89 = vector.broadcast %88 : vector<64x1xf32> to vector<64x32xf32>
    %90 = arith.mulf %85, %89 : vector<64x32xf32>
    %91 = vector.broadcast %71 : vector<1x32xf32> to vector<64x32xf32>
    %92 = arith.mulf %90, %91 : vector<64x32xf32>
    %93 = vector.broadcast %72 : vector<1x32xf32> to vector<64x32xf32>
    %94 = arith.addf %92, %93 : vector<64x32xf32>
    %95 = arith.truncf %94 : vector<64x32xf32> to vector<64x32xbf16>
    %c0_33 = arith.constant 0 : index
    %c0_34 = arith.constant 0 : index
    %c0_35 = arith.constant 0 : index
    %96 = vector.load %arg6[%c0_33, %c0_34, %c0_35] : memref<2x32x64xbf16, #tpu.memory_space<vmem>>, vector<1x32x64xbf16>
    %97 = vector.shape_cast %96 : vector<1x32x64xbf16> to vector<32x64xbf16>
    %cst_36 = arith.constant dense<0.000000e+00> : vector<64x64xf32>
    %98 = tpu.matmul %95, %97, %cst_36 {dimension_numbers = #tpu.dot_dimension_numbers<[1], [0], [0], [1], [0, 0, 1, 1], [], []>} : vector<64x32xbf16>, vector<32x64xbf16>, vector<64x64xf32> -> vector<64x64xf32>
    %99 = vector.extract_strided_slice %30 {offsets = [4, 0], sizes = [1, 64], strides = [1, 1]} : vector<8x96xf32> to vector<1x64xf32>
    %100 = vector.broadcast %99 : vector<1x64xf32> to vector<64x64xf32>
    %101 = arith.addf %98, %100 : vector<64x64xf32>
    %102 = arith.mulf %101, %101 : vector<64x64xf32>
    %103 = arith.mulf %101, %102 : vector<64x64xf32>
    %cst_37 = arith.constant 4.471500e-02 : f32
    %104 = vector.broadcast %cst_37 : f32 to vector<64x64xf32>
    %105 = arith.mulf %104, %103 : vector<64x64xf32>
    %106 = arith.addf %101, %105 : vector<64x64xf32>
    %cst_38 = arith.constant 0.797884583 : f32
    %107 = vector.broadcast %cst_38 : f32 to vector<64x64xf32>
    %108 = arith.mulf %107, %106 : vector<64x64xf32>
    %109 = math.tanh %108 : vector<64x64xf32>
    %cst_39 = arith.constant 1.000000e+00 : f32
    %110 = vector.broadcast %cst_39 : f32 to vector<64x64xf32>
    %111 = arith.addf %110, %109 : vector<64x64xf32>
    %cst_40 = arith.constant 5.000000e-01 : f32
    %112 = vector.broadcast %cst_40 : f32 to vector<64x64xf32>
    %113 = arith.mulf %112, %111 : vector<64x64xf32>
    %114 = arith.mulf %101, %113 : vector<64x64xf32>
    %115 = arith.truncf %114 : vector<64x64xf32> to vector<64x64xbf16>
    %c0_41 = arith.constant 0 : index
    %c0_42 = arith.constant 0 : index
    %c0_43 = arith.constant 0 : index
    %116 = vector.load %arg7[%c0_41, %c0_42, %c0_43] : memref<2x64x32xbf16, #tpu.memory_space<vmem>>, vector<1x64x32xbf16>
    %117 = vector.shape_cast %116 : vector<1x64x32xbf16> to vector<64x32xbf16>
    %cst_44 = arith.constant dense<0.000000e+00> : vector<64x32xf32>
    %118 = tpu.matmul %115, %117, %cst_44 {dimension_numbers = #tpu.dot_dimension_numbers<[1], [0], [0], [1], [0, 0, 1, 1], [], []>} : vector<64x64xbf16>, vector<64x32xbf16>, vector<64x32xf32> -> vector<64x32xf32>
    %119 = vector.extract_strided_slice %30 {offsets = [5, 0], sizes = [1, 32], strides = [1, 1]} : vector<8x96xf32> to vector<1x32xf32>
    %120 = vector.broadcast %119 : vector<1x32xf32> to vector<64x32xf32>
    %121 = arith.addf %118, %120 : vector<64x32xf32>
    %122 = arith.addf %94, %121 : vector<64x32xf32>
    %123 = vector.extract_strided_slice %30 {offsets = [6, 0], sizes = [1, 32], strides = [1, 1]} : vector<8x96xf32> to vector<1x32xf32>
    %124 = vector.extract_strided_slice %30 {offsets = [7, 0], sizes = [1, 32], strides = [1, 1]} : vector<8x96xf32> to vector<1x32xf32>
    %cst_45 = arith.constant dense<0.000000e+00> : vector<64xf32>
    %125 = vector.multi_reduction <add>, %122, %cst_45 [1] : vector<64x32xf32> to vector<64xf32>
    %126 = vector.shape_cast %125 : vector<64xf32> to vector<64x1xf32>
    %cst_46 = arith.constant 3.200000e+01 : f32
    %127 = vector.broadcast %cst_46 : f32 to vector<64x1xf32>
    %128 = arith.divf %126, %127 : vector<64x1xf32>
    %129 = vector.broadcast %128 : vector<64x1xf32> to vector<64x32xf32>
    %130 = arith.subf %122, %129 : vector<64x32xf32>
    %131 = arith.mulf %130, %130 : vector<64x32xf32>
    %cst_47 = arith.constant dense<0.000000e+00> : vector<64xf32>
    %132 = vector.multi_reduction <add>, %131, %cst_47 [1] : vector<64x32xf32> to vector<64xf32>
    %133 = vector.shape_cast %132 : vector<64xf32> to vector<64x1xf32>
    %cst_48 = arith.constant 3.200000e+01 : f32
    %134 = vector.broadcast %cst_48 : f32 to vector<64x1xf32>
    %135 = arith.divf %133, %134 : vector<64x1xf32>
    %136 = vector.broadcast %128 : vector<64x1xf32> to vector<64x32xf32>
    %137 = arith.subf %122, %136 : vector<64x32xf32>
    %cst_49 = arith.constant 9.99999996E-13 : f32
    %138 = vector.broadcast %cst_49 : f32 to vector<64x1xf32>
    %139 = arith.addf %135, %138 : vector<64x1xf32>
    %140 = math.rsqrt %139 : vector<64x1xf32>
    %141 = vector.broadcast %140 : vector<64x1xf32> to vector<64x32xf32>
    %142 = arith.mulf %137, %141 : vector<64x32xf32>
    %143 = vector.broadcast %123 : vector<1x32xf32> to vector<64x32xf32>
    %144 = arith.mulf %142, %143 : vector<64x32xf32>
    %145 = vector.broadcast %124 : vector<1x32xf32> to vector<64x32xf32>
    %146 = arith.addf %144, %145 : vector<64x32xf32>
    %c1 = arith.constant 1 : index
    %c0_50 = arith.constant 0 : index
    %c0_51 = arith.constant 0 : index
    %147 = vector.load %arg8[%c1, %c0_50, %c0_51] : memref<2x8x96xf32, #tpu.memory_space<vmem>>, vector<1x8x96xf32>
    %148 = vector.shape_cast %147 : vector<1x8x96xf32> to vector<8x96xf32>
    %149 = arith.truncf %146 : vector<64x32xf32> to vector<64x32xbf16>
    %c1_52 = arith.constant 1 : index
    %c0_53 = arith.constant 0 : index
    %c0_54 = arith.constant 0 : index
    %150 = vector.load %arg4[%c1_52, %c0_53, %c0_54] : memref<2x32x96xbf16, #tpu.memory_space<vmem>>, vector<1x32x96xbf16>
    %151 = vector.shape_cast %150 : vector<1x32x96xbf16> to vector<32x96xbf16>
    %cst_55 = arith.constant dense<0.000000e+00> : vector<64x96xf32>
    %152 = tpu.matmul %149, %151, %cst_55 {dimension_numbers = #tpu.dot_dimension_numbers<[1], [0], [0], [1], [0, 0, 1, 1], [], []>} : vector<64x32xbf16>, vector<32x96xbf16>, vector<64x96xf32> -> vector<64x96xf32>
    %153 = vector.extract_strided_slice %148 {offsets = [0, 0], sizes = [1, 96], strides = [1, 1]} : vector<8x96xf32> to vector<1x96xf32>
    %154 = vector.broadcast %153 : vector<1x96xf32> to vector<64x96xf32>
    %155 = arith.addf %152, %154 : vector<64x96xf32>
    %156 = vector.shape_cast %155 : vector<64x96xf32> to vector<8x8x2x48xf32>
    %157 = tpu.transpose %156, [0, 2, 1, 3] : vector<8x8x2x48xf32> -> vector<8x2x8x48xf32>
    %158 = vector.shape_cast %157 : vector<8x2x8x48xf32> to vector<16x8x48xf32>
    %159 = arith.truncf %158 : vector<16x8x48xf32> to vector<16x8x48xbf16>
    %160 = vector.extract_strided_slice %159 {offsets = [0, 0, 0], sizes = [16, 8, 16], strides = [1, 1, 1]} : vector<16x8x48xbf16> to vector<16x8x16xbf16>
    %161 = vector.extract_strided_slice %159 {offsets = [0, 0, 16], sizes = [16, 8, 16], strides = [1, 1, 1]} : vector<16x8x48xbf16> to vector<16x8x16xbf16>
    %162 = vector.extract_strided_slice %159 {offsets = [0, 0, 32], sizes = [16, 8, 16], strides = [1, 1, 1]} : vector<16x8x48xbf16> to vector<16x8x16xbf16>
    "tpu.trace_start"() <{level = 10 : i32, message = "bqd,bkd->bqk"}> : () -> ()
    %cst_56 = arith.constant dense<0.000000e+00> : vector<16x8x8xf32>
    %163 = tpu.matmul %160, %161, %cst_56 {dimension_numbers = #tpu.dot_dimension_numbers<[2], [2], [1], [1], [0, 0, 0, 1, 1, 1], [0], [0]>} : vector<16x8x16xbf16>, vector<16x8x16xbf16>, vector<16x8x8xf32> -> vector<16x8x8xf32>
    "tpu.trace_stop"() : () -> ()
    %164 = vector.broadcast %28 : vector<16x1x8xf32> to vector<16x8x8xf32>
    %165 = arith.addf %163, %164 : vector<16x8x8xf32>
    %cst_57 = arith.constant dense<0xFF800000> : vector<16x8xf32>
    %166 = vector.multi_reduction <maximumf>, %165, %cst_57 [2] : vector<16x8x8xf32> to vector<16x8xf32>
    %167 = vector.shape_cast %166 : vector<16x8xf32> to vector<16x8x1xf32>
    %168 = vector.broadcast %167 : vector<16x8x1xf32> to vector<16x8x8xf32>
    %169 = arith.subf %165, %168 : vector<16x8x8xf32>
    %170 = math.exp %169 : vector<16x8x8xf32>
    %cst_58 = arith.constant dense<0.000000e+00> : vector<16x8xf32>
    %171 = vector.multi_reduction <add>, %170, %cst_58 [2] : vector<16x8x8xf32> to vector<16x8xf32>
    %172 = vector.shape_cast %171 : vector<16x8xf32> to vector<16x8x1xf32>
    %173 = tpu.reciprocal %172 {approx = true} : vector<16x8x1xf32> -> vector<16x8x1xf32>
    %174 = vector.broadcast %173 : vector<16x8x1xf32> to vector<16x8x8xf32>
    %175 = arith.mulf %170, %174 : vector<16x8x8xf32>
    %176 = arith.truncf %175 : vector<16x8x8xf32> to vector<16x8x8xbf16>
    "tpu.trace_start"() <{level = 10 : i32, message = "bqk,bkd->bqd"}> : () -> ()
    %cst_59 = arith.constant dense<0.000000e+00> : vector<16x8x16xf32>
    %177 = tpu.matmul %176, %162, %cst_59 {dimension_numbers = #tpu.dot_dimension_numbers<[2], [1], [1], [2], [0, 0, 0, 1, 1, 2], [0], [0]>} : vector<16x8x8xbf16>, vector<16x8x16xbf16>, vector<16x8x16xf32> -> vector<16x8x16xf32>
    "tpu.trace_stop"() : () -> ()
    %178 = vector.shape_cast %177 : vector<16x8x16xf32> to vector<8x2x8x16xf32>
    %179 = tpu.transpose %178, [0, 2, 1, 3] : vector<8x2x8x16xf32> -> vector<8x8x2x16xf32>
    %180 = vector.shape_cast %179 : vector<8x8x2x16xf32> to vector<64x32xf32>
    %181 = arith.truncf %180 : vector<64x32xf32> to vector<64x32xbf16>
    %c1_60 = arith.constant 1 : index
    %c0_61 = arith.constant 0 : index
    %c0_62 = arith.constant 0 : index
    %182 = vector.load %arg5[%c1_60, %c0_61, %c0_62] : memref<2x32x32xbf16, #tpu.memory_space<vmem>>, vector<1x32x32xbf16>
    %183 = vector.shape_cast %182 : vector<1x32x32xbf16> to vector<32x32xbf16>
    %cst_63 = arith.constant dense<0.000000e+00> : vector<64x32xf32>
    %184 = tpu.matmul %181, %183, %cst_63 {dimension_numbers = #tpu.dot_dimension_numbers<[1], [0], [0], [1], [0, 0, 1, 1], [], []>} : vector<64x32xbf16>, vector<32x32xbf16>, vector<64x32xf32> -> vector<64x32xf32>
    %185 = vector.extract_strided_slice %148 {offsets = [1, 0], sizes = [1, 32], strides = [1, 1]} : vector<8x96xf32> to vector<1x32xf32>
    %186 = vector.broadcast %185 : vector<1x32xf32> to vector<64x32xf32>
    %187 = arith.addf %184, %186 : vector<64x32xf32>
    %188 = arith.addf %146, %187 : vector<64x32xf32>
    %189 = vector.extract_strided_slice %148 {offsets = [2, 0], sizes = [1, 32], strides = [1, 1]} : vector<8x96xf32> to vector<1x32xf32>
    %190 = vector.extract_strided_slice %148 {offsets = [3, 0], sizes = [1, 32], strides = [1, 1]} : vector<8x96xf32> to vector<1x32xf32>
    %cst_64 = arith.constant dense<0.000000e+00> : vector<64xf32>
    %191 = vector.multi_reduction <add>, %188, %cst_64 [1] : vector<64x32xf32> to vector<64xf32>
    %192 = vector.shape_cast %191 : vector<64xf32> to vector<64x1xf32>
    %cst_65 = arith.constant 3.200000e+01 : f32
    %193 = vector.broadcast %cst_65 : f32 to vector<64x1xf32>
    %194 = arith.divf %192, %193 : vector<64x1xf32>
    %195 = vector.broadcast %194 : vector<64x1xf32> to vector<64x32xf32>
    %196 = arith.subf %188, %195 : vector<64x32xf32>
    %197 = arith.mulf %196, %196 : vector<64x32xf32>
    %cst_66 = arith.constant dense<0.000000e+00> : vector<64xf32>
    %198 = vector.multi_reduction <add>, %197, %cst_66 [1] : vector<64x32xf32> to vector<64xf32>
    %199 = vector.shape_cast %198 : vector<64xf32> to vector<64x1xf32>
    %cst_67 = arith.constant 3.200000e+01 : f32
    %200 = vector.broadcast %cst_67 : f32 to vector<64x1xf32>
    %201 = arith.divf %199, %200 : vector<64x1xf32>
    %202 = vector.broadcast %194 : vector<64x1xf32> to vector<64x32xf32>
    %203 = arith.subf %188, %202 : vector<64x32xf32>
    %cst_68 = arith.constant 9.99999996E-13 : f32
    %204 = vector.broadcast %cst_68 : f32 to vector<64x1xf32>
    %205 = arith.addf %201, %204 : vector<64x1xf32>
    %206 = math.rsqrt %205 : vector<64x1xf32>
    %207 = vector.broadcast %206 : vector<64x1xf32> to vector<64x32xf32>
    %208 = arith.mulf %203, %207 : vector<64x32xf32>
    %209 = vector.broadcast %189 : vector<1x32xf32> to vector<64x32xf32>
    %210 = arith.mulf %208, %209 : vector<64x32xf32>
    %211 = vector.broadcast %190 : vector<1x32xf32> to vector<64x32xf32>
    %212 = arith.addf %210, %211 : vector<64x32xf32>
    %213 = arith.truncf %212 : vector<64x32xf32> to vector<64x32xbf16>
    %c1_69 = arith.constant 1 : index
    %c0_70 = arith.constant 0 : index
    %c0_71 = arith.constant 0 : index
    %214 = vector.load %arg6[%c1_69, %c0_70, %c0_71] : memref<2x32x64xbf16, #tpu.memory_space<vmem>>, vector<1x32x64xbf16>
    %215 = vector.shape_cast %214 : vector<1x32x64xbf16> to vector<32x64xbf16>
    %cst_72 = arith.constant dense<0.000000e+00> : vector<64x64xf32>
    %216 = tpu.matmul %213, %215, %cst_72 {dimension_numbers = #tpu.dot_dimension_numbers<[1], [0], [0], [1], [0, 0, 1, 1], [], []>} : vector<64x32xbf16>, vector<32x64xbf16>, vector<64x64xf32> -> vector<64x64xf32>
    %217 = vector.extract_strided_slice %148 {offsets = [4, 0], sizes = [1, 64], strides = [1, 1]} : vector<8x96xf32> to vector<1x64xf32>
    %218 = vector.broadcast %217 : vector<1x64xf32> to vector<64x64xf32>
    %219 = arith.addf %216, %218 : vector<64x64xf32>
    %220 = arith.mulf %219, %219 : vector<64x64xf32>
    %221 = arith.mulf %219, %220 : vector<64x64xf32>
    %cst_73 = arith.constant 4.471500e-02 : f32
    %222 = vector.broadcast %cst_73 : f32 to vector<64x64xf32>
    %223 = arith.mulf %222, %221 : vector<64x64xf32>
    %224 = arith.addf %219, %223 : vector<64x64xf32>
    %cst_74 = arith.constant 0.797884583 : f32
    %225 = vector.broadcast %cst_74 : f32 to vector<64x64xf32>
    %226 = arith.mulf %225, %224 : vector<64x64xf32>
    %227 = math.tanh %226 : vector<64x64xf32>
    %cst_75 = arith.constant 1.000000e+00 : f32
    %228 = vector.broadcast %cst_75 : f32 to vector<64x64xf32>
    %229 = arith.addf %228, %227 : vector<64x64xf32>
    %cst_76 = arith.constant 5.000000e-01 : f32
    %230 = vector.broadcast %cst_76 : f32 to vector<64x64xf32>
    %231 = arith.mulf %230, %229 : vector<64x64xf32>
    %232 = arith.mulf %219, %231 : vector<64x64xf32>
    %233 = arith.truncf %232 : vector<64x64xf32> to vector<64x64xbf16>
    %c1_77 = arith.constant 1 : index
    %c0_78 = arith.constant 0 : index
    %c0_79 = arith.constant 0 : index
    %234 = vector.load %arg7[%c1_77, %c0_78, %c0_79] : memref<2x64x32xbf16, #tpu.memory_space<vmem>>, vector<1x64x32xbf16>
    %235 = vector.shape_cast %234 : vector<1x64x32xbf16> to vector<64x32xbf16>
    %cst_80 = arith.constant dense<0.000000e+00> : vector<64x32xf32>
    %236 = tpu.matmul %233, %235, %cst_80 {dimension_numbers = #tpu.dot_dimension_numbers<[1], [0], [0], [1], [0, 0, 1, 1], [], []>} : vector<64x64xbf16>, vector<64x32xbf16>, vector<64x32xf32> -> vector<64x32xf32>
    %237 = vector.extract_strided_slice %148 {offsets = [5, 0], sizes = [1, 32], strides = [1, 1]} : vector<8x96xf32> to vector<1x32xf32>
    %238 = vector.broadcast %237 : vector<1x32xf32> to vector<64x32xf32>
    %239 = arith.addf %236, %238 : vector<64x32xf32>
    %240 = arith.addf %212, %239 : vector<64x32xf32>
    %241 = vector.extract_strided_slice %148 {offsets = [6, 0], sizes = [1, 32], strides = [1, 1]} : vector<8x96xf32> to vector<1x32xf32>
    %242 = vector.extract_strided_slice %148 {offsets = [7, 0], sizes = [1, 32], strides = [1, 1]} : vector<8x96xf32> to vector<1x32xf32>
    %cst_81 = arith.constant dense<0.000000e+00> : vector<64xf32>
    %243 = vector.multi_reduction <add>, %240, %cst_81 [1] : vector<64x32xf32> to vector<64xf32>
    %244 = vector.shape_cast %243 : vector<64xf32> to vector<64x1xf32>
    %cst_82 = arith.constant 3.200000e+01 : f32
    %245 = vector.broadcast %cst_82 : f32 to vector<64x1xf32>
    %246 = arith.divf %244, %245 : vector<64x1xf32>
    %247 = vector.broadcast %246 : vector<64x1xf32> to vector<64x32xf32>
    %248 = arith.subf %240, %247 : vector<64x32xf32>
    %249 = arith.mulf %248, %248 : vector<64x32xf32>
    %cst_83 = arith.constant dense<0.000000e+00> : vector<64xf32>
    %250 = vector.multi_reduction <add>, %249, %cst_83 [1] : vector<64x32xf32> to vector<64xf32>
    %251 = vector.shape_cast %250 : vector<64xf32> to vector<64x1xf32>
    %cst_84 = arith.constant 3.200000e+01 : f32
    %252 = vector.broadcast %cst_84 : f32 to vector<64x1xf32>
    %253 = arith.divf %251, %252 : vector<64x1xf32>
    %254 = vector.broadcast %246 : vector<64x1xf32> to vector<64x32xf32>
    %255 = arith.subf %240, %254 : vector<64x32xf32>
    %cst_85 = arith.constant 9.99999996E-13 : f32
    %256 = vector.broadcast %cst_85 : f32 to vector<64x1xf32>
    %257 = arith.addf %253, %256 : vector<64x1xf32>
    %258 = math.rsqrt %257 : vector<64x1xf32>
    %259 = vector.broadcast %258 : vector<64x1xf32> to vector<64x32xf32>
    %260 = arith.mulf %255, %259 : vector<64x32xf32>
    %261 = vector.broadcast %241 : vector<1x32xf32> to vector<64x32xf32>
    %262 = arith.mulf %260, %261 : vector<64x32xf32>
    %263 = vector.broadcast %242 : vector<1x32xf32> to vector<64x32xf32>
    %264 = arith.addf %262, %263 : vector<64x32xf32>
    %265 = vector.shape_cast %264 : vector<64x32xf32> to vector<8x8x32xf32>
    %266 = vector.extract_strided_slice %265 {offsets = [0, 0, 0], sizes = [8, 1, 32], strides = [1, 1, 1]} : vector<8x8x32xf32> to vector<8x1x32xf32>
    %267 = vector.shape_cast %266 : vector<8x1x32xf32> to vector<8x32xf32>
    %268 = arith.truncf %267 : vector<8x32xf32> to vector<8x32xbf16>
    %c0_86 = arith.constant 0 : index
    %c0_87 = arith.constant 0 : index
    %269 = vector.load %arg9[%c0_86, %c0_87] : memref<32x32xbf16, #tpu.memory_space<vmem>>, vector<32x32xbf16>
    %cst_88 = arith.constant dense<0.000000e+00> : vector<8x32xf32>
    %270 = tpu.matmul %268, %269, %cst_88 {dimension_numbers = #tpu.dot_dimension_numbers<[1], [0], [0], [1], [0, 0, 1, 1], [], []>} : vector<8x32xbf16>, vector<32x32xbf16>, vector<8x32xf32> -> vector<8x32xf32>
    %c0_89 = arith.constant 0 : index
    %c0_90 = arith.constant 0 : index
    %271 = vector.load %arg10[%c0_89, %c0_90] : memref<1x32xf32, #tpu.memory_space<vmem>>, vector<1x32xf32>
    %272 = vector.broadcast %271 : vector<1x32xf32> to vector<8x32xf32>
    %273 = arith.addf %270, %272 : vector<8x32xf32>
    %274 = math.tanh %273 : vector<8x32xf32>
    %275 = arith.truncf %274 : vector<8x32xf32> to vector<8x32xbf16>
    %c0_91 = arith.constant 0 : index
    %c0_92 = arith.constant 0 : index
    %276 = vector.load %arg11[%c0_91, %c0_92] : memref<32x128xbf16, #tpu.memory_space<vmem>>, vector<32x128xbf16>
    %cst_93 = arith.constant dense<0.000000e+00> : vector<8x128xf32>
    %277 = tpu.matmul %275, %276, %cst_93 {dimension_numbers = #tpu.dot_dimension_numbers<[1], [0], [0], [1], [0, 0, 1, 1], [], []>} : vector<8x32xbf16>, vector<32x128xbf16>, vector<8x128xf32> -> vector<8x128xf32>
    %c0_94 = arith.constant 0 : index
    %c0_95 = arith.constant 0 : index
    %278 = vector.load %arg12[%c0_94, %c0_95] : memref<1x128xf32, #tpu.memory_space<vmem>>, vector<1x128xf32>
    %279 = vector.broadcast %278 : vector<1x128xf32> to vector<8x128xf32>
    %280 = arith.addf %277, %279 : vector<8x128xf32>
    %c0_96 = arith.constant 0 : index
    %c0_97 = arith.constant 0 : index
    %281 = vector.load %arg13[%c0_96, %c0_97] : memref<8x128xf32, #tpu.memory_space<vmem>>, vector<8x128xf32>
    tpu.vector_store %arg13[%c0_96, %c0_97], %280 {strides = array<i32>} : memref<8x128xf32, #tpu.memory_space<vmem>>, vector<8x128xf32>,
    return
  }
}

</mosaic_0001>

<llo_original>
// kernel: squeeze.1
$region0: #{squeeze.1}
  %s0 = inlined_call_operand.vmem [shape: f32[8], index: 0, kind: input, shape index: {}]
  %s1 = inlined_call_operand.hbm [shape: f32[2,4], index: 1, kind: output, shape index: {}]
  $region1: #{squeeze.1} parent=0
    #allocation0 [shape = 'u8[1024]{0}', space=vmem, size = 0x400, scoped, tag = 'operand span for operand 1']
    #allocation1 [shape = 's32[1]{0}', space=sflag, size = 0x4, scoped, tag = 'scoped memory for squeeze.1']
    #allocation2 [shape = 'u8[4096]{0}', space=vmem, size = 0x1000, scoped, tag = 'scoped mem for output reshape']
    #allocation3 [shape = 'u8[4096]{0}', space=vmem, size = 0x1000, scoped, tag = 'scoped mem for input reshape']
    %2 = vsyncpa [#allocation1], 0
    %s4 = sshllo.u32 0, 1
    %v5 = vld [vmem:[%s0] sm:%s4]
    %6 = vst [vmem:[#allocation3] sm:%s4] %v5
    %v7 = vld [vmem:[#allocation3] sm:$0x1]
    %vm8 = vcmask 31744
    %9 = vst.msk [vmem:[#allocation2] sm:$0x1] %vm8, %v7
    %v10 = vld [vmem:[#allocation3] sm:$0x1]
    %11 = vrot.lane.b32.xlu0 %v10, 124
    %v12 = vpop.permute.xlu0 %11
    %vm13 = vcmask 31744
    %s14 = scalar_lea.vmem [#allocation2], 1
    %15 = vst.msk [vmem:[%s14] sm:$0x1] %vm13, %v12
    %s17 = sshllo.u32 0, 2
    %v19 = vld [vmem:[#allocation2] sm:%s17]
    %s20 = sshllo.u32 0, 2
    %21 = vst [vmem:[#allocation0] sm:%s20] %v19
    %s23 = ssub.s32 32, 32
    %24 = vsyncadd [#allocation1], %s23
    %s26 = sshll.u32 [#allocation0], 4
    %s27 = int_to_ptr.vmem [resolvable:$true] %s26
    %29 = dma.vmem_to_hbm [thread:$0]  %s27, 32, %s1, [#allocation1]
    %30 = dma.done [#allocation1], 32
    %31 = vsyncpa [#allocation1], 1

// kernel: multiple_choice_forward.1
$region0: #{multiple_choice_forward.1}
  #allocation0 [shape = 'u32[]', space=smem, size = 0x4, offset = 0x4, fixed_abs, tag = 'smem constant byte address 0x4 - core index']
  #allocation1 [shape = 'u32[144,128]{1,0:T(1,128)}', space=vmem, size = 0x12000, scoped, tag = 'internal scratch']
  %s0 = inlined_call_operand.vmem [shape: f32[8,8,32], index: 0, kind: input, shape index: {}]
  %s1 = inlined_call_operand.vmem [shape: f32[16,1,8], index: 1, kind: input, shape index: {}]
  %s2 = inlined_call_operand.vmem [shape: f32[1,32], index: 2, kind: input, shape index: {}]
  %s3 = inlined_call_operand.vmem [shape: f32[1,32], index: 3, kind: input, shape index: {}]
  %s4 = inlined_call_operand.vmem [shape: bf16[2,32,96], index: 4, kind: input, shape index: {}]
  %s5 = inlined_call_operand.vmem [shape: bf16[2,32,32], index: 5, kind: input, shape index: {}]
  %s6 = inlined_call_operand.vmem [shape: bf16[2,32,64], index: 6, kind: input, shape index: {}]
  %s7 = inlined_call_operand.vmem [shape: bf16[2,64,32], index: 7, kind: input, shape index: {}]
  %s8 = inlined_call_operand.vmem [shape: f32[2,8,96], index: 8, kind: input, shape index: {}]
  %s9 = inlined_call_operand.vmem [shape: bf16[32,32], index: 9, kind: input, shape index: {}]
  %s10 = inlined_call_operand.vmem [shape: f32[1,32], index: 10, kind: input, shape index: {}]
  %s11 = inlined_call_operand.vmem [shape: bf16[32,128], index: 11, kind: input, shape index: {}]
  %s12 = inlined_call_operand.vmem [shape: f32[1,128], index: 12, kind: input, shape index: {}]
  %s13 = inlined_call_operand.vmem [shape: f32[8,128], index: 13, kind: output, shape index: {}]
  %s14 = sld [smem:[#allocation0]]
  $region62: #{multiple_choice_forward.1} parent=0
    _
  %s16 = ssub.s32 1, %s14
  %s17 = scalar_select 0, %s16, %s14
  // Predicated region
  $region2: #{multiple_choice_forward.1} parent=0 // pred_check
    _
  $region3: #{multiple_choice_forward.1} parent=0 // pred_check_branch
    %19 = sbr.rel (0) target = $region5
  $region4: #{multiple_choice_forward.1} parent=0 // pred_region
    _
  $region5: #{multiple_choice_forward.1} parent=0 // pred_fallthru
    _
  // Predicated region
  $region6: #{multiple_choice_forward.1} parent=0 // pred_check
    _
  $region7: #{multiple_choice_forward.1} parent=0 // pred_check_branch
    %21 = sbr.rel (0) target = $region9
  $region8: #{multiple_choice_forward.1} parent=0 // pred_region
    _
  $region9: #{multiple_choice_forward.1} parent=0 // pred_fallthru
    _
  // Predicated region
  $region10: #{multiple_choice_forward.1} parent=0 // pred_check
    _
  $region11: #{multiple_choice_forward.1} parent=0 // pred_check_branch
    %23 = sbr.rel (0) target = $region13
  $region12: #{multiple_choice_forward.1} parent=0 // pred_region
    _
  $region13: #{multiple_choice_forward.1} parent=0 // pred_fallthru
    _
  // Predicated region
  $region14: #{multiple_choice_forward.1} parent=0 // pred_check
    _
  $region15: #{multiple_choice_forward.1} parent=0 // pred_check_branch
    %25 = sbr.rel (0) target = $region17
  $region16: #{multiple_choice_forward.1} parent=0 // pred_region
    _
  $region17: #{multiple_choice_forward.1} parent=0 // pred_fallthru
    _
  // Predicated region
  $region18: #{multiple_choice_forward.1} parent=0 // pred_check
    _
  $region19: #{multiple_choice_forward.1} parent=0 // pred_check_branch
    %27 = sbr.rel (0) target = $region21
  $region20: #{multiple_choice_forward.1} parent=0 // pred_region
    _
  $region21: #{multiple_choice_forward.1} parent=0 // pred_fallthru
    _
  // Predicated region
  $region22: #{multiple_choice_forward.1} parent=0 // pred_check
    _
  $region23: #{multiple_choice_forward.1} parent=0 // pred_check_branch
    %29 = sbr.rel (0) target = $region25
  $region24: #{multiple_choice_forward.1} parent=0 // pred_region
    _
  $region25: #{multiple_choice_forward.1} parent=0 // pred_fallthru
    _
  // Predicated region
  $region26: #{multiple_choice_forward.1} parent=0 // pred_check
    _
  $region27: #{multiple_choice_forward.1} parent=0 // pred_check_branch
    %31 = sbr.rel (0) target = $region29
  $region28: #{multiple_choice_forward.1} parent=0 // pred_region
    _
  $region29: #{multiple_choice_forward.1} parent=0 // pred_fallthru
    _
  // Predicated region
  $region30: #{multiple_choice_forward.1} parent=0 // pred_check
    _
  $region31: #{multiple_choice_forward.1} parent=0 // pred_check_branch
    %33 = sbr.rel (0) target = $region33
  $region32: #{multiple_choice_forward.1} parent=0 // pred_region
    _
  $region33: #{multiple_choice_forward.1} parent=0 // pred_fallthru
    _
  // Predicated region
  $region34: #{multiple_choice_forward.1} parent=0 // pred_check
    _
  $region35: #{multiple_choice_forward.1} parent=0 // pred_check_branch
    %35 = sbr.rel (0) target = $region37
  $region36: #{multiple_choice_forward.1} parent=0 // pred_region
    _
  $region37: #{multiple_choice_forward.1} parent=0 // pred_fallthru
    _
  // Predicated region
  $region38: #{multiple_choice_forward.1} parent=0 // pred_check
    _
  $region39: #{multiple_choice_forward.1} parent=0 // pred_check_branch
    %37 = sbr.rel (0) target = $region41
  $region40: #{multiple_choice_forward.1} parent=0 // pred_region
    _
  $region41: #{multiple_choice_forward.1} parent=0 // pred_fallthru
    _
  // Predicated region
  $region42: #{multiple_choice_forward.1} parent=0 // pred_check
    _
  $region43: #{multiple_choice_forward.1} parent=0 // pred_check_branch
    %39 = sbr.rel (0) target = $region45
  $region44: #{multiple_choice_forward.1} parent=0 // pred_region
    _
  $region45: #{multiple_choice_forward.1} parent=0 // pred_fallthru
    _
  // Predicated region
  $region46: #{multiple_choice_forward.1} parent=0 // pred_check
    _
  $region47: #{multiple_choice_forward.1} parent=0 // pred_check_branch
    %41 = sbr.rel (0) target = $region49
  $region48: #{multiple_choice_forward.1} parent=0 // pred_region
    _
  $region49: #{multiple_choice_forward.1} parent=0 // pred_fallthru
    _
  // Predicated region
  $region50: #{multiple_choice_forward.1} parent=0 // pred_check
    _
  $region51: #{multiple_choice_forward.1} parent=0 // pred_check_branch
    %43 = sbr.rel (0) target = $region53
  $region52: #{multiple_choice_forward.1} parent=0 // pred_region
    _
  $region53: #{multiple_choice_forward.1} parent=0 // pred_fallthru
    _
  %v45 = vld [vmem:[%s0] sm:$0xff]
  %v46 = vld [vmem:[%s0 + $0x8] sm:$0xff]
  %v47 = vld [vmem:[%s0 + $0x10] sm:$0xff]
  %v48 = vld [vmem:[%s0 + $0x18] sm:$0xff]
  %v49 = vld [vmem:[%s0 + $0x20] sm:$0xff]
  %v50 = vld [vmem:[%s0 + $0x28] sm:$0xff]
  %v51 = vld [vmem:[%s0 + $0x30] sm:$0xff]
  %v52 = vld [vmem:[%s0 + $0x38] sm:$0xff]
  %v53 = vld [vmem:[%s2] sm:$0x1]
  %v54 = vld [vmem:[%s3] sm:$0x1]
  %vm55 = vcmask 261120
  %v56 = vsel %vm55, %v45, 0.0
  %57 = vadd.xlane.f32.xlu0 %v56
  %v58 = vpop.xlane.xlu0 %57
  %v59 = vsel %vm55, %v46, 0.0
  %60 = vadd.xlane.f32.xlu0 %v59
  %v61 = vpop.xlane.xlu0 %60
  %v62 = vsel %vm55, %v47, 0.0
  %63 = vadd.xlane.f32.xlu0 %v62
  %v64 = vpop.xlane.xlu0 %63
  %v65 = vsel %vm55, %v48, 0.0
  %66 = vadd.xlane.f32.xlu0 %v65
  %v67 = vpop.xlane.xlu0 %66
  %v68 = vsel %vm55, %v49, 0.0
  %69 = vadd.xlane.f32.xlu0 %v68
  %v70 = vpop.xlane.xlu0 %69
  %v71 = vsel %vm55, %v50, 0.0
  %72 = vadd.xlane.f32.xlu0 %v71
  %v73 = vpop.xlane.xlu0 %72
  %v74 = vsel %vm55, %v51, 0.0
  %75 = vadd.xlane.f32.xlu0 %v74
  %v76 = vpop.xlane.xlu0 %75
  %v77 = vsel %vm55, %v52, 0.0
  %78 = vadd.xlane.f32.xlu0 %v77
  %v79 = vpop.xlane.xlu0 %78
  %v80 = vrcp.pop 32.0
  %v81 = vmul.f32 %v58, %v80
  %v82 = vmul.f32 %v61, %v80
  %v83 = vmul.f32 %v64, %v80
  %v84 = vmul.f32 %v67, %v80
  %v85 = vmul.f32 %v70, %v80
  %v86 = vmul.f32 %v73, %v80
  %v87 = vmul.f32 %v76, %v80
  %v88 = vmul.f32 %v79, %v80
  %v89 = vsub.f32 %v45, %v81
  %v90 = vsub.f32 %v46, %v82
  %v91 = vsub.f32 %v47, %v83
  %v92 = vsub.f32 %v48, %v84
  %v93 = vsub.f32 %v49, %v85
  %v94 = vsub.f32 %v50, %v86
  %v95 = vsub.f32 %v51, %v87
  %v96 = vsub.f32 %v52, %v88
  %v97 = vmul.f32 %v89, %v89
  %v98 = vmul.f32 %v90, %v90
  %v99 = vmul.f32 %v91, %v91
  %v100 = vmul.f32 %v92, %v92
  %v101 = vmul.f32 %v93, %v93
  %v102 = vmul.f32 %v94, %v94
  %v103 = vmul.f32 %v95, %v95
  %v104 = vmul.f32 %v96, %v96
  %v105 = vsel %vm55, %v97, 0.0
  %106 = vadd.xlane.f32.xlu0 %v105
  %v107 = vpop.xlane.xlu0 %106
  %v108 = vsel %vm55, %v98, 0.0
  %109 = vadd.xlane.f32.xlu0 %v108
  %v110 = vpop.xlane.xlu0 %109
  %v111 = vsel %vm55, %v99, 0.0
  %112 = vadd.xlane.f32.xlu0 %v111
  %v113 = vpop.xlane.xlu0 %112
  %v114 = vsel %vm55, %v100, 0.0
  %115 = vadd.xlane.f32.xlu0 %v114
  %v116 = vpop.xlane.xlu0 %115
  %v117 = vsel %vm55, %v101, 0.0
  %118 = vadd.xlane.f32.xlu0 %v117
  %v119 = vpop.xlane.xlu0 %118
  %v120 = vsel %vm55, %v102, 0.0
  %121 = vadd.xlane.f32.xlu0 %v120
  %v122 = vpop.xlane.xlu0 %121
  %v123 = vsel %vm55, %v103, 0.0
  %124 = vadd.xlane.f32.xlu0 %v123
  %v125 = vpop.xlane.xlu0 %124
  %v126 = vsel %vm55, %v104, 0.0
  %127 = vadd.xlane.f32.xlu0 %v126
  %v128 = vpop.xlane.xlu0 %127
  %v129 = vmul.f32 %v107, %v80
  %v130 = vmul.f32 %v110, %v80
  %v131 = vmul.f32 %v113, %v80
  %v132 = vmul.f32 %v116, %v80
  %v133 = vmul.f32 %v119, %v80
  %v134 = vmul.f32 %v122, %v80
  %v135 = vmul.f32 %v125, %v80
  %v136 = vmul.f32 %v128, %v80
  %v137 = vadd.f32 %v129, 1e-12
  %v138 = vadd.f32 %v130, 1e-12
  %v139 = vadd.f32 %v131, 1e-12
  %v140 = vadd.f32 %v132, 1e-12
  %v141 = vadd.f32 %v133, 1e-12
  %v142 = vadd.f32 %v134, 1e-12
  %v143 = vadd.f32 %v135, 1e-12
  %v144 = vadd.f32 %v136, 1e-12
  %v145 = vrsqrt.pop %v137
  %v146 = vrsqrt.pop %v138
  %v147 = vrsqrt.pop %v139
  %v148 = vrsqrt.pop %v140
  %v149 = vrsqrt.pop %v141
  %v150 = vrsqrt.pop %v142
  %v151 = vrsqrt.pop %v143
  %v152 = vrsqrt.pop %v144
  %v153 = vmul.f32 %v89, %v145
  %v154 = vmul.f32 %v90, %v146
  %v155 = vmul.f32 %v91, %v147
  %v156 = vmul.f32 %v92, %v148
  %v157 = vmul.f32 %v93, %v149
  %v158 = vmul.f32 %v94, %v150
  %v159 = vmul.f32 %v95, %v151
  %v160 = vmul.f32 %v96, %v152
  %v162 = vlaneseq
  %v163 = vshrl.u32 %v162, 7
  %v164 = vsub.s32 0, %v163
  %v165 = vrot.slane %v53, %v164
  %v167 = vmul.f32 %v153, %v165
  %v168 = vmul.f32 %v154, %v165
  %v169 = vmul.f32 %v155, %v165
  %v170 = vmul.f32 %v156, %v165
  %v171 = vmul.f32 %v157, %v165
  %v172 = vmul.f32 %v158, %v165
  %v173 = vmul.f32 %v159, %v165
  %v174 = vmul.f32 %v160, %v165
  %v176 = vlaneseq
  %v177 = vshrl.u32 %v176, 7
  %v178 = vsub.s32 0, %v177
  %v179 = vrot.slane %v54, %v178
  %v181 = vadd.f32 %v167, %v179
  %v182 = vadd.f32 %v168, %v179
  %v183 = vadd.f32 %v169, %v179
  %v184 = vadd.f32 %v170, %v179
  %v185 = vadd.f32 %v171, %v179
  %v186 = vadd.f32 %v172, %v179
  %v187 = vadd.f32 %v173, %v179
  %v188 = vadd.f32 %v174, %v179
  %v189 = vld [vmem:[%s1] sm:$0x1]
  %v190 = vld [vmem:[%s1 + $0x1] sm:$0x1]
  %v191 = vld [vmem:[%s1 + $0x2] sm:$0x1]
  %v192 = vld [vmem:[%s1 + $0x3] sm:$0x1]
  %v193 = vld [vmem:[%s1 + $0x4] sm:$0x1]
  %v194 = vld [vmem:[%s1 + $0x5] sm:$0x1]
  %v195 = vld [vmem:[%s1 + $0x6] sm:$0x1]
  %v196 = vld [vmem:[%s1 + $0x7] sm:$0x1]
  %v197 = vld [vmem:[%s1 + $0x8] sm:$0x1]
  %v198 = vld [vmem:[%s1 + $0x9] sm:$0x1]
  %v199 = vld [vmem:[%s1 + $0xa] sm:$0x1]
  %v200 = vld [vmem:[%s1 + $0xb] sm:$0x1]
  %v201 = vld [vmem:[%s1 + $0xc] sm:$0x1]
  %v202 = vld [vmem:[%s1 + $0xd] sm:$0x1]
  %v203 = vld [vmem:[%s1 + $0xe] sm:$0x1]
  %v204 = vld [vmem:[%s1 + $0xf] sm:$0x1]
  %v205 = vld [vmem:[%s8] sm:$0xff]
  %v206 = vpack.c.bf16 %v182, %v181
  %v207 = vpack.c.bf16 %v184, %v183
  %v208 = vpack.c.bf16 %v186, %v185
  %v209 = vpack.c.bf16 %v188, %v187
  %v210 = vld [vmem:[%s4] sm:$0xf]
  %v211 = vld [vmem:[%s4 + $0x4] sm:$0xf]
  %v212 = vld [vmem:[%s4 + $0x8] sm:$0xf]
  %v213 = vld [vmem:[%s4 + $0xc] sm:$0xf]
  %v214 = vlaneseq
  %v215 = vshrl.u32 %v214, 7
  %v216 = vsub.s32 0, %v215
  %v217 = vrot.slane %v205, %v216
  %v222 = vunpack.c.l.b16 %v210
  %v223 = vunpack.c.l.b16 %v211
  %v224 = vunpack.c.l.b16 %v212
  %v225 = vunpack.c.l.b16 %v213
  %v226 = vpack.c.b16 %v223, %v222
  %v227 = vpack.c.b16 %v225, %v224
  %v231 = vsel %vm55, %v206, 0
  %v234 = vsel %vm55, %v207, 0
  %v237 = vsel %vm55, %v208, 0
  %v240 = vsel %vm55, %v209, 0
  %242 = vmatprep.subr.bf16.mxu0 0
  %243 = vmatpush1.bf16.msra.mxu0 %v226
  %244 = vmatprep.subr.bf16.mxu0 0
  %245 = vmatpush1.bf16.msra.mxu0 %v227
  %246 = vmatprep.subr.bf16.mxu0 0
  %247 = vmatpush1.bf16.msra.mxu0 0
  %248 = vmatprep.subr.bf16.mxu0 0
  %249 = vmatpush1.bf16.msra.mxu0 0
  %250 = vmatprep.subr.bf16.mxu0 0
  %251 = vmatpush1.bf16.msra.mxu0 0
  %252 = vmatprep.subr.bf16.mxu0 0
  %253 = vmatpush1.bf16.msra.mxu0 0
  %254 = vmatprep.subr.bf16.mxu0 0
  %255 = vmatpush1.bf16.msra.mxu0 0
  %256 = vmatprep.subr.bf16.mxu0 0
  %257 = vmatpush1.bf16.msra.mxu0 0
  %258 = vmatprep.subr.bf16.mxu0 0
  %259 = vmatpush1.bf16.msra.mxu0 0
  %260 = vmatprep.subr.bf16.mxu0 0
  %261 = vmatpush1.bf16.msra.mxu0 0
  %262 = vmatprep.subr.bf16.mxu0 0
  %263 = vmatpush1.bf16.msra.mxu0 0
  %264 = vmatprep.subr.bf16.mxu0 0
  %265 = vmatpush1.bf16.msra.mxu0 0
  %266 = vmatprep.subr.bf16.mxu0 0
  %267 = vmatpush1.bf16.msra.mxu0 0
  %268 = vmatprep.subr.bf16.mxu0 0
  %269 = vmatpush1.bf16.msra.mxu0 0
  %270 = vmatprep.subr.bf16.mxu0 0
  %271 = vmatpush1.bf16.msra.mxu0 0
  %272 = vmatprep.subr.bf16.mxu0 0
  %273 = vmatpush1.bf16.msra.mxu0 0
  %274 = vmatprep.mubr.bf16.mxu0 0
  %275 = vmatmul.mubr.bf16.gmra.mrb[0].mxu0 %v231
  %v276 = vpop.f32.mrb[0].mxu0
  %v277 = vadd.f32 %v217, %v276
  %v278 = vpop.f32.mrb[0].mxu0
  %v279 = vpop.f32.mrb[0].mxu0
  %v280 = vadd.f32 %v217, %v279
  %v281 = vpop.f32.mrb[0].mxu0
  %282 = vmatprep.mubr.bf16.mxu0 0
  %283 = vmatmul.mubr.bf16.gmra.mrb[0].mxu0 %v234
  %v284 = vpop.f32.mrb[0].mxu0
  %v285 = vadd.f32 %v217, %v284
  %v286 = vpop.f32.mrb[0].mxu0
  %v287 = vpop.f32.mrb[0].mxu0
  %v288 = vadd.f32 %v217, %v287
  %v289 = vpop.f32.mrb[0].mxu0
  %290 = vmatprep.mubr.bf16.mxu0 0
  %291 = vmatmul.mubr.bf16.gmra.mrb[0].mxu0 %v237
  %v292 = vpop.f32.mrb[0].mxu0
  %v293 = vadd.f32 %v217, %v292
  %v294 = vpop.f32.mrb[0].mxu0
  %v295 = vpop.f32.mrb[0].mxu0
  %v296 = vadd.f32 %v217, %v295
  %v297 = vpop.f32.mrb[0].mxu0
  %298 = vmatprep.mubr.bf16.mxu0 0
  %299 = vmatmul.mubr.bf16.gmra.mrb[0].mxu0 %v240
  %v300 = vpop.f32.mrb[0].mxu0
  %v301 = vadd.f32 %v217, %v300
  %v302 = vpop.f32.mrb[0].mxu0
  %v303 = vpop.f32.mrb[0].mxu0
  %v304 = vadd.f32 %v217, %v303
  %v305 = vpop.f32.mrb[0].mxu0
  %306 = vdwg.mxu0
  %315 = vrot.lane.b32.xlu0 %v277, 80
  %v316 = vpop.permute.xlu0 %315
  %317 = vrot.lane.b32.xlu0 %v280, 80
  %v318 = vpop.permute.xlu0 %317
  %319 = vrot.lane.b32.xlu0 %v285, 80
  %v320 = vpop.permute.xlu0 %319
  %321 = vrot.lane.b32.xlu0 %v288, 80
  %v322 = vpop.permute.xlu0 %321
  %323 = vrot.lane.b32.xlu0 %v293, 80
  %v324 = vpop.permute.xlu0 %323
  %325 = vrot.lane.b32.xlu0 %v296, 80
  %v326 = vpop.permute.xlu0 %325
  %327 = vrot.lane.b32.xlu0 %v301, 80
  %v328 = vpop.permute.xlu0 %327
  %329 = vrot.lane.b32.xlu0 %v304, 80
  %v330 = vpop.permute.xlu0 %329
  %v339 = vcombine.high %v277, 0.0
  %v341 = vunpack.c.l.s4 1983009808
  %v342 = vunpack.c.0.s8 %v341
  %v343 = vlaneseq
  %v344 = vshrl.u32 %v343, 7
  %v345 = vsub.s32 %v342, %v344
  %v346 = vrot.slane %v277, %v345
  %v348 = vunpack.c.l.s4 1983009808
  %v349 = vunpack.c.0.s8 %v348
  %v350 = vlaneseq
  %v351 = vshrl.u32 %v350, 7
  %v352 = vsub.s32 %v349, %v351
  %v353 = vrot.slane %v339, %v352
  %v354 = vcombine.high %v316, 0.0
  %v356 = vunpack.c.l.s4 1983009808
  %v357 = vunpack.c.0.s8 %v356
  %v358 = vlaneseq
  %v359 = vshrl.u32 %v358, 7
  %v360 = vsub.s32 %v357, %v359
  %v361 = vrot.slane %v316, %v360
  %v363 = vunpack.c.l.s4 1983009808
  %v364 = vunpack.c.0.s8 %v363
  %v365 = vlaneseq
  %v366 = vshrl.u32 %v365, 7
  %v367 = vsub.s32 %v364, %v366
  %v368 = vrot.slane %v354, %v367
  %v369 = vcombine.low %v346, %v361
  %v370 = vcombine.high %v346, %v361
  %v372 = vunpack.c.l.s4 1934713408
  %v373 = vunpack.c.0.s8 %v372
  %v374 = vlaneseq
  %v375 = vshrl.u32 %v374, 7
  %v376 = vsub.s32 %v373, %v375
  %v377 = vrot.slane %v369, %v376
  %v379 = vunpack.c.l.s4 1934713408
  %v380 = vunpack.c.0.s8 %v379
  %v381 = vlaneseq
  %v382 = vshrl.u32 %v381, 7
  %v383 = vsub.s32 %v380, %v382
  %v384 = vrot.slane %v370, %v383
  %v385 = vcombine.low %v353, %v368
  %v386 = vcombine.high %v353, %v368
  %v388 = vunpack.c.l.s4 1934713408
  %v389 = vunpack.c.0.s8 %v388
  %v390 = vlaneseq
  %v391 = vshrl.u32 %v390, 7
  %v392 = vsub.s32 %v389, %v391
  %v393 = vrot.slane %v385, %v392
  %v395 = vunpack.c.l.s4 1934713408
  %v396 = vunpack.c.0.s8 %v395
  %v397 = vlaneseq
  %v398 = vshrl.u32 %v397, 7
  %v399 = vsub.s32 %v396, %v398
  %v400 = vrot.slane %v386, %v399
  %v401 = vcombine.high %v377, 0.0
  %v402 = vcombine.high %v384, 0.0
  %v403 = vcombine.high %v393, 0.0
  %v404 = vcombine.high %v400, 0.0
  %v405 = vcombine.high %v280, 0.0
  %v407 = vunpack.c.l.s4 1983009808
  %v408 = vunpack.c.0.s8 %v407
  %v409 = vlaneseq
  %v410 = vshrl.u32 %v409, 7
  %v411 = vsub.s32 %v408, %v410
  %v412 = vrot.slane %v280, %v411
  %v414 = vunpack.c.l.s4 1983009808
  %v415 = vunpack.c.0.s8 %v414
  %v416 = vlaneseq
  %v417 = vshrl.u32 %v416, 7
  %v418 = vsub.s32 %v415, %v417
  %v419 = vrot.slane %v405, %v418
  %v420 = vcombine.high %v318, 0.0
  %v422 = vunpack.c.l.s4 1983009808
  %v423 = vunpack.c.0.s8 %v422
  %v424 = vlaneseq
  %v425 = vshrl.u32 %v424, 7
  %v426 = vsub.s32 %v423, %v425
  %v427 = vrot.slane %v318, %v426
  %v429 = vunpack.c.l.s4 1983009808
  %v430 = vunpack.c.0.s8 %v429
  %v431 = vlaneseq
  %v432 = vshrl.u32 %v431, 7
  %v433 = vsub.s32 %v430, %v432
  %v434 = vrot.slane %v420, %v433
  %v435 = vcombine.low %v412, %v427
  %v436 = vcombine.high %v412, %v427
  %v438 = vunpack.c.l.s4 1934713408
  %v439 = vunpack.c.0.s8 %v438
  %v440 = vlaneseq
  %v441 = vshrl.u32 %v440, 7
  %v442 = vsub.s32 %v439, %v441
  %v443 = vrot.slane %v435, %v442
  %v445 = vunpack.c.l.s4 1934713408
  %v446 = vunpack.c.0.s8 %v445
  %v447 = vlaneseq
  %v448 = vshrl.u32 %v447, 7
  %v449 = vsub.s32 %v446, %v448
  %v450 = vrot.slane %v436, %v449
  %v451 = vcombine.low %v419, %v434
  %v452 = vcombine.high %v419, %v434
  %v454 = vunpack.c.l.s4 1934713408
  %v455 = vunpack.c.0.s8 %v454
  %v456 = vlaneseq
  %v457 = vshrl.u32 %v456, 7
  %v458 = vsub.s32 %v455, %v457
  %v459 = vrot.slane %v451, %v458
  %v461 = vunpack.c.l.s4 1934713408
  %v462 = vunpack.c.0.s8 %v461
  %v463 = vlaneseq
  %v464 = vshrl.u32 %v463, 7
  %v465 = vsub.s32 %v462, %v464
  %v466 = vrot.slane %v452, %v465
  %v467 = vcombine.high %v443, 0.0
  %v468 = vcombine.high %v450, 0.0
  %v469 = vcombine.high %v459, 0.0
  %v470 = vcombine.high %v466, 0.0
  %v471 = vcombine.high %v285, 0.0
  %v473 = vunpack.c.l.s4 1983009808
  %v474 = vunpack.c.0.s8 %v473
  %v475 = vlaneseq
  %v476 = vshrl.u32 %v475, 7
  %v477 = vsub.s32 %v474, %v476
  %v478 = vrot.slane %v285, %v477
  %v480 = vunpack.c.l.s4 1983009808
  %v481 = vunpack.c.0.s8 %v480
  %v482 = vlaneseq
  %v483 = vshrl.u32 %v482, 7
  %v484 = vsub.s32 %v481, %v483
  %v485 = vrot.slane %v471, %v484
  %v486 = vcombine.high %v320, 0.0
  %v488 = vunpack.c.l.s4 1983009808
  %v489 = vunpack.c.0.s8 %v488
  %v490 = vlaneseq
  %v491 = vshrl.u32 %v490, 7
  %v492 = vsub.s32 %v489, %v491
  %v493 = vrot.slane %v320, %v492
  %v495 = vunpack.c.l.s4 1983009808
  %v496 = vunpack.c.0.s8 %v495
  %v497 = vlaneseq
  %v498 = vshrl.u32 %v497, 7
  %v499 = vsub.s32 %v496, %v498
  %v500 = vrot.slane %v486, %v499
  %v501 = vcombine.low %v478, %v493
  %v502 = vcombine.high %v478, %v493
  %v504 = vunpack.c.l.s4 1934713408
  %v505 = vunpack.c.0.s8 %v504
  %v506 = vlaneseq
  %v507 = vshrl.u32 %v506, 7
  %v508 = vsub.s32 %v505, %v507
  %v509 = vrot.slane %v501, %v508
  %v511 = vunpack.c.l.s4 1934713408
  %v512 = vunpack.c.0.s8 %v511
  %v513 = vlaneseq
  %v514 = vshrl.u32 %v513, 7
  %v515 = vsub.s32 %v512, %v514
  %v516 = vrot.slane %v502, %v515
  %v517 = vcombine.low %v485, %v500
  %v518 = vcombine.high %v485, %v500
  %v520 = vunpack.c.l.s4 1934713408
  %v521 = vunpack.c.0.s8 %v520
  %v522 = vlaneseq
  %v523 = vshrl.u32 %v522, 7
  %v524 = vsub.s32 %v521, %v523
  %v525 = vrot.slane %v517, %v524
  %v527 = vunpack.c.l.s4 1934713408
  %v528 = vunpack.c.0.s8 %v527
  %v529 = vlaneseq
  %v530 = vshrl.u32 %v529, 7
  %v531 = vsub.s32 %v528, %v530
  %v532 = vrot.slane %v518, %v531
  %v533 = vcombine.high %v509, 0.0
  %v534 = vcombine.high %v516, 0.0
  %v535 = vcombine.high %v525, 0.0
  %v536 = vcombine.high %v532, 0.0
  %v537 = vcombine.high %v288, 0.0
  %v539 = vunpack.c.l.s4 1983009808
  %v540 = vunpack.c.0.s8 %v539
  %v541 = vlaneseq
  %v542 = vshrl.u32 %v541, 7
  %v543 = vsub.s32 %v540, %v542
  %v544 = vrot.slane %v288, %v543
  %v546 = vunpack.c.l.s4 1983009808
  %v547 = vunpack.c.0.s8 %v546
  %v548 = vlaneseq
  %v549 = vshrl.u32 %v548, 7
  %v550 = vsub.s32 %v547, %v549
  %v551 = vrot.slane %v537, %v550
  %v552 = vcombine.high %v322, 0.0
  %v554 = vunpack.c.l.s4 1983009808
  %v555 = vunpack.c.0.s8 %v554
  %v556 = vlaneseq
  %v557 = vshrl.u32 %v556, 7
  %v558 = vsub.s32 %v555, %v557
  %v559 = vrot.slane %v322, %v558
  %v561 = vunpack.c.l.s4 1983009808
  %v562 = vunpack.c.0.s8 %v561
  %v563 = vlaneseq
  %v564 = vshrl.u32 %v563, 7
  %v565 = vsub.s32 %v562, %v564
  %v566 = vrot.slane %v552, %v565
  %v567 = vcombine.low %v544, %v559
  %v568 = vcombine.high %v544, %v559
  %v570 = vunpack.c.l.s4 1934713408
  %v571 = vunpack.c.0.s8 %v570
  %v572 = vlaneseq
  %v573 = vshrl.u32 %v572, 7
  %v574 = vsub.s32 %v571, %v573
  %v575 = vrot.slane %v567, %v574
  %v577 = vunpack.c.l.s4 1934713408
  %v578 = vunpack.c.0.s8 %v577
  %v579 = vlaneseq
  %v580 = vshrl.u32 %v579, 7
  %v581 = vsub.s32 %v578, %v580
  %v582 = vrot.slane %v568, %v581
  %v583 = vcombine.low %v551, %v566
  %v584 = vcombine.high %v551, %v566
  %v586 = vunpack.c.l.s4 1934713408
  %v587 = vunpack.c.0.s8 %v586
  %v588 = vlaneseq
  %v589 = vshrl.u32 %v588, 7
  %v590 = vsub.s32 %v587, %v589
  %v591 = vrot.slane %v583, %v590
  %v593 = vunpack.c.l.s4 1934713408
  %v594 = vunpack.c.0.s8 %v593
  %v595 = vlaneseq
  %v596 = vshrl.u32 %v595, 7
  %v597 = vsub.s32 %v594, %v596
  %v598 = vrot.slane %v584, %v597
  %v599 = vcombine.high %v575, 0.0
  %v600 = vcombine.high %v582, 0.0
  %v601 = vcombine.high %v591, 0.0
  %v602 = vcombine.high %v598, 0.0
  %v603 = vcombine.high %v293, 0.0
  %v605 = vunpack.c.l.s4 1983009808
  %v606 = vunpack.c.0.s8 %v605
  %v607 = vlaneseq
  %v608 = vshrl.u32 %v607, 7
  %v609 = vsub.s32 %v606, %v608
  %v610 = vrot.slane %v293, %v609
  %v612 = vunpack.c.l.s4 1983009808
  %v613 = vunpack.c.0.s8 %v612
  %v614 = vlaneseq
  %v615 = vshrl.u32 %v614, 7
  %v616 = vsub.s32 %v613, %v615
  %v617 = vrot.slane %v603, %v616
  %v618 = vcombine.high %v324, 0.0
  %v620 = vunpack.c.l.s4 1983009808
  %v621 = vunpack.c.0.s8 %v620
  %v622 = vlaneseq
  %v623 = vshrl.u32 %v622, 7
  %v624 = vsub.s32 %v621, %v623
  %v625 = vrot.slane %v324, %v624
  %v627 = vunpack.c.l.s4 1983009808
  %v628 = vunpack.c.0.s8 %v627
  %v629 = vlaneseq
  %v630 = vshrl.u32 %v629, 7
  %v631 = vsub.s32 %v628, %v630
  %v632 = vrot.slane %v618, %v631
  %v633 = vcombine.low %v610, %v625
  %v634 = vcombine.high %v610, %v625
  %v636 = vunpack.c.l.s4 1934713408
  %v637 = vunpack.c.0.s8 %v636
  %v638 = vlaneseq
  %v639 = vshrl.u32 %v638, 7
  %v640 = vsub.s32 %v637, %v639
  %v641 = vrot.slane %v633, %v640
  %v643 = vunpack.c.l.s4 1934713408
  %v644 = vunpack.c.0.s8 %v643
  %v645 = vlaneseq
  %v646 = vshrl.u32 %v645, 7
  %v647 = vsub.s32 %v644, %v646
  %v648 = vrot.slane %v634, %v647
  %v649 = vcombine.low %v617, %v632
  %v650 = vcombine.high %v617, %v632
  %v652 = vunpack.c.l.s4 1934713408
  %v653 = vunpack.c.0.s8 %v652
  %v654 = vlaneseq
  %v655 = vshrl.u32 %v654, 7
  %v656 = vsub.s32 %v653, %v655
  %v657 = vrot.slane %v649, %v656
  %v659 = vunpack.c.l.s4 1934713408
  %v660 = vunpack.c.0.s8 %v659
  %v661 = vlaneseq
  %v662 = vshrl.u32 %v661, 7
  %v663 = vsub.s32 %v660, %v662
  %v664 = vrot.slane %v650, %v663
  %v665 = vcombine.high %v641, 0.0
  %v666 = vcombine.high %v648, 0.0
  %v667 = vcombine.high %v657, 0.0
  %v668 = vcombine.high %v664, 0.0
  %v669 = vcombine.high %v296, 0.0
  %v671 = vunpack.c.l.s4 1983009808
  %v672 = vunpack.c.0.s8 %v671
  %v673 = vlaneseq
  %v674 = vshrl.u32 %v673, 7
  %v675 = vsub.s32 %v672, %v674
  %v676 = vrot.slane %v296, %v675
  %v678 = vunpack.c.l.s4 1983009808
  %v679 = vunpack.c.0.s8 %v678
  %v680 = vlaneseq
  %v681 = vshrl.u32 %v680, 7
  %v682 = vsub.s32 %v679, %v681
  %v683 = vrot.slane %v669, %v682
  %v684 = vcombine.high %v326, 0.0
  %v686 = vunpack.c.l.s4 1983009808
  %v687 = vunpack.c.0.s8 %v686
  %v688 = vlaneseq
  %v689 = vshrl.u32 %v688, 7
  %v690 = vsub.s32 %v687, %v689
  %v691 = vrot.slane %v326, %v690
  %v693 = vunpack.c.l.s4 1983009808
  %v694 = vunpack.c.0.s8 %v693
  %v695 = vlaneseq
  %v696 = vshrl.u32 %v695, 7
  %v697 = vsub.s32 %v694, %v696
  %v698 = vrot.slane %v684, %v697
  %v699 = vcombine.low %v676, %v691
  %v700 = vcombine.high %v676, %v691
  %v702 = vunpack.c.l.s4 1934713408
  %v703 = vunpack.c.0.s8 %v702
  %v704 = vlaneseq
  %v705 = vshrl.u32 %v704, 7
  %v706 = vsub.s32 %v703, %v705
  %v707 = vrot.slane %v699, %v706
  %v709 = vunpack.c.l.s4 1934713408
  %v710 = vunpack.c.0.s8 %v709
  %v711 = vlaneseq
  %v712 = vshrl.u32 %v711, 7
  %v713 = vsub.s32 %v710, %v712
  %v714 = vrot.slane %v700, %v713
  %v715 = vcombine.low %v683, %v698
  %v716 = vcombine.high %v683, %v698
  %v718 = vunpack.c.l.s4 1934713408
  %v719 = vunpack.c.0.s8 %v718
  %v720 = vlaneseq
  %v721 = vshrl.u32 %v720, 7
  %v722 = vsub.s32 %v719, %v721
  %v723 = vrot.slane %v715, %v722
  %v725 = vunpack.c.l.s4 1934713408
  %v726 = vunpack.c.0.s8 %v725
  %v727 = vlaneseq
  %v728 = vshrl.u32 %v727, 7
  %v729 = vsub.s32 %v726, %v728
  %v730 = vrot.slane %v716, %v729
  %v731 = vcombine.high %v707, 0.0
  %v732 = vcombine.high %v714, 0.0
  %v733 = vcombine.high %v723, 0.0
  %v734 = vcombine.high %v730, 0.0
  %v735 = vcombine.high %v301, 0.0
  %v737 = vunpack.c.l.s4 1983009808
  %v738 = vunpack.c.0.s8 %v737
  %v739 = vlaneseq
  %v740 = vshrl.u32 %v739, 7
  %v741 = vsub.s32 %v738, %v740
  %v742 = vrot.slane %v301, %v741
  %v744 = vunpack.c.l.s4 1983009808
  %v745 = vunpack.c.0.s8 %v744
  %v746 = vlaneseq
  %v747 = vshrl.u32 %v746, 7
  %v748 = vsub.s32 %v745, %v747
  %v749 = vrot.slane %v735, %v748
  %v750 = vcombine.high %v328, 0.0
  %v752 = vunpack.c.l.s4 1983009808
  %v753 = vunpack.c.0.s8 %v752
  %v754 = vlaneseq
  %v755 = vshrl.u32 %v754, 7
  %v756 = vsub.s32 %v753, %v755
  %v757 = vrot.slane %v328, %v756
  %v759 = vunpack.c.l.s4 1983009808
  %v760 = vunpack.c.0.s8 %v759
  %v761 = vlaneseq
  %v762 = vshrl.u32 %v761, 7
  %v763 = vsub.s32 %v760, %v762
  %v764 = vrot.slane %v750, %v763
  %v765 = vcombine.low %v742, %v757
  %v766 = vcombine.high %v742, %v757
  %v768 = vunpack.c.l.s4 1934713408
  %v769 = vunpack.c.0.s8 %v768
  %v770 = vlaneseq
  %v771 = vshrl.u32 %v770, 7
  %v772 = vsub.s32 %v769, %v771
  %v773 = vrot.slane %v765, %v772
  %v775 = vunpack.c.l.s4 1934713408
  %v776 = vunpack.c.0.s8 %v775
  %v777 = vlaneseq
  %v778 = vshrl.u32 %v777, 7
  %v779 = vsub.s32 %v776, %v778
  %v780 = vrot.slane %v766, %v779
  %v781 = vcombine.low %v749, %v764
  %v782 = vcombine.high %v749, %v764
  %v784 = vunpack.c.l.s4 1934713408
  %v785 = vunpack.c.0.s8 %v784
  %v786 = vlaneseq
  %v787 = vshrl.u32 %v786, 7
  %v788 = vsub.s32 %v785, %v787
  %v789 = vrot.slane %v781, %v788
  %v791 = vunpack.c.l.s4 1934713408
  %v792 = vunpack.c.0.s8 %v791
  %v793 = vlaneseq
  %v794 = vshrl.u32 %v793, 7
  %v795 = vsub.s32 %v792, %v794
  %v796 = vrot.slane %v782, %v795
  %v797 = vcombine.high %v773, 0.0
  %v798 = vcombine.high %v780, 0.0
  %v799 = vcombine.high %v789, 0.0
  %v800 = vcombine.high %v796, 0.0
  %v801 = vcombine.high %v304, 0.0
  %v803 = vunpack.c.l.s4 1983009808
  %v804 = vunpack.c.0.s8 %v803
  %v805 = vlaneseq
  %v806 = vshrl.u32 %v805, 7
  %v807 = vsub.s32 %v804, %v806
  %v808 = vrot.slane %v304, %v807
  %v810 = vunpack.c.l.s4 1983009808
  %v811 = vunpack.c.0.s8 %v810
  %v812 = vlaneseq
  %v813 = vshrl.u32 %v812, 7
  %v814 = vsub.s32 %v811, %v813
  %v815 = vrot.slane %v801, %v814
  %v816 = vcombine.high %v330, 0.0
  %v818 = vunpack.c.l.s4 1983009808
  %v819 = vunpack.c.0.s8 %v818
  %v820 = vlaneseq
  %v821 = vshrl.u32 %v820, 7
  %v822 = vsub.s32 %v819, %v821
  %v823 = vrot.slane %v330, %v822
  %v825 = vunpack.c.l.s4 1983009808
  %v826 = vunpack.c.0.s8 %v825
  %v827 = vlaneseq
  %v828 = vshrl.u32 %v827, 7
  %v829 = vsub.s32 %v826, %v828
  %v830 = vrot.slane %v816, %v829
  %v831 = vcombine.low %v808, %v823
  %v832 = vcombine.high %v808, %v823
  %v834 = vunpack.c.l.s4 1934713408
  %v835 = vunpack.c.0.s8 %v834
  %v836 = vlaneseq
  %v837 = vshrl.u32 %v836, 7
  %v838 = vsub.s32 %v835, %v837
  %v839 = vrot.slane %v831, %v838
  %v841 = vunpack.c.l.s4 1934713408
  %v842 = vunpack.c.0.s8 %v841
  %v843 = vlaneseq
  %v844 = vshrl.u32 %v843, 7
  %v845 = vsub.s32 %v842, %v844
  %v846 = vrot.slane %v832, %v845
  %v847 = vcombine.low %v815, %v830
  %v848 = vcombine.high %v815, %v830
  %v850 = vunpack.c.l.s4 1934713408
  %v851 = vunpack.c.0.s8 %v850
  %v852 = vlaneseq
  %v853 = vshrl.u32 %v852, 7
  %v854 = vsub.s32 %v851, %v853
  %v855 = vrot.slane %v847, %v854
  %v857 = vunpack.c.l.s4 1934713408
  %v858 = vunpack.c.0.s8 %v857
  %v859 = vlaneseq
  %v860 = vshrl.u32 %v859, 7
  %v861 = vsub.s32 %v858, %v860
  %v862 = vrot.slane %v848, %v861
  %v863 = vcombine.high %v839, 0.0
  %v864 = vcombine.high %v846, 0.0
  %v865 = vcombine.high %v855, 0.0
  %v866 = vcombine.high %v862, 0.0
  %v867 = vcombine.low %v377, %v384
  %v869 = vunpack.c.l.s4 1983009808
  %v870 = vunpack.c.0.s8 %v869
  %v871 = vlaneseq
  %v872 = vshrl.u32 %v871, 7
  %v873 = vsub.s32 %v870, %v872
  %v874 = vrot.slane %v867, %v873
  %v875 = vcombine.low %v401, %v402
  %v877 = vunpack.c.l.s4 1983009808
  %v878 = vunpack.c.0.s8 %v877
  %v879 = vlaneseq
  %v880 = vshrl.u32 %v879, 7
  %v881 = vsub.s32 %v878, %v880
  %v882 = vrot.slane %v875, %v881
  %v883 = vcombine.low %v393, %v400
  %v885 = vunpack.c.l.s4 1983009808
  %v886 = vunpack.c.0.s8 %v885
  %v887 = vlaneseq
  %v888 = vshrl.u32 %v887, 7
  %v889 = vsub.s32 %v886, %v888
  %v890 = vrot.slane %v883, %v889
  %v891 = vcombine.low %v403, %v404
  %v893 = vunpack.c.l.s4 1983009808
  %v894 = vunpack.c.0.s8 %v893
  %v895 = vlaneseq
  %v896 = vshrl.u32 %v895, 7
  %v897 = vsub.s32 %v894, %v896
  %v898 = vrot.slane %v891, %v897
  %v899 = vcombine.low %v874, %v882
  %v901 = vunpack.c.l.s4 1934713408
  %v902 = vunpack.c.0.s8 %v901
  %v903 = vlaneseq
  %v904 = vshrl.u32 %v903, 7
  %v905 = vsub.s32 %v902, %v904
  %v906 = vrot.slane %v899, %v905
  %v907 = vcombine.low %v890, %v898
  %v909 = vunpack.c.l.s4 1934713408
  %v910 = vunpack.c.0.s8 %v909
  %v911 = vlaneseq
  %v912 = vshrl.u32 %v911, 7
  %v913 = vsub.s32 %v910, %v912
  %v914 = vrot.slane %v907, %v913
  %v915 = vcombine.low %v906, %v914
  %v916 = vcombine.high %v906, %v914
  %v917 = vcombine.low %v443, %v450
  %v919 = vunpack.c.l.s4 1983009808
  %v920 = vunpack.c.0.s8 %v919
  %v921 = vlaneseq
  %v922 = vshrl.u32 %v921, 7
  %v923 = vsub.s32 %v920, %v922
  %v924 = vrot.slane %v917, %v923
  %v925 = vcombine.low %v467, %v468
  %v927 = vunpack.c.l.s4 1983009808
  %v928 = vunpack.c.0.s8 %v927
  %v929 = vlaneseq
  %v930 = vshrl.u32 %v929, 7
  %v931 = vsub.s32 %v928, %v930
  %v932 = vrot.slane %v925, %v931
  %v933 = vcombine.low %v459, %v466
  %v935 = vunpack.c.l.s4 1983009808
  %v936 = vunpack.c.0.s8 %v935
  %v937 = vlaneseq
  %v938 = vshrl.u32 %v937, 7
  %v939 = vsub.s32 %v936, %v938
  %v940 = vrot.slane %v933, %v939
  %v941 = vcombine.low %v469, %v470
  %v943 = vunpack.c.l.s4 1983009808
  %v944 = vunpack.c.0.s8 %v943
  %v945 = vlaneseq
  %v946 = vshrl.u32 %v945, 7
  %v947 = vsub.s32 %v944, %v946
  %v948 = vrot.slane %v941, %v947
  %v949 = vcombine.low %v924, %v932
  %v951 = vunpack.c.l.s4 1934713408
  %v952 = vunpack.c.0.s8 %v951
  %v953 = vlaneseq
  %v954 = vshrl.u32 %v953, 7
  %v955 = vsub.s32 %v952, %v954
  %v956 = vrot.slane %v949, %v955
  %v957 = vcombine.low %v940, %v948
  %v959 = vunpack.c.l.s4 1934713408
  %v960 = vunpack.c.0.s8 %v959
  %v961 = vlaneseq
  %v962 = vshrl.u32 %v961, 7
  %v963 = vsub.s32 %v960, %v962
  %v964 = vrot.slane %v957, %v963
  %v965 = vcombine.low %v956, %v964
  %v966 = vcombine.high %v956, %v964
  %v967 = vcombine.low %v509, %v516
  %v969 = vunpack.c.l.s4 1983009808
  %v970 = vunpack.c.0.s8 %v969
  %v971 = vlaneseq
  %v972 = vshrl.u32 %v971, 7
  %v973 = vsub.s32 %v970, %v972
  %v974 = vrot.slane %v967, %v973
  %v975 = vcombine.low %v533, %v534
  %v977 = vunpack.c.l.s4 1983009808
  %v978 = vunpack.c.0.s8 %v977
  %v979 = vlaneseq
  %v980 = vshrl.u32 %v979, 7
  %v981 = vsub.s32 %v978, %v980
  %v982 = vrot.slane %v975, %v981
  %v983 = vcombine.low %v525, %v532
  %v985 = vunpack.c.l.s4 1983009808
  %v986 = vunpack.c.0.s8 %v985
  %v987 = vlaneseq
  %v988 = vshrl.u32 %v987, 7
  %v989 = vsub.s32 %v986, %v988
  %v990 = vrot.slane %v983, %v989
  %v991 = vcombine.low %v535, %v536
  %v993 = vunpack.c.l.s4 1983009808
  %v994 = vunpack.c.0.s8 %v993
  %v995 = vlaneseq
  %v996 = vshrl.u32 %v995, 7
  %v997 = vsub.s32 %v994, %v996
  %v998 = vrot.slane %v991, %v997
  %v999 = vcombine.low %v974, %v982
  %v1001 = vunpack.c.l.s4 1934713408
  %v1002 = vunpack.c.0.s8 %v1001
  %v1003 = vlaneseq
  %v1004 = vshrl.u32 %v1003, 7
  %v1005 = vsub.s32 %v1002, %v1004
  %v1006 = vrot.slane %v999, %v1005
  %v1007 = vcombine.low %v990, %v998
  %v1009 = vunpack.c.l.s4 1934713408
  %v1010 = vunpack.c.0.s8 %v1009
  %v1011 = vlaneseq
  %v1012 = vshrl.u32 %v1011, 7
  %v1013 = vsub.s32 %v1010, %v1012
  %v1014 = vrot.slane %v1007, %v1013
  %v1015 = vcombine.low %v1006, %v1014
  %v1016 = vcombine.high %v1006, %v1014
  %v1017 = vcombine.low %v575, %v582
  %v1019 = vunpack.c.l.s4 1983009808
  %v1020 = vunpack.c.0.s8 %v1019
  %v1021 = vlaneseq
  %v1022 = vshrl.u32 %v1021, 7
  %v1023 = vsub.s32 %v1020, %v1022
  %v1024 = vrot.slane %v1017, %v1023
  %v1025 = vcombine.low %v599, %v600
  %v1027 = vunpack.c.l.s4 1983009808
  %v1028 = vunpack.c.0.s8 %v1027
  %v1029 = vlaneseq
  %v1030 = vshrl.u32 %v1029, 7
  %v1031 = vsub.s32 %v1028, %v1030
  %v1032 = vrot.slane %v1025, %v1031
  %v1033 = vcombine.low %v591, %v598
  %v1035 = vunpack.c.l.s4 1983009808
  %v1036 = vunpack.c.0.s8 %v1035
  %v1037 = vlaneseq
  %v1038 = vshrl.u32 %v1037, 7
  %v1039 = vsub.s32 %v1036, %v1038
  %v1040 = vrot.slane %v1033, %v1039
  %v1041 = vcombine.low %v601, %v602
  %v1043 = vunpack.c.l.s4 1983009808
  %v1044 = vunpack.c.0.s8 %v1043
  %v1045 = vlaneseq
  %v1046 = vshrl.u32 %v1045, 7
  %v1047 = vsub.s32 %v1044, %v1046
  %v1048 = vrot.slane %v1041, %v1047
  %v1049 = vcombine.low %v1024, %v1032
  %v1051 = vunpack.c.l.s4 1934713408
  %v1052 = vunpack.c.0.s8 %v1051
  %v1053 = vlaneseq
  %v1054 = vshrl.u32 %v1053, 7
  %v1055 = vsub.s32 %v1052, %v1054
  %v1056 = vrot.slane %v1049, %v1055
  %v1057 = vcombine.low %v1040, %v1048
  %v1059 = vunpack.c.l.s4 1934713408
  %v1060 = vunpack.c.0.s8 %v1059
  %v1061 = vlaneseq
  %v1062 = vshrl.u32 %v1061, 7
  %v1063 = vsub.s32 %v1060, %v1062
  %v1064 = vrot.slane %v1057, %v1063
  %v1065 = vcombine.low %v1056, %v1064
  %v1066 = vcombine.high %v1056, %v1064
  %v1067 = vcombine.low %v641, %v648
  %v1069 = vunpack.c.l.s4 1983009808
  %v1070 = vunpack.c.0.s8 %v1069
  %v1071 = vlaneseq
  %v1072 = vshrl.u32 %v1071, 7
  %v1073 = vsub.s32 %v1070, %v1072
  %v1074 = vrot.slane %v1067, %v1073
  %v1075 = vcombine.low %v665, %v666
  %v1077 = vunpack.c.l.s4 1983009808
  %v1078 = vunpack.c.0.s8 %v1077
  %v1079 = vlaneseq
  %v1080 = vshrl.u32 %v1079, 7
  %v1081 = vsub.s32 %v1078, %v1080
  %v1082 = vrot.slane %v1075, %v1081
  %v1083 = vcombine.low %v657, %v664
  %v1085 = vunpack.c.l.s4 1983009808
  %v1086 = vunpack.c.0.s8 %v1085
  %v1087 = vlaneseq
  %v1088 = vshrl.u32 %v1087, 7
  %v1089 = vsub.s32 %v1086, %v1088
  %v1090 = vrot.slane %v1083, %v1089
  %v1091 = vcombine.low %v667, %v668
  %v1093 = vunpack.c.l.s4 1983009808
  %v1094 = vunpack.c.0.s8 %v1093
  %v1095 = vlaneseq
  %v1096 = vshrl.u32 %v1095, 7
  %v1097 = vsub.s32 %v1094, %v1096
  %v1098 = vrot.slane %v1091, %v1097
  %v1099 = vcombine.low %v1074, %v1082
  %v1101 = vunpack.c.l.s4 1934713408
  %v1102 = vunpack.c.0.s8 %v1101
  %v1103 = vlaneseq
  %v1104 = vshrl.u32 %v1103, 7
  %v1105 = vsub.s32 %v1102, %v1104
  %v1106 = vrot.slane %v1099, %v1105
  %v1107 = vcombine.low %v1090, %v1098
  %v1109 = vunpack.c.l.s4 1934713408
  %v1110 = vunpack.c.0.s8 %v1109
  %v1111 = vlaneseq
  %v1112 = vshrl.u32 %v1111, 7
  %v1113 = vsub.s32 %v1110, %v1112
  %v1114 = vrot.slane %v1107, %v1113
  %v1115 = vcombine.low %v1106, %v1114
  %v1116 = vcombine.high %v1106, %v1114
  %v1117 = vcombine.low %v707, %v714
  %v1119 = vunpack.c.l.s4 1983009808
  %v1120 = vunpack.c.0.s8 %v1119
  %v1121 = vlaneseq
  %v1122 = vshrl.u32 %v1121, 7
  %v1123 = vsub.s32 %v1120, %v1122
  %v1124 = vrot.slane %v1117, %v1123
  %v1125 = vcombine.low %v731, %v732
  %v1127 = vunpack.c.l.s4 1983009808
  %v1128 = vunpack.c.0.s8 %v1127
  %v1129 = vlaneseq
  %v1130 = vshrl.u32 %v1129, 7
  %v1131 = vsub.s32 %v1128, %v1130
  %v1132 = vrot.slane %v1125, %v1131
  %v1133 = vcombine.low %v723, %v730
  %v1135 = vunpack.c.l.s4 1983009808
  %v1136 = vunpack.c.0.s8 %v1135
  %v1137 = vlaneseq
  %v1138 = vshrl.u32 %v1137, 7
  %v1139 = vsub.s32 %v1136, %v1138
  %v1140 = vrot.slane %v1133, %v1139
  %v1141 = vcombine.low %v733, %v734
  %v1143 = vunpack.c.l.s4 1983009808
  %v1144 = vunpack.c.0.s8 %v1143
  %v1145 = vlaneseq
  %v1146 = vshrl.u32 %v1145, 7
  %v1147 = vsub.s32 %v1144, %v1146
  %v1148 = vrot.slane %v1141, %v1147
  %v1149 = vcombine.low %v1124, %v1132
  %v1151 = vunpack.c.l.s4 1934713408
  %v1152 = vunpack.c.0.s8 %v1151
  %v1153 = vlaneseq
  %v1154 = vshrl.u32 %v1153, 7
  %v1155 = vsub.s32 %v1152, %v1154
  %v1156 = vrot.slane %v1149, %v1155
  %v1157 = vcombine.low %v1140, %v1148
  %v1159 = vunpack.c.l.s4 1934713408
  %v1160 = vunpack.c.0.s8 %v1159
  %v1161 = vlaneseq
  %v1162 = vshrl.u32 %v1161, 7
  %v1163 = vsub.s32 %v1160, %v1162
  %v1164 = vrot.slane %v1157, %v1163
  %v1165 = vcombine.low %v1156, %v1164
  %v1166 = vcombine.high %v1156, %v1164
  %v1167 = vcombine.low %v773, %v780
  %v1169 = vunpack.c.l.s4 1983009808
  %v1170 = vunpack.c.0.s8 %v1169
  %v1171 = vlaneseq
  %v1172 = vshrl.u32 %v1171, 7
  %v1173 = vsub.s32 %v1170, %v1172
  %v1174 = vrot.slane %v1167, %v1173
  %v1175 = vcombine.low %v797, %v798
  %v1177 = vunpack.c.l.s4 1983009808
  %v1178 = vunpack.c.0.s8 %v1177
  %v1179 = vlaneseq
  %v1180 = vshrl.u32 %v1179, 7
  %v1181 = vsub.s32 %v1178, %v1180
  %v1182 = vrot.slane %v1175, %v1181
  %v1183 = vcombine.low %v789, %v796
  %v1185 = vunpack.c.l.s4 1983009808
  %v1186 = vunpack.c.0.s8 %v1185
  %v1187 = vlaneseq
  %v1188 = vshrl.u32 %v1187, 7
  %v1189 = vsub.s32 %v1186, %v1188
  %v1190 = vrot.slane %v1183, %v1189
  %v1191 = vcombine.low %v799, %v800
  %v1193 = vunpack.c.l.s4 1983009808
  %v1194 = vunpack.c.0.s8 %v1193
  %v1195 = vlaneseq
  %v1196 = vshrl.u32 %v1195, 7
  %v1197 = vsub.s32 %v1194, %v1196
  %v1198 = vrot.slane %v1191, %v1197
  %v1199 = vcombine.low %v1174, %v1182
  %v1201 = vunpack.c.l.s4 1934713408
  %v1202 = vunpack.c.0.s8 %v1201
  %v1203 = vlaneseq
  %v1204 = vshrl.u32 %v1203, 7
  %v1205 = vsub.s32 %v1202, %v1204
  %v1206 = vrot.slane %v1199, %v1205
  %v1207 = vcombine.low %v1190, %v1198
  %v1209 = vunpack.c.l.s4 1934713408
  %v1210 = vunpack.c.0.s8 %v1209
  %v1211 = vlaneseq
  %v1212 = vshrl.u32 %v1211, 7
  %v1213 = vsub.s32 %v1210, %v1212
  %v1214 = vrot.slane %v1207, %v1213
  %v1215 = vcombine.low %v1206, %v1214
  %v1216 = vcombine.high %v1206, %v1214
  %v1217 = vcombine.low %v839, %v846
  %v1219 = vunpack.c.l.s4 1983009808
  %v1220 = vunpack.c.0.s8 %v1219
  %v1221 = vlaneseq
  %v1222 = vshrl.u32 %v1221, 7
  %v1223 = vsub.s32 %v1220, %v1222
  %v1224 = vrot.slane %v1217, %v1223
  %v1225 = vcombine.low %v863, %v864
  %v1227 = vunpack.c.l.s4 1983009808
  %v1228 = vunpack.c.0.s8 %v1227
  %v1229 = vlaneseq
  %v1230 = vshrl.u32 %v1229, 7
  %v1231 = vsub.s32 %v1228, %v1230
  %v1232 = vrot.slane %v1225, %v1231
  %v1233 = vcombine.low %v855, %v862
  %v1235 = vunpack.c.l.s4 1983009808
  %v1236 = vunpack.c.0.s8 %v1235
  %v1237 = vlaneseq
  %v1238 = vshrl.u32 %v1237, 7
  %v1239 = vsub.s32 %v1236, %v1238
  %v1240 = vrot.slane %v1233, %v1239
  %v1241 = vcombine.low %v865, %v866
  %v1243 = vunpack.c.l.s4 1983009808
  %v1244 = vunpack.c.0.s8 %v1243
  %v1245 = vlaneseq
  %v1246 = vshrl.u32 %v1245, 7
  %v1247 = vsub.s32 %v1244, %v1246
  %v1248 = vrot.slane %v1241, %v1247
  %v1249 = vcombine.low %v1224, %v1232
  %v1251 = vunpack.c.l.s4 1934713408
  %v1252 = vunpack.c.0.s8 %v1251
  %v1253 = vlaneseq
  %v1254 = vshrl.u32 %v1253, 7
  %v1255 = vsub.s32 %v1252, %v1254
  %v1256 = vrot.slane %v1249, %v1255
  %v1257 = vcombine.low %v1240, %v1248
  %v1259 = vunpack.c.l.s4 1934713408
  %v1260 = vunpack.c.0.s8 %v1259
  %v1261 = vlaneseq
  %v1262 = vshrl.u32 %v1261, 7
  %v1263 = vsub.s32 %v1260, %v1262
  %v1264 = vrot.slane %v1257, %v1263
  %v1265 = vcombine.low %v1256, %v1264
  %v1266 = vcombine.high %v1256, %v1264
  %v1267 = vpack.c.bf16 %v915, %v915
  %v1268 = vpack.c.bf16 %v916, %v916
  %v1269 = vpack.c.bf16 %v965, %v965
  %v1270 = vpack.c.bf16 %v966, %v966
  %v1271 = vpack.c.bf16 %v1015, %v1015
  %v1272 = vpack.c.bf16 %v1016, %v1016
  %v1273 = vpack.c.bf16 %v1065, %v1065
  %v1274 = vpack.c.bf16 %v1066, %v1066
  %v1275 = vpack.c.bf16 %v1115, %v1115
  %v1276 = vpack.c.bf16 %v1116, %v1116
  %v1277 = vpack.c.bf16 %v1165, %v1165
  %v1278 = vpack.c.bf16 %v1166, %v1166
  %v1279 = vpack.c.bf16 %v1215, %v1215
  %v1280 = vpack.c.bf16 %v1216, %v1216
  %v1281 = vpack.c.bf16 %v1265, %v1265
  %v1282 = vpack.c.bf16 %v1266, %v1266
  %v1299 = vlaneseq
  %v1300 = vshrl.u32 %v1299, 7
  %v1301 = vsub.s32 0, %v1300
  %v1302 = vrot.slane %v189, %v1301
  %v1303 = vlaneseq
  %v1304 = vshrl.u32 %v1303, 7
  %v1305 = vsub.s32 0, %v1304
  %v1306 = vrot.slane %v190, %v1305
  %v1307 = vlaneseq
  %v1308 = vshrl.u32 %v1307, 7
  %v1309 = vsub.s32 0, %v1308
  %v1310 = vrot.slane %v191, %v1309
  %v1311 = vlaneseq
  %v1312 = vshrl.u32 %v1311, 7
  %v1313 = vsub.s32 0, %v1312
  %v1314 = vrot.slane %v192, %v1313
  %v1315 = vlaneseq
  %v1316 = vshrl.u32 %v1315, 7
  %v1317 = vsub.s32 0, %v1316
  %v1318 = vrot.slane %v193, %v1317
  %v1319 = vlaneseq
  %v1320 = vshrl.u32 %v1319, 7
  %v1321 = vsub.s32 0, %v1320
  %v1322 = vrot.slane %v194, %v1321
  %v1323 = vlaneseq
  %v1324 = vshrl.u32 %v1323, 7
  %v1325 = vsub.s32 0, %v1324
  %v1326 = vrot.slane %v195, %v1325
  %v1327 = vlaneseq
  %v1328 = vshrl.u32 %v1327, 7
  %v1329 = vsub.s32 0, %v1328
  %v1330 = vrot.slane %v196, %v1329
  %v1331 = vlaneseq
  %v1332 = vshrl.u32 %v1331, 7
  %v1333 = vsub.s32 0, %v1332
  %v1334 = vrot.slane %v197, %v1333
  %v1335 = vlaneseq
  %v1336 = vshrl.u32 %v1335, 7
  %v1337 = vsub.s32 0, %v1336
  %v1338 = vrot.slane %v198, %v1337
  %v1339 = vlaneseq
  %v1340 = vshrl.u32 %v1339, 7
  %v1341 = vsub.s32 0, %v1340
  %v1342 = vrot.slane %v199, %v1341
  %v1343 = vlaneseq
  %v1344 = vshrl.u32 %v1343, 7
  %v1345 = vsub.s32 0, %v1344
  %v1346 = vrot.slane %v200, %v1345
  %v1347 = vlaneseq
  %v1348 = vshrl.u32 %v1347, 7
  %v1349 = vsub.s32 0, %v1348
  %v1350 = vrot.slane %v201, %v1349
  %v1351 = vlaneseq
  %v1352 = vshrl.u32 %v1351, 7
  %v1353 = vsub.s32 0, %v1352
  %v1354 = vrot.slane %v202, %v1353
  %v1355 = vlaneseq
  %v1356 = vshrl.u32 %v1355, 7
  %v1357 = vsub.s32 0, %v1356
  %v1358 = vrot.slane %v203, %v1357
  %v1359 = vlaneseq
  %v1360 = vshrl.u32 %v1359, 7
  %v1361 = vsub.s32 0, %v1360
  %v1362 = vrot.slane %v204, %v1361
  %1380 = vrot.lane.b32.xlu0 %v1267, 112
  %v1381 = vpop.permute.xlu0 %1380
  %vm1382 = vcmask 130048
  %v1384 = vsel %vm1382, %v1267, 0
  %v1387 = vsel %vm1382, %v1381, 0
  %1389 = vmatprep.subr.bf16.mxu0 0
  %1390 = vmatpush1.bf16.xpose.msra.mxu0 %v1387
  %1391 = vmatprep.subr.bf16.mxu0 0
  %1392 = vmatpush1.bf16.xpose.msra.mxu0 0
  %1393 = vmatprep.subr.bf16.mxu0 0
  %1394 = vmatpush1.bf16.xpose.msra.mxu0 0
  %1395 = vmatprep.subr.bf16.mxu0 0
  %1396 = vmatpush1.bf16.xpose.msra.mxu0 0
  %1397 = vmatprep.subr.bf16.mxu0 0
  %1398 = vmatpush1.bf16.xpose.msra.mxu0 0
  %1399 = vmatprep.subr.bf16.mxu0 0
  %1400 = vmatpush1.bf16.xpose.msra.mxu0 0
  %1401 = vmatprep.subr.bf16.mxu0 0
  %1402 = vmatpush1.bf16.xpose.msra.mxu0 0
  %1403 = vmatprep.subr.bf16.mxu0 0
  %1404 = vmatpush1.bf16.xpose.msra.mxu0 0
  %1405 = vmatprep.subr.bf16.mxu0 0
  %1406 = vmatpush1.bf16.xpose.msra.mxu0 0
  %1407 = vmatprep.subr.bf16.mxu0 0
  %1408 = vmatpush1.bf16.xpose.msra.mxu0 0
  %1409 = vmatprep.subr.bf16.mxu0 0
  %1410 = vmatpush1.bf16.xpose.msra.mxu0 0
  %1411 = vmatprep.subr.bf16.mxu0 0
  %1412 = vmatpush1.bf16.xpose.msra.mxu0 0
  %1413 = vmatprep.subr.bf16.mxu0 0
  %1414 = vmatpush1.bf16.xpose.msra.mxu0 0
  %1415 = vmatprep.subr.bf16.mxu0 0
  %1416 = vmatpush1.bf16.xpose.msra.mxu0 0
  %1417 = vmatprep.subr.bf16.mxu0 0
  %1418 = vmatpush1.bf16.xpose.msra.mxu0 0
  %1419 = vmatprep.subr.bf16.mxu0 0
  %1420 = vmatpush1.bf16.xpose.msra.mxu0 0
  %1421 = vmatprep.mubr.bf16.mxu0 0
  %1422 = vmatmul.mubr.bf16.gmra.mrb[0].mxu0 %v1384
  %v1423 = vpop.f32.mrb[0].mxu0
  %v1424 = vadd.f32 %v1302, %v1423
  %v1425 = vpop.f32.mrb[0].mxu0
  %v1426 = vpop.f32.mrb[0].mxu0
  %v1427 = vpop.f32.mrb[0].mxu0
  %1428 = vdwg.mxu0
  %1430 = vrot.lane.b32.xlu0 %v1268, 112
  %v1431 = vpop.permute.xlu0 %1430
  %v1433 = vsel %vm1382, %v1268, 0
  %v1436 = vsel %vm1382, %v1431, 0
  %1438 = vmatprep.subr.bf16.mxu0 0
  %1439 = vmatpush1.bf16.xpose.msra.mxu0 %v1436
  %1440 = vmatprep.subr.bf16.mxu0 0
  %1441 = vmatpush1.bf16.xpose.msra.mxu0 0
  %1442 = vmatprep.subr.bf16.mxu0 0
  %1443 = vmatpush1.bf16.xpose.msra.mxu0 0
  %1444 = vmatprep.subr.bf16.mxu0 0
  %1445 = vmatpush1.bf16.xpose.msra.mxu0 0
  %1446 = vmatprep.subr.bf16.mxu0 0
  %1447 = vmatpush1.bf16.xpose.msra.mxu0 0
  %1448 = vmatprep.subr.bf16.mxu0 0
  %1449 = vmatpush1.bf16.xpose.msra.mxu0 0
  %1450 = vmatprep.subr.bf16.mxu0 0
  %1451 = vmatpush1.bf16.xpose.msra.mxu0 0
  %1452 = vmatprep.subr.bf16.mxu0 0
  %1453 = vmatpush1.bf16.xpose.msra.mxu0 0
  %1454 = vmatprep.subr.bf16.mxu0 0
  %1455 = vmatpush1.bf16.xpose.msra.mxu0 0
  %1456 = vmatprep.subr.bf16.mxu0 0
  %1457 = vmatpush1.bf16.xpose.msra.mxu0 0
  %1458 = vmatprep.subr.bf16.mxu0 0
  %1459 = vmatpush1.bf16.xpose.msra.mxu0 0
  %1460 = vmatprep.subr.bf16.mxu0 0
  %1461 = vmatpush1.bf16.xpose.msra.mxu0 0
  %1462 = vmatprep.subr.bf16.mxu0 0
  %1463 = vmatpush1.bf16.xpose.msra.mxu0 0
  %1464 = vmatprep.subr.bf16.mxu0 0
  %1465 = vmatpush1.bf16.xpose.msra.mxu0 0
  %1466 = vmatprep.subr.bf16.mxu0 0
  %1467 = vmatpush1.bf16.xpose.msra.mxu0 0
  %1468 = vmatprep.subr.bf16.mxu0 0
  %1469 = vmatpush1.bf16.xpose.msra.mxu0 0
  %1470 = vmatprep.mubr.bf16.mxu0 0
  %1471 = vmatmul.mubr.bf16.gmra.mrb[0].mxu0 %v1433
  %v1472 = vpop.f32.mrb[0].mxu0
  %v1473 = vadd.f32 %v1306, %v1472
  %v1474 = vpop.f32.mrb[0].mxu0
  %v1475 = vpop.f32.mrb[0].mxu0
  %v1476 = vpop.f32.mrb[0].mxu0
  %1477 = vdwg.mxu0
  %1479 = vrot.lane.b32.xlu0 %v1269, 112
  %v1480 = vpop.permute.xlu0 %1479
  %v1482 = vsel %vm1382, %v1269, 0
  %v1485 = vsel %vm1382, %v1480, 0
  %1487 = vmatprep.subr.bf16.mxu0 0
  %1488 = vmatpush1.bf16.xpose.msra.mxu0 %v1485
  %1489 = vmatprep.subr.bf16.mxu0 0
  %1490 = vmatpush1.bf16.xpose.msra.mxu0 0
  %1491 = vmatprep.subr.bf16.mxu0 0
  %1492 = vmatpush1.bf16.xpose.msra.mxu0 0
  %1493 = vmatprep.subr.bf16.mxu0 0
  %1494 = vmatpush1.bf16.xpose.msra.mxu0 0
  %1495 = vmatprep.subr.bf16.mxu0 0
  %1496 = vmatpush1.bf16.xpose.msra.mxu0 0
  %1497 = vmatprep.subr.bf16.mxu0 0
  %1498 = vmatpush1.bf16.xpose.msra.mxu0 0
  %1499 = vmatprep.subr.bf16.mxu0 0
  %1500 = vmatpush1.bf16.xpose.msra.mxu0 0
  %1501 = vmatprep.subr.bf16.mxu0 0
  %1502 = vmatpush1.bf16.xpose.msra.mxu0 0
  %1503 = vmatprep.subr.bf16.mxu0 0
  %1504 = vmatpush1.bf16.xpose.msra.mxu0 0
  %1505 = vmatprep.subr.bf16.mxu0 0
  %1506 = vmatpush1.bf16.xpose.msra.mxu0 0
  %1507 = vmatprep.subr.bf16.mxu0 0
  %1508 = vmatpush1.bf16.xpose.msra.mxu0 0
  %1509 = vmatprep.subr.bf16.mxu0 0
  %1510 = vmatpush1.bf16.xpose.msra.mxu0 0
  %1511 = vmatprep.subr.bf16.mxu0 0
  %1512 = vmatpush1.bf16.xpose.msra.mxu0 0
  %1513 = vmatprep.subr.bf16.mxu0 0
  %1514 = vmatpush1.bf16.xpose.msra.mxu0 0
  %1515 = vmatprep.subr.bf16.mxu0 0
  %1516 = vmatpush1.bf16.xpose.msra.mxu0 0
  %1517 = vmatprep.subr.bf16.mxu0 0
  %1518 = vmatpush1.bf16.xpose.msra.mxu0 0
  %1519 = vmatprep.mubr.bf16.mxu0 0
  %1520 = vmatmul.mubr.bf16.gmra.mrb[0].mxu0 %v1482
  %v1521 = vpop.f32.mrb[0].mxu0
  %v1522 = vadd.f32 %v1310, %v1521
  %v1523 = vpop.f32.mrb[0].mxu0
  %v1524 = vpop.f32.mrb[0].mxu0
  %v1525 = vpop.f32.mrb[0].mxu0
  %1526 = vdwg.mxu0
  %1528 = vrot.lane.b32.xlu0 %v1270, 112
  %v1529 = vpop.permute.xlu0 %1528
  %v1531 = vsel %vm1382, %v1270, 0
  %v1534 = vsel %vm1382, %v1529, 0
  %1536 = vmatprep.subr.bf16.mxu0 0
  %1537 = vmatpush1.bf16.xpose.msra.mxu0 %v1534
  %1538 = vmatprep.subr.bf16.mxu0 0
  %1539 = vmatpush1.bf16.xpose.msra.mxu0 0
  %1540 = vmatprep.subr.bf16.mxu0 0
  %1541 = vmatpush1.bf16.xpose.msra.mxu0 0
  %1542 = vmatprep.subr.bf16.mxu0 0
  %1543 = vmatpush1.bf16.xpose.msra.mxu0 0
  %1544 = vmatprep.subr.bf16.mxu0 0
  %1545 = vmatpush1.bf16.xpose.msra.mxu0 0
  %1546 = vmatprep.subr.bf16.mxu0 0
  %1547 = vmatpush1.bf16.xpose.msra.mxu0 0
  %1548 = vmatprep.subr.bf16.mxu0 0
  %1549 = vmatpush1.bf16.xpose.msra.mxu0 0
  %1550 = vmatprep.subr.bf16.mxu0 0
  %1551 = vmatpush1.bf16.xpose.msra.mxu0 0
  %1552 = vmatprep.subr.bf16.mxu0 0
  %1553 = vmatpush1.bf16.xpose.msra.mxu0 0
  %1554 = vmatprep.subr.bf16.mxu0 0
  %1555 = vmatpush1.bf16.xpose.msra.mxu0 0
  %1556 = vmatprep.subr.bf16.mxu0 0
  %1557 = vmatpush1.bf16.xpose.msra.mxu0 0
  %1558 = vmatprep.subr.bf16.mxu0 0
  %1559 = vmatpush1.bf16.xpose.msra.mxu0 0
  %1560 = vmatprep.subr.bf16.mxu0 0
  %1561 = vmatpush1.bf16.xpose.msra.mxu0 0
  %1562 = vmatprep.subr.bf16.mxu0 0
  %1563 = vmatpush1.bf16.xpose.msra.mxu0 0
  %1564 = vmatprep.subr.bf16.mxu0 0
  %1565 = vmatpush1.bf16.xpose.msra.mxu0 0
  %1566 = vmatprep.subr.bf16.mxu0 0
  %1567 = vmatpush1.bf16.xpose.msra.mxu0 0
  %1568 = vmatprep.mubr.bf16.mxu0 0
  %1569 = vmatmul.mubr.bf16.gmra.mrb[0].mxu0 %v1531
  %v1570 = vpop.f32.mrb[0].mxu0
  %v1571 = vadd.f32 %v1314, %v1570
  %v1572 = vpop.f32.mrb[0].mxu0
  %v1573 = vpop.f32.mrb[0].mxu0
  %v1574 = vpop.f32.mrb[0].mxu0
  %1575 = vdwg.mxu0
  %1577 = vrot.lane.b32.xlu0 %v1271, 112
  %v1578 = vpop.permute.xlu0 %1577
  %v1580 = vsel %vm1382, %v1271, 0
  %v1583 = vsel %vm1382, %v1578, 0
  %1585 = vmatprep.subr.bf16.mxu0 0
  %1586 = vmatpush1.bf16.xpose.msra.mxu0 %v1583
  %1587 = vmatprep.subr.bf16.mxu0 0
  %1588 = vmatpush1.bf16.xpose.msra.mxu0 0
  %1589 = vmatprep.subr.bf16.mxu0 0
  %1590 = vmatpush1.bf16.xpose.msra.mxu0 0
  %1591 = vmatprep.subr.bf16.mxu0 0
  %1592 = vmatpush1.bf16.xpose.msra.mxu0 0
  %1593 = vmatprep.subr.bf16.mxu0 0
  %1594 = vmatpush1.bf16.xpose.msra.mxu0 0
  %1595 = vmatprep.subr.bf16.mxu0 0
  %1596 = vmatpush1.bf16.xpose.msra.mxu0 0
  %1597 = vmatprep.subr.bf16.mxu0 0
  %1598 = vmatpush1.bf16.xpose.msra.mxu0 0
  %1599 = vmatprep.subr.bf16.mxu0 0
  %1600 = vmatpush1.bf16.xpose.msra.mxu0 0
  %1601 = vmatprep.subr.bf16.mxu0 0
  %1602 = vmatpush1.bf16.xpose.msra.mxu0 0
  %1603 = vmatprep.subr.bf16.mxu0 0
  %1604 = vmatpush1.bf16.xpose.msra.mxu0 0
  %1605 = vmatprep.subr.bf16.mxu0 0
  %1606 = vmatpush1.bf16.xpose.msra.mxu0 0
  %1607 = vmatprep.subr.bf16.mxu0 0
  %1608 = vmatpush1.bf16.xpose.msra.mxu0 0
  %1609 = vmatprep.subr.bf16.mxu0 0
  %1610 = vmatpush1.bf16.xpose.msra.mxu0 0
  %1611 = vmatprep.subr.bf16.mxu0 0
  %1612 = vmatpush1.bf16.xpose.msra.mxu0 0
  %1613 = vmatprep.subr.bf16.mxu0 0
  %1614 = vmatpush1.bf16.xpose.msra.mxu0 0
  %1615 = vmatprep.subr.bf16.mxu0 0
  %1616 = vmatpush1.bf16.xpose.msra.mxu0 0
  %1617 = vmatprep.mubr.bf16.mxu0 0
  %1618 = vmatmul.mubr.bf16.gmra.mrb[0].mxu0 %v1580
  %v1619 = vpop.f32.mrb[0].mxu0
  %v1620 = vadd.f32 %v1318, %v1619
  %v1621 = vpop.f32.mrb[0].mxu0
  %v1622 = vpop.f32.mrb[0].mxu0
  %v1623 = vpop.f32.mrb[0].mxu0
  %1624 = vdwg.mxu0
  %1626 = vrot.lane.b32.xlu0 %v1272, 112
  %v1627 = vpop.permute.xlu0 %1626
  %v1629 = vsel %vm1382, %v1272, 0
  %v1632 = vsel %vm1382, %v1627, 0
  %1634 = vmatprep.subr.bf16.mxu0 0
  %1635 = vmatpush1.bf16.xpose.msra.mxu0 %v1632
  %1636 = vmatprep.subr.bf16.mxu0 0
  %1637 = vmatpush1.bf16.xpose.msra.mxu0 0
  %1638 = vmatprep.subr.bf16.mxu0 0
  %1639 = vmatpush1.bf16.xpose.msra.mxu0 0
  %1640 = vmatprep.subr.bf16.mxu0 0
  %1641 = vmatpush1.bf16.xpose.msra.mxu0 0
  %1642 = vmatprep.subr.bf16.mxu0 0
  %1643 = vmatpush1.bf16.xpose.msra.mxu0 0
  %1644 = vmatprep.subr.bf16.mxu0 0
  %1645 = vmatpush1.bf16.xpose.msra.mxu0 0
  %1646 = vmatprep.subr.bf16.mxu0 0
  %1647 = vmatpush1.bf16.xpose.msra.mxu0 0
  %1648 = vmatprep.subr.bf16.mxu0 0
  %1649 = vmatpush1.bf16.xpose.msra.mxu0 0
  %1650 = vmatprep.subr.bf16.mxu0 0
  %1651 = vmatpush1.bf16.xpose.msra.mxu0 0
  %1652 = vmatprep.subr.bf16.mxu0 0
  %1653 = vmatpush1.bf16.xpose.msra.mxu0 0
  %1654 = vmatprep.subr.bf16.mxu0 0
  %1655 = vmatpush1.bf16.xpose.msra.mxu0 0
  %1656 = vmatprep.subr.bf16.mxu0 0
  %1657 = vmatpush1.bf16.xpose.msra.mxu0 0
  %1658 = vmatprep.subr.bf16.mxu0 0
  %1659 = vmatpush1.bf16.xpose.msra.mxu0 0
  %1660 = vmatprep.subr.bf16.mxu0 0
  %1661 = vmatpush1.bf16.xpose.msra.mxu0 0
  %1662 = vmatprep.subr.bf16.mxu0 0
  %1663 = vmatpush1.bf16.xpose.msra.mxu0 0
  %1664 = vmatprep.subr.bf16.mxu0 0
  %1665 = vmatpush1.bf16.xpose.msra.mxu0 0
  %1666 = vmatprep.mubr.bf16.mxu0 0
  %1667 = vmatmul.mubr.bf16.gmra.mrb[0].mxu0 %v1629
  %v1668 = vpop.f32.mrb[0].mxu0
  %v1669 = vadd.f32 %v1322, %v1668
  %v1670 = vpop.f32.mrb[0].mxu0
  %v1671 = vpop.f32.mrb[0].mxu0
  %v1672 = vpop.f32.mrb[0].mxu0
  %1673 = vdwg.mxu0
  %1675 = vrot.lane.b32.xlu0 %v1273, 112
  %v1676 = vpop.permute.xlu0 %1675
  %v1678 = vsel %vm1382, %v1273, 0
  %v1681 = vsel %vm1382, %v1676, 0
  %1683 = vmatprep.subr.bf16.mxu0 0
  %1684 = vmatpush1.bf16.xpose.msra.mxu0 %v1681
  %1685 = vmatprep.subr.bf16.mxu0 0
  %1686 = vmatpush1.bf16.xpose.msra.mxu0 0
  %1687 = vmatprep.subr.bf16.mxu0 0
  %1688 = vmatpush1.bf16.xpose.msra.mxu0 0
  %1689 = vmatprep.subr.bf16.mxu0 0
  %1690 = vmatpush1.bf16.xpose.msra.mxu0 0
  %1691 = vmatprep.subr.bf16.mxu0 0
  %1692 = vmatpush1.bf16.xpose.msra.mxu0 0
  %1693 = vmatprep.subr.bf16.mxu0 0
  %1694 = vmatpush1.bf16.xpose.msra.mxu0 0
  %1695 = vmatprep.subr.bf16.mxu0 0
  %1696 = vmatpush1.bf16.xpose.msra.mxu0 0
  %1697 = vmatprep.subr.bf16.mxu0 0
  %1698 = vmatpush1.bf16.xpose.msra.mxu0 0
  %1699 = vmatprep.subr.bf16.mxu0 0
  %1700 = vmatpush1.bf16.xpose.msra.mxu0 0
  %1701 = vmatprep.subr.bf16.mxu0 0
  %1702 = vmatpush1.bf16.xpose.msra.mxu0 0
  %1703 = vmatprep.subr.bf16.mxu0 0
  %1704 = vmatpush1.bf16.xpose.msra.mxu0 0
  %1705 = vmatprep.subr.bf16.mxu0 0
  %1706 = vmatpush1.bf16.xpose.msra.mxu0 0
  %1707 = vmatprep.subr.bf16.mxu0 0
  %1708 = vmatpush1.bf16.xpose.msra.mxu0 0
  %1709 = vmatprep.subr.bf16.mxu0 0
  %1710 = vmatpush1.bf16.xpose.msra.mxu0 0
  %1711 = vmatprep.subr.bf16.mxu0 0
  %1712 = vmatpush1.bf16.xpose.msra.mxu0 0
  %1713 = vmatprep.subr.bf16.mxu0 0
  %1714 = vmatpush1.bf16.xpose.msra.mxu0 0
  %1715 = vmatprep.mubr.bf16.mxu0 0
  %1716 = vmatmul.mubr.bf16.gmra.mrb[0].mxu0 %v1678
  %v1717 = vpop.f32.mrb[0].mxu0
  %v1718 = vadd.f32 %v1326, %v1717
  %v1719 = vpop.f32.mrb[0].mxu0
  %v1720 = vpop.f32.mrb[0].mxu0
  %v1721 = vpop.f32.mrb[0].mxu0
  %1722 = vdwg.mxu0
  %1724 = vrot.lane.b32.xlu0 %v1274, 112
  %v1725 = vpop.permute.xlu0 %1724
  %v1727 = vsel %vm1382, %v1274, 0
  %v1730 = vsel %vm1382, %v1725, 0
  %1732 = vmatprep.subr.bf16.mxu0 0
  %1733 = vmatpush1.bf16.xpose.msra.mxu0 %v1730
  %1734 = vmatprep.subr.bf16.mxu0 0
  %1735 = vmatpush1.bf16.xpose.msra.mxu0 0
  %1736 = vmatprep.subr.bf16.mxu0 0
  %1737 = vmatpush1.bf16.xpose.msra.mxu0 0
  %1738 = vmatprep.subr.bf16.mxu0 0
  %1739 = vmatpush1.bf16.xpose.msra.mxu0 0
  %1740 = vmatprep.subr.bf16.mxu0 0
  %1741 = vmatpush1.bf16.xpose.msra.mxu0 0
  %1742 = vmatprep.subr.bf16.mxu0 0
  %1743 = vmatpush1.bf16.xpose.msra.mxu0 0
  %1744 = vmatprep.subr.bf16.mxu0 0
  %1745 = vmatpush1.bf16.xpose.msra.mxu0 0
  %1746 = vmatprep.subr.bf16.mxu0 0
  %1747 = vmatpush1.bf16.xpose.msra.mxu0 0
  %1748 = vmatprep.subr.bf16.mxu0 0
  %1749 = vmatpush1.bf16.xpose.msra.mxu0 0
  %1750 = vmatprep.subr.bf16.mxu0 0
  %1751 = vmatpush1.bf16.xpose.msra.mxu0 0
  %1752 = vmatprep.subr.bf16.mxu0 0
  %1753 = vmatpush1.bf16.xpose.msra.mxu0 0
  %1754 = vmatprep.subr.bf16.mxu0 0
  %1755 = vmatpush1.bf16.xpose.msra.mxu0 0
  %1756 = vmatprep.subr.bf16.mxu0 0
  %1757 = vmatpush1.bf16.xpose.msra.mxu0 0
  %1758 = vmatprep.subr.bf16.mxu0 0
  %1759 = vmatpush1.bf16.xpose.msra.mxu0 0
  %1760 = vmatprep.subr.bf16.mxu0 0
  %1761 = vmatpush1.bf16.xpose.msra.mxu0 0
  %1762 = vmatprep.subr.bf16.mxu0 0
  %1763 = vmatpush1.bf16.xpose.msra.mxu0 0
  %1764 = vmatprep.mubr.bf16.mxu0 0
  %1765 = vmatmul.mubr.bf16.gmra.mrb[0].mxu0 %v1727
  %v1766 = vpop.f32.mrb[0].mxu0
  %v1767 = vadd.f32 %v1330, %v1766
  %v1768 = vpop.f32.mrb[0].mxu0
  %v1769 = vpop.f32.mrb[0].mxu0
  %v1770 = vpop.f32.mrb[0].mxu0
  %1771 = vdwg.mxu0
  %1773 = vrot.lane.b32.xlu0 %v1275, 112
  %v1774 = vpop.permute.xlu0 %1773
  %v1776 = vsel %vm1382, %v1275, 0
  %v1779 = vsel %vm1382, %v1774, 0
  %1781 = vmatprep.subr.bf16.mxu0 0
  %1782 = vmatpush1.bf16.xpose.msra.mxu0 %v1779
  %1783 = vmatprep.subr.bf16.mxu0 0
  %1784 = vmatpush1.bf16.xpose.msra.mxu0 0
  %1785 = vmatprep.subr.bf16.mxu0 0
  %1786 = vmatpush1.bf16.xpose.msra.mxu0 0
  %1787 = vmatprep.subr.bf16.mxu0 0
  %1788 = vmatpush1.bf16.xpose.msra.mxu0 0
  %1789 = vmatprep.subr.bf16.mxu0 0
  %1790 = vmatpush1.bf16.xpose.msra.mxu0 0
  %1791 = vmatprep.subr.bf16.mxu0 0
  %1792 = vmatpush1.bf16.xpose.msra.mxu0 0
  %1793 = vmatprep.subr.bf16.mxu0 0
  %1794 = vmatpush1.bf16.xpose.msra.mxu0 0
  %1795 = vmatprep.subr.bf16.mxu0 0
  %1796 = vmatpush1.bf16.xpose.msra.mxu0 0
  %1797 = vmatprep.subr.bf16.mxu0 0
  %1798 = vmatpush1.bf16.xpose.msra.mxu0 0
  %1799 = vmatprep.subr.bf16.mxu0 0
  %1800 = vmatpush1.bf16.xpose.msra.mxu0 0
  %1801 = vmatprep.subr.bf16.mxu0 0
  %1802 = vmatpush1.bf16.xpose.msra.mxu0 0
  %1803 = vmatprep.subr.bf16.mxu0 0
  %1804 = vmatpush1.bf16.xpose.msra.mxu0 0
  %1805 = vmatprep.subr.bf16.mxu0 0
  %1806 = vmatpush1.bf16.xpose.msra.mxu0 0
  %1807 = vmatprep.subr.bf16.mxu0 0
  %1808 = vmatpush1.bf16.xpose.msra.mxu0 0
  %1809 = vmatprep.subr.bf16.mxu0 0
  %1810 = vmatpush1.bf16.xpose.msra.mxu0 0
  %1811 = vmatprep.subr.bf16.mxu0 0
  %1812 = vmatpush1.bf16.xpose.msra.mxu0 0
  %1813 = vmatprep.mubr.bf16.mxu0 0
  %1814 = vmatmul.mubr.bf16.gmra.mrb[0].mxu0 %v1776
  %v1815 = vpop.f32.mrb[0].mxu0
  %v1816 = vadd.f32 %v1334, %v1815
  %v1817 = vpop.f32.mrb[0].mxu0
  %v1818 = vpop.f32.mrb[0].mxu0
  %v1819 = vpop.f32.mrb[0].mxu0
  %1820 = vdwg.mxu0
  %1822 = vrot.lane.b32.xlu0 %v1276, 112
  %v1823 = vpop.permute.xlu0 %1822
  %v1825 = vsel %vm1382, %v1276, 0
  %v1828 = vsel %vm1382, %v1823, 0
  %1830 = vmatprep.subr.bf16.mxu0 0
  %1831 = vmatpush1.bf16.xpose.msra.mxu0 %v1828
  %1832 = vmatprep.subr.bf16.mxu0 0
  %1833 = vmatpush1.bf16.xpose.msra.mxu0 0
  %1834 = vmatprep.subr.bf16.mxu0 0
  %1835 = vmatpush1.bf16.xpose.msra.mxu0 0
  %1836 = vmatprep.subr.bf16.mxu0 0
  %1837 = vmatpush1.bf16.xpose.msra.mxu0 0
  %1838 = vmatprep.subr.bf16.mxu0 0
  %1839 = vmatpush1.bf16.xpose.msra.mxu0 0
  %1840 = vmatprep.subr.bf16.mxu0 0
  %1841 = vmatpush1.bf16.xpose.msra.mxu0 0
  %1842 = vmatprep.subr.bf16.mxu0 0
  %1843 = vmatpush1.bf16.xpose.msra.mxu0 0
  %1844 = vmatprep.subr.bf16.mxu0 0
  %1845 = vmatpush1.bf16.xpose.msra.mxu0 0
  %1846 = vmatprep.subr.bf16.mxu0 0
  %1847 = vmatpush1.bf16.xpose.msra.mxu0 0
  %1848 = vmatprep.subr.bf16.mxu0 0
  %1849 = vmatpush1.bf16.xpose.msra.mxu0 0
  %1850 = vmatprep.subr.bf16.mxu0 0
  %1851 = vmatpush1.bf16.xpose.msra.mxu0 0
  %1852 = vmatprep.subr.bf16.mxu0 0
  %1853 = vmatpush1.bf16.xpose.msra.mxu0 0
  %1854 = vmatprep.subr.bf16.mxu0 0
  %1855 = vmatpush1.bf16.xpose.msra.mxu0 0
  %1856 = vmatprep.subr.bf16.mxu0 0
  %1857 = vmatpush1.bf16.xpose.msra.mxu0 0
  %1858 = vmatprep.subr.bf16.mxu0 0
  %1859 = vmatpush1.bf16.xpose.msra.mxu0 0
  %1860 = vmatprep.subr.bf16.mxu0 0
  %1861 = vmatpush1.bf16.xpose.msra.mxu0 0
  %1862 = vmatprep.mubr.bf16.mxu0 0
  %1863 = vmatmul.mubr.bf16.gmra.mrb[0].mxu0 %v1825
  %v1864 = vpop.f32.mrb[0].mxu0
  %v1865 = vadd.f32 %v1338, %v1864
  %v1866 = vpop.f32.mrb[0].mxu0
  %v1867 = vpop.f32.mrb[0].mxu0
  %v1868 = vpop.f32.mrb[0].mxu0
  %1869 = vdwg.mxu0
  %1871 = vrot.lane.b32.xlu0 %v1277, 112
  %v1872 = vpop.permute.xlu0 %1871
  %v1874 = vsel %vm1382, %v1277, 0
  %v1877 = vsel %vm1382, %v1872, 0
  %1879 = vmatprep.subr.bf16.mxu0 0
  %1880 = vmatpush1.bf16.xpose.msra.mxu0 %v1877
  %1881 = vmatprep.subr.bf16.mxu0 0
  %1882 = vmatpush1.bf16.xpose.msra.mxu0 0
  %1883 = vmatprep.subr.bf16.mxu0 0
  %1884 = vmatpush1.bf16.xpose.msra.mxu0 0
  %1885 = vmatprep.subr.bf16.mxu0 0
  %1886 = vmatpush1.bf16.xpose.msra.mxu0 0
  %1887 = vmatprep.subr.bf16.mxu0 0
  %1888 = vmatpush1.bf16.xpose.msra.mxu0 0
  %1889 = vmatprep.subr.bf16.mxu0 0
  %1890 = vmatpush1.bf16.xpose.msra.mxu0 0
  %1891 = vmatprep.subr.bf16.mxu0 0
  %1892 = vmatpush1.bf16.xpose.msra.mxu0 0
  %1893 = vmatprep.subr.bf16.mxu0 0
  %1894 = vmatpush1.bf16.xpose.msra.mxu0 0
  %1895 = vmatprep.subr.bf16.mxu0 0
  %1896 = vmatpush1.bf16.xpose.msra.mxu0 0
  %1897 = vmatprep.subr.bf16.mxu0 0
  %1898 = vmatpush1.bf16.xpose.msra.mxu0 0
  %1899 = vmatprep.subr.bf16.mxu0 0
  %1900 = vmatpush1.bf16.xpose.msra.mxu0 0
  %1901 = vmatprep.subr.bf16.mxu0 0
  %1902 = vmatpush1.bf16.xpose.msra.mxu0 0
  %1903 = vmatprep.subr.bf16.mxu0 0
  %1904 = vmatpush1.bf16.xpose.msra.mxu0 0
  %1905 = vmatprep.subr.bf16.mxu0 0
  %1906 = vmatpush1.bf16.xpose.msra.mxu0 0
  %1907 = vmatprep.subr.bf16.mxu0 0
  %1908 = vmatpush1.bf16.xpose.msra.mxu0 0
  %1909 = vmatprep.subr.bf16.mxu0 0
  %1910 = vmatpush1.bf16.xpose.msra.mxu0 0
  %1911 = vmatprep.mubr.bf16.mxu0 0
  %1912 = vmatmul.mubr.bf16.gmra.mrb[0].mxu0 %v1874
  %v1913 = vpop.f32.mrb[0].mxu0
  %v1914 = vadd.f32 %v1342, %v1913
  %v1915 = vpop.f32.mrb[0].mxu0
  %v1916 = vpop.f32.mrb[0].mxu0
  %v1917 = vpop.f32.mrb[0].mxu0
  %1918 = vdwg.mxu0
  %1920 = vrot.lane.b32.xlu0 %v1278, 112
  %v1921 = vpop.permute.xlu0 %1920
  %v1923 = vsel %vm1382, %v1278, 0
  %v1926 = vsel %vm1382, %v1921, 0
  %1928 = vmatprep.subr.bf16.mxu0 0
  %1929 = vmatpush1.bf16.xpose.msra.mxu0 %v1926
  %1930 = vmatprep.subr.bf16.mxu0 0
  %1931 = vmatpush1.bf16.xpose.msra.mxu0 0
  %1932 = vmatprep.subr.bf16.mxu0 0
  %1933 = vmatpush1.bf16.xpose.msra.mxu0 0
  %1934 = vmatprep.subr.bf16.mxu0 0
  %1935 = vmatpush1.bf16.xpose.msra.mxu0 0
  %1936 = vmatprep.subr.bf16.mxu0 0
  %1937 = vmatpush1.bf16.xpose.msra.mxu0 0
  %1938 = vmatprep.subr.bf16.mxu0 0
  %1939 = vmatpush1.bf16.xpose.msra.mxu0 0
  %1940 = vmatprep.subr.bf16.mxu0 0
  %1941 = vmatpush1.bf16.xpose.msra.mxu0 0
  %1942 = vmatprep.subr.bf16.mxu0 0
  %1943 = vmatpush1.bf16.xpose.msra.mxu0 0
  %1944 = vmatprep.subr.bf16.mxu0 0
  %1945 = vmatpush1.bf16.xpose.msra.mxu0 0
  %1946 = vmatprep.subr.bf16.mxu0 0
  %1947 = vmatpush1.bf16.xpose.msra.mxu0 0
  %1948 = vmatprep.subr.bf16.mxu0 0
  %1949 = vmatpush1.bf16.xpose.msra.mxu0 0
  %1950 = vmatprep.subr.bf16.mxu0 0
  %1951 = vmatpush1.bf16.xpose.msra.mxu0 0
  %1952 = vmatprep.subr.bf16.mxu0 0
  %1953 = vmatpush1.bf16.xpose.msra.mxu0 0
  %1954 = vmatprep.subr.bf16.mxu0 0
  %1955 = vmatpush1.bf16.xpose.msra.mxu0 0
  %1956 = vmatprep.subr.bf16.mxu0 0
  %1957 = vmatpush1.bf16.xpose.msra.mxu0 0
  %1958 = vmatprep.subr.bf16.mxu0 0
  %1959 = vmatpush1.bf16.xpose.msra.mxu0 0
  %1960 = vmatprep.mubr.bf16.mxu0 0
  %1961 = vmatmul.mubr.bf16.gmra.mrb[0].mxu0 %v1923
  %v1962 = vpop.f32.mrb[0].mxu0
  %v1963 = vadd.f32 %v1346, %v1962
  %v1964 = vpop.f32.mrb[0].mxu0
  %v1965 = vpop.f32.mrb[0].mxu0
  %v1966 = vpop.f32.mrb[0].mxu0
  %1967 = vdwg.mxu0
  %1969 = vrot.lane.b32.xlu0 %v1279, 112
  %v1970 = vpop.permute.xlu0 %1969
  %v1972 = vsel %vm1382, %v1279, 0
  %v1975 = vsel %vm1382, %v1970, 0
  %1977 = vmatprep.subr.bf16.mxu0 0
  %1978 = vmatpush1.bf16.xpose.msra.mxu0 %v1975
  %1979 = vmatprep.subr.bf16.mxu0 0
  %1980 = vmatpush1.bf16.xpose.msra.mxu0 0
  %1981 = vmatprep.subr.bf16.mxu0 0
  %1982 = vmatpush1.bf16.xpose.msra.mxu0 0
  %1983 = vmatprep.subr.bf16.mxu0 0
  %1984 = vmatpush1.bf16.xpose.msra.mxu0 0
  %1985 = vmatprep.subr.bf16.mxu0 0
  %1986 = vmatpush1.bf16.xpose.msra.mxu0 0
  %1987 = vmatprep.subr.bf16.mxu0 0
  %1988 = vmatpush1.bf16.xpose.msra.mxu0 0
  %1989 = vmatprep.subr.bf16.mxu0 0
  %1990 = vmatpush1.bf16.xpose.msra.mxu0 0
  %1991 = vmatprep.subr.bf16.mxu0 0
  %1992 = vmatpush1.bf16.xpose.msra.mxu0 0
  %1993 = vmatprep.subr.bf16.mxu0 0
  %1994 = vmatpush1.bf16.xpose.msra.mxu0 0
  %1995 = vmatprep.subr.bf16.mxu0 0
  %1996 = vmatpush1.bf16.xpose.msra.mxu0 0
  %1997 = vmatprep.subr.bf16.mxu0 0
  %1998 = vmatpush1.bf16.xpose.msra.mxu0 0
  %1999 = vmatprep.subr.bf16.mxu0 0
  %2000 = vmatpush1.bf16.xpose.msra.mxu0 0
  %2001 = vmatprep.subr.bf16.mxu0 0
  %2002 = vmatpush1.bf16.xpose.msra.mxu0 0
  %2003 = vmatprep.subr.bf16.mxu0 0
  %2004 = vmatpush1.bf16.xpose.msra.mxu0 0
  %2005 = vmatprep.subr.bf16.mxu0 0
  %2006 = vmatpush1.bf16.xpose.msra.mxu0 0
  %2007 = vmatprep.subr.bf16.mxu0 0
  %2008 = vmatpush1.bf16.xpose.msra.mxu0 0
  %2009 = vmatprep.mubr.bf16.mxu0 0
  %2010 = vmatmul.mubr.bf16.gmra.mrb[0].mxu0 %v1972
  %v2011 = vpop.f32.mrb[0].mxu0
  %v2012 = vadd.f32 %v1350, %v2011
  %v2013 = vpop.f32.mrb[0].mxu0
  %v2014 = vpop.f32.mrb[0].mxu0
  %v2015 = vpop.f32.mrb[0].mxu0
  %2016 = vdwg.mxu0
  %2018 = vrot.lane.b32.xlu0 %v1280, 112
  %v2019 = vpop.permute.xlu0 %2018
  %v2021 = vsel %vm1382, %v1280, 0
  %v2024 = vsel %vm1382, %v2019, 0
  %2026 = vmatprep.subr.bf16.mxu0 0
  %2027 = vmatpush1.bf16.xpose.msra.mxu0 %v2024
  %2028 = vmatprep.subr.bf16.mxu0 0
  %2029 = vmatpush1.bf16.xpose.msra.mxu0 0
  %2030 = vmatprep.subr.bf16.mxu0 0
  %2031 = vmatpush1.bf16.xpose.msra.mxu0 0
  %2032 = vmatprep.subr.bf16.mxu0 0
  %2033 = vmatpush1.bf16.xpose.msra.mxu0 0
  %2034 = vmatprep.subr.bf16.mxu0 0
  %2035 = vmatpush1.bf16.xpose.msra.mxu0 0
  %2036 = vmatprep.subr.bf16.mxu0 0
  %2037 = vmatpush1.bf16.xpose.msra.mxu0 0
  %2038 = vmatprep.subr.bf16.mxu0 0
  %2039 = vmatpush1.bf16.xpose.msra.mxu0 0
  %2040 = vmatprep.subr.bf16.mxu0 0
  %2041 = vmatpush1.bf16.xpose.msra.mxu0 0
  %2042 = vmatprep.subr.bf16.mxu0 0
  %2043 = vmatpush1.bf16.xpose.msra.mxu0 0
  %2044 = vmatprep.subr.bf16.mxu0 0
  %2045 = vmatpush1.bf16.xpose.msra.mxu0 0
  %2046 = vmatprep.subr.bf16.mxu0 0
  %2047 = vmatpush1.bf16.xpose.msra.mxu0 0
  %2048 = vmatprep.subr.bf16.mxu0 0
  %2049 = vmatpush1.bf16.xpose.msra.mxu0 0
  %2050 = vmatprep.subr.bf16.mxu0 0
  %2051 = vmatpush1.bf16.xpose.msra.mxu0 0
  %2052 = vmatprep.subr.bf16.mxu0 0
  %2053 = vmatpush1.bf16.xpose.msra.mxu0 0
  %2054 = vmatprep.subr.bf16.mxu0 0
  %2055 = vmatpush1.bf16.xpose.msra.mxu0 0
  %2056 = vmatprep.subr.bf16.mxu0 0
  %2057 = vmatpush1.bf16.xpose.msra.mxu0 0
  %2058 = vmatprep.mubr.bf16.mxu0 0
  %2059 = vmatmul.mubr.bf16.gmra.mrb[0].mxu0 %v2021
  %v2060 = vpop.f32.mrb[0].mxu0
  %v2061 = vadd.f32 %v1354, %v2060
  %v2062 = vpop.f32.mrb[0].mxu0
  %v2063 = vpop.f32.mrb[0].mxu0
  %v2064 = vpop.f32.mrb[0].mxu0
  %2065 = vdwg.mxu0
  %2067 = vrot.lane.b32.xlu0 %v1281, 112
  %v2068 = vpop.permute.xlu0 %2067
  %v2070 = vsel %vm1382, %v1281, 0
  %v2073 = vsel %vm1382, %v2068, 0
  %2075 = vmatprep.subr.bf16.mxu0 0
  %2076 = vmatpush1.bf16.xpose.msra.mxu0 %v2073
  %2077 = vmatprep.subr.bf16.mxu0 0
  %2078 = vmatpush1.bf16.xpose.msra.mxu0 0
  %2079 = vmatprep.subr.bf16.mxu0 0
  %2080 = vmatpush1.bf16.xpose.msra.mxu0 0
  %2081 = vmatprep.subr.bf16.mxu0 0
  %2082 = vmatpush1.bf16.xpose.msra.mxu0 0
  %2083 = vmatprep.subr.bf16.mxu0 0
  %2084 = vmatpush1.bf16.xpose.msra.mxu0 0
  %2085 = vmatprep.subr.bf16.mxu0 0
  %2086 = vmatpush1.bf16.xpose.msra.mxu0 0
  %2087 = vmatprep.subr.bf16.mxu0 0
  %2088 = vmatpush1.bf16.xpose.msra.mxu0 0
  %2089 = vmatprep.subr.bf16.mxu0 0
  %2090 = vmatpush1.bf16.xpose.msra.mxu0 0
  %2091 = vmatprep.subr.bf16.mxu0 0
  %2092 = vmatpush1.bf16.xpose.msra.mxu0 0
  %2093 = vmatprep.subr.bf16.mxu0 0
  %2094 = vmatpush1.bf16.xpose.msra.mxu0 0
  %2095 = vmatprep.subr.bf16.mxu0 0
  %2096 = vmatpush1.bf16.xpose.msra.mxu0 0
  %2097 = vmatprep.subr.bf16.mxu0 0
  %2098 = vmatpush1.bf16.xpose.msra.mxu0 0
  %2099 = vmatprep.subr.bf16.mxu0 0
  %2100 = vmatpush1.bf16.xpose.msra.mxu0 0
  %2101 = vmatprep.subr.bf16.mxu0 0
  %2102 = vmatpush1.bf16.xpose.msra.mxu0 0
  %2103 = vmatprep.subr.bf16.mxu0 0
  %2104 = vmatpush1.bf16.xpose.msra.mxu0 0
  %2105 = vmatprep.subr.bf16.mxu0 0
  %2106 = vmatpush1.bf16.xpose.msra.mxu0 0
  %2107 = vmatprep.mubr.bf16.mxu0 0
  %2108 = vmatmul.mubr.bf16.gmra.mrb[0].mxu0 %v2070
  %v2109 = vpop.f32.mrb[0].mxu0
  %v2110 = vadd.f32 %v1358, %v2109
  %v2111 = vpop.f32.mrb[0].mxu0
  %v2112 = vpop.f32.mrb[0].mxu0
  %v2113 = vpop.f32.mrb[0].mxu0
  %2114 = vdwg.mxu0
  %2116 = vrot.lane.b32.xlu0 %v1282, 112
  %v2117 = vpop.permute.xlu0 %2116
  %v2119 = vsel %vm1382, %v1282, 0
  %v2122 = vsel %vm1382, %v2117, 0
  %2124 = vmatprep.subr.bf16.mxu0 0
  %2125 = vmatpush1.bf16.xpose.msra.mxu0 %v2122
  %2126 = vmatprep.subr.bf16.mxu0 0
  %2127 = vmatpush1.bf16.xpose.msra.mxu0 0
  %2128 = vmatprep.subr.bf16.mxu0 0
  %2129 = vmatpush1.bf16.xpose.msra.mxu0 0
  %2130 = vmatprep.subr.bf16.mxu0 0
  %2131 = vmatpush1.bf16.xpose.msra.mxu0 0
  %2132 = vmatprep.subr.bf16.mxu0 0
  %2133 = vmatpush1.bf16.xpose.msra.mxu0 0
  %2134 = vmatprep.subr.bf16.mxu0 0
  %2135 = vmatpush1.bf16.xpose.msra.mxu0 0
  %2136 = vmatprep.subr.bf16.mxu0 0
  %2137 = vmatpush1.bf16.xpose.msra.mxu0 0
  %2138 = vmatprep.subr.bf16.mxu0 0
  %2139 = vmatpush1.bf16.xpose.msra.mxu0 0
  %2140 = vmatprep.subr.bf16.mxu0 0
  %2141 = vmatpush1.bf16.xpose.msra.mxu0 0
  %2142 = vmatprep.subr.bf16.mxu0 0
  %2143 = vmatpush1.bf16.xpose.msra.mxu0 0
  %2144 = vmatprep.subr.bf16.mxu0 0
  %2145 = vmatpush1.bf16.xpose.msra.mxu0 0
  %2146 = vmatprep.subr.bf16.mxu0 0
  %2147 = vmatpush1.bf16.xpose.msra.mxu0 0
  %2148 = vmatprep.subr.bf16.mxu0 0
  %2149 = vmatpush1.bf16.xpose.msra.mxu0 0
  %2150 = vmatprep.subr.bf16.mxu0 0
  %2151 = vmatpush1.bf16.xpose.msra.mxu0 0
  %2152 = vmatprep.subr.bf16.mxu0 0
  %2153 = vmatpush1.bf16.xpose.msra.mxu0 0
  %2154 = vmatprep.subr.bf16.mxu0 0
  %2155 = vmatpush1.bf16.xpose.msra.mxu0 0
  %2156 = vmatprep.mubr.bf16.mxu0 0
  %2157 = vmatmul.mubr.bf16.gmra.mrb[0].mxu0 %v2119
  %v2158 = vpop.f32.mrb[0].mxu0
  %v2159 = vadd.f32 %v1362, %v2158
  %v2160 = vpop.f32.mrb[0].mxu0
  %v2161 = vpop.f32.mrb[0].mxu0
  %v2162 = vpop.f32.mrb[0].mxu0
  %2163 = vdwg.mxu0
  %vm2164 = vcmask 64512
  %v2165 = vsel %vm2164, %v1424, -inf
  %2166 = vmax.xlane.f32.xlu0 %v2165
  %v2167 = vpop.xlane.xlu0 %2166
  %v2168 = vsel %vm2164, %v1473, -inf
  %2169 = vmax.xlane.f32.xlu0 %v2168
  %v2170 = vpop.xlane.xlu0 %2169
  %v2171 = vsel %vm2164, %v1522, -inf
  %2172 = vmax.xlane.f32.xlu0 %v2171
  %v2173 = vpop.xlane.xlu0 %2172
  %v2174 = vsel %vm2164, %v1571, -inf
  %2175 = vmax.xlane.f32.xlu0 %v2174
  %v2176 = vpop.xlane.xlu0 %2175
  %v2177 = vsel %vm2164, %v1620, -inf
  %2178 = vmax.xlane.f32.xlu0 %v2177
  %v2179 = vpop.xlane.xlu0 %2178
  %v2180 = vsel %vm2164, %v1669, -inf
  %2181 = vmax.xlane.f32.xlu0 %v2180
  %v2182 = vpop.xlane.xlu0 %2181
  %v2183 = vsel %vm2164, %v1718, -inf
  %2184 = vmax.xlane.f32.xlu0 %v2183
  %v2185 = vpop.xlane.xlu0 %2184
  %v2186 = vsel %vm2164, %v1767, -inf
  %2187 = vmax.xlane.f32.xlu0 %v2186
  %v2188 = vpop.xlane.xlu0 %2187
  %v2189 = vsel %vm2164, %v1816, -inf
  %2190 = vmax.xlane.f32.xlu0 %v2189
  %v2191 = vpop.xlane.xlu0 %2190
  %v2192 = vsel %vm2164, %v1865, -inf
  %2193 = vmax.xlane.f32.xlu0 %v2192
  %v2194 = vpop.xlane.xlu0 %2193
  %v2195 = vsel %vm2164, %v1914, -inf
  %2196 = vmax.xlane.f32.xlu0 %v2195
  %v2197 = vpop.xlane.xlu0 %2196
  %v2198 = vsel %vm2164, %v1963, -inf
  %2199 = vmax.xlane.f32.xlu0 %v2198
  %v2200 = vpop.xlane.xlu0 %2199
  %v2201 = vsel %vm2164, %v2012, -inf
  %2202 = vmax.xlane.f32.xlu0 %v2201
  %v2203 = vpop.xlane.xlu0 %2202
  %v2204 = vsel %vm2164, %v2061, -inf
  %2205 = vmax.xlane.f32.xlu0 %v2204
  %v2206 = vpop.xlane.xlu0 %2205
  %v2207 = vsel %vm2164, %v2110, -inf
  %2208 = vmax.xlane.f32.xlu0 %v2207
  %v2209 = vpop.xlane.xlu0 %2208
  %v2210 = vsel %vm2164, %v2159, -inf
  %2211 = vmax.xlane.f32.xlu0 %v2210
  %v2212 = vpop.xlane.xlu0 %2211
  %v2213 = vsub.f32 %v1424, %v2167
  %v2214 = vsub.f32 %v1473, %v2170
  %v2215 = vsub.f32 %v1522, %v2173
  %v2216 = vsub.f32 %v1571, %v2176
  %v2217 = vsub.f32 %v1620, %v2179
  %v2218 = vsub.f32 %v1669, %v2182
  %v2219 = vsub.f32 %v1718, %v2185
  %v2220 = vsub.f32 %v1767, %v2188
  %v2221 = vsub.f32 %v1816, %v2191
  %v2222 = vsub.f32 %v1865, %v2194
  %v2223 = vsub.f32 %v1914, %v2197
  %v2224 = vsub.f32 %v1963, %v2200
  %v2225 = vsub.f32 %v2012, %v2203
  %v2226 = vsub.f32 %v2061, %v2206
  %v2227 = vsub.f32 %v2110, %v2209
  %v2228 = vsub.f32 %v2159, %v2212
  %v2229 = vmul.f32 %v2213, 1.442695
  %v2230 = vpow.pop %v2229
  %v2231 = vmul.f32 %v2214, 1.442695
  %v2232 = vpow.pop %v2231
  %v2233 = vmul.f32 %v2215, 1.442695
  %v2234 = vpow.pop %v2233
  %v2235 = vmul.f32 %v2216, 1.442695
  %v2236 = vpow.pop %v2235
  %v2237 = vmul.f32 %v2217, 1.442695
  %v2238 = vpow.pop %v2237
  %v2239 = vmul.f32 %v2218, 1.442695
  %v2240 = vpow.pop %v2239
  %v2241 = vmul.f32 %v2219, 1.442695
  %v2242 = vpow.pop %v2241
  %v2243 = vmul.f32 %v2220, 1.442695
  %v2244 = vpow.pop %v2243
  %v2245 = vmul.f32 %v2221, 1.442695
  %v2246 = vpow.pop %v2245
  %v2247 = vmul.f32 %v2222, 1.442695
  %v2248 = vpow.pop %v2247
  %v2249 = vmul.f32 %v2223, 1.442695
  %v2250 = vpow.pop %v2249
  %v2251 = vmul.f32 %v2224, 1.442695
  %v2252 = vpow.pop %v2251
  %v2253 = vmul.f32 %v2225, 1.442695
  %v2254 = vpow.pop %v2253
  %v2255 = vmul.f32 %v2226, 1.442695
  %v2256 = vpow.pop %v2255
  %v2257 = vmul.f32 %v2227, 1.442695
  %v2258 = vpow.pop %v2257
  %v2259 = vmul.f32 %v2228, 1.442695
  %v2260 = vpow.pop %v2259
  %v2261 = vsel %vm2164, %v2230, 0.0
  %2262 = vadd.xlane.f32.xlu0 %v2261
  %v2263 = vpop.xlane.xlu0 %2262
  %v2264 = vsel %vm2164, %v2232, 0.0
  %2265 = vadd.xlane.f32.xlu0 %v2264
  %v2266 = vpop.xlane.xlu0 %2265
  %v2267 = vsel %vm2164, %v2234, 0.0
  %2268 = vadd.xlane.f32.xlu0 %v2267
  %v2269 = vpop.xlane.xlu0 %2268
  %v2270 = vsel %vm2164, %v2236, 0.0
  %2271 = vadd.xlane.f32.xlu0 %v2270
  %v2272 = vpop.xlane.xlu0 %2271
  %v2273 = vsel %vm2164, %v2238, 0.0
  %2274 = vadd.xlane.f32.xlu0 %v2273
  %v2275 = vpop.xlane.xlu0 %2274
  %v2276 = vsel %vm2164, %v2240, 0.0
  %2277 = vadd.xlane.f32.xlu0 %v2276
  %v2278 = vpop.xlane.xlu0 %2277
  %v2279 = vsel %vm2164, %v2242, 0.0
  %2280 = vadd.xlane.f32.xlu0 %v2279
  %v2281 = vpop.xlane.xlu0 %2280
  %v2282 = vsel %vm2164, %v2244, 0.0
  %2283 = vadd.xlane.f32.xlu0 %v2282
  %v2284 = vpop.xlane.xlu0 %2283
  %v2285 = vsel %vm2164, %v2246, 0.0
  %2286 = vadd.xlane.f32.xlu0 %v2285
  %v2287 = vpop.xlane.xlu0 %2286
  %v2288 = vsel %vm2164, %v2248, 0.0
  %2289 = vadd.xlane.f32.xlu0 %v2288
  %v2290 = vpop.xlane.xlu0 %2289
  %v2291 = vsel %vm2164, %v2250, 0.0
  %2292 = vadd.xlane.f32.xlu0 %v2291
  %v2293 = vpop.xlane.xlu0 %2292
  %v2294 = vsel %vm2164, %v2252, 0.0
  %2295 = vadd.xlane.f32.xlu0 %v2294
  %v2296 = vpop.xlane.xlu0 %2295
  %v2297 = vsel %vm2164, %v2254, 0.0
  %2298 = vadd.xlane.f32.xlu0 %v2297
  %v2299 = vpop.xlane.xlu0 %2298
  %v2300 = vsel %vm2164, %v2256, 0.0
  %2301 = vadd.xlane.f32.xlu0 %v2300
  %v2302 = vpop.xlane.xlu0 %2301
  %v2303 = vsel %vm2164, %v2258, 0.0
  %2304 = vadd.xlane.f32.xlu0 %v2303
  %v2305 = vpop.xlane.xlu0 %2304
  %v2306 = vsel %vm2164, %v2260, 0.0
  %2307 = vadd.xlane.f32.xlu0 %v2306
  %v2308 = vpop.xlane.xlu0 %2307
  %v2309 = vrcp.pop %v2263
  %v2310 = vrcp.pop %v2266
  %v2311 = vrcp.pop %v2269
  %v2312 = vrcp.pop %v2272
  %v2313 = vrcp.pop %v2275
  %v2314 = vrcp.pop %v2278
  %v2315 = vrcp.pop %v2281
  %v2316 = vrcp.pop %v2284
  %v2317 = vrcp.pop %v2287
  %v2318 = vrcp.pop %v2290
  %v2319 = vrcp.pop %v2293
  %v2320 = vrcp.pop %v2296
  %v2321 = vrcp.pop %v2299
  %v2322 = vrcp.pop %v2302
  %v2323 = vrcp.pop %v2305
  %v2324 = vrcp.pop %v2308
  %v2325 = vmul.f32 %v2230, %v2309
  %v2326 = vmul.f32 %v2232, %v2310
  %v2327 = vmul.f32 %v2234, %v2311
  %v2328 = vmul.f32 %v2236, %v2312
  %v2329 = vmul.f32 %v2238, %v2313
  %v2330 = vmul.f32 %v2240, %v2314
  %v2331 = vmul.f32 %v2242, %v2315
  %v2332 = vmul.f32 %v2244, %v2316
  %v2333 = vmul.f32 %v2246, %v2317
  %v2334 = vmul.f32 %v2248, %v2318
  %v2335 = vmul.f32 %v2250, %v2319
  %v2336 = vmul.f32 %v2252, %v2320
  %v2337 = vmul.f32 %v2254, %v2321
  %v2338 = vmul.f32 %v2256, %v2322
  %v2339 = vmul.f32 %v2258, %v2323
  %v2340 = vmul.f32 %v2260, %v2324
  %v2341 = vpack.c.bf16 %v2325, %v2325
  %v2342 = vpack.c.bf16 %v2326, %v2326
  %v2343 = vpack.c.bf16 %v2327, %v2327
  %v2344 = vpack.c.bf16 %v2328, %v2328
  %v2345 = vpack.c.bf16 %v2329, %v2329
  %v2346 = vpack.c.bf16 %v2330, %v2330
  %v2347 = vpack.c.bf16 %v2331, %v2331
  %v2348 = vpack.c.bf16 %v2332, %v2332
  %v2349 = vpack.c.bf16 %v2333, %v2333
  %v2350 = vpack.c.bf16 %v2334, %v2334
  %v2351 = vpack.c.bf16 %v2335, %v2335
  %v2352 = vpack.c.bf16 %v2336, %v2336
  %v2353 = vpack.c.bf16 %v2337, %v2337
  %v2354 = vpack.c.bf16 %v2338, %v2338
  %v2355 = vpack.c.bf16 %v2339, %v2339
  %v2356 = vpack.c.bf16 %v2340, %v2340
  %2357 = vrot.lane.b32.xlu0 %v1267, 96
  %v2358 = vpop.permute.xlu0 %2357
  %v2360 = vsel %vm2164, %v2341, 0
  %vm2362 = vcmask 1043456
  %v2364 = vsel %vm2362, %v2358, 0
  %2366 = vmatprep.subr.bf16.mxu0 0
  %2367 = vmatpush1.bf16.msra.mxu0 %v2364
  %2368 = vmatprep.subr.bf16.mxu0 0
  %2369 = vmatpush1.bf16.msra.mxu0 0
  %2370 = vmatprep.subr.bf16.mxu0 0
  %2371 = vmatpush1.bf16.msra.mxu0 0
  %2372 = vmatprep.subr.bf16.mxu0 0
  %2373 = vmatpush1.bf16.msra.mxu0 0
  %2374 = vmatprep.subr.bf16.mxu0 0
  %2375 = vmatpush1.bf16.msra.mxu0 0
  %2376 = vmatprep.subr.bf16.mxu0 0
  %2377 = vmatpush1.bf16.msra.mxu0 0
  %2378 = vmatprep.subr.bf16.mxu0 0
  %2379 = vmatpush1.bf16.msra.mxu0 0
  %2380 = vmatprep.subr.bf16.mxu0 0
  %2381 = vmatpush1.bf16.msra.mxu0 0
  %2382 = vmatprep.subr.bf16.mxu0 0
  %2383 = vmatpush1.bf16.msra.mxu0 0
  %2384 = vmatprep.subr.bf16.mxu0 0
  %2385 = vmatpush1.bf16.msra.mxu0 0
  %2386 = vmatprep.subr.bf16.mxu0 0
  %2387 = vmatpush1.bf16.msra.mxu0 0
  %2388 = vmatprep.subr.bf16.mxu0 0
  %2389 = vmatpush1.bf16.msra.mxu0 0
  %2390 = vmatprep.subr.bf16.mxu0 0
  %2391 = vmatpush1.bf16.msra.mxu0 0
  %2392 = vmatprep.subr.bf16.mxu0 0
  %2393 = vmatpush1.bf16.msra.mxu0 0
  %2394 = vmatprep.subr.bf16.mxu0 0
  %2395 = vmatpush1.bf16.msra.mxu0 0
  %2396 = vmatprep.subr.bf16.mxu0 0
  %2397 = vmatpush1.bf16.msra.mxu0 0
  %2398 = vmatprep.mubr.bf16.mxu0 0
  %2399 = vmatmul.mubr.bf16.gmra.mrb[0].mxu0 %v2360
  %v2400 = vpop.f32.mrb[0].mxu0
  %v2401 = vadd.f32 0.0, %v2400
  %v2402 = vpop.f32.mrb[0].mxu0
  %v2403 = vpop.f32.mrb[0].mxu0
  %v2404 = vpop.f32.mrb[0].mxu0
  %2405 = vdwg.mxu0
  %2406 = vrot.lane.b32.xlu0 %v1268, 96
  %v2407 = vpop.permute.xlu0 %2406
  %v2409 = vsel %vm2164, %v2342, 0
  %v2412 = vsel %vm2362, %v2407, 0
  %2414 = vmatprep.subr.bf16.mxu0 0
  %2415 = vmatpush1.bf16.msra.mxu0 %v2412
  %2416 = vmatprep.subr.bf16.mxu0 0
  %2417 = vmatpush1.bf16.msra.mxu0 0
  %2418 = vmatprep.subr.bf16.mxu0 0
  %2419 = vmatpush1.bf16.msra.mxu0 0
  %2420 = vmatprep.subr.bf16.mxu0 0
  %2421 = vmatpush1.bf16.msra.mxu0 0
  %2422 = vmatprep.subr.bf16.mxu0 0
  %2423 = vmatpush1.bf16.msra.mxu0 0
  %2424 = vmatprep.subr.bf16.mxu0 0
  %2425 = vmatpush1.bf16.msra.mxu0 0
  %2426 = vmatprep.subr.bf16.mxu0 0
  %2427 = vmatpush1.bf16.msra.mxu0 0
  %2428 = vmatprep.subr.bf16.mxu0 0
  %2429 = vmatpush1.bf16.msra.mxu0 0
  %2430 = vmatprep.subr.bf16.mxu0 0
  %2431 = vmatpush1.bf16.msra.mxu0 0
  %2432 = vmatprep.subr.bf16.mxu0 0
  %2433 = vmatpush1.bf16.msra.mxu0 0
  %2434 = vmatprep.subr.bf16.mxu0 0
  %2435 = vmatpush1.bf16.msra.mxu0 0
  %2436 = vmatprep.subr.bf16.mxu0 0
  %2437 = vmatpush1.bf16.msra.mxu0 0
  %2438 = vmatprep.subr.bf16.mxu0 0
  %2439 = vmatpush1.bf16.msra.mxu0 0
  %2440 = vmatprep.subr.bf16.mxu0 0
  %2441 = vmatpush1.bf16.msra.mxu0 0
  %2442 = vmatprep.subr.bf16.mxu0 0
  %2443 = vmatpush1.bf16.msra.mxu0 0
  %2444 = vmatprep.subr.bf16.mxu0 0
  %2445 = vmatpush1.bf16.msra.mxu0 0
  %2446 = vmatprep.mubr.bf16.mxu0 0
  %2447 = vmatmul.mubr.bf16.gmra.mrb[0].mxu0 %v2409
  %v2448 = vpop.f32.mrb[0].mxu0
  %v2449 = vadd.f32 0.0, %v2448
  %v2450 = vpop.f32.mrb[0].mxu0
  %v2451 = vpop.f32.mrb[0].mxu0
  %v2452 = vpop.f32.mrb[0].mxu0
  %2453 = vdwg.mxu0
  %2454 = vrot.lane.b32.xlu0 %v1269, 96
  %v2455 = vpop.permute.xlu0 %2454
  %v2457 = vsel %vm2164, %v2343, 0
  %v2460 = vsel %vm2362, %v2455, 0
  %2462 = vmatprep.subr.bf16.mxu0 0
  %2463 = vmatpush1.bf16.msra.mxu0 %v2460
  %2464 = vmatprep.subr.bf16.mxu0 0
  %2465 = vmatpush1.bf16.msra.mxu0 0
  %2466 = vmatprep.subr.bf16.mxu0 0
  %2467 = vmatpush1.bf16.msra.mxu0 0
  %2468 = vmatprep.subr.bf16.mxu0 0
  %2469 = vmatpush1.bf16.msra.mxu0 0
  %2470 = vmatprep.subr.bf16.mxu0 0
  %2471 = vmatpush1.bf16.msra.mxu0 0
  %2472 = vmatprep.subr.bf16.mxu0 0
  %2473 = vmatpush1.bf16.msra.mxu0 0
  %2474 = vmatprep.subr.bf16.mxu0 0
  %2475 = vmatpush1.bf16.msra.mxu0 0
  %2476 = vmatprep.subr.bf16.mxu0 0
  %2477 = vmatpush1.bf16.msra.mxu0 0
  %2478 = vmatprep.subr.bf16.mxu0 0
  %2479 = vmatpush1.bf16.msra.mxu0 0
  %2480 = vmatprep.subr.bf16.mxu0 0
  %2481 = vmatpush1.bf16.msra.mxu0 0
  %2482 = vmatprep.subr.bf16.mxu0 0
  %2483 = vmatpush1.bf16.msra.mxu0 0
  %2484 = vmatprep.subr.bf16.mxu0 0
  %2485 = vmatpush1.bf16.msra.mxu0 0
  %2486 = vmatprep.subr.bf16.mxu0 0
  %2487 = vmatpush1.bf16.msra.mxu0 0
  %2488 = vmatprep.subr.bf16.mxu0 0
  %2489 = vmatpush1.bf16.msra.mxu0 0
  %2490 = vmatprep.subr.bf16.mxu0 0
  %2491 = vmatpush1.bf16.msra.mxu0 0
  %2492 = vmatprep.subr.bf16.mxu0 0
  %2493 = vmatpush1.bf16.msra.mxu0 0
  %2494 = vmatprep.mubr.bf16.mxu0 0
  %2495 = vmatmul.mubr.bf16.gmra.mrb[0].mxu0 %v2457
  %v2496 = vpop.f32.mrb[0].mxu0
  %v2497 = vadd.f32 0.0, %v2496
  %v2498 = vpop.f32.mrb[0].mxu0
  %v2499 = vpop.f32.mrb[0].mxu0
  %v2500 = vpop.f32.mrb[0].mxu0
  %2501 = vdwg.mxu0
  %2502 = vrot.lane.b32.xlu0 %v1270, 96
  %v2503 = vpop.permute.xlu0 %2502
  %v2505 = vsel %vm2164, %v2344, 0
  %v2508 = vsel %vm2362, %v2503, 0
  %2510 = vmatprep.subr.bf16.mxu0 0
  %2511 = vmatpush1.bf16.msra.mxu0 %v2508
  %2512 = vmatprep.subr.bf16.mxu0 0
  %2513 = vmatpush1.bf16.msra.mxu0 0
  %2514 = vmatprep.subr.bf16.mxu0 0
  %2515 = vmatpush1.bf16.msra.mxu0 0
  %2516 = vmatprep.subr.bf16.mxu0 0
  %2517 = vmatpush1.bf16.msra.mxu0 0
  %2518 = vmatprep.subr.bf16.mxu0 0
  %2519 = vmatpush1.bf16.msra.mxu0 0
  %2520 = vmatprep.subr.bf16.mxu0 0
  %2521 = vmatpush1.bf16.msra.mxu0 0
  %2522 = vmatprep.subr.bf16.mxu0 0
  %2523 = vmatpush1.bf16.msra.mxu0 0
  %2524 = vmatprep.subr.bf16.mxu0 0
  %2525 = vmatpush1.bf16.msra.mxu0 0
  %2526 = vmatprep.subr.bf16.mxu0 0
  %2527 = vmatpush1.bf16.msra.mxu0 0
  %2528 = vmatprep.subr.bf16.mxu0 0
  %2529 = vmatpush1.bf16.msra.mxu0 0
  %2530 = vmatprep.subr.bf16.mxu0 0
  %2531 = vmatpush1.bf16.msra.mxu0 0
  %2532 = vmatprep.subr.bf16.mxu0 0
  %2533 = vmatpush1.bf16.msra.mxu0 0
  %2534 = vmatprep.subr.bf16.mxu0 0
  %2535 = vmatpush1.bf16.msra.mxu0 0
  %2536 = vmatprep.subr.bf16.mxu0 0
  %2537 = vmatpush1.bf16.msra.mxu0 0
  %2538 = vmatprep.subr.bf16.mxu0 0
  %2539 = vmatpush1.bf16.msra.mxu0 0
  %2540 = vmatprep.subr.bf16.mxu0 0
  %2541 = vmatpush1.bf16.msra.mxu0 0
  %2542 = vmatprep.mubr.bf16.mxu0 0
  %2543 = vmatmul.mubr.bf16.gmra.mrb[0].mxu0 %v2505
  %v2544 = vpop.f32.mrb[0].mxu0
  %v2545 = vadd.f32 0.0, %v2544
  %v2546 = vpop.f32.mrb[0].mxu0
  %v2547 = vpop.f32.mrb[0].mxu0
  %v2548 = vpop.f32.mrb[0].mxu0
  %2549 = vdwg.mxu0
  %2550 = vrot.lane.b32.xlu0 %v1271, 96
  %v2551 = vpop.permute.xlu0 %2550
  %v2553 = vsel %vm2164, %v2345, 0
  %v2556 = vsel %vm2362, %v2551, 0
  %2558 = vmatprep.subr.bf16.mxu0 0
  %2559 = vmatpush1.bf16.msra.mxu0 %v2556
  %2560 = vmatprep.subr.bf16.mxu0 0
  %2561 = vmatpush1.bf16.msra.mxu0 0
  %2562 = vmatprep.subr.bf16.mxu0 0
  %2563 = vmatpush1.bf16.msra.mxu0 0
  %2564 = vmatprep.subr.bf16.mxu0 0
  %2565 = vmatpush1.bf16.msra.mxu0 0
  %2566 = vmatprep.subr.bf16.mxu0 0
  %2567 = vmatpush1.bf16.msra.mxu0 0
  %2568 = vmatprep.subr.bf16.mxu0 0
  %2569 = vmatpush1.bf16.msra.mxu0 0
  %2570 = vmatprep.subr.bf16.mxu0 0
  %2571 = vmatpush1.bf16.msra.mxu0 0
  %2572 = vmatprep.subr.bf16.mxu0 0
  %2573 = vmatpush1.bf16.msra.mxu0 0
  %2574 = vmatprep.subr.bf16.mxu0 0
  %2575 = vmatpush1.bf16.msra.mxu0 0
  %2576 = vmatprep.subr.bf16.mxu0 0
  %2577 = vmatpush1.bf16.msra.mxu0 0
  %2578 = vmatprep.subr.bf16.mxu0 0
  %2579 = vmatpush1.bf16.msra.mxu0 0
  %2580 = vmatprep.subr.bf16.mxu0 0
  %2581 = vmatpush1.bf16.msra.mxu0 0
  %2582 = vmatprep.subr.bf16.mxu0 0
  %2583 = vmatpush1.bf16.msra.mxu0 0
  %2584 = vmatprep.subr.bf16.mxu0 0
  %2585 = vmatpush1.bf16.msra.mxu0 0
  %2586 = vmatprep.subr.bf16.mxu0 0
  %2587 = vmatpush1.bf16.msra.mxu0 0
  %2588 = vmatprep.subr.bf16.mxu0 0
  %2589 = vmatpush1.bf16.msra.mxu0 0
  %2590 = vmatprep.mubr.bf16.mxu0 0
  %2591 = vmatmul.mubr.bf16.gmra.mrb[0].mxu0 %v2553
  %v2592 = vpop.f32.mrb[0].mxu0
  %v2593 = vadd.f32 0.0, %v2592
  %v2594 = vpop.f32.mrb[0].mxu0
  %v2595 = vpop.f32.mrb[0].mxu0
  %v2596 = vpop.f32.mrb[0].mxu0
  %2597 = vdwg.mxu0
  %2598 = vrot.lane.b32.xlu0 %v1272, 96
  %v2599 = vpop.permute.xlu0 %2598
  %v2601 = vsel %vm2164, %v2346, 0
  %v2604 = vsel %vm2362, %v2599, 0
  %2606 = vmatprep.subr.bf16.mxu0 0
  %2607 = vmatpush1.bf16.msra.mxu0 %v2604
  %2608 = vmatprep.subr.bf16.mxu0 0
  %2609 = vmatpush1.bf16.msra.mxu0 0
  %2610 = vmatprep.subr.bf16.mxu0 0
  %2611 = vmatpush1.bf16.msra.mxu0 0
  %2612 = vmatprep.subr.bf16.mxu0 0
  %2613 = vmatpush1.bf16.msra.mxu0 0
  %2614 = vmatprep.subr.bf16.mxu0 0
  %2615 = vmatpush1.bf16.msra.mxu0 0
  %2616 = vmatprep.subr.bf16.mxu0 0
  %2617 = vmatpush1.bf16.msra.mxu0 0
  %2618 = vmatprep.subr.bf16.mxu0 0
  %2619 = vmatpush1.bf16.msra.mxu0 0
  %2620 = vmatprep.subr.bf16.mxu0 0
  %2621 = vmatpush1.bf16.msra.mxu0 0
  %2622 = vmatprep.subr.bf16.mxu0 0
  %2623 = vmatpush1.bf16.msra.mxu0 0
  %2624 = vmatprep.subr.bf16.mxu0 0
  %2625 = vmatpush1.bf16.msra.mxu0 0
  %2626 = vmatprep.subr.bf16.mxu0 0
  %2627 = vmatpush1.bf16.msra.mxu0 0
  %2628 = vmatprep.subr.bf16.mxu0 0
  %2629 = vmatpush1.bf16.msra.mxu0 0
  %2630 = vmatprep.subr.bf16.mxu0 0
  %2631 = vmatpush1.bf16.msra.mxu0 0
  %2632 = vmatprep.subr.bf16.mxu0 0
  %2633 = vmatpush1.bf16.msra.mxu0 0
  %2634 = vmatprep.subr.bf16.mxu0 0
  %2635 = vmatpush1.bf16.msra.mxu0 0
  %2636 = vmatprep.subr.bf16.mxu0 0
  %2637 = vmatpush1.bf16.msra.mxu0 0
  %2638 = vmatprep.mubr.bf16.mxu0 0
  %2639 = vmatmul.mubr.bf16.gmra.mrb[0].mxu0 %v2601
  %v2640 = vpop.f32.mrb[0].mxu0
  %v2641 = vadd.f32 0.0, %v2640
  %v2642 = vpop.f32.mrb[0].mxu0
  %v2643 = vpop.f32.mrb[0].mxu0
  %v2644 = vpop.f32.mrb[0].mxu0
  %2645 = vdwg.mxu0
  %2646 = vrot.lane.b32.xlu0 %v1273, 96
  %v2647 = vpop.permute.xlu0 %2646
  %v2649 = vsel %vm2164, %v2347, 0
  %v2652 = vsel %vm2362, %v2647, 0
  %2654 = vmatprep.subr.bf16.mxu0 0
  %2655 = vmatpush1.bf16.msra.mxu0 %v2652
  %2656 = vmatprep.subr.bf16.mxu0 0
  %2657 = vmatpush1.bf16.msra.mxu0 0
  %2658 = vmatprep.subr.bf16.mxu0 0
  %2659 = vmatpush1.bf16.msra.mxu0 0
  %2660 = vmatprep.subr.bf16.mxu0 0
  %2661 = vmatpush1.bf16.msra.mxu0 0
  %2662 = vmatprep.subr.bf16.mxu0 0
  %2663 = vmatpush1.bf16.msra.mxu0 0
  %2664 = vmatprep.subr.bf16.mxu0 0
  %2665 = vmatpush1.bf16.msra.mxu0 0
  %2666 = vmatprep.subr.bf16.mxu0 0
  %2667 = vmatpush1.bf16.msra.mxu0 0
  %2668 = vmatprep.subr.bf16.mxu0 0
  %2669 = vmatpush1.bf16.msra.mxu0 0
  %2670 = vmatprep.subr.bf16.mxu0 0
  %2671 = vmatpush1.bf16.msra.mxu0 0
  %2672 = vmatprep.subr.bf16.mxu0 0
  %2673 = vmatpush1.bf16.msra.mxu0 0
  %2674 = vmatprep.subr.bf16.mxu0 0
  %2675 = vmatpush1.bf16.msra.mxu0 0
  %2676 = vmatprep.subr.bf16.mxu0 0
  %2677 = vmatpush1.bf16.msra.mxu0 0
  %2678 = vmatprep.subr.bf16.mxu0 0
  %2679 = vmatpush1.bf16.msra.mxu0 0
  %2680 = vmatprep.subr.bf16.mxu0 0
  %2681 = vmatpush1.bf16.msra.mxu0 0
  %2682 = vmatprep.subr.bf16.mxu0 0
  %2683 = vmatpush1.bf16.msra.mxu0 0
  %2684 = vmatprep.subr.bf16.mxu0 0
  %2685 = vmatpush1.bf16.msra.mxu0 0
  %2686 = vmatprep.mubr.bf16.mxu0 0
  %2687 = vmatmul.mubr.bf16.gmra.mrb[0].mxu0 %v2649
  %v2688 = vpop.f32.mrb[0].mxu0
  %v2689 = vadd.f32 0.0, %v2688
  %v2690 = vpop.f32.mrb[0].mxu0
  %v2691 = vpop.f32.mrb[0].mxu0
  %v2692 = vpop.f32.mrb[0].mxu0
  %2693 = vdwg.mxu0
  %2694 = vrot.lane.b32.xlu0 %v1274, 96
  %v2695 = vpop.permute.xlu0 %2694
  %v2697 = vsel %vm2164, %v2348, 0
  %v2700 = vsel %vm2362, %v2695, 0
  %2702 = vmatprep.subr.bf16.mxu0 0
  %2703 = vmatpush1.bf16.msra.mxu0 %v2700
  %2704 = vmatprep.subr.bf16.mxu0 0
  %2705 = vmatpush1.bf16.msra.mxu0 0
  %2706 = vmatprep.subr.bf16.mxu0 0
  %2707 = vmatpush1.bf16.msra.mxu0 0
  %2708 = vmatprep.subr.bf16.mxu0 0
  %2709 = vmatpush1.bf16.msra.mxu0 0
  %2710 = vmatprep.subr.bf16.mxu0 0
  %2711 = vmatpush1.bf16.msra.mxu0 0
  %2712 = vmatprep.subr.bf16.mxu0 0
  %2713 = vmatpush1.bf16.msra.mxu0 0
  %2714 = vmatprep.subr.bf16.mxu0 0
  %2715 = vmatpush1.bf16.msra.mxu0 0
  %2716 = vmatprep.subr.bf16.mxu0 0
  %2717 = vmatpush1.bf16.msra.mxu0 0
  %2718 = vmatprep.subr.bf16.mxu0 0
  %2719 = vmatpush1.bf16.msra.mxu0 0
  %2720 = vmatprep.subr.bf16.mxu0 0
  %2721 = vmatpush1.bf16.msra.mxu0 0
  %2722 = vmatprep.subr.bf16.mxu0 0
  %2723 = vmatpush1.bf16.msra.mxu0 0
  %2724 = vmatprep.subr.bf16.mxu0 0
  %2725 = vmatpush1.bf16.msra.mxu0 0
  %2726 = vmatprep.subr.bf16.mxu0 0
  %2727 = vmatpush1.bf16.msra.mxu0 0
  %2728 = vmatprep.subr.bf16.mxu0 0
  %2729 = vmatpush1.bf16.msra.mxu0 0
  %2730 = vmatprep.subr.bf16.mxu0 0
  %2731 = vmatpush1.bf16.msra.mxu0 0
  %2732 = vmatprep.subr.bf16.mxu0 0
  %2733 = vmatpush1.bf16.msra.mxu0 0
  %2734 = vmatprep.mubr.bf16.mxu0 0
  %2735 = vmatmul.mubr.bf16.gmra.mrb[0].mxu0 %v2697
  %v2736 = vpop.f32.mrb[0].mxu0
  %v2737 = vadd.f32 0.0, %v2736
  %v2738 = vpop.f32.mrb[0].mxu0
  %v2739 = vpop.f32.mrb[0].mxu0
  %v2740 = vpop.f32.mrb[0].mxu0
  %2741 = vdwg.mxu0
  %2742 = vrot.lane.b32.xlu0 %v1275, 96
  %v2743 = vpop.permute.xlu0 %2742
  %v2745 = vsel %vm2164, %v2349, 0
  %v2748 = vsel %vm2362, %v2743, 0
  %2750 = vmatprep.subr.bf16.mxu0 0
  %2751 = vmatpush1.bf16.msra.mxu0 %v2748
  %2752 = vmatprep.subr.bf16.mxu0 0
  %2753 = vmatpush1.bf16.msra.mxu0 0
  %2754 = vmatprep.subr.bf16.mxu0 0
  %2755 = vmatpush1.bf16.msra.mxu0 0
  %2756 = vmatprep.subr.bf16.mxu0 0
  %2757 = vmatpush1.bf16.msra.mxu0 0
  %2758 = vmatprep.subr.bf16.mxu0 0
  %2759 = vmatpush1.bf16.msra.mxu0 0
  %2760 = vmatprep.subr.bf16.mxu0 0
  %2761 = vmatpush1.bf16.msra.mxu0 0
  %2762 = vmatprep.subr.bf16.mxu0 0
  %2763 = vmatpush1.bf16.msra.mxu0 0
  %2764 = vmatprep.subr.bf16.mxu0 0
  %2765 = vmatpush1.bf16.msra.mxu0 0
  %2766 = vmatprep.subr.bf16.mxu0 0
  %2767 = vmatpush1.bf16.msra.mxu0 0
  %2768 = vmatprep.subr.bf16.mxu0 0
  %2769 = vmatpush1.bf16.msra.mxu0 0
  %2770 = vmatprep.subr.bf16.mxu0 0
  %2771 = vmatpush1.bf16.msra.mxu0 0
  %2772 = vmatprep.subr.bf16.mxu0 0
  %2773 = vmatpush1.bf16.msra.mxu0 0
  %2774 = vmatprep.subr.bf16.mxu0 0
  %2775 = vmatpush1.bf16.msra.mxu0 0
  %2776 = vmatprep.subr.bf16.mxu0 0
  %2777 = vmatpush1.bf16.msra.mxu0 0
  %2778 = vmatprep.subr.bf16.mxu0 0
  %2779 = vmatpush1.bf16.msra.mxu0 0
  %2780 = vmatprep.subr.bf16.mxu0 0
  %2781 = vmatpush1.bf16.msra.mxu0 0
  %2782 = vmatprep.mubr.bf16.mxu0 0
  %2783 = vmatmul.mubr.bf16.gmra.mrb[0].mxu0 %v2745
  %v2784 = vpop.f32.mrb[0].mxu0
  %v2785 = vadd.f32 0.0, %v2784
  %v2786 = vpop.f32.mrb[0].mxu0
  %v2787 = vpop.f32.mrb[0].mxu0
  %v2788 = vpop.f32.mrb[0].mxu0
  %2789 = vdwg.mxu0
  %2790 = vrot.lane.b32.xlu0 %v1276, 96
  %v2791 = vpop.permute.xlu0 %2790
  %v2793 = vsel %vm2164, %v2350, 0
  %v2796 = vsel %vm2362, %v2791, 0
  %2798 = vmatprep.subr.bf16.mxu0 0
  %2799 = vmatpush1.bf16.msra.mxu0 %v2796
  %2800 = vmatprep.subr.bf16.mxu0 0
  %2801 = vmatpush1.bf16.msra.mxu0 0
  %2802 = vmatprep.subr.bf16.mxu0 0
  %2803 = vmatpush1.bf16.msra.mxu0 0
  %2804 = vmatprep.subr.bf16.mxu0 0
  %2805 = vmatpush1.bf16.msra.mxu0 0
  %2806 = vmatprep.subr.bf16.mxu0 0
  %2807 = vmatpush1.bf16.msra.mxu0 0
  %2808 = vmatprep.subr.bf16.mxu0 0
  %2809 = vmatpush1.bf16.msra.mxu0 0
  %2810 = vmatprep.subr.bf16.mxu0 0
  %2811 = vmatpush1.bf16.msra.mxu0 0
  %2812 = vmatprep.subr.bf16.mxu0 0
  %2813 = vmatpush1.bf16.msra.mxu0 0
  %2814 = vmatprep.subr.bf16.mxu0 0
  %2815 = vmatpush1.bf16.msra.mxu0 0
  %2816 = vmatprep.subr.bf16.mxu0 0
  %2817 = vmatpush1.bf16.msra.mxu0 0
  %2818 = vmatprep.subr.bf16.mxu0 0
  %2819 = vmatpush1.bf16.msra.mxu0 0
  %2820 = vmatprep.subr.bf16.mxu0 0
  %2821 = vmatpush1.bf16.msra.mxu0 0
  %2822 = vmatprep.subr.bf16.mxu0 0
  %2823 = vmatpush1.bf16.msra.mxu0 0
  %2824 = vmatprep.subr.bf16.mxu0 0
  %2825 = vmatpush1.bf16.msra.mxu0 0
  %2826 = vmatprep.subr.bf16.mxu0 0
  %2827 = vmatpush1.bf16.msra.mxu0 0
  %2828 = vmatprep.subr.bf16.mxu0 0
  %2829 = vmatpush1.bf16.msra.mxu0 0
  %2830 = vmatprep.mubr.bf16.mxu0 0
  %2831 = vmatmul.mubr.bf16.gmra.mrb[0].mxu0 %v2793
  %v2832 = vpop.f32.mrb[0].mxu0
  %v2833 = vadd.f32 0.0, %v2832
  %v2834 = vpop.f32.mrb[0].mxu0
  %v2835 = vpop.f32.mrb[0].mxu0
  %v2836 = vpop.f32.mrb[0].mxu0
  %2837 = vdwg.mxu0
  %2838 = vrot.lane.b32.xlu0 %v1277, 96
  %v2839 = vpop.permute.xlu0 %2838
  %v2841 = vsel %vm2164, %v2351, 0
  %v2844 = vsel %vm2362, %v2839, 0
  %2846 = vmatprep.subr.bf16.mxu0 0
  %2847 = vmatpush1.bf16.msra.mxu0 %v2844
  %2848 = vmatprep.subr.bf16.mxu0 0
  %2849 = vmatpush1.bf16.msra.mxu0 0
  %2850 = vmatprep.subr.bf16.mxu0 0
  %2851 = vmatpush1.bf16.msra.mxu0 0
  %2852 = vmatprep.subr.bf16.mxu0 0
  %2853 = vmatpush1.bf16.msra.mxu0 0
  %2854 = vmatprep.subr.bf16.mxu0 0
  %2855 = vmatpush1.bf16.msra.mxu0 0
  %2856 = vmatprep.subr.bf16.mxu0 0
  %2857 = vmatpush1.bf16.msra.mxu0 0
  %2858 = vmatprep.subr.bf16.mxu0 0
  %2859 = vmatpush1.bf16.msra.mxu0 0
  %2860 = vmatprep.subr.bf16.mxu0 0
  %2861 = vmatpush1.bf16.msra.mxu0 0
  %2862 = vmatprep.subr.bf16.mxu0 0
  %2863 = vmatpush1.bf16.msra.mxu0 0
  %2864 = vmatprep.subr.bf16.mxu0 0
  %2865 = vmatpush1.bf16.msra.mxu0 0
  %2866 = vmatprep.subr.bf16.mxu0 0
  %2867 = vmatpush1.bf16.msra.mxu0 0
  %2868 = vmatprep.subr.bf16.mxu0 0
  %2869 = vmatpush1.bf16.msra.mxu0 0
  %2870 = vmatprep.subr.bf16.mxu0 0
  %2871 = vmatpush1.bf16.msra.mxu0 0
  %2872 = vmatprep.subr.bf16.mxu0 0
  %2873 = vmatpush1.bf16.msra.mxu0 0
  %2874 = vmatprep.subr.bf16.mxu0 0
  %2875 = vmatpush1.bf16.msra.mxu0 0
  %2876 = vmatprep.subr.bf16.mxu0 0
  %2877 = vmatpush1.bf16.msra.mxu0 0
  %2878 = vmatprep.mubr.bf16.mxu0 0
  %2879 = vmatmul.mubr.bf16.gmra.mrb[0].mxu0 %v2841
  %v2880 = vpop.f32.mrb[0].mxu0
  %v2881 = vadd.f32 0.0, %v2880
  %v2882 = vpop.f32.mrb[0].mxu0
  %v2883 = vpop.f32.mrb[0].mxu0
  %v2884 = vpop.f32.mrb[0].mxu0
  %2885 = vdwg.mxu0
  %2886 = vrot.lane.b32.xlu0 %v1278, 96
  %v2887 = vpop.permute.xlu0 %2886
  %v2889 = vsel %vm2164, %v2352, 0
  %v2892 = vsel %vm2362, %v2887, 0
  %2894 = vmatprep.subr.bf16.mxu0 0
  %2895 = vmatpush1.bf16.msra.mxu0 %v2892
  %2896 = vmatprep.subr.bf16.mxu0 0
  %2897 = vmatpush1.bf16.msra.mxu0 0
  %2898 = vmatprep.subr.bf16.mxu0 0
  %2899 = vmatpush1.bf16.msra.mxu0 0
  %2900 = vmatprep.subr.bf16.mxu0 0
  %2901 = vmatpush1.bf16.msra.mxu0 0
  %2902 = vmatprep.subr.bf16.mxu0 0
  %2903 = vmatpush1.bf16.msra.mxu0 0
  %2904 = vmatprep.subr.bf16.mxu0 0
  %2905 = vmatpush1.bf16.msra.mxu0 0
  %2906 = vmatprep.subr.bf16.mxu0 0
  %2907 = vmatpush1.bf16.msra.mxu0 0
  %2908 = vmatprep.subr.bf16.mxu0 0
  %2909 = vmatpush1.bf16.msra.mxu0 0
  %2910 = vmatprep.subr.bf16.mxu0 0
  %2911 = vmatpush1.bf16.msra.mxu0 0
  %2912 = vmatprep.subr.bf16.mxu0 0
  %2913 = vmatpush1.bf16.msra.mxu0 0
  %2914 = vmatprep.subr.bf16.mxu0 0
  %2915 = vmatpush1.bf16.msra.mxu0 0
  %2916 = vmatprep.subr.bf16.mxu0 0
  %2917 = vmatpush1.bf16.msra.mxu0 0
  %2918 = vmatprep.subr.bf16.mxu0 0
  %2919 = vmatpush1.bf16.msra.mxu0 0
  %2920 = vmatprep.subr.bf16.mxu0 0
  %2921 = vmatpush1.bf16.msra.mxu0 0
  %2922 = vmatprep.subr.bf16.mxu0 0
  %2923 = vmatpush1.bf16.msra.mxu0 0
  %2924 = vmatprep.subr.bf16.mxu0 0
  %2925 = vmatpush1.bf16.msra.mxu0 0
  %2926 = vmatprep.mubr.bf16.mxu0 0
  %2927 = vmatmul.mubr.bf16.gmra.mrb[0].mxu0 %v2889
  %v2928 = vpop.f32.mrb[0].mxu0
  %v2929 = vadd.f32 0.0, %v2928
  %v2930 = vpop.f32.mrb[0].mxu0
  %v2931 = vpop.f32.mrb[0].mxu0
  %v2932 = vpop.f32.mrb[0].mxu0
  %2933 = vdwg.mxu0
  %2934 = vrot.lane.b32.xlu0 %v1279, 96
  %v2935 = vpop.permute.xlu0 %2934
  %v2937 = vsel %vm2164, %v2353, 0
  %v2940 = vsel %vm2362, %v2935, 0
  %2942 = vmatprep.subr.bf16.mxu0 0
  %2943 = vmatpush1.bf16.msra.mxu0 %v2940
  %2944 = vmatprep.subr.bf16.mxu0 0
  %2945 = vmatpush1.bf16.msra.mxu0 0
  %2946 = vmatprep.subr.bf16.mxu0 0
  %2947 = vmatpush1.bf16.msra.mxu0 0
  %2948 = vmatprep.subr.bf16.mxu0 0
  %2949 = vmatpush1.bf16.msra.mxu0 0
  %2950 = vmatprep.subr.bf16.mxu0 0
  %2951 = vmatpush1.bf16.msra.mxu0 0
  %2952 = vmatprep.subr.bf16.mxu0 0
  %2953 = vmatpush1.bf16.msra.mxu0 0
  %2954 = vmatprep.subr.bf16.mxu0 0
  %2955 = vmatpush1.bf16.msra.mxu0 0
  %2956 = vmatprep.subr.bf16.mxu0 0
  %2957 = vmatpush1.bf16.msra.mxu0 0
  %2958 = vmatprep.subr.bf16.mxu0 0
  %2959 = vmatpush1.bf16.msra.mxu0 0
  %2960 = vmatprep.subr.bf16.mxu0 0
  %2961 = vmatpush1.bf16.msra.mxu0 0
  %2962 = vmatprep.subr.bf16.mxu0 0
  %2963 = vmatpush1.bf16.msra.mxu0 0
  %2964 = vmatprep.subr.bf16.mxu0 0
  %2965 = vmatpush1.bf16.msra.mxu0 0
  %2966 = vmatprep.subr.bf16.mxu0 0
  %2967 = vmatpush1.bf16.msra.mxu0 0
  %2968 = vmatprep.subr.bf16.mxu0 0
  %2969 = vmatpush1.bf16.msra.mxu0 0
  %2970 = vmatprep.subr.bf16.mxu0 0
  %2971 = vmatpush1.bf16.msra.mxu0 0
  %2972 = vmatprep.subr.bf16.mxu0 0
  %2973 = vmatpush1.bf16.msra.mxu0 0
  %2974 = vmatprep.mubr.bf16.mxu0 0
  %2975 = vmatmul.mubr.bf16.gmra.mrb[0].mxu0 %v2937
  %v2976 = vpop.f32.mrb[0].mxu0
  %v2977 = vadd.f32 0.0, %v2976
  %v2978 = vpop.f32.mrb[0].mxu0
  %v2979 = vpop.f32.mrb[0].mxu0
  %v2980 = vpop.f32.mrb[0].mxu0
  %2981 = vdwg.mxu0
  %2982 = vrot.lane.b32.xlu0 %v1280, 96
  %v2983 = vpop.permute.xlu0 %2982
  %v2985 = vsel %vm2164, %v2354, 0
  %v2988 = vsel %vm2362, %v2983, 0
  %2990 = vmatprep.subr.bf16.mxu0 0
  %2991 = vmatpush1.bf16.msra.mxu0 %v2988
  %2992 = vmatprep.subr.bf16.mxu0 0
  %2993 = vmatpush1.bf16.msra.mxu0 0
  %2994 = vmatprep.subr.bf16.mxu0 0
  %2995 = vmatpush1.bf16.msra.mxu0 0
  %2996 = vmatprep.subr.bf16.mxu0 0
  %2997 = vmatpush1.bf16.msra.mxu0 0
  %2998 = vmatprep.subr.bf16.mxu0 0
  %2999 = vmatpush1.bf16.msra.mxu0 0
  %3000 = vmatprep.subr.bf16.mxu0 0
  %3001 = vmatpush1.bf16.msra.mxu0 0
  %3002 = vmatprep.subr.bf16.mxu0 0
  %3003 = vmatpush1.bf16.msra.mxu0 0
  %3004 = vmatprep.subr.bf16.mxu0 0
  %3005 = vmatpush1.bf16.msra.mxu0 0
  %3006 = vmatprep.subr.bf16.mxu0 0
  %3007 = vmatpush1.bf16.msra.mxu0 0
  %3008 = vmatprep.subr.bf16.mxu0 0
  %3009 = vmatpush1.bf16.msra.mxu0 0
  %3010 = vmatprep.subr.bf16.mxu0 0
  %3011 = vmatpush1.bf16.msra.mxu0 0
  %3012 = vmatprep.subr.bf16.mxu0 0
  %3013 = vmatpush1.bf16.msra.mxu0 0
  %3014 = vmatprep.subr.bf16.mxu0 0
  %3015 = vmatpush1.bf16.msra.mxu0 0
  %3016 = vmatprep.subr.bf16.mxu0 0
  %3017 = vmatpush1.bf16.msra.mxu0 0
  %3018 = vmatprep.subr.bf16.mxu0 0
  %3019 = vmatpush1.bf16.msra.mxu0 0
  %3020 = vmatprep.subr.bf16.mxu0 0
  %3021 = vmatpush1.bf16.msra.mxu0 0
  %3022 = vmatprep.mubr.bf16.mxu0 0
  %3023 = vmatmul.mubr.bf16.gmra.mrb[0].mxu0 %v2985
  %v3024 = vpop.f32.mrb[0].mxu0
  %v3025 = vadd.f32 0.0, %v3024
  %v3026 = vpop.f32.mrb[0].mxu0
  %v3027 = vpop.f32.mrb[0].mxu0
  %v3028 = vpop.f32.mrb[0].mxu0
  %3029 = vdwg.mxu0
  %3030 = vrot.lane.b32.xlu0 %v1281, 96
  %v3031 = vpop.permute.xlu0 %3030
  %v3033 = vsel %vm2164, %v2355, 0
  %v3036 = vsel %vm2362, %v3031, 0
  %3038 = vmatprep.subr.bf16.mxu0 0
  %3039 = vmatpush1.bf16.msra.mxu0 %v3036
  %3040 = vmatprep.subr.bf16.mxu0 0
  %3041 = vmatpush1.bf16.msra.mxu0 0
  %3042 = vmatprep.subr.bf16.mxu0 0
  %3043 = vmatpush1.bf16.msra.mxu0 0
  %3044 = vmatprep.subr.bf16.mxu0 0
  %3045 = vmatpush1.bf16.msra.mxu0 0
  %3046 = vmatprep.subr.bf16.mxu0 0
  %3047 = vmatpush1.bf16.msra.mxu0 0
  %3048 = vmatprep.subr.bf16.mxu0 0
  %3049 = vmatpush1.bf16.msra.mxu0 0
  %3050 = vmatprep.subr.bf16.mxu0 0
  %3051 = vmatpush1.bf16.msra.mxu0 0
  %3052 = vmatprep.subr.bf16.mxu0 0
  %3053 = vmatpush1.bf16.msra.mxu0 0
  %3054 = vmatprep.subr.bf16.mxu0 0
  %3055 = vmatpush1.bf16.msra.mxu0 0
  %3056 = vmatprep.subr.bf16.mxu0 0
  %3057 = vmatpush1.bf16.msra.mxu0 0
  %3058 = vmatprep.subr.bf16.mxu0 0
  %3059 = vmatpush1.bf16.msra.mxu0 0
  %3060 = vmatprep.subr.bf16.mxu0 0
  %3061 = vmatpush1.bf16.msra.mxu0 0
  %3062 = vmatprep.subr.bf16.mxu0 0
  %3063 = vmatpush1.bf16.msra.mxu0 0
  %3064 = vmatprep.subr.bf16.mxu0 0
  %3065 = vmatpush1.bf16.msra.mxu0 0
  %3066 = vmatprep.subr.bf16.mxu0 0
  %3067 = vmatpush1.bf16.msra.mxu0 0
  %3068 = vmatprep.subr.bf16.mxu0 0
  %3069 = vmatpush1.bf16.msra.mxu0 0
  %3070 = vmatprep.mubr.bf16.mxu0 0
  %3071 = vmatmul.mubr.bf16.gmra.mrb[0].mxu0 %v3033
  %v3072 = vpop.f32.mrb[0].mxu0
  %v3073 = vadd.f32 0.0, %v3072
  %v3074 = vpop.f32.mrb[0].mxu0
  %v3075 = vpop.f32.mrb[0].mxu0
  %v3076 = vpop.f32.mrb[0].mxu0
  %3077 = vdwg.mxu0
  %3078 = vrot.lane.b32.xlu0 %v1282, 96
  %v3079 = vpop.permute.xlu0 %3078
  %v3081 = vsel %vm2164, %v2356, 0
  %v3084 = vsel %vm2362, %v3079, 0
  %3086 = vmatprep.subr.bf16.mxu0 0
  %3087 = vmatpush1.bf16.msra.mxu0 %v3084
  %3088 = vmatprep.subr.bf16.mxu0 0
  %3089 = vmatpush1.bf16.msra.mxu0 0
  %3090 = vmatprep.subr.bf16.mxu0 0
  %3091 = vmatpush1.bf16.msra.mxu0 0
  %3092 = vmatprep.subr.bf16.mxu0 0
  %3093 = vmatpush1.bf16.msra.mxu0 0
  %3094 = vmatprep.subr.bf16.mxu0 0
  %3095 = vmatpush1.bf16.msra.mxu0 0
  %3096 = vmatprep.subr.bf16.mxu0 0
  %3097 = vmatpush1.bf16.msra.mxu0 0
  %3098 = vmatprep.subr.bf16.mxu0 0
  %3099 = vmatpush1.bf16.msra.mxu0 0
  %3100 = vmatprep.subr.bf16.mxu0 0
  %3101 = vmatpush1.bf16.msra.mxu0 0
  %3102 = vmatprep.subr.bf16.mxu0 0
  %3103 = vmatpush1.bf16.msra.mxu0 0
  %3104 = vmatprep.subr.bf16.mxu0 0
  %3105 = vmatpush1.bf16.msra.mxu0 0
  %3106 = vmatprep.subr.bf16.mxu0 0
  %3107 = vmatpush1.bf16.msra.mxu0 0
  %3108 = vmatprep.subr.bf16.mxu0 0
  %3109 = vmatpush1.bf16.msra.mxu0 0
  %3110 = vmatprep.subr.bf16.mxu0 0
  %3111 = vmatpush1.bf16.msra.mxu0 0
  %3112 = vmatprep.subr.bf16.mxu0 0
  %3113 = vmatpush1.bf16.msra.mxu0 0
  %3114 = vmatprep.subr.bf16.mxu0 0
  %3115 = vmatpush1.bf16.msra.mxu0 0
  %3116 = vmatprep.subr.bf16.mxu0 0
  %3117 = vmatpush1.bf16.msra.mxu0 0
  %3118 = vmatprep.mubr.bf16.mxu0 0
  %3119 = vmatmul.mubr.bf16.gmra.mrb[0].mxu0 %v3081
  %v3120 = vpop.f32.mrb[0].mxu0
  %v3121 = vadd.f32 0.0, %v3120
  %v3122 = vpop.f32.mrb[0].mxu0
  %v3123 = vpop.f32.mrb[0].mxu0
  %v3124 = vpop.f32.mrb[0].mxu0
  %3125 = vdwg.mxu0
  %v3126 = vcombine.high %v2401, 0.0
  %v3128 = vunpack.c.l.s4 1983009808
  %v3129 = vunpack.c.0.s8 %v3128
  %v3130 = vlaneseq
  %v3131 = vshrl.u32 %v3130, 7
  %v3132 = vsub.s32 %v3129, %v3131
  %v3133 = vrot.slane %v2401, %v3132
  %v3135 = vunpack.c.l.s4 1983009808
  %v3136 = vunpack.c.0.s8 %v3135
  %v3137 = vlaneseq
  %v3138 = vshrl.u32 %v3137, 7
  %v3139 = vsub.s32 %v3136, %v3138
  %v3140 = vrot.slane %v3126, %v3139
  %v3141 = vcombine.high %v2449, 0.0
  %v3143 = vunpack.c.l.s4 1983009808
  %v3144 = vunpack.c.0.s8 %v3143
  %v3145 = vlaneseq
  %v3146 = vshrl.u32 %v3145, 7
  %v3147 = vsub.s32 %v3144, %v3146
  %v3148 = vrot.slane %v2449, %v3147
  %v3150 = vunpack.c.l.s4 1983009808
  %v3151 = vunpack.c.0.s8 %v3150
  %v3152 = vlaneseq
  %v3153 = vshrl.u32 %v3152, 7
  %v3154 = vsub.s32 %v3151, %v3153
  %v3155 = vrot.slane %v3141, %v3154
  %v3156 = vcombine.low %v3133, %v3148
  %v3157 = vcombine.high %v3133, %v3148
  %v3159 = vunpack.c.l.s4 1934713408
  %v3160 = vunpack.c.0.s8 %v3159
  %v3161 = vlaneseq
  %v3162 = vshrl.u32 %v3161, 7
  %v3163 = vsub.s32 %v3160, %v3162
  %v3164 = vrot.slane %v3156, %v3163
  %v3166 = vunpack.c.l.s4 1934713408
  %v3167 = vunpack.c.0.s8 %v3166
  %v3168 = vlaneseq
  %v3169 = vshrl.u32 %v3168, 7
  %v3170 = vsub.s32 %v3167, %v3169
  %v3171 = vrot.slane %v3157, %v3170
  %v3172 = vcombine.low %v3140, %v3155
  %v3173 = vcombine.high %v3140, %v3155
  %v3175 = vunpack.c.l.s4 1934713408
  %v3176 = vunpack.c.0.s8 %v3175
  %v3177 = vlaneseq
  %v3178 = vshrl.u32 %v3177, 7
  %v3179 = vsub.s32 %v3176, %v3178
  %v3180 = vrot.slane %v3172, %v3179
  %v3182 = vunpack.c.l.s4 1934713408
  %v3183 = vunpack.c.0.s8 %v3182
  %v3184 = vlaneseq
  %v3185 = vshrl.u32 %v3184, 7
  %v3186 = vsub.s32 %v3183, %v3185
  %v3187 = vrot.slane %v3173, %v3186
  %v3188 = vcombine.high %v3164, 0.0
  %v3189 = vcombine.high %v3171, 0.0
  %v3190 = vcombine.high %v3180, 0.0
  %v3191 = vcombine.high %v3187, 0.0
  %v3192 = vcombine.high %v2497, 0.0
  %v3194 = vunpack.c.l.s4 1983009808
  %v3195 = vunpack.c.0.s8 %v3194
  %v3196 = vlaneseq
  %v3197 = vshrl.u32 %v3196, 7
  %v3198 = vsub.s32 %v3195, %v3197
  %v3199 = vrot.slane %v2497, %v3198
  %v3201 = vunpack.c.l.s4 1983009808
  %v3202 = vunpack.c.0.s8 %v3201
  %v3203 = vlaneseq
  %v3204 = vshrl.u32 %v3203, 7
  %v3205 = vsub.s32 %v3202, %v3204
  %v3206 = vrot.slane %v3192, %v3205
  %v3207 = vcombine.high %v2545, 0.0
  %v3209 = vunpack.c.l.s4 1983009808
  %v3210 = vunpack.c.0.s8 %v3209
  %v3211 = vlaneseq
  %v3212 = vshrl.u32 %v3211, 7
  %v3213 = vsub.s32 %v3210, %v3212
  %v3214 = vrot.slane %v2545, %v3213
  %v3216 = vunpack.c.l.s4 1983009808
  %v3217 = vunpack.c.0.s8 %v3216
  %v3218 = vlaneseq
  %v3219 = vshrl.u32 %v3218, 7
  %v3220 = vsub.s32 %v3217, %v3219
  %v3221 = vrot.slane %v3207, %v3220
  %v3222 = vcombine.low %v3199, %v3214
  %v3223 = vcombine.high %v3199, %v3214
  %v3225 = vunpack.c.l.s4 1934713408
  %v3226 = vunpack.c.0.s8 %v3225
  %v3227 = vlaneseq
  %v3228 = vshrl.u32 %v3227, 7
  %v3229 = vsub.s32 %v3226, %v3228
  %v3230 = vrot.slane %v3222, %v3229
  %v3232 = vunpack.c.l.s4 1934713408
  %v3233 = vunpack.c.0.s8 %v3232
  %v3234 = vlaneseq
  %v3235 = vshrl.u32 %v3234, 7
  %v3236 = vsub.s32 %v3233, %v3235
  %v3237 = vrot.slane %v3223, %v3236
  %v3238 = vcombine.low %v3206, %v3221
  %v3239 = vcombine.high %v3206, %v3221
  %v3241 = vunpack.c.l.s4 1934713408
  %v3242 = vunpack.c.0.s8 %v3241
  %v3243 = vlaneseq
  %v3244 = vshrl.u32 %v3243, 7
  %v3245 = vsub.s32 %v3242, %v3244
  %v3246 = vrot.slane %v3238, %v3245
  %v3248 = vunpack.c.l.s4 1934713408
  %v3249 = vunpack.c.0.s8 %v3248
  %v3250 = vlaneseq
  %v3251 = vshrl.u32 %v3250, 7
  %v3252 = vsub.s32 %v3249, %v3251
  %v3253 = vrot.slane %v3239, %v3252
  %v3254 = vcombine.high %v3230, 0.0
  %v3255 = vcombine.high %v3237, 0.0
  %v3256 = vcombine.high %v3246, 0.0
  %v3257 = vcombine.high %v3253, 0.0
  %v3258 = vcombine.high %v2593, 0.0
  %v3260 = vunpack.c.l.s4 1983009808
  %v3261 = vunpack.c.0.s8 %v3260
  %v3262 = vlaneseq
  %v3263 = vshrl.u32 %v3262, 7
  %v3264 = vsub.s32 %v3261, %v3263
  %v3265 = vrot.slane %v2593, %v3264
  %v3267 = vunpack.c.l.s4 1983009808
  %v3268 = vunpack.c.0.s8 %v3267
  %v3269 = vlaneseq
  %v3270 = vshrl.u32 %v3269, 7
  %v3271 = vsub.s32 %v3268, %v3270
  %v3272 = vrot.slane %v3258, %v3271
  %v3273 = vcombine.high %v2641, 0.0
  %v3275 = vunpack.c.l.s4 1983009808
  %v3276 = vunpack.c.0.s8 %v3275
  %v3277 = vlaneseq
  %v3278 = vshrl.u32 %v3277, 7
  %v3279 = vsub.s32 %v3276, %v3278
  %v3280 = vrot.slane %v2641, %v3279
  %v3282 = vunpack.c.l.s4 1983009808
  %v3283 = vunpack.c.0.s8 %v3282
  %v3284 = vlaneseq
  %v3285 = vshrl.u32 %v3284, 7
  %v3286 = vsub.s32 %v3283, %v3285
  %v3287 = vrot.slane %v3273, %v3286
  %v3288 = vcombine.low %v3265, %v3280
  %v3289 = vcombine.high %v3265, %v3280
  %v3291 = vunpack.c.l.s4 1934713408
  %v3292 = vunpack.c.0.s8 %v3291
  %v3293 = vlaneseq
  %v3294 = vshrl.u32 %v3293, 7
  %v3295 = vsub.s32 %v3292, %v3294
  %v3296 = vrot.slane %v3288, %v3295
  %v3298 = vunpack.c.l.s4 1934713408
  %v3299 = vunpack.c.0.s8 %v3298
  %v3300 = vlaneseq
  %v3301 = vshrl.u32 %v3300, 7
  %v3302 = vsub.s32 %v3299, %v3301
  %v3303 = vrot.slane %v3289, %v3302
  %v3304 = vcombine.low %v3272, %v3287
  %v3305 = vcombine.high %v3272, %v3287
  %v3307 = vunpack.c.l.s4 1934713408
  %v3308 = vunpack.c.0.s8 %v3307
  %v3309 = vlaneseq
  %v3310 = vshrl.u32 %v3309, 7
  %v3311 = vsub.s32 %v3308, %v3310
  %v3312 = vrot.slane %v3304, %v3311
  %v3314 = vunpack.c.l.s4 1934713408
  %v3315 = vunpack.c.0.s8 %v3314
  %v3316 = vlaneseq
  %v3317 = vshrl.u32 %v3316, 7
  %v3318 = vsub.s32 %v3315, %v3317
  %v3319 = vrot.slane %v3305, %v3318
  %v3320 = vcombine.high %v3296, 0.0
  %v3321 = vcombine.high %v3303, 0.0
  %v3322 = vcombine.high %v3312, 0.0
  %v3323 = vcombine.high %v3319, 0.0
  %v3324 = vcombine.high %v2689, 0.0
  %v3326 = vunpack.c.l.s4 1983009808
  %v3327 = vunpack.c.0.s8 %v3326
  %v3328 = vlaneseq
  %v3329 = vshrl.u32 %v3328, 7
  %v3330 = vsub.s32 %v3327, %v3329
  %v3331 = vrot.slane %v2689, %v3330
  %v3333 = vunpack.c.l.s4 1983009808
  %v3334 = vunpack.c.0.s8 %v3333
  %v3335 = vlaneseq
  %v3336 = vshrl.u32 %v3335, 7
  %v3337 = vsub.s32 %v3334, %v3336
  %v3338 = vrot.slane %v3324, %v3337
  %v3339 = vcombine.high %v2737, 0.0
  %v3341 = vunpack.c.l.s4 1983009808
  %v3342 = vunpack.c.0.s8 %v3341
  %v3343 = vlaneseq
  %v3344 = vshrl.u32 %v3343, 7
  %v3345 = vsub.s32 %v3342, %v3344
  %v3346 = vrot.slane %v2737, %v3345
  %v3348 = vunpack.c.l.s4 1983009808
  %v3349 = vunpack.c.0.s8 %v3348
  %v3350 = vlaneseq
  %v3351 = vshrl.u32 %v3350, 7
  %v3352 = vsub.s32 %v3349, %v3351
  %v3353 = vrot.slane %v3339, %v3352
  %v3354 = vcombine.low %v3331, %v3346
  %v3355 = vcombine.high %v3331, %v3346
  %v3357 = vunpack.c.l.s4 1934713408
  %v3358 = vunpack.c.0.s8 %v3357
  %v3359 = vlaneseq
  %v3360 = vshrl.u32 %v3359, 7
  %v3361 = vsub.s32 %v3358, %v3360
  %v3362 = vrot.slane %v3354, %v3361
  %v3364 = vunpack.c.l.s4 1934713408
  %v3365 = vunpack.c.0.s8 %v3364
  %v3366 = vlaneseq
  %v3367 = vshrl.u32 %v3366, 7
  %v3368 = vsub.s32 %v3365, %v3367
  %v3369 = vrot.slane %v3355, %v3368
  %v3370 = vcombine.low %v3338, %v3353
  %v3371 = vcombine.high %v3338, %v3353
  %v3373 = vunpack.c.l.s4 1934713408
  %v3374 = vunpack.c.0.s8 %v3373
  %v3375 = vlaneseq
  %v3376 = vshrl.u32 %v3375, 7
  %v3377 = vsub.s32 %v3374, %v3376
  %v3378 = vrot.slane %v3370, %v3377
  %v3380 = vunpack.c.l.s4 1934713408
  %v3381 = vunpack.c.0.s8 %v3380
  %v3382 = vlaneseq
  %v3383 = vshrl.u32 %v3382, 7
  %v3384 = vsub.s32 %v3381, %v3383
  %v3385 = vrot.slane %v3371, %v3384
  %v3386 = vcombine.high %v3362, 0.0
  %v3387 = vcombine.high %v3369, 0.0
  %v3388 = vcombine.high %v3378, 0.0
  %v3389 = vcombine.high %v3385, 0.0
  %v3390 = vcombine.high %v2785, 0.0
  %v3392 = vunpack.c.l.s4 1983009808
  %v3393 = vunpack.c.0.s8 %v3392
  %v3394 = vlaneseq
  %v3395 = vshrl.u32 %v3394, 7
  %v3396 = vsub.s32 %v3393, %v3395
  %v3397 = vrot.slane %v2785, %v3396
  %v3399 = vunpack.c.l.s4 1983009808
  %v3400 = vunpack.c.0.s8 %v3399
  %v3401 = vlaneseq
  %v3402 = vshrl.u32 %v3401, 7
  %v3403 = vsub.s32 %v3400, %v3402
  %v3404 = vrot.slane %v3390, %v3403
  %v3405 = vcombine.high %v2833, 0.0
  %v3407 = vunpack.c.l.s4 1983009808
  %v3408 = vunpack.c.0.s8 %v3407
  %v3409 = vlaneseq
  %v3410 = vshrl.u32 %v3409, 7
  %v3411 = vsub.s32 %v3408, %v3410
  %v3412 = vrot.slane %v2833, %v3411
  %v3414 = vunpack.c.l.s4 1983009808
  %v3415 = vunpack.c.0.s8 %v3414
  %v3416 = vlaneseq
  %v3417 = vshrl.u32 %v3416, 7
  %v3418 = vsub.s32 %v3415, %v3417
  %v3419 = vrot.slane %v3405, %v3418
  %v3420 = vcombine.low %v3397, %v3412
  %v3421 = vcombine.high %v3397, %v3412
  %v3423 = vunpack.c.l.s4 1934713408
  %v3424 = vunpack.c.0.s8 %v3423
  %v3425 = vlaneseq
  %v3426 = vshrl.u32 %v3425, 7
  %v3427 = vsub.s32 %v3424, %v3426
  %v3428 = vrot.slane %v3420, %v3427
  %v3430 = vunpack.c.l.s4 1934713408
  %v3431 = vunpack.c.0.s8 %v3430
  %v3432 = vlaneseq
  %v3433 = vshrl.u32 %v3432, 7
  %v3434 = vsub.s32 %v3431, %v3433
  %v3435 = vrot.slane %v3421, %v3434
  %v3436 = vcombine.low %v3404, %v3419
  %v3437 = vcombine.high %v3404, %v3419
  %v3439 = vunpack.c.l.s4 1934713408
  %v3440 = vunpack.c.0.s8 %v3439
  %v3441 = vlaneseq
  %v3442 = vshrl.u32 %v3441, 7
  %v3443 = vsub.s32 %v3440, %v3442
  %v3444 = vrot.slane %v3436, %v3443
  %v3446 = vunpack.c.l.s4 1934713408
  %v3447 = vunpack.c.0.s8 %v3446
  %v3448 = vlaneseq
  %v3449 = vshrl.u32 %v3448, 7
  %v3450 = vsub.s32 %v3447, %v3449
  %v3451 = vrot.slane %v3437, %v3450
  %v3452 = vcombine.high %v3428, 0.0
  %v3453 = vcombine.high %v3435, 0.0
  %v3454 = vcombine.high %v3444, 0.0
  %v3455 = vcombine.high %v3451, 0.0
  %v3456 = vcombine.high %v2881, 0.0
  %v3458 = vunpack.c.l.s4 1983009808
  %v3459 = vunpack.c.0.s8 %v3458
  %v3460 = vlaneseq
  %v3461 = vshrl.u32 %v3460, 7
  %v3462 = vsub.s32 %v3459, %v3461
  %v3463 = vrot.slane %v2881, %v3462
  %v3465 = vunpack.c.l.s4 1983009808
  %v3466 = vunpack.c.0.s8 %v3465
  %v3467 = vlaneseq
  %v3468 = vshrl.u32 %v3467, 7
  %v3469 = vsub.s32 %v3466, %v3468
  %v3470 = vrot.slane %v3456, %v3469
  %v3471 = vcombine.high %v2929, 0.0
  %v3473 = vunpack.c.l.s4 1983009808
  %v3474 = vunpack.c.0.s8 %v3473
  %v3475 = vlaneseq
  %v3476 = vshrl.u32 %v3475, 7
  %v3477 = vsub.s32 %v3474, %v3476
  %v3478 = vrot.slane %v2929, %v3477
  %v3480 = vunpack.c.l.s4 1983009808
  %v3481 = vunpack.c.0.s8 %v3480
  %v3482 = vlaneseq
  %v3483 = vshrl.u32 %v3482, 7
  %v3484 = vsub.s32 %v3481, %v3483
  %v3485 = vrot.slane %v3471, %v3484
  %v3486 = vcombine.low %v3463, %v3478
  %v3487 = vcombine.high %v3463, %v3478
  %v3489 = vunpack.c.l.s4 1934713408
  %v3490 = vunpack.c.0.s8 %v3489
  %v3491 = vlaneseq
  %v3492 = vshrl.u32 %v3491, 7
  %v3493 = vsub.s32 %v3490, %v3492
  %v3494 = vrot.slane %v3486, %v3493
  %v3496 = vunpack.c.l.s4 1934713408
  %v3497 = vunpack.c.0.s8 %v3496
  %v3498 = vlaneseq
  %v3499 = vshrl.u32 %v3498, 7
  %v3500 = vsub.s32 %v3497, %v3499
  %v3501 = vrot.slane %v3487, %v3500
  %v3502 = vcombine.low %v3470, %v3485
  %v3503 = vcombine.high %v3470, %v3485
  %v3505 = vunpack.c.l.s4 1934713408
  %v3506 = vunpack.c.0.s8 %v3505
  %v3507 = vlaneseq
  %v3508 = vshrl.u32 %v3507, 7
  %v3509 = vsub.s32 %v3506, %v3508
  %v3510 = vrot.slane %v3502, %v3509
  %v3512 = vunpack.c.l.s4 1934713408
  %v3513 = vunpack.c.0.s8 %v3512
  %v3514 = vlaneseq
  %v3515 = vshrl.u32 %v3514, 7
  %v3516 = vsub.s32 %v3513, %v3515
  %v3517 = vrot.slane %v3503, %v3516
  %v3518 = vcombine.high %v3494, 0.0
  %v3519 = vcombine.high %v3501, 0.0
  %v3520 = vcombine.high %v3510, 0.0
  %v3521 = vcombine.high %v3517, 0.0
  %v3522 = vcombine.high %v2977, 0.0
  %v3524 = vunpack.c.l.s4 1983009808
  %v3525 = vunpack.c.0.s8 %v3524
  %v3526 = vlaneseq
  %v3527 = vshrl.u32 %v3526, 7
  %v3528 = vsub.s32 %v3525, %v3527
  %v3529 = vrot.slane %v2977, %v3528
  %v3531 = vunpack.c.l.s4 1983009808
  %v3532 = vunpack.c.0.s8 %v3531
  %v3533 = vlaneseq
  %v3534 = vshrl.u32 %v3533, 7
  %v3535 = vsub.s32 %v3532, %v3534
  %v3536 = vrot.slane %v3522, %v3535
  %v3537 = vcombine.high %v3025, 0.0
  %v3539 = vunpack.c.l.s4 1983009808
  %v3540 = vunpack.c.0.s8 %v3539
  %v3541 = vlaneseq
  %v3542 = vshrl.u32 %v3541, 7
  %v3543 = vsub.s32 %v3540, %v3542
  %v3544 = vrot.slane %v3025, %v3543
  %v3546 = vunpack.c.l.s4 1983009808
  %v3547 = vunpack.c.0.s8 %v3546
  %v3548 = vlaneseq
  %v3549 = vshrl.u32 %v3548, 7
  %v3550 = vsub.s32 %v3547, %v3549
  %v3551 = vrot.slane %v3537, %v3550
  %v3552 = vcombine.low %v3529, %v3544
  %v3553 = vcombine.high %v3529, %v3544
  %v3555 = vunpack.c.l.s4 1934713408
  %v3556 = vunpack.c.0.s8 %v3555
  %v3557 = vlaneseq
  %v3558 = vshrl.u32 %v3557, 7
  %v3559 = vsub.s32 %v3556, %v3558
  %v3560 = vrot.slane %v3552, %v3559
  %v3562 = vunpack.c.l.s4 1934713408
  %v3563 = vunpack.c.0.s8 %v3562
  %v3564 = vlaneseq
  %v3565 = vshrl.u32 %v3564, 7
  %v3566 = vsub.s32 %v3563, %v3565
  %v3567 = vrot.slane %v3553, %v3566
  %v3568 = vcombine.low %v3536, %v3551
  %v3569 = vcombine.high %v3536, %v3551
  %v3571 = vunpack.c.l.s4 1934713408
  %v3572 = vunpack.c.0.s8 %v3571
  %v3573 = vlaneseq
  %v3574 = vshrl.u32 %v3573, 7
  %v3575 = vsub.s32 %v3572, %v3574
  %v3576 = vrot.slane %v3568, %v3575
  %v3578 = vunpack.c.l.s4 1934713408
  %v3579 = vunpack.c.0.s8 %v3578
  %v3580 = vlaneseq
  %v3581 = vshrl.u32 %v3580, 7
  %v3582 = vsub.s32 %v3579, %v3581
  %v3583 = vrot.slane %v3569, %v3582
  %v3584 = vcombine.high %v3560, 0.0
  %v3585 = vcombine.high %v3567, 0.0
  %v3586 = vcombine.high %v3576, 0.0
  %v3587 = vcombine.high %v3583, 0.0
  %v3588 = vcombine.high %v3073, 0.0
  %v3590 = vunpack.c.l.s4 1983009808
  %v3591 = vunpack.c.0.s8 %v3590
  %v3592 = vlaneseq
  %v3593 = vshrl.u32 %v3592, 7
  %v3594 = vsub.s32 %v3591, %v3593
  %v3595 = vrot.slane %v3073, %v3594
  %v3597 = vunpack.c.l.s4 1983009808
  %v3598 = vunpack.c.0.s8 %v3597
  %v3599 = vlaneseq
  %v3600 = vshrl.u32 %v3599, 7
  %v3601 = vsub.s32 %v3598, %v3600
  %v3602 = vrot.slane %v3588, %v3601
  %v3603 = vcombine.high %v3121, 0.0
  %v3605 = vunpack.c.l.s4 1983009808
  %v3606 = vunpack.c.0.s8 %v3605
  %v3607 = vlaneseq
  %v3608 = vshrl.u32 %v3607, 7
  %v3609 = vsub.s32 %v3606, %v3608
  %v3610 = vrot.slane %v3121, %v3609
  %v3612 = vunpack.c.l.s4 1983009808
  %v3613 = vunpack.c.0.s8 %v3612
  %v3614 = vlaneseq
  %v3615 = vshrl.u32 %v3614, 7
  %v3616 = vsub.s32 %v3613, %v3615
  %v3617 = vrot.slane %v3603, %v3616
  %v3618 = vcombine.low %v3595, %v3610
  %v3619 = vcombine.high %v3595, %v3610
  %v3621 = vunpack.c.l.s4 1934713408
  %v3622 = vunpack.c.0.s8 %v3621
  %v3623 = vlaneseq
  %v3624 = vshrl.u32 %v3623, 7
  %v3625 = vsub.s32 %v3622, %v3624
  %v3626 = vrot.slane %v3618, %v3625
  %v3628 = vunpack.c.l.s4 1934713408
  %v3629 = vunpack.c.0.s8 %v3628
  %v3630 = vlaneseq
  %v3631 = vshrl.u32 %v3630, 7
  %v3632 = vsub.s32 %v3629, %v3631
  %v3633 = vrot.slane %v3619, %v3632
  %v3634 = vcombine.low %v3602, %v3617
  %v3635 = vcombine.high %v3602, %v3617
  %v3637 = vunpack.c.l.s4 1934713408
  %v3638 = vunpack.c.0.s8 %v3637
  %v3639 = vlaneseq
  %v3640 = vshrl.u32 %v3639, 7
  %v3641 = vsub.s32 %v3638, %v3640
  %v3642 = vrot.slane %v3634, %v3641
  %v3644 = vunpack.c.l.s4 1934713408
  %v3645 = vunpack.c.0.s8 %v3644
  %v3646 = vlaneseq
  %v3647 = vshrl.u32 %v3646, 7
  %v3648 = vsub.s32 %v3645, %v3647
  %v3649 = vrot.slane %v3635, %v3648
  %v3650 = vcombine.high %v3626, 0.0
  %v3651 = vcombine.high %v3633, 0.0
  %v3652 = vcombine.high %v3642, 0.0
  %v3653 = vcombine.high %v3649, 0.0
  %v3654 = vcombine.low %v3164, %v3171
  %v3656 = vunpack.c.l.s4 1983009808
  %v3657 = vunpack.c.0.s8 %v3656
  %v3658 = vlaneseq
  %v3659 = vshrl.u32 %v3658, 7
  %v3660 = vsub.s32 %v3657, %v3659
  %v3661 = vrot.slane %v3654, %v3660
  %v3662 = vcombine.low %v3188, %v3189
  %v3664 = vunpack.c.l.s4 1983009808
  %v3665 = vunpack.c.0.s8 %v3664
  %v3666 = vlaneseq
  %v3667 = vshrl.u32 %v3666, 7
  %v3668 = vsub.s32 %v3665, %v3667
  %v3669 = vrot.slane %v3662, %v3668
  %v3670 = vcombine.low %v3180, %v3187
  %v3672 = vunpack.c.l.s4 1983009808
  %v3673 = vunpack.c.0.s8 %v3672
  %v3674 = vlaneseq
  %v3675 = vshrl.u32 %v3674, 7
  %v3676 = vsub.s32 %v3673, %v3675
  %v3677 = vrot.slane %v3670, %v3676
  %v3678 = vcombine.low %v3190, %v3191
  %v3680 = vunpack.c.l.s4 1983009808
  %v3681 = vunpack.c.0.s8 %v3680
  %v3682 = vlaneseq
  %v3683 = vshrl.u32 %v3682, 7
  %v3684 = vsub.s32 %v3681, %v3683
  %v3685 = vrot.slane %v3678, %v3684
  %v3686 = vcombine.low %v3661, %v3669
  %v3688 = vunpack.c.l.s4 1934713408
  %v3689 = vunpack.c.0.s8 %v3688
  %v3690 = vlaneseq
  %v3691 = vshrl.u32 %v3690, 7
  %v3692 = vsub.s32 %v3689, %v3691
  %v3693 = vrot.slane %v3686, %v3692
  %v3694 = vcombine.low %v3677, %v3685
  %v3696 = vunpack.c.l.s4 1934713408
  %v3697 = vunpack.c.0.s8 %v3696
  %v3698 = vlaneseq
  %v3699 = vshrl.u32 %v3698, 7
  %v3700 = vsub.s32 %v3697, %v3699
  %v3701 = vrot.slane %v3694, %v3700
  %v3702 = vcombine.low %v3693, %v3701
  %v3703 = vcombine.high %v3693, %v3701
  %v3704 = vcombine.low %v3230, %v3237
  %v3706 = vunpack.c.l.s4 1983009808
  %v3707 = vunpack.c.0.s8 %v3706
  %v3708 = vlaneseq
  %v3709 = vshrl.u32 %v3708, 7
  %v3710 = vsub.s32 %v3707, %v3709
  %v3711 = vrot.slane %v3704, %v3710
  %v3712 = vcombine.low %v3254, %v3255
  %v3714 = vunpack.c.l.s4 1983009808
  %v3715 = vunpack.c.0.s8 %v3714
  %v3716 = vlaneseq
  %v3717 = vshrl.u32 %v3716, 7
  %v3718 = vsub.s32 %v3715, %v3717
  %v3719 = vrot.slane %v3712, %v3718
  %v3720 = vcombine.low %v3246, %v3253
  %v3722 = vunpack.c.l.s4 1983009808
  %v3723 = vunpack.c.0.s8 %v3722
  %v3724 = vlaneseq
  %v3725 = vshrl.u32 %v3724, 7
  %v3726 = vsub.s32 %v3723, %v3725
  %v3727 = vrot.slane %v3720, %v3726
  %v3728 = vcombine.low %v3256, %v3257
  %v3730 = vunpack.c.l.s4 1983009808
  %v3731 = vunpack.c.0.s8 %v3730
  %v3732 = vlaneseq
  %v3733 = vshrl.u32 %v3732, 7
  %v3734 = vsub.s32 %v3731, %v3733
  %v3735 = vrot.slane %v3728, %v3734
  %v3736 = vcombine.low %v3711, %v3719
  %v3738 = vunpack.c.l.s4 1934713408
  %v3739 = vunpack.c.0.s8 %v3738
  %v3740 = vlaneseq
  %v3741 = vshrl.u32 %v3740, 7
  %v3742 = vsub.s32 %v3739, %v3741
  %v3743 = vrot.slane %v3736, %v3742
  %v3744 = vcombine.low %v3727, %v3735
  %v3746 = vunpack.c.l.s4 1934713408
  %v3747 = vunpack.c.0.s8 %v3746
  %v3748 = vlaneseq
  %v3749 = vshrl.u32 %v3748, 7
  %v3750 = vsub.s32 %v3747, %v3749
  %v3751 = vrot.slane %v3744, %v3750
  %v3752 = vcombine.low %v3743, %v3751
  %v3753 = vcombine.high %v3743, %v3751
  %v3754 = vcombine.low %v3296, %v3303
  %v3756 = vunpack.c.l.s4 1983009808
  %v3757 = vunpack.c.0.s8 %v3756
  %v3758 = vlaneseq
  %v3759 = vshrl.u32 %v3758, 7
  %v3760 = vsub.s32 %v3757, %v3759
  %v3761 = vrot.slane %v3754, %v3760
  %v3762 = vcombine.low %v3320, %v3321
  %v3764 = vunpack.c.l.s4 1983009808
  %v3765 = vunpack.c.0.s8 %v3764
  %v3766 = vlaneseq
  %v3767 = vshrl.u32 %v3766, 7
  %v3768 = vsub.s32 %v3765, %v3767
  %v3769 = vrot.slane %v3762, %v3768
  %v3770 = vcombine.low %v3312, %v3319
  %v3772 = vunpack.c.l.s4 1983009808
  %v3773 = vunpack.c.0.s8 %v3772
  %v3774 = vlaneseq
  %v3775 = vshrl.u32 %v3774, 7
  %v3776 = vsub.s32 %v3773, %v3775
  %v3777 = vrot.slane %v3770, %v3776
  %v3778 = vcombine.low %v3322, %v3323
  %v3780 = vunpack.c.l.s4 1983009808
  %v3781 = vunpack.c.0.s8 %v3780
  %v3782 = vlaneseq
  %v3783 = vshrl.u32 %v3782, 7
  %v3784 = vsub.s32 %v3781, %v3783
  %v3785 = vrot.slane %v3778, %v3784
  %v3786 = vcombine.low %v3761, %v3769
  %v3788 = vunpack.c.l.s4 1934713408
  %v3789 = vunpack.c.0.s8 %v3788
  %v3790 = vlaneseq
  %v3791 = vshrl.u32 %v3790, 7
  %v3792 = vsub.s32 %v3789, %v3791
  %v3793 = vrot.slane %v3786, %v3792
  %v3794 = vcombine.low %v3777, %v3785
  %v3796 = vunpack.c.l.s4 1934713408
  %v3797 = vunpack.c.0.s8 %v3796
  %v3798 = vlaneseq
  %v3799 = vshrl.u32 %v3798, 7
  %v3800 = vsub.s32 %v3797, %v3799
  %v3801 = vrot.slane %v3794, %v3800
  %v3802 = vcombine.low %v3793, %v3801
  %v3803 = vcombine.high %v3793, %v3801
  %v3804 = vcombine.low %v3362, %v3369
  %v3806 = vunpack.c.l.s4 1983009808
  %v3807 = vunpack.c.0.s8 %v3806
  %v3808 = vlaneseq
  %v3809 = vshrl.u32 %v3808, 7
  %v3810 = vsub.s32 %v3807, %v3809
  %v3811 = vrot.slane %v3804, %v3810
  %v3812 = vcombine.low %v3386, %v3387
  %v3814 = vunpack.c.l.s4 1983009808
  %v3815 = vunpack.c.0.s8 %v3814
  %v3816 = vlaneseq
  %v3817 = vshrl.u32 %v3816, 7
  %v3818 = vsub.s32 %v3815, %v3817
  %v3819 = vrot.slane %v3812, %v3818
  %v3820 = vcombine.low %v3378, %v3385
  %v3822 = vunpack.c.l.s4 1983009808
  %v3823 = vunpack.c.0.s8 %v3822
  %v3824 = vlaneseq
  %v3825 = vshrl.u32 %v3824, 7
  %v3826 = vsub.s32 %v3823, %v3825
  %v3827 = vrot.slane %v3820, %v3826
  %v3828 = vcombine.low %v3388, %v3389
  %v3830 = vunpack.c.l.s4 1983009808
  %v3831 = vunpack.c.0.s8 %v3830
  %v3832 = vlaneseq
  %v3833 = vshrl.u32 %v3832, 7
  %v3834 = vsub.s32 %v3831, %v3833
  %v3835 = vrot.slane %v3828, %v3834
  %v3836 = vcombine.low %v3811, %v3819
  %v3838 = vunpack.c.l.s4 1934713408
  %v3839 = vunpack.c.0.s8 %v3838
  %v3840 = vlaneseq
  %v3841 = vshrl.u32 %v3840, 7
  %v3842 = vsub.s32 %v3839, %v3841
  %v3843 = vrot.slane %v3836, %v3842
  %v3844 = vcombine.low %v3827, %v3835
  %v3846 = vunpack.c.l.s4 1934713408
  %v3847 = vunpack.c.0.s8 %v3846
  %v3848 = vlaneseq
  %v3849 = vshrl.u32 %v3848, 7
  %v3850 = vsub.s32 %v3847, %v3849
  %v3851 = vrot.slane %v3844, %v3850
  %v3852 = vcombine.low %v3843, %v3851
  %v3853 = vcombine.high %v3843, %v3851
  %v3854 = vcombine.low %v3428, %v3435
  %v3856 = vunpack.c.l.s4 1983009808
  %v3857 = vunpack.c.0.s8 %v3856
  %v3858 = vlaneseq
  %v3859 = vshrl.u32 %v3858, 7
  %v3860 = vsub.s32 %v3857, %v3859
  %v3861 = vrot.slane %v3854, %v3860
  %v3862 = vcombine.low %v3452, %v3453
  %v3864 = vunpack.c.l.s4 1983009808
  %v3865 = vunpack.c.0.s8 %v3864
  %v3866 = vlaneseq
  %v3867 = vshrl.u32 %v3866, 7
  %v3868 = vsub.s32 %v3865, %v3867
  %v3869 = vrot.slane %v3862, %v3868
  %v3870 = vcombine.low %v3444, %v3451
  %v3872 = vunpack.c.l.s4 1983009808
  %v3873 = vunpack.c.0.s8 %v3872
  %v3874 = vlaneseq
  %v3875 = vshrl.u32 %v3874, 7
  %v3876 = vsub.s32 %v3873, %v3875
  %v3877 = vrot.slane %v3870, %v3876
  %v3878 = vcombine.low %v3454, %v3455
  %v3880 = vunpack.c.l.s4 1983009808
  %v3881 = vunpack.c.0.s8 %v3880
  %v3882 = vlaneseq
  %v3883 = vshrl.u32 %v3882, 7
  %v3884 = vsub.s32 %v3881, %v3883
  %v3885 = vrot.slane %v3878, %v3884
  %v3886 = vcombine.low %v3861, %v3869
  %v3888 = vunpack.c.l.s4 1934713408
  %v3889 = vunpack.c.0.s8 %v3888
  %v3890 = vlaneseq
  %v3891 = vshrl.u32 %v3890, 7
  %v3892 = vsub.s32 %v3889, %v3891
  %v3893 = vrot.slane %v3886, %v3892
  %v3894 = vcombine.low %v3877, %v3885
  %v3896 = vunpack.c.l.s4 1934713408
  %v3897 = vunpack.c.0.s8 %v3896
  %v3898 = vlaneseq
  %v3899 = vshrl.u32 %v3898, 7
  %v3900 = vsub.s32 %v3897, %v3899
  %v3901 = vrot.slane %v3894, %v3900
  %v3902 = vcombine.low %v3893, %v3901
  %v3903 = vcombine.high %v3893, %v3901
  %v3904 = vcombine.low %v3494, %v3501
  %v3906 = vunpack.c.l.s4 1983009808
  %v3907 = vunpack.c.0.s8 %v3906
  %v3908 = vlaneseq
  %v3909 = vshrl.u32 %v3908, 7
  %v3910 = vsub.s32 %v3907, %v3909
  %v3911 = vrot.slane %v3904, %v3910
  %v3912 = vcombine.low %v3518, %v3519
  %v3914 = vunpack.c.l.s4 1983009808
  %v3915 = vunpack.c.0.s8 %v3914
  %v3916 = vlaneseq
  %v3917 = vshrl.u32 %v3916, 7
  %v3918 = vsub.s32 %v3915, %v3917
  %v3919 = vrot.slane %v3912, %v3918
  %v3920 = vcombine.low %v3510, %v3517
  %v3922 = vunpack.c.l.s4 1983009808
  %v3923 = vunpack.c.0.s8 %v3922
  %v3924 = vlaneseq
  %v3925 = vshrl.u32 %v3924, 7
  %v3926 = vsub.s32 %v3923, %v3925
  %v3927 = vrot.slane %v3920, %v3926
  %v3928 = vcombine.low %v3520, %v3521
  %v3930 = vunpack.c.l.s4 1983009808
  %v3931 = vunpack.c.0.s8 %v3930
  %v3932 = vlaneseq
  %v3933 = vshrl.u32 %v3932, 7
  %v3934 = vsub.s32 %v3931, %v3933
  %v3935 = vrot.slane %v3928, %v3934
  %v3936 = vcombine.low %v3911, %v3919
  %v3938 = vunpack.c.l.s4 1934713408
  %v3939 = vunpack.c.0.s8 %v3938
  %v3940 = vlaneseq
  %v3941 = vshrl.u32 %v3940, 7
  %v3942 = vsub.s32 %v3939, %v3941
  %v3943 = vrot.slane %v3936, %v3942
  %v3944 = vcombine.low %v3927, %v3935
  %v3946 = vunpack.c.l.s4 1934713408
  %v3947 = vunpack.c.0.s8 %v3946
  %v3948 = vlaneseq
  %v3949 = vshrl.u32 %v3948, 7
  %v3950 = vsub.s32 %v3947, %v3949
  %v3951 = vrot.slane %v3944, %v3950
  %v3952 = vcombine.low %v3943, %v3951
  %v3953 = vcombine.high %v3943, %v3951
  %v3954 = vcombine.low %v3560, %v3567
  %v3956 = vunpack.c.l.s4 1983009808
  %v3957 = vunpack.c.0.s8 %v3956
  %v3958 = vlaneseq
  %v3959 = vshrl.u32 %v3958, 7
  %v3960 = vsub.s32 %v3957, %v3959
  %v3961 = vrot.slane %v3954, %v3960
  %v3962 = vcombine.low %v3584, %v3585
  %v3964 = vunpack.c.l.s4 1983009808
  %v3965 = vunpack.c.0.s8 %v3964
  %v3966 = vlaneseq
  %v3967 = vshrl.u32 %v3966, 7
  %v3968 = vsub.s32 %v3965, %v3967
  %v3969 = vrot.slane %v3962, %v3968
  %v3970 = vcombine.low %v3576, %v3583
  %v3972 = vunpack.c.l.s4 1983009808
  %v3973 = vunpack.c.0.s8 %v3972
  %v3974 = vlaneseq
  %v3975 = vshrl.u32 %v3974, 7
  %v3976 = vsub.s32 %v3973, %v3975
  %v3977 = vrot.slane %v3970, %v3976
  %v3978 = vcombine.low %v3586, %v3587
  %v3980 = vunpack.c.l.s4 1983009808
  %v3981 = vunpack.c.0.s8 %v3980
  %v3982 = vlaneseq
  %v3983 = vshrl.u32 %v3982, 7
  %v3984 = vsub.s32 %v3981, %v3983
  %v3985 = vrot.slane %v3978, %v3984
  %v3986 = vcombine.low %v3961, %v3969
  %v3988 = vunpack.c.l.s4 1934713408
  %v3989 = vunpack.c.0.s8 %v3988
  %v3990 = vlaneseq
  %v3991 = vshrl.u32 %v3990, 7
  %v3992 = vsub.s32 %v3989, %v3991
  %v3993 = vrot.slane %v3986, %v3992
  %v3994 = vcombine.low %v3977, %v3985
  %v3996 = vunpack.c.l.s4 1934713408
  %v3997 = vunpack.c.0.s8 %v3996
  %v3998 = vlaneseq
  %v3999 = vshrl.u32 %v3998, 7
  %v4000 = vsub.s32 %v3997, %v3999
  %v4001 = vrot.slane %v3994, %v4000
  %v4002 = vcombine.low %v3993, %v4001
  %v4003 = vcombine.high %v3993, %v4001
  %v4004 = vcombine.low %v3626, %v3633
  %v4006 = vunpack.c.l.s4 1983009808
  %v4007 = vunpack.c.0.s8 %v4006
  %v4008 = vlaneseq
  %v4009 = vshrl.u32 %v4008, 7
  %v4010 = vsub.s32 %v4007, %v4009
  %v4011 = vrot.slane %v4004, %v4010
  %v4012 = vcombine.low %v3650, %v3651
  %v4014 = vunpack.c.l.s4 1983009808
  %v4015 = vunpack.c.0.s8 %v4014
  %v4016 = vlaneseq
  %v4017 = vshrl.u32 %v4016, 7
  %v4018 = vsub.s32 %v4015, %v4017
  %v4019 = vrot.slane %v4012, %v4018
  %v4020 = vcombine.low %v3642, %v3649
  %v4022 = vunpack.c.l.s4 1983009808
  %v4023 = vunpack.c.0.s8 %v4022
  %v4024 = vlaneseq
  %v4025 = vshrl.u32 %v4024, 7
  %v4026 = vsub.s32 %v4023, %v4025
  %v4027 = vrot.slane %v4020, %v4026
  %v4028 = vcombine.low %v3652, %v3653
  %v4030 = vunpack.c.l.s4 1983009808
  %v4031 = vunpack.c.0.s8 %v4030
  %v4032 = vlaneseq
  %v4033 = vshrl.u32 %v4032, 7
  %v4034 = vsub.s32 %v4031, %v4033
  %v4035 = vrot.slane %v4028, %v4034
  %v4036 = vcombine.low %v4011, %v4019
  %v4038 = vunpack.c.l.s4 1934713408
  %v4039 = vunpack.c.0.s8 %v4038
  %v4040 = vlaneseq
  %v4041 = vshrl.u32 %v4040, 7
  %v4042 = vsub.s32 %v4039, %v4041
  %v4043 = vrot.slane %v4036, %v4042
  %v4044 = vcombine.low %v4027, %v4035
  %v4046 = vunpack.c.l.s4 1934713408
  %v4047 = vunpack.c.0.s8 %v4046
  %v4048 = vlaneseq
  %v4049 = vshrl.u32 %v4048, 7
  %v4050 = vsub.s32 %v4047, %v4049
  %v4051 = vrot.slane %v4044, %v4050
  %v4052 = vcombine.low %v4043, %v4051
  %v4053 = vcombine.high %v4043, %v4051
  %4062 = vrot.lane.b32.xlu0 %v3703, 16
  %v4063 = vpop.permute.xlu0 %4062
  %4064 = vrot.lane.b32.xlu0 %v3753, 16
  %v4065 = vpop.permute.xlu0 %4064
  %4066 = vrot.lane.b32.xlu0 %v3803, 16
  %v4067 = vpop.permute.xlu0 %4066
  %4068 = vrot.lane.b32.xlu0 %v3853, 16
  %v4069 = vpop.permute.xlu0 %4068
  %4070 = vrot.lane.b32.xlu0 %v3903, 16
  %v4071 = vpop.permute.xlu0 %4070
  %4072 = vrot.lane.b32.xlu0 %v3953, 16
  %v4073 = vpop.permute.xlu0 %4072
  %4074 = vrot.lane.b32.xlu0 %v4003, 16
  %v4075 = vpop.permute.xlu0 %4074
  %4076 = vrot.lane.b32.xlu0 %v4053, 16
  %v4077 = vpop.permute.xlu0 %4076
  %v4086 = vsel %vm1382, %v3702, %v4063
  %v4087 = vsel %vm1382, %v3752, %v4065
  %v4088 = vsel %vm1382, %v3802, %v4067
  %v4089 = vsel %vm1382, %v3852, %v4069
  %v4090 = vsel %vm1382, %v3902, %v4071
  %v4091 = vsel %vm1382, %v3952, %v4073
  %v4092 = vsel %vm1382, %v4002, %v4075
  %v4093 = vsel %vm1382, %v4052, %v4077
  %v4094 = vpack.c.bf16 %v4087, %v4086
  %v4095 = vpack.c.bf16 %v4089, %v4088
  %v4096 = vpack.c.bf16 %v4091, %v4090
  %v4097 = vpack.c.bf16 %v4093, %v4092
  %v4098 = vld [vmem:[%s5] sm:$0xf]
  %v4099 = vld [vmem:[%s5 + $0x4] sm:$0xf]
  %v4100 = vld [vmem:[%s5 + $0x8] sm:$0xf]
  %v4101 = vld [vmem:[%s5 + $0xc] sm:$0xf]
  %v4102 = vlaneseq
  %v4103 = vshrl.u32 %v4102, 7
  %v4104 = vsub.s32 1, %v4103
  %v4105 = vrot.slane %v205, %v4104
  %v4110 = vunpack.c.l.b16 %v4098
  %v4111 = vunpack.c.l.b16 %v4099
  %v4112 = vunpack.c.l.b16 %v4100
  %v4113 = vunpack.c.l.b16 %v4101
  %v4114 = vpack.c.b16 %v4111, %v4110
  %v4115 = vpack.c.b16 %v4113, %v4112
  %v4119 = vsel %vm55, %v4094, 0
  %v4122 = vsel %vm55, %v4095, 0
  %v4125 = vsel %vm55, %v4096, 0
  %v4128 = vsel %vm55, %v4097, 0
  %4130 = vmatprep.subr.bf16.mxu0 0
  %4131 = vmatpush1.bf16.msra.mxu0 %v4114
  %4132 = vmatprep.subr.bf16.mxu0 0
  %4133 = vmatpush1.bf16.msra.mxu0 %v4115
  %4134 = vmatprep.subr.bf16.mxu0 0
  %4135 = vmatpush1.bf16.msra.mxu0 0
  %4136 = vmatprep.subr.bf16.mxu0 0
  %4137 = vmatpush1.bf16.msra.mxu0 0
  %4138 = vmatprep.subr.bf16.mxu0 0
  %4139 = vmatpush1.bf16.msra.mxu0 0
  %4140 = vmatprep.subr.bf16.mxu0 0
  %4141 = vmatpush1.bf16.msra.mxu0 0
  %4142 = vmatprep.subr.bf16.mxu0 0
  %4143 = vmatpush1.bf16.msra.mxu0 0
  %4144 = vmatprep.subr.bf16.mxu0 0
  %4145 = vmatpush1.bf16.msra.mxu0 0
  %4146 = vmatprep.subr.bf16.mxu0 0
  %4147 = vmatpush1.bf16.msra.mxu0 0
  %4148 = vmatprep.subr.bf16.mxu0 0
  %4149 = vmatpush1.bf16.msra.mxu0 0
  %4150 = vmatprep.subr.bf16.mxu0 0
  %4151 = vmatpush1.bf16.msra.mxu0 0
  %4152 = vmatprep.subr.bf16.mxu0 0
  %4153 = vmatpush1.bf16.msra.mxu0 0
  %4154 = vmatprep.subr.bf16.mxu0 0
  %4155 = vmatpush1.bf16.msra.mxu0 0
  %4156 = vmatprep.subr.bf16.mxu0 0
  %4157 = vmatpush1.bf16.msra.mxu0 0
  %4158 = vmatprep.subr.bf16.mxu0 0
  %4159 = vmatpush1.bf16.msra.mxu0 0
  %4160 = vmatprep.subr.bf16.mxu0 0
  %4161 = vmatpush1.bf16.msra.mxu0 0
  %4162 = vmatprep.mubr.bf16.mxu0 0
  %4163 = vmatmul.mubr.bf16.gmra.mrb[0].mxu0 %v4119
  %v4164 = vpop.f32.mrb[0].mxu0
  %v4165 = vadd.f32 %v4105, %v4164
  %v4166 = vpop.f32.mrb[0].mxu0
  %v4167 = vpop.f32.mrb[0].mxu0
  %v4168 = vadd.f32 %v4105, %v4167
  %v4169 = vpop.f32.mrb[0].mxu0
  %4170 = vmatprep.mubr.bf16.mxu0 0
  %4171 = vmatmul.mubr.bf16.gmra.mrb[0].mxu0 %v4122
  %v4172 = vpop.f32.mrb[0].mxu0
  %v4173 = vadd.f32 %v4105, %v4172
  %v4174 = vpop.f32.mrb[0].mxu0
  %v4175 = vpop.f32.mrb[0].mxu0
  %v4176 = vadd.f32 %v4105, %v4175
  %v4177 = vpop.f32.mrb[0].mxu0
  %4178 = vmatprep.mubr.bf16.mxu0 0
  %4179 = vmatmul.mubr.bf16.gmra.mrb[0].mxu0 %v4125
  %v4180 = vpop.f32.mrb[0].mxu0
  %v4181 = vadd.f32 %v4105, %v4180
  %v4182 = vpop.f32.mrb[0].mxu0
  %v4183 = vpop.f32.mrb[0].mxu0
  %v4184 = vadd.f32 %v4105, %v4183
  %v4185 = vpop.f32.mrb[0].mxu0
  %4186 = vmatprep.mubr.bf16.mxu0 0
  %4187 = vmatmul.mubr.bf16.gmra.mrb[0].mxu0 %v4128
  %v4188 = vpop.f32.mrb[0].mxu0
  %v4189 = vadd.f32 %v4105, %v4188
  %v4190 = vpop.f32.mrb[0].mxu0
  %v4191 = vpop.f32.mrb[0].mxu0
  %v4192 = vadd.f32 %v4105, %v4191
  %v4193 = vpop.f32.mrb[0].mxu0
  %4194 = vdwg.mxu0
  %v4195 = vadd.f32 %v181, %v4165
  %v4196 = vadd.f32 %v182, %v4168
  %v4197 = vadd.f32 %v183, %v4173
  %v4198 = vadd.f32 %v184, %v4176
  %v4199 = vadd.f32 %v185, %v4181
  %v4200 = vadd.f32 %v186, %v4184
  %v4201 = vadd.f32 %v187, %v4189
  %v4202 = vadd.f32 %v188, %v4192
  %v4203 = vsel %vm55, %v4195, 0.0
  %4204 = vadd.xlane.f32.xlu0 %v4203
  %v4205 = vpop.xlane.xlu0 %4204
  %v4206 = vsel %vm55, %v4196, 0.0
  %4207 = vadd.xlane.f32.xlu0 %v4206
  %v4208 = vpop.xlane.xlu0 %4207
  %v4209 = vsel %vm55, %v4197, 0.0
  %4210 = vadd.xlane.f32.xlu0 %v4209
  %v4211 = vpop.xlane.xlu0 %4210
  %v4212 = vsel %vm55, %v4198, 0.0
  %4213 = vadd.xlane.f32.xlu0 %v4212
  %v4214 = vpop.xlane.xlu0 %4213
  %v4215 = vsel %vm55, %v4199, 0.0
  %4216 = vadd.xlane.f32.xlu0 %v4215
  %v4217 = vpop.xlane.xlu0 %4216
  %v4218 = vsel %vm55, %v4200, 0.0
  %4219 = vadd.xlane.f32.xlu0 %v4218
  %v4220 = vpop.xlane.xlu0 %4219
  %v4221 = vsel %vm55, %v4201, 0.0
  %4222 = vadd.xlane.f32.xlu0 %v4221
  %v4223 = vpop.xlane.xlu0 %4222
  %v4224 = vsel %vm55, %v4202, 0.0
  %4225 = vadd.xlane.f32.xlu0 %v4224
  %v4226 = vpop.xlane.xlu0 %4225
  %v4227 = vmul.f32 %v4205, %v80
  %v4228 = vmul.f32 %v4208, %v80
  %v4229 = vmul.f32 %v4211, %v80
  %v4230 = vmul.f32 %v4214, %v80
  %v4231 = vmul.f32 %v4217, %v80
  %v4232 = vmul.f32 %v4220, %v80
  %v4233 = vmul.f32 %v4223, %v80
  %v4234 = vmul.f32 %v4226, %v80
  %v4235 = vsub.f32 %v4195, %v4227
  %v4236 = vsub.f32 %v4196, %v4228
  %v4237 = vsub.f32 %v4197, %v4229
  %v4238 = vsub.f32 %v4198, %v4230
  %v4239 = vsub.f32 %v4199, %v4231
  %v4240 = vsub.f32 %v4200, %v4232
  %v4241 = vsub.f32 %v4201, %v4233
  %v4242 = vsub.f32 %v4202, %v4234
  %v4243 = vmul.f32 %v4235, %v4235
  %v4244 = vmul.f32 %v4236, %v4236
  %v4245 = vmul.f32 %v4237, %v4237
  %v4246 = vmul.f32 %v4238, %v4238
  %v4247 = vmul.f32 %v4239, %v4239
  %v4248 = vmul.f32 %v4240, %v4240
  %v4249 = vmul.f32 %v4241, %v4241
  %v4250 = vmul.f32 %v4242, %v4242
  %v4251 = vsel %vm55, %v4243, 0.0
  %4252 = vadd.xlane.f32.xlu0 %v4251
  %v4253 = vpop.xlane.xlu0 %4252
  %v4254 = vsel %vm55, %v4244, 0.0
  %4255 = vadd.xlane.f32.xlu0 %v4254
  %v4256 = vpop.xlane.xlu0 %4255
  %v4257 = vsel %vm55, %v4245, 0.0
  %4258 = vadd.xlane.f32.xlu0 %v4257
  %v4259 = vpop.xlane.xlu0 %4258
  %v4260 = vsel %vm55, %v4246, 0.0
  %4261 = vadd.xlane.f32.xlu0 %v4260
  %v4262 = vpop.xlane.xlu0 %4261
  %v4263 = vsel %vm55, %v4247, 0.0
  %4264 = vadd.xlane.f32.xlu0 %v4263
  %v4265 = vpop.xlane.xlu0 %4264
  %v4266 = vsel %vm55, %v4248, 0.0
  %4267 = vadd.xlane.f32.xlu0 %v4266
  %v4268 = vpop.xlane.xlu0 %4267
  %v4269 = vsel %vm55, %v4249, 0.0
  %4270 = vadd.xlane.f32.xlu0 %v4269
  %v4271 = vpop.xlane.xlu0 %4270
  %v4272 = vsel %vm55, %v4250, 0.0
  %4273 = vadd.xlane.f32.xlu0 %v4272
  %v4274 = vpop.xlane.xlu0 %4273
  %v4275 = vmul.f32 %v4253, %v80
  %v4276 = vmul.f32 %v4256, %v80
  %v4277 = vmul.f32 %v4259, %v80
  %v4278 = vmul.f32 %v4262, %v80
  %v4279 = vmul.f32 %v4265, %v80
  %v4280 = vmul.f32 %v4268, %v80
  %v4281 = vmul.f32 %v4271, %v80
  %v4282 = vmul.f32 %v4274, %v80
  %v4283 = vadd.f32 %v4275, 1e-12
  %v4284 = vadd.f32 %v4276, 1e-12
  %v4285 = vadd.f32 %v4277, 1e-12
  %v4286 = vadd.f32 %v4278, 1e-12
  %v4287 = vadd.f32 %v4279, 1e-12
  %v4288 = vadd.f32 %v4280, 1e-12
  %v4289 = vadd.f32 %v4281, 1e-12
  %v4290 = vadd.f32 %v4282, 1e-12
  %v4291 = vrsqrt.pop %v4283
  %v4292 = vrsqrt.pop %v4284
  %v4293 = vrsqrt.pop %v4285
  %v4294 = vrsqrt.pop %v4286
  %v4295 = vrsqrt.pop %v4287
  %v4296 = vrsqrt.pop %v4288
  %v4297 = vrsqrt.pop %v4289
  %v4298 = vrsqrt.pop %v4290
  %v4299 = vmul.f32 %v4235, %v4291
  %v4300 = vmul.f32 %v4236, %v4292
  %v4301 = vmul.f32 %v4237, %v4293
  %v4302 = vmul.f32 %v4238, %v4294
  %v4303 = vmul.f32 %v4239, %v4295
  %v4304 = vmul.f32 %v4240, %v4296
  %v4305 = vmul.f32 %v4241, %v4297
  %v4306 = vmul.f32 %v4242, %v4298
  %v4307 = vlaneseq
  %v4308 = vshrl.u32 %v4307, 7
  %v4309 = vsub.s32 2, %v4308
  %v4310 = vrot.slane %v205, %v4309
  %v4311 = vmul.f32 %v4299, %v4310
  %v4312 = vmul.f32 %v4300, %v4310
  %v4313 = vmul.f32 %v4301, %v4310
  %v4314 = vmul.f32 %v4302, %v4310
  %v4315 = vmul.f32 %v4303, %v4310
  %v4316 = vmul.f32 %v4304, %v4310
  %v4317 = vmul.f32 %v4305, %v4310
  %v4318 = vmul.f32 %v4306, %v4310
  %v4319 = vlaneseq
  %v4320 = vshrl.u32 %v4319, 7
  %v4321 = vsub.s32 3, %v4320
  %v4322 = vrot.slane %v205, %v4321
  %v4323 = vadd.f32 %v4311, %v4322
  %v4324 = vadd.f32 %v4312, %v4322
  %v4325 = vadd.f32 %v4313, %v4322
  %v4326 = vadd.f32 %v4314, %v4322
  %v4327 = vadd.f32 %v4315, %v4322
  %v4328 = vadd.f32 %v4316, %v4322
  %v4329 = vadd.f32 %v4317, %v4322
  %v4330 = vadd.f32 %v4318, %v4322
  %v4331 = vpack.c.bf16 %v4324, %v4323
  %v4332 = vpack.c.bf16 %v4326, %v4325
  %v4333 = vpack.c.bf16 %v4328, %v4327
  %v4334 = vpack.c.bf16 %v4330, %v4329
  %v4335 = vld [vmem:[%s6] sm:$0xf]
  %v4336 = vld [vmem:[%s6 + $0x4] sm:$0xf]
  %v4337 = vld [vmem:[%s6 + $0x8] sm:$0xf]
  %v4338 = vld [vmem:[%s6 + $0xc] sm:$0xf]
  %v4339 = vlaneseq
  %v4340 = vshrl.u32 %v4339, 7
  %v4341 = vsub.s32 4, %v4340
  %v4342 = vrot.slane %v205, %v4341
  %v4347 = vunpack.c.l.b16 %v4335
  %v4348 = vunpack.c.l.b16 %v4336
  %v4349 = vunpack.c.l.b16 %v4337
  %v4350 = vunpack.c.l.b16 %v4338
  %v4351 = vpack.c.b16 %v4348, %v4347
  %v4352 = vpack.c.b16 %v4350, %v4349
  %v4356 = vsel %vm55, %v4331, 0
  %v4359 = vsel %vm55, %v4332, 0
  %v4362 = vsel %vm55, %v4333, 0
  %v4365 = vsel %vm55, %v4334, 0
  %4367 = vmatprep.subr.bf16.mxu0 0
  %4368 = vmatpush1.bf16.msra.mxu0 %v4351
  %4369 = vmatprep.subr.bf16.mxu0 0
  %4370 = vmatpush1.bf16.msra.mxu0 %v4352
  %4371 = vmatprep.subr.bf16.mxu0 0
  %4372 = vmatpush1.bf16.msra.mxu0 0
  %4373 = vmatprep.subr.bf16.mxu0 0
  %4374 = vmatpush1.bf16.msra.mxu0 0
  %4375 = vmatprep.subr.bf16.mxu0 0
  %4376 = vmatpush1.bf16.msra.mxu0 0
  %4377 = vmatprep.subr.bf16.mxu0 0
  %4378 = vmatpush1.bf16.msra.mxu0 0
  %4379 = vmatprep.subr.bf16.mxu0 0
  %4380 = vmatpush1.bf16.msra.mxu0 0
  %4381 = vmatprep.subr.bf16.mxu0 0
  %4382 = vmatpush1.bf16.msra.mxu0 0
  %4383 = vmatprep.subr.bf16.mxu0 0
  %4384 = vmatpush1.bf16.msra.mxu0 0
  %4385 = vmatprep.subr.bf16.mxu0 0
  %4386 = vmatpush1.bf16.msra.mxu0 0
  %4387 = vmatprep.subr.bf16.mxu0 0
  %4388 = vmatpush1.bf16.msra.mxu0 0
  %4389 = vmatprep.subr.bf16.mxu0 0
  %4390 = vmatpush1.bf16.msra.mxu0 0
  %4391 = vmatprep.subr.bf16.mxu0 0
  %4392 = vmatpush1.bf16.msra.mxu0 0
  %4393 = vmatprep.subr.bf16.mxu0 0
  %4394 = vmatpush1.bf16.msra.mxu0 0
  %4395 = vmatprep.subr.bf16.mxu0 0
  %4396 = vmatpush1.bf16.msra.mxu0 0
  %4397 = vmatprep.subr.bf16.mxu0 0
  %4398 = vmatpush1.bf16.msra.mxu0 0
  %4399 = vmatprep.mubr.bf16.mxu0 0
  %4400 = vmatmul.mubr.bf16.gmra.mrb[0].mxu0 %v4356
  %v4401 = vpop.f32.mrb[0].mxu0
  %v4402 = vadd.f32 %v4342, %v4401
  %v4403 = vpop.f32.mrb[0].mxu0
  %v4404 = vpop.f32.mrb[0].mxu0
  %v4405 = vadd.f32 %v4342, %v4404
  %v4406 = vpop.f32.mrb[0].mxu0
  %4407 = vmatprep.mubr.bf16.mxu0 0
  %4408 = vmatmul.mubr.bf16.gmra.mrb[0].mxu0 %v4359
  %v4409 = vpop.f32.mrb[0].mxu0
  %v4410 = vadd.f32 %v4342, %v4409
  %v4411 = vpop.f32.mrb[0].mxu0
  %v4412 = vpop.f32.mrb[0].mxu0
  %v4413 = vadd.f32 %v4342, %v4412
  %v4414 = vpop.f32.mrb[0].mxu0
  %4415 = vmatprep.mubr.bf16.mxu0 0
  %4416 = vmatmul.mubr.bf16.gmra.mrb[0].mxu0 %v4362
  %v4417 = vpop.f32.mrb[0].mxu0
  %v4418 = vadd.f32 %v4342, %v4417
  %v4419 = vpop.f32.mrb[0].mxu0
  %v4420 = vpop.f32.mrb[0].mxu0
  %v4421 = vadd.f32 %v4342, %v4420
  %v4422 = vpop.f32.mrb[0].mxu0
  %4423 = vmatprep.mubr.bf16.mxu0 0
  %4424 = vmatmul.mubr.bf16.gmra.mrb[0].mxu0 %v4365
  %v4425 = vpop.f32.mrb[0].mxu0
  %v4426 = vadd.f32 %v4342, %v4425
  %v4427 = vpop.f32.mrb[0].mxu0
  %v4428 = vpop.f32.mrb[0].mxu0
  %v4429 = vadd.f32 %v4342, %v4428
  %v4430 = vpop.f32.mrb[0].mxu0
  %4431 = vdwg.mxu0
  %v4432 = vmul.f32 %v4402, %v4402
  %v4433 = vmul.f32 %v4405, %v4405
  %v4434 = vmul.f32 %v4410, %v4410
  %v4435 = vmul.f32 %v4413, %v4413
  %v4436 = vmul.f32 %v4418, %v4418
  %v4437 = vmul.f32 %v4421, %v4421
  %v4438 = vmul.f32 %v4426, %v4426
  %v4439 = vmul.f32 %v4429, %v4429
  %v4440 = vmul.f32 %v4402, %v4432
  %v4441 = vmul.f32 %v4405, %v4433
  %v4442 = vmul.f32 %v4410, %v4434
  %v4443 = vmul.f32 %v4413, %v4435
  %v4444 = vmul.f32 %v4418, %v4436
  %v4445 = vmul.f32 %v4421, %v4437
  %v4446 = vmul.f32 %v4426, %v4438
  %v4447 = vmul.f32 %v4429, %v4439
  %v4448 = vmul.f32 %v4440, 0.044715
  %v4449 = vmul.f32 %v4441, 0.044715
  %v4450 = vmul.f32 %v4442, 0.044715
  %v4451 = vmul.f32 %v4443, 0.044715
  %v4452 = vmul.f32 %v4444, 0.044715
  %v4453 = vmul.f32 %v4445, 0.044715
  %v4454 = vmul.f32 %v4446, 0.044715
  %v4455 = vmul.f32 %v4447, 0.044715
  %v4456 = vadd.f32 %v4402, %v4448
  %v4457 = vadd.f32 %v4405, %v4449
  %v4458 = vadd.f32 %v4410, %v4450
  %v4459 = vadd.f32 %v4413, %v4451
  %v4460 = vadd.f32 %v4418, %v4452
  %v4461 = vadd.f32 %v4421, %v4453
  %v4462 = vadd.f32 %v4426, %v4454
  %v4463 = vadd.f32 %v4429, %v4455
  %v4464 = vmul.f32 %v4456, 0.7978846
  %v4465 = vmul.f32 %v4457, 0.7978846
  %v4466 = vmul.f32 %v4458, 0.7978846
  %v4467 = vmul.f32 %v4459, 0.7978846
  %v4468 = vmul.f32 %v4460, 0.7978846
  %v4469 = vmul.f32 %v4461, 0.7978846
  %v4470 = vmul.f32 %v4462, 0.7978846
  %v4471 = vmul.f32 %v4463, 0.7978846
  %v4472 = vtanh.pop %v4464
  %v4473 = vtanh.pop %v4465
  %v4474 = vtanh.pop %v4466
  %v4475 = vtanh.pop %v4467
  %v4476 = vtanh.pop %v4468
  %v4477 = vtanh.pop %v4469
  %v4478 = vtanh.pop %v4470
  %v4479 = vtanh.pop %v4471
  %v4480 = vadd.f32 %v4472, 1.0
  %v4481 = vadd.f32 %v4473, 1.0
  %v4482 = vadd.f32 %v4474, 1.0
  %v4483 = vadd.f32 %v4475, 1.0
  %v4484 = vadd.f32 %v4476, 1.0
  %v4485 = vadd.f32 %v4477, 1.0
  %v4486 = vadd.f32 %v4478, 1.0
  %v4487 = vadd.f32 %v4479, 1.0
  %v4488 = vmul.f32 %v4480, 0.5
  %v4489 = vmul.f32 %v4481, 0.5
  %v4490 = vmul.f32 %v4482, 0.5
  %v4491 = vmul.f32 %v4483, 0.5
  %v4492 = vmul.f32 %v4484, 0.5
  %v4493 = vmul.f32 %v4485, 0.5
  %v4494 = vmul.f32 %v4486, 0.5
  %v4495 = vmul.f32 %v4487, 0.5
  %v4496 = vmul.f32 %v4402, %v4488
  %v4497 = vmul.f32 %v4405, %v4489
  %v4498 = vmul.f32 %v4410, %v4490
  %v4499 = vmul.f32 %v4413, %v4491
  %v4500 = vmul.f32 %v4418, %v4492
  %v4501 = vmul.f32 %v4421, %v4493
  %v4502 = vmul.f32 %v4426, %v4494
  %v4503 = vmul.f32 %v4429, %v4495
  %v4504 = vpack.c.bf16 %v4497, %v4496
  %v4505 = vpack.c.bf16 %v4499, %v4498
  %v4506 = vpack.c.bf16 %v4501, %v4500
  %v4507 = vpack.c.bf16 %v4503, %v4502
  %v4508 = vld [vmem:[%s7] sm:$0xf]
  %v4509 = vld [vmem:[%s7 + $0x4] sm:$0xf]
  %v4510 = vld [vmem:[%s7 + $0x8] sm:$0xf]
  %v4511 = vld [vmem:[%s7 + $0xc] sm:$0xf]
  %v4512 = vld [vmem:[%s7 + $0x10] sm:$0xf]
  %v4513 = vld [vmem:[%s7 + $0x14] sm:$0xf]
  %v4514 = vld [vmem:[%s7 + $0x18] sm:$0xf]
  %v4515 = vld [vmem:[%s7 + $0x1c] sm:$0xf]
  %v4516 = vlaneseq
  %v4517 = vshrl.u32 %v4516, 7
  %v4518 = vsub.s32 5, %v4517
  %v4519 = vrot.slane %v205, %v4518
  %v4528 = vunpack.c.l.b16 %v4508
  %v4529 = vunpack.c.l.b16 %v4509
  %v4530 = vunpack.c.l.b16 %v4510
  %v4531 = vunpack.c.l.b16 %v4511
  %v4532 = vunpack.c.l.b16 %v4512
  %v4533 = vunpack.c.l.b16 %v4513
  %v4534 = vunpack.c.l.b16 %v4514
  %v4535 = vunpack.c.l.b16 %v4515
  %v4536 = vpack.c.b16 %v4529, %v4528
  %v4537 = vpack.c.b16 %v4531, %v4530
  %v4538 = vpack.c.b16 %v4533, %v4532
  %v4539 = vpack.c.b16 %v4535, %v4534
  %vm4544 = vcmask 523264
  %v4546 = vsel %vm4544, %v4504, 0
  %v4549 = vsel %vm4544, %v4505, 0
  %v4552 = vsel %vm4544, %v4506, 0
  %v4555 = vsel %vm4544, %v4507, 0
  %4557 = vmatprep.subr.bf16.mxu0 0
  %4558 = vmatpush1.bf16.msra.mxu0 %v4536
  %4559 = vmatprep.subr.bf16.mxu0 0
  %4560 = vmatpush1.bf16.msra.mxu0 %v4537
  %4561 = vmatprep.subr.bf16.mxu0 0
  %4562 = vmatpush1.bf16.msra.mxu0 %v4538
  %4563 = vmatprep.subr.bf16.mxu0 0
  %4564 = vmatpush1.bf16.msra.mxu0 %v4539
  %4565 = vmatprep.subr.bf16.mxu0 0
  %4566 = vmatpush1.bf16.msra.mxu0 0
  %4567 = vmatprep.subr.bf16.mxu0 0
  %4568 = vmatpush1.bf16.msra.mxu0 0
  %4569 = vmatprep.subr.bf16.mxu0 0
  %4570 = vmatpush1.bf16.msra.mxu0 0
  %4571 = vmatprep.subr.bf16.mxu0 0
  %4572 = vmatpush1.bf16.msra.mxu0 0
  %4573 = vmatprep.subr.bf16.mxu0 0
  %4574 = vmatpush1.bf16.msra.mxu0 0
  %4575 = vmatprep.subr.bf16.mxu0 0
  %4576 = vmatpush1.bf16.msra.mxu0 0
  %4577 = vmatprep.subr.bf16.mxu0 0
  %4578 = vmatpush1.bf16.msra.mxu0 0
  %4579 = vmatprep.subr.bf16.mxu0 0
  %4580 = vmatpush1.bf16.msra.mxu0 0
  %4581 = vmatprep.subr.bf16.mxu0 0
  %4582 = vmatpush1.bf16.msra.mxu0 0
  %4583 = vmatprep.subr.bf16.mxu0 0
  %4584 = vmatpush1.bf16.msra.mxu0 0
  %4585 = vmatprep.subr.bf16.mxu0 0
  %4586 = vmatpush1.bf16.msra.mxu0 0
  %4587 = vmatprep.subr.bf16.mxu0 0
  %4588 = vmatpush1.bf16.msra.mxu0 0
  %4589 = vmatprep.mubr.bf16.mxu0 0
  %4590 = vmatmul.mubr.bf16.gmra.mrb[0].mxu0 %v4546
  %v4591 = vpop.f32.mrb[0].mxu0
  %v4592 = vadd.f32 %v4519, %v4591
  %v4593 = vpop.f32.mrb[0].mxu0
  %v4594 = vpop.f32.mrb[0].mxu0
  %v4595 = vadd.f32 %v4519, %v4594
  %v4596 = vpop.f32.mrb[0].mxu0
  %4597 = vmatprep.mubr.bf16.mxu0 0
  %4598 = vmatmul.mubr.bf16.gmra.mrb[0].mxu0 %v4549
  %v4599 = vpop.f32.mrb[0].mxu0
  %v4600 = vadd.f32 %v4519, %v4599
  %v4601 = vpop.f32.mrb[0].mxu0
  %v4602 = vpop.f32.mrb[0].mxu0
  %v4603 = vadd.f32 %v4519, %v4602
  %v4604 = vpop.f32.mrb[0].mxu0
  %4605 = vmatprep.mubr.bf16.mxu0 0
  %4606 = vmatmul.mubr.bf16.gmra.mrb[0].mxu0 %v4552
  %v4607 = vpop.f32.mrb[0].mxu0
  %v4608 = vadd.f32 %v4519, %v4607
  %v4609 = vpop.f32.mrb[0].mxu0
  %v4610 = vpop.f32.mrb[0].mxu0
  %v4611 = vadd.f32 %v4519, %v4610
  %v4612 = vpop.f32.mrb[0].mxu0
  %4613 = vmatprep.mubr.bf16.mxu0 0
  %4614 = vmatmul.mubr.bf16.gmra.mrb[0].mxu0 %v4555
  %v4615 = vpop.f32.mrb[0].mxu0
  %v4616 = vadd.f32 %v4519, %v4615
  %v4617 = vpop.f32.mrb[0].mxu0
  %v4618 = vpop.f32.mrb[0].mxu0
  %v4619 = vadd.f32 %v4519, %v4618
  %v4620 = vpop.f32.mrb[0].mxu0
  %4621 = vdwg.mxu0
  %v4622 = vadd.f32 %v4323, %v4592
  %v4623 = vadd.f32 %v4324, %v4595
  %v4624 = vadd.f32 %v4325, %v4600
  %v4625 = vadd.f32 %v4326, %v4603
  %v4626 = vadd.f32 %v4327, %v4608
  %v4627 = vadd.f32 %v4328, %v4611
  %v4628 = vadd.f32 %v4329, %v4616
  %v4629 = vadd.f32 %v4330, %v4619
  %v4630 = vsel %vm55, %v4622, 0.0
  %4631 = vadd.xlane.f32.xlu0 %v4630
  %v4632 = vpop.xlane.xlu0 %4631
  %v4633 = vsel %vm55, %v4623, 0.0
  %4634 = vadd.xlane.f32.xlu0 %v4633
  %v4635 = vpop.xlane.xlu0 %4634
  %v4636 = vsel %vm55, %v4624, 0.0
  %4637 = vadd.xlane.f32.xlu0 %v4636
  %v4638 = vpop.xlane.xlu0 %4637
  %v4639 = vsel %vm55, %v4625, 0.0
  %4640 = vadd.xlane.f32.xlu0 %v4639
  %v4641 = vpop.xlane.xlu0 %4640
  %v4642 = vsel %vm55, %v4626, 0.0
  %4643 = vadd.xlane.f32.xlu0 %v4642
  %v4644 = vpop.xlane.xlu0 %4643
  %v4645 = vsel %vm55, %v4627, 0.0
  %4646 = vadd.xlane.f32.xlu0 %v4645
  %v4647 = vpop.xlane.xlu0 %4646
  %v4648 = vsel %vm55, %v4628, 0.0
  %4649 = vadd.xlane.f32.xlu0 %v4648
  %v4650 = vpop.xlane.xlu0 %4649
  %v4651 = vsel %vm55, %v4629, 0.0
  %4652 = vadd.xlane.f32.xlu0 %v4651
  %v4653 = vpop.xlane.xlu0 %4652
  %v4654 = vmul.f32 %v4632, %v80
  %v4655 = vmul.f32 %v4635, %v80
  %v4656 = vmul.f32 %v4638, %v80
  %v4657 = vmul.f32 %v4641, %v80
  %v4658 = vmul.f32 %v4644, %v80
  %v4659 = vmul.f32 %v4647, %v80
  %v4660 = vmul.f32 %v4650, %v80
  %v4661 = vmul.f32 %v4653, %v80
  %v4662 = vsub.f32 %v4622, %v4654
  %v4663 = vsub.f32 %v4623, %v4655
  %v4664 = vsub.f32 %v4624, %v4656
  %v4665 = vsub.f32 %v4625, %v4657
  %v4666 = vsub.f32 %v4626, %v4658
  %v4667 = vsub.f32 %v4627, %v4659
  %v4668 = vsub.f32 %v4628, %v4660
  %v4669 = vsub.f32 %v4629, %v4661
  %v4670 = vmul.f32 %v4662, %v4662
  %v4671 = vmul.f32 %v4663, %v4663
  %v4672 = vmul.f32 %v4664, %v4664
  %v4673 = vmul.f32 %v4665, %v4665
  %v4674 = vmul.f32 %v4666, %v4666
  %v4675 = vmul.f32 %v4667, %v4667
  %v4676 = vmul.f32 %v4668, %v4668
  %v4677 = vmul.f32 %v4669, %v4669
  %v4678 = vsel %vm55, %v4670, 0.0
  %4679 = vadd.xlane.f32.xlu0 %v4678
  %v4680 = vpop.xlane.xlu0 %4679
  %v4681 = vsel %vm55, %v4671, 0.0
  %4682 = vadd.xlane.f32.xlu0 %v4681
  %v4683 = vpop.xlane.xlu0 %4682
  %v4684 = vsel %vm55, %v4672, 0.0
  %4685 = vadd.xlane.f32.xlu0 %v4684
  %v4686 = vpop.xlane.xlu0 %4685
  %v4687 = vsel %vm55, %v4673, 0.0
  %4688 = vadd.xlane.f32.xlu0 %v4687
  %v4689 = vpop.xlane.xlu0 %4688
  %v4690 = vsel %vm55, %v4674, 0.0
  %4691 = vadd.xlane.f32.xlu0 %v4690
  %v4692 = vpop.xlane.xlu0 %4691
  %v4693 = vsel %vm55, %v4675, 0.0
  %4694 = vadd.xlane.f32.xlu0 %v4693
  %v4695 = vpop.xlane.xlu0 %4694
  %v4696 = vsel %vm55, %v4676, 0.0
  %4697 = vadd.xlane.f32.xlu0 %v4696
  %v4698 = vpop.xlane.xlu0 %4697
  %v4699 = vsel %vm55, %v4677, 0.0
  %4700 = vadd.xlane.f32.xlu0 %v4699
  %v4701 = vpop.xlane.xlu0 %4700
  %v4702 = vmul.f32 %v4680, %v80
  %v4703 = vmul.f32 %v4683, %v80
  %v4704 = vmul.f32 %v4686, %v80
  %v4705 = vmul.f32 %v4689, %v80
  %v4706 = vmul.f32 %v4692, %v80
  %v4707 = vmul.f32 %v4695, %v80
  %v4708 = vmul.f32 %v4698, %v80
  %v4709 = vmul.f32 %v4701, %v80
  %v4710 = vadd.f32 %v4702, 1e-12
  %v4711 = vadd.f32 %v4703, 1e-12
  %v4712 = vadd.f32 %v4704, 1e-12
  %v4713 = vadd.f32 %v4705, 1e-12
  %v4714 = vadd.f32 %v4706, 1e-12
  %v4715 = vadd.f32 %v4707, 1e-12
  %v4716 = vadd.f32 %v4708, 1e-12
  %v4717 = vadd.f32 %v4709, 1e-12
  %v4718 = vrsqrt.pop %v4710
  %v4719 = vrsqrt.pop %v4711
  %v4720 = vrsqrt.pop %v4712
  %v4721 = vrsqrt.pop %v4713
  %v4722 = vrsqrt.pop %v4714
  %v4723 = vrsqrt.pop %v4715
  %v4724 = vrsqrt.pop %v4716
  %v4725 = vrsqrt.pop %v4717
  %v4726 = vmul.f32 %v4662, %v4718
  %v4727 = vmul.f32 %v4663, %v4719
  %v4728 = vmul.f32 %v4664, %v4720
  %v4729 = vmul.f32 %v4665, %v4721
  %v4730 = vmul.f32 %v4666, %v4722
  %v4731 = vmul.f32 %v4667, %v4723
  %v4732 = vmul.f32 %v4668, %v4724
  %v4733 = vmul.f32 %v4669, %v4725
  %v4734 = vlaneseq
  %v4735 = vshrl.u32 %v4734, 7
  %v4736 = vsub.s32 6, %v4735
  %v4737 = vrot.slane %v205, %v4736
  %v4738 = vmul.f32 %v4726, %v4737
  %v4739 = vmul.f32 %v4727, %v4737
  %v4740 = vmul.f32 %v4728, %v4737
  %v4741 = vmul.f32 %v4729, %v4737
  %v4742 = vmul.f32 %v4730, %v4737
  %v4743 = vmul.f32 %v4731, %v4737
  %v4744 = vmul.f32 %v4732, %v4737
  %v4745 = vmul.f32 %v4733, %v4737
  %v4746 = vlaneseq
  %v4747 = vshrl.u32 %v4746, 7
  %v4748 = vsub.s32 7, %v4747
  %v4749 = vrot.slane %v205, %v4748
  %v4750 = vadd.f32 %v4738, %v4749
  %v4751 = vadd.f32 %v4739, %v4749
  %v4752 = vadd.f32 %v4740, %v4749
  %v4753 = vadd.f32 %v4741, %v4749
  %v4754 = vadd.f32 %v4742, %v4749
  %v4755 = vadd.f32 %v4743, %v4749
  %v4756 = vadd.f32 %v4744, %v4749
  %v4757 = vadd.f32 %v4745, %v4749
  %s4758 = scalar_lea.vmem %s8, 8
  %v4759 = vld [vmem:[%s4758] sm:$0xff]
  %v4760 = vpack.c.bf16 %v4751, %v4750
  %v4761 = vpack.c.bf16 %v4753, %v4752
  %v4762 = vpack.c.bf16 %v4755, %v4754
  %v4763 = vpack.c.bf16 %v4757, %v4756
  %s4764 = scalar_lea.vmem %s4, 16
  %v4765 = vld [vmem:[%s4764] sm:$0xf]
  %v4766 = vld [vmem:[%s4764 + $0x4] sm:$0xf]
  %v4767 = vld [vmem:[%s4764 + $0x8] sm:$0xf]
  %v4768 = vld [vmem:[%s4764 + $0xc] sm:$0xf]
  %v4769 = vlaneseq
  %v4770 = vshrl.u32 %v4769, 7
  %v4771 = vsub.s32 0, %v4770
  %v4772 = vrot.slane %v4759, %v4771
  %v4777 = vunpack.c.l.b16 %v4765
  %v4778 = vunpack.c.l.b16 %v4766
  %v4779 = vunpack.c.l.b16 %v4767
  %v4780 = vunpack.c.l.b16 %v4768
  %v4781 = vpack.c.b16 %v4778, %v4777
  %v4782 = vpack.c.b16 %v4780, %v4779
  %v4786 = vsel %vm55, %v4760, 0
  %v4789 = vsel %vm55, %v4761, 0
  %v4792 = vsel %vm55, %v4762, 0
  %v4795 = vsel %vm55, %v4763, 0
  %4797 = vmatprep.subr.bf16.mxu0 0
  %4798 = vmatpush1.bf16.msra.mxu0 %v4781
  %4799 = vmatprep.subr.bf16.mxu0 0
  %4800 = vmatpush1.bf16.msra.mxu0 %v4782
  %4801 = vmatprep.subr.bf16.mxu0 0
  %4802 = vmatpush1.bf16.msra.mxu0 0
  %4803 = vmatprep.subr.bf16.mxu0 0
  %4804 = vmatpush1.bf16.msra.mxu0 0
  %4805 = vmatprep.subr.bf16.mxu0 0
  %4806 = vmatpush1.bf16.msra.mxu0 0
  %4807 = vmatprep.subr.bf16.mxu0 0
  %4808 = vmatpush1.bf16.msra.mxu0 0
  %4809 = vmatprep.subr.bf16.mxu0 0
  %4810 = vmatpush1.bf16.msra.mxu0 0
  %4811 = vmatprep.subr.bf16.mxu0 0
  %4812 = vmatpush1.bf16.msra.mxu0 0
  %4813 = vmatprep.subr.bf16.mxu0 0
  %4814 = vmatpush1.bf16.msra.mxu0 0
  %4815 = vmatprep.subr.bf16.mxu0 0
  %4816 = vmatpush1.bf16.msra.mxu0 0
  %4817 = vmatprep.subr.bf16.mxu0 0
  %4818 = vmatpush1.bf16.msra.mxu0 0
  %4819 = vmatprep.subr.bf16.mxu0 0
  %4820 = vmatpush1.bf16.msra.mxu0 0
  %4821 = vmatprep.subr.bf16.mxu0 0
  %4822 = vmatpush1.bf16.msra.mxu0 0
  %4823 = vmatprep.subr.bf16.mxu0 0
  %4824 = vmatpush1.bf16.msra.mxu0 0
  %4825 = vmatprep.subr.bf16.mxu0 0
  %4826 = vmatpush1.bf16.msra.mxu0 0
  %4827 = vmatprep.subr.bf16.mxu0 0
  %4828 = vmatpush1.bf16.msra.mxu0 0
  %4829 = vmatprep.mubr.bf16.mxu0 0
  %4830 = vmatmul.mubr.bf16.gmra.mrb[0].mxu0 %v4786
  %v4831 = vpop.f32.mrb[0].mxu0
  %v4832 = vadd.f32 %v4772, %v4831
  %v4833 = vpop.f32.mrb[0].mxu0
  %v4834 = vpop.f32.mrb[0].mxu0
  %v4835 = vadd.f32 %v4772, %v4834
  %v4836 = vpop.f32.mrb[0].mxu0
  %4837 = vmatprep.mubr.bf16.mxu0 0
  %4838 = vmatmul.mubr.bf16.gmra.mrb[0].mxu0 %v4789
  %v4839 = vpop.f32.mrb[0].mxu0
  %v4840 = vadd.f32 %v4772, %v4839
  %v4841 = vpop.f32.mrb[0].mxu0
  %v4842 = vpop.f32.mrb[0].mxu0
  %v4843 = vadd.f32 %v4772, %v4842
  %v4844 = vpop.f32.mrb[0].mxu0
  %4845 = vmatprep.mubr.bf16.mxu0 0
  %4846 = vmatmul.mubr.bf16.gmra.mrb[0].mxu0 %v4792
  %v4847 = vpop.f32.mrb[0].mxu0
  %v4848 = vadd.f32 %v4772, %v4847
  %v4849 = vpop.f32.mrb[0].mxu0
  %v4850 = vpop.f32.mrb[0].mxu0
  %v4851 = vadd.f32 %v4772, %v4850
  %v4852 = vpop.f32.mrb[0].mxu0
  %4853 = vmatprep.mubr.bf16.mxu0 0
  %4854 = vmatmul.mubr.bf16.gmra.mrb[0].mxu0 %v4795
  %v4855 = vpop.f32.mrb[0].mxu0
  %v4856 = vadd.f32 %v4772, %v4855
  %v4857 = vpop.f32.mrb[0].mxu0
  %v4858 = vpop.f32.mrb[0].mxu0
  %v4859 = vadd.f32 %v4772, %v4858
  %v4860 = vpop.f32.mrb[0].mxu0
  %4861 = vdwg.mxu0
  %4870 = vrot.lane.b32.xlu0 %v4832, 80
  %v4871 = vpop.permute.xlu0 %4870
  %4872 = vrot.lane.b32.xlu0 %v4835, 80
  %v4873 = vpop.permute.xlu0 %4872
  %4874 = vrot.lane.b32.xlu0 %v4840, 80
  %v4875 = vpop.permute.xlu0 %4874
  %4876 = vrot.lane.b32.xlu0 %v4843, 80
  %v4877 = vpop.permute.xlu0 %4876
  %4878 = vrot.lane.b32.xlu0 %v4848, 80
  %v4879 = vpop.permute.xlu0 %4878
  %4880 = vrot.lane.b32.xlu0 %v4851, 80
  %v4881 = vpop.permute.xlu0 %4880
  %4882 = vrot.lane.b32.xlu0 %v4856, 80
  %v4883 = vpop.permute.xlu0 %4882
  %4884 = vrot.lane.b32.xlu0 %v4859, 80
  %v4885 = vpop.permute.xlu0 %4884
  %v4894 = vcombine.high %v4832, 0.0
  %v4896 = vunpack.c.l.s4 1983009808
  %v4897 = vunpack.c.0.s8 %v4896
  %v4898 = vlaneseq
  %v4899 = vshrl.u32 %v4898, 7
  %v4900 = vsub.s32 %v4897, %v4899
  %v4901 = vrot.slane %v4832, %v4900
  %v4903 = vunpack.c.l.s4 1983009808
  %v4904 = vunpack.c.0.s8 %v4903
  %v4905 = vlaneseq
  %v4906 = vshrl.u32 %v4905, 7
  %v4907 = vsub.s32 %v4904, %v4906
  %v4908 = vrot.slane %v4894, %v4907
  %v4909 = vcombine.high %v4871, 0.0
  %v4911 = vunpack.c.l.s4 1983009808
  %v4912 = vunpack.c.0.s8 %v4911
  %v4913 = vlaneseq
  %v4914 = vshrl.u32 %v4913, 7
  %v4915 = vsub.s32 %v4912, %v4914
  %v4916 = vrot.slane %v4871, %v4915
  %v4918 = vunpack.c.l.s4 1983009808
  %v4919 = vunpack.c.0.s8 %v4918
  %v4920 = vlaneseq
  %v4921 = vshrl.u32 %v4920, 7
  %v4922 = vsub.s32 %v4919, %v4921
  %v4923 = vrot.slane %v4909, %v4922
  %v4924 = vcombine.low %v4901, %v4916
  %v4925 = vcombine.high %v4901, %v4916
  %v4927 = vunpack.c.l.s4 1934713408
  %v4928 = vunpack.c.0.s8 %v4927
  %v4929 = vlaneseq
  %v4930 = vshrl.u32 %v4929, 7
  %v4931 = vsub.s32 %v4928, %v4930
  %v4932 = vrot.slane %v4924, %v4931
  %v4934 = vunpack.c.l.s4 1934713408
  %v4935 = vunpack.c.0.s8 %v4934
  %v4936 = vlaneseq
  %v4937 = vshrl.u32 %v4936, 7
  %v4938 = vsub.s32 %v4935, %v4937
  %v4939 = vrot.slane %v4925, %v4938
  %v4940 = vcombine.low %v4908, %v4923
  %v4941 = vcombine.high %v4908, %v4923
  %v4943 = vunpack.c.l.s4 1934713408
  %v4944 = vunpack.c.0.s8 %v4943
  %v4945 = vlaneseq
  %v4946 = vshrl.u32 %v4945, 7
  %v4947 = vsub.s32 %v4944, %v4946
  %v4948 = vrot.slane %v4940, %v4947
  %v4950 = vunpack.c.l.s4 1934713408
  %v4951 = vunpack.c.0.s8 %v4950
  %v4952 = vlaneseq
  %v4953 = vshrl.u32 %v4952, 7
  %v4954 = vsub.s32 %v4951, %v4953
  %v4955 = vrot.slane %v4941, %v4954
  %v4956 = vcombine.high %v4932, 0.0
  %v4957 = vcombine.high %v4939, 0.0
  %v4958 = vcombine.high %v4948, 0.0
  %v4959 = vcombine.high %v4955, 0.0
  %v4960 = vcombine.high %v4835, 0.0
  %v4962 = vunpack.c.l.s4 1983009808
  %v4963 = vunpack.c.0.s8 %v4962
  %v4964 = vlaneseq
  %v4965 = vshrl.u32 %v4964, 7
  %v4966 = vsub.s32 %v4963, %v4965
  %v4967 = vrot.slane %v4835, %v4966
  %v4969 = vunpack.c.l.s4 1983009808
  %v4970 = vunpack.c.0.s8 %v4969
  %v4971 = vlaneseq
  %v4972 = vshrl.u32 %v4971, 7
  %v4973 = vsub.s32 %v4970, %v4972
  %v4974 = vrot.slane %v4960, %v4973
  %v4975 = vcombine.high %v4873, 0.0
  %v4977 = vunpack.c.l.s4 1983009808
  %v4978 = vunpack.c.0.s8 %v4977
  %v4979 = vlaneseq
  %v4980 = vshrl.u32 %v4979, 7
  %v4981 = vsub.s32 %v4978, %v4980
  %v4982 = vrot.slane %v4873, %v4981
  %v4984 = vunpack.c.l.s4 1983009808
  %v4985 = vunpack.c.0.s8 %v4984
  %v4986 = vlaneseq
  %v4987 = vshrl.u32 %v4986, 7
  %v4988 = vsub.s32 %v4985, %v4987
  %v4989 = vrot.slane %v4975, %v4988
  %v4990 = vcombine.low %v4967, %v4982
  %v4991 = vcombine.high %v4967, %v4982
  %v4993 = vunpack.c.l.s4 1934713408
  %v4994 = vunpack.c.0.s8 %v4993
  %v4995 = vlaneseq
  %v4996 = vshrl.u32 %v4995, 7
  %v4997 = vsub.s32 %v4994, %v4996
  %v4998 = vrot.slane %v4990, %v4997
  %v5000 = vunpack.c.l.s4 1934713408
  %v5001 = vunpack.c.0.s8 %v5000
  %v5002 = vlaneseq
  %v5003 = vshrl.u32 %v5002, 7
  %v5004 = vsub.s32 %v5001, %v5003
  %v5005 = vrot.slane %v4991, %v5004
  %v5006 = vcombine.low %v4974, %v4989
  %v5007 = vcombine.high %v4974, %v4989
  %v5009 = vunpack.c.l.s4 1934713408
  %v5010 = vunpack.c.0.s8 %v5009
  %v5011 = vlaneseq
  %v5012 = vshrl.u32 %v5011, 7
  %v5013 = vsub.s32 %v5010, %v5012
  %v5014 = vrot.slane %v5006, %v5013
  %v5016 = vunpack.c.l.s4 1934713408
  %v5017 = vunpack.c.0.s8 %v5016
  %v5018 = vlaneseq
  %v5019 = vshrl.u32 %v5018, 7
  %v5020 = vsub.s32 %v5017, %v5019
  %v5021 = vrot.slane %v5007, %v5020
  %v5022 = vcombine.high %v4998, 0.0
  %v5023 = vcombine.high %v5005, 0.0
  %v5024 = vcombine.high %v5014, 0.0
  %v5025 = vcombine.high %v5021, 0.0
  %v5026 = vcombine.high %v4840, 0.0
  %v5028 = vunpack.c.l.s4 1983009808
  %v5029 = vunpack.c.0.s8 %v5028
  %v5030 = vlaneseq
  %v5031 = vshrl.u32 %v5030, 7
  %v5032 = vsub.s32 %v5029, %v5031
  %v5033 = vrot.slane %v4840, %v5032
  %v5035 = vunpack.c.l.s4 1983009808
  %v5036 = vunpack.c.0.s8 %v5035
  %v5037 = vlaneseq
  %v5038 = vshrl.u32 %v5037, 7
  %v5039 = vsub.s32 %v5036, %v5038
  %v5040 = vrot.slane %v5026, %v5039
  %v5041 = vcombine.high %v4875, 0.0
  %v5043 = vunpack.c.l.s4 1983009808
  %v5044 = vunpack.c.0.s8 %v5043
  %v5045 = vlaneseq
  %v5046 = vshrl.u32 %v5045, 7
  %v5047 = vsub.s32 %v5044, %v5046
  %v5048 = vrot.slane %v4875, %v5047
  %v5050 = vunpack.c.l.s4 1983009808
  %v5051 = vunpack.c.0.s8 %v5050
  %v5052 = vlaneseq
  %v5053 = vshrl.u32 %v5052, 7
  %v5054 = vsub.s32 %v5051, %v5053
  %v5055 = vrot.slane %v5041, %v5054
  %v5056 = vcombine.low %v5033, %v5048
  %v5057 = vcombine.high %v5033, %v5048
  %v5059 = vunpack.c.l.s4 1934713408
  %v5060 = vunpack.c.0.s8 %v5059
  %v5061 = vlaneseq
  %v5062 = vshrl.u32 %v5061, 7
  %v5063 = vsub.s32 %v5060, %v5062
  %v5064 = vrot.slane %v5056, %v5063
  %v5066 = vunpack.c.l.s4 1934713408
  %v5067 = vunpack.c.0.s8 %v5066
  %v5068 = vlaneseq
  %v5069 = vshrl.u32 %v5068, 7
  %v5070 = vsub.s32 %v5067, %v5069
  %v5071 = vrot.slane %v5057, %v5070
  %v5072 = vcombine.low %v5040, %v5055
  %v5073 = vcombine.high %v5040, %v5055
  %v5075 = vunpack.c.l.s4 1934713408
  %v5076 = vunpack.c.0.s8 %v5075
  %v5077 = vlaneseq
  %v5078 = vshrl.u32 %v5077, 7
  %v5079 = vsub.s32 %v5076, %v5078
  %v5080 = vrot.slane %v5072, %v5079
  %v5082 = vunpack.c.l.s4 1934713408
  %v5083 = vunpack.c.0.s8 %v5082
  %v5084 = vlaneseq
  %v5085 = vshrl.u32 %v5084, 7
  %v5086 = vsub.s32 %v5083, %v5085
  %v5087 = vrot.slane %v5073, %v5086
  %v5088 = vcombine.high %v5064, 0.0
  %v5089 = vcombine.high %v5071, 0.0
  %v5090 = vcombine.high %v5080, 0.0
  %v5091 = vcombine.high %v5087, 0.0
  %v5092 = vcombine.high %v4843, 0.0
  %v5094 = vunpack.c.l.s4 1983009808
  %v5095 = vunpack.c.0.s8 %v5094
  %v5096 = vlaneseq
  %v5097 = vshrl.u32 %v5096, 7
  %v5098 = vsub.s32 %v5095, %v5097
  %v5099 = vrot.slane %v4843, %v5098
  %v5101 = vunpack.c.l.s4 1983009808
  %v5102 = vunpack.c.0.s8 %v5101
  %v5103 = vlaneseq
  %v5104 = vshrl.u32 %v5103, 7
  %v5105 = vsub.s32 %v5102, %v5104
  %v5106 = vrot.slane %v5092, %v5105
  %v5107 = vcombine.high %v4877, 0.0
  %v5109 = vunpack.c.l.s4 1983009808
  %v5110 = vunpack.c.0.s8 %v5109
  %v5111 = vlaneseq
  %v5112 = vshrl.u32 %v5111, 7
  %v5113 = vsub.s32 %v5110, %v5112
  %v5114 = vrot.slane %v4877, %v5113
  %v5116 = vunpack.c.l.s4 1983009808
  %v5117 = vunpack.c.0.s8 %v5116
  %v5118 = vlaneseq
  %v5119 = vshrl.u32 %v5118, 7
  %v5120 = vsub.s32 %v5117, %v5119
  %v5121 = vrot.slane %v5107, %v5120
  %v5122 = vcombine.low %v5099, %v5114
  %v5123 = vcombine.high %v5099, %v5114
  %v5125 = vunpack.c.l.s4 1934713408
  %v5126 = vunpack.c.0.s8 %v5125
  %v5127 = vlaneseq
  %v5128 = vshrl.u32 %v5127, 7
  %v5129 = vsub.s32 %v5126, %v5128
  %v5130 = vrot.slane %v5122, %v5129
  %v5132 = vunpack.c.l.s4 1934713408
  %v5133 = vunpack.c.0.s8 %v5132
  %v5134 = vlaneseq
  %v5135 = vshrl.u32 %v5134, 7
  %v5136 = vsub.s32 %v5133, %v5135
  %v5137 = vrot.slane %v5123, %v5136
  %v5138 = vcombine.low %v5106, %v5121
  %v5139 = vcombine.high %v5106, %v5121
  %v5141 = vunpack.c.l.s4 1934713408
  %v5142 = vunpack.c.0.s8 %v5141
  %v5143 = vlaneseq
  %v5144 = vshrl.u32 %v5143, 7
  %v5145 = vsub.s32 %v5142, %v5144
  %v5146 = vrot.slane %v5138, %v5145
  %v5148 = vunpack.c.l.s4 1934713408
  %v5149 = vunpack.c.0.s8 %v5148
  %v5150 = vlaneseq
  %v5151 = vshrl.u32 %v5150, 7
  %v5152 = vsub.s32 %v5149, %v5151
  %v5153 = vrot.slane %v5139, %v5152
  %v5154 = vcombine.high %v5130, 0.0
  %v5155 = vcombine.high %v5137, 0.0
  %v5156 = vcombine.high %v5146, 0.0
  %v5157 = vcombine.high %v5153, 0.0
  %v5158 = vcombine.high %v4848, 0.0
  %v5160 = vunpack.c.l.s4 1983009808
  %v5161 = vunpack.c.0.s8 %v5160
  %v5162 = vlaneseq
  %v5163 = vshrl.u32 %v5162, 7
  %v5164 = vsub.s32 %v5161, %v5163
  %v5165 = vrot.slane %v4848, %v5164
  %v5167 = vunpack.c.l.s4 1983009808
  %v5168 = vunpack.c.0.s8 %v5167
  %v5169 = vlaneseq
  %v5170 = vshrl.u32 %v5169, 7
  %v5171 = vsub.s32 %v5168, %v5170
  %v5172 = vrot.slane %v5158, %v5171
  %v5173 = vcombine.high %v4879, 0.0
  %v5175 = vunpack.c.l.s4 1983009808
  %v5176 = vunpack.c.0.s8 %v5175
  %v5177 = vlaneseq
  %v5178 = vshrl.u32 %v5177, 7
  %v5179 = vsub.s32 %v5176, %v5178
  %v5180 = vrot.slane %v4879, %v5179
  %v5182 = vunpack.c.l.s4 1983009808
  %v5183 = vunpack.c.0.s8 %v5182
  %v5184 = vlaneseq
  %v5185 = vshrl.u32 %v5184, 7
  %v5186 = vsub.s32 %v5183, %v5185
  %v5187 = vrot.slane %v5173, %v5186
  %v5188 = vcombine.low %v5165, %v5180
  %v5189 = vcombine.high %v5165, %v5180
  %v5191 = vunpack.c.l.s4 1934713408
  %v5192 = vunpack.c.0.s8 %v5191
  %v5193 = vlaneseq
  %v5194 = vshrl.u32 %v5193, 7
  %v5195 = vsub.s32 %v5192, %v5194
  %v5196 = vrot.slane %v5188, %v5195
  %v5198 = vunpack.c.l.s4 1934713408
  %v5199 = vunpack.c.0.s8 %v5198
  %v5200 = vlaneseq
  %v5201 = vshrl.u32 %v5200, 7
  %v5202 = vsub.s32 %v5199, %v5201
  %v5203 = vrot.slane %v5189, %v5202
  %v5204 = vcombine.low %v5172, %v5187
  %v5205 = vcombine.high %v5172, %v5187
  %v5207 = vunpack.c.l.s4 1934713408
  %v5208 = vunpack.c.0.s8 %v5207
  %v5209 = vlaneseq
  %v5210 = vshrl.u32 %v5209, 7
  %v5211 = vsub.s32 %v5208, %v5210
  %v5212 = vrot.slane %v5204, %v5211
  %v5214 = vunpack.c.l.s4 1934713408
  %v5215 = vunpack.c.0.s8 %v5214
  %v5216 = vlaneseq
  %v5217 = vshrl.u32 %v5216, 7
  %v5218 = vsub.s32 %v5215, %v5217
  %v5219 = vrot.slane %v5205, %v5218
  %v5220 = vcombine.high %v5196, 0.0
  %v5221 = vcombine.high %v5203, 0.0
  %v5222 = vcombine.high %v5212, 0.0
  %v5223 = vcombine.high %v5219, 0.0
  %v5224 = vcombine.high %v4851, 0.0
  %v5226 = vunpack.c.l.s4 1983009808
  %v5227 = vunpack.c.0.s8 %v5226
  %v5228 = vlaneseq
  %v5229 = vshrl.u32 %v5228, 7
  %v5230 = vsub.s32 %v5227, %v5229
  %v5231 = vrot.slane %v4851, %v5230
  %v5233 = vunpack.c.l.s4 1983009808
  %v5234 = vunpack.c.0.s8 %v5233
  %v5235 = vlaneseq
  %v5236 = vshrl.u32 %v5235, 7
  %v5237 = vsub.s32 %v5234, %v5236
  %v5238 = vrot.slane %v5224, %v5237
  %v5239 = vcombine.high %v4881, 0.0
  %v5241 = vunpack.c.l.s4 1983009808
  %v5242 = vunpack.c.0.s8 %v5241
  %v5243 = vlaneseq
  %v5244 = vshrl.u32 %v5243, 7
  %v5245 = vsub.s32 %v5242, %v5244
  %v5246 = vrot.slane %v4881, %v5245
  %v5248 = vunpack.c.l.s4 1983009808
  %v5249 = vunpack.c.0.s8 %v5248
  %v5250 = vlaneseq
  %v5251 = vshrl.u32 %v5250, 7
  %v5252 = vsub.s32 %v5249, %v5251
  %v5253 = vrot.slane %v5239, %v5252
  %v5254 = vcombine.low %v5231, %v5246
  %v5255 = vcombine.high %v5231, %v5246
  %v5257 = vunpack.c.l.s4 1934713408
  %v5258 = vunpack.c.0.s8 %v5257
  %v5259 = vlaneseq
  %v5260 = vshrl.u32 %v5259, 7
  %v5261 = vsub.s32 %v5258, %v5260
  %v5262 = vrot.slane %v5254, %v5261
  %v5264 = vunpack.c.l.s4 1934713408
  %v5265 = vunpack.c.0.s8 %v5264
  %v5266 = vlaneseq
  %v5267 = vshrl.u32 %v5266, 7
  %v5268 = vsub.s32 %v5265, %v5267
  %v5269 = vrot.slane %v5255, %v5268
  %v5270 = vcombine.low %v5238, %v5253
  %v5271 = vcombine.high %v5238, %v5253
  %v5273 = vunpack.c.l.s4 1934713408
  %v5274 = vunpack.c.0.s8 %v5273
  %v5275 = vlaneseq
  %v5276 = vshrl.u32 %v5275, 7
  %v5277 = vsub.s32 %v5274, %v5276
  %v5278 = vrot.slane %v5270, %v5277
  %v5280 = vunpack.c.l.s4 1934713408
  %v5281 = vunpack.c.0.s8 %v5280
  %v5282 = vlaneseq
  %v5283 = vshrl.u32 %v5282, 7
  %v5284 = vsub.s32 %v5281, %v5283
  %v5285 = vrot.slane %v5271, %v5284
  %v5286 = vcombine.high %v5262, 0.0
  %v5287 = vcombine.high %v5269, 0.0
  %v5288 = vcombine.high %v5278, 0.0
  %v5289 = vcombine.high %v5285, 0.0
  %v5290 = vcombine.high %v4856, 0.0
  %v5292 = vunpack.c.l.s4 1983009808
  %v5293 = vunpack.c.0.s8 %v5292
  %v5294 = vlaneseq
  %v5295 = vshrl.u32 %v5294, 7
  %v5296 = vsub.s32 %v5293, %v5295
  %v5297 = vrot.slane %v4856, %v5296
  %v5299 = vunpack.c.l.s4 1983009808
  %v5300 = vunpack.c.0.s8 %v5299
  %v5301 = vlaneseq
  %v5302 = vshrl.u32 %v5301, 7
  %v5303 = vsub.s32 %v5300, %v5302
  %v5304 = vrot.slane %v5290, %v5303
  %v5305 = vcombine.high %v4883, 0.0
  %v5307 = vunpack.c.l.s4 1983009808
  %v5308 = vunpack.c.0.s8 %v5307
  %v5309 = vlaneseq
  %v5310 = vshrl.u32 %v5309, 7
  %v5311 = vsub.s32 %v5308, %v5310
  %v5312 = vrot.slane %v4883, %v5311
  %v5314 = vunpack.c.l.s4 1983009808
  %v5315 = vunpack.c.0.s8 %v5314
  %v5316 = vlaneseq
  %v5317 = vshrl.u32 %v5316, 7
  %v5318 = vsub.s32 %v5315, %v5317
  %v5319 = vrot.slane %v5305, %v5318
  %v5320 = vcombine.low %v5297, %v5312
  %v5321 = vcombine.high %v5297, %v5312
  %v5323 = vunpack.c.l.s4 1934713408
  %v5324 = vunpack.c.0.s8 %v5323
  %v5325 = vlaneseq
  %v5326 = vshrl.u32 %v5325, 7
  %v5327 = vsub.s32 %v5324, %v5326
  %v5328 = vrot.slane %v5320, %v5327
  %v5330 = vunpack.c.l.s4 1934713408
  %v5331 = vunpack.c.0.s8 %v5330
  %v5332 = vlaneseq
  %v5333 = vshrl.u32 %v5332, 7
  %v5334 = vsub.s32 %v5331, %v5333
  %v5335 = vrot.slane %v5321, %v5334
  %v5336 = vcombine.low %v5304, %v5319
  %v5337 = vcombine.high %v5304, %v5319
  %v5339 = vunpack.c.l.s4 1934713408
  %v5340 = vunpack.c.0.s8 %v5339
  %v5341 = vlaneseq
  %v5342 = vshrl.u32 %v5341, 7
  %v5343 = vsub.s32 %v5340, %v5342
  %v5344 = vrot.slane %v5336, %v5343
  %v5346 = vunpack.c.l.s4 1934713408
  %v5347 = vunpack.c.0.s8 %v5346
  %v5348 = vlaneseq
  %v5349 = vshrl.u32 %v5348, 7
  %v5350 = vsub.s32 %v5347, %v5349
  %v5351 = vrot.slane %v5337, %v5350
  %v5352 = vcombine.high %v5328, 0.0
  %v5353 = vcombine.high %v5335, 0.0
  %v5354 = vcombine.high %v5344, 0.0
  %v5355 = vcombine.high %v5351, 0.0
  %v5356 = vcombine.high %v4859, 0.0
  %v5358 = vunpack.c.l.s4 1983009808
  %v5359 = vunpack.c.0.s8 %v5358
  %v5360 = vlaneseq
  %v5361 = vshrl.u32 %v5360, 7
  %v5362 = vsub.s32 %v5359, %v5361
  %v5363 = vrot.slane %v4859, %v5362
  %v5365 = vunpack.c.l.s4 1983009808
  %v5366 = vunpack.c.0.s8 %v5365
  %v5367 = vlaneseq
  %v5368 = vshrl.u32 %v5367, 7
  %v5369 = vsub.s32 %v5366, %v5368
  %v5370 = vrot.slane %v5356, %v5369
  %v5371 = vcombine.high %v4885, 0.0
  %v5373 = vunpack.c.l.s4 1983009808
  %v5374 = vunpack.c.0.s8 %v5373
  %v5375 = vlaneseq
  %v5376 = vshrl.u32 %v5375, 7
  %v5377 = vsub.s32 %v5374, %v5376
  %v5378 = vrot.slane %v4885, %v5377
  %v5380 = vunpack.c.l.s4 1983009808
  %v5381 = vunpack.c.0.s8 %v5380
  %v5382 = vlaneseq
  %v5383 = vshrl.u32 %v5382, 7
  %v5384 = vsub.s32 %v5381, %v5383
  %v5385 = vrot.slane %v5371, %v5384
  %v5386 = vcombine.low %v5363, %v5378
  %v5387 = vcombine.high %v5363, %v5378
  %v5389 = vunpack.c.l.s4 1934713408
  %v5390 = vunpack.c.0.s8 %v5389
  %v5391 = vlaneseq
  %v5392 = vshrl.u32 %v5391, 7
  %v5393 = vsub.s32 %v5390, %v5392
  %v5394 = vrot.slane %v5386, %v5393
  %v5396 = vunpack.c.l.s4 1934713408
  %v5397 = vunpack.c.0.s8 %v5396
  %v5398 = vlaneseq
  %v5399 = vshrl.u32 %v5398, 7
  %v5400 = vsub.s32 %v5397, %v5399
  %v5401 = vrot.slane %v5387, %v5400
  %v5402 = vcombine.low %v5370, %v5385
  %v5403 = vcombine.high %v5370, %v5385
  %v5405 = vunpack.c.l.s4 1934713408
  %v5406 = vunpack.c.0.s8 %v5405
  %v5407 = vlaneseq
  %v5408 = vshrl.u32 %v5407, 7
  %v5409 = vsub.s32 %v5406, %v5408
  %v5410 = vrot.slane %v5402, %v5409
  %v5412 = vunpack.c.l.s4 1934713408
  %v5413 = vunpack.c.0.s8 %v5412
  %v5414 = vlaneseq
  %v5415 = vshrl.u32 %v5414, 7
  %v5416 = vsub.s32 %v5413, %v5415
  %v5417 = vrot.slane %v5403, %v5416
  %v5418 = vcombine.high %v5394, 0.0
  %v5419 = vcombine.high %v5401, 0.0
  %v5420 = vcombine.high %v5410, 0.0
  %v5421 = vcombine.high %v5417, 0.0
  %v5422 = vcombine.low %v4932, %v4939
  %v5424 = vunpack.c.l.s4 1983009808
  %v5425 = vunpack.c.0.s8 %v5424
  %v5426 = vlaneseq
  %v5427 = vshrl.u32 %v5426, 7
  %v5428 = vsub.s32 %v5425, %v5427
  %v5429 = vrot.slane %v5422, %v5428
  %v5430 = vcombine.low %v4956, %v4957
  %v5432 = vunpack.c.l.s4 1983009808
  %v5433 = vunpack.c.0.s8 %v5432
  %v5434 = vlaneseq
  %v5435 = vshrl.u32 %v5434, 7
  %v5436 = vsub.s32 %v5433, %v5435
  %v5437 = vrot.slane %v5430, %v5436
  %v5438 = vcombine.low %v4948, %v4955
  %v5440 = vunpack.c.l.s4 1983009808
  %v5441 = vunpack.c.0.s8 %v5440
  %v5442 = vlaneseq
  %v5443 = vshrl.u32 %v5442, 7
  %v5444 = vsub.s32 %v5441, %v5443
  %v5445 = vrot.slane %v5438, %v5444
  %v5446 = vcombine.low %v4958, %v4959
  %v5448 = vunpack.c.l.s4 1983009808
  %v5449 = vunpack.c.0.s8 %v5448
  %v5450 = vlaneseq
  %v5451 = vshrl.u32 %v5450, 7
  %v5452 = vsub.s32 %v5449, %v5451
  %v5453 = vrot.slane %v5446, %v5452
  %v5454 = vcombine.low %v5429, %v5437
  %v5456 = vunpack.c.l.s4 1934713408
  %v5457 = vunpack.c.0.s8 %v5456
  %v5458 = vlaneseq
  %v5459 = vshrl.u32 %v5458, 7
  %v5460 = vsub.s32 %v5457, %v5459
  %v5461 = vrot.slane %v5454, %v5460
  %v5462 = vcombine.low %v5445, %v5453
  %v5464 = vunpack.c.l.s4 1934713408
  %v5465 = vunpack.c.0.s8 %v5464
  %v5466 = vlaneseq
  %v5467 = vshrl.u32 %v5466, 7
  %v5468 = vsub.s32 %v5465, %v5467
  %v5469 = vrot.slane %v5462, %v5468
  %v5470 = vcombine.low %v5461, %v5469
  %v5471 = vcombine.high %v5461, %v5469
  %v5472 = vcombine.low %v4998, %v5005
  %v5474 = vunpack.c.l.s4 1983009808
  %v5475 = vunpack.c.0.s8 %v5474
  %v5476 = vlaneseq
  %v5477 = vshrl.u32 %v5476, 7
  %v5478 = vsub.s32 %v5475, %v5477
  %v5479 = vrot.slane %v5472, %v5478
  %v5480 = vcombine.low %v5022, %v5023
  %v5482 = vunpack.c.l.s4 1983009808
  %v5483 = vunpack.c.0.s8 %v5482
  %v5484 = vlaneseq
  %v5485 = vshrl.u32 %v5484, 7
  %v5486 = vsub.s32 %v5483, %v5485
  %v5487 = vrot.slane %v5480, %v5486
  %v5488 = vcombine.low %v5014, %v5021
  %v5490 = vunpack.c.l.s4 1983009808
  %v5491 = vunpack.c.0.s8 %v5490
  %v5492 = vlaneseq
  %v5493 = vshrl.u32 %v5492, 7
  %v5494 = vsub.s32 %v5491, %v5493
  %v5495 = vrot.slane %v5488, %v5494
  %v5496 = vcombine.low %v5024, %v5025
  %v5498 = vunpack.c.l.s4 1983009808
  %v5499 = vunpack.c.0.s8 %v5498
  %v5500 = vlaneseq
  %v5501 = vshrl.u32 %v5500, 7
  %v5502 = vsub.s32 %v5499, %v5501
  %v5503 = vrot.slane %v5496, %v5502
  %v5504 = vcombine.low %v5479, %v5487
  %v5506 = vunpack.c.l.s4 1934713408
  %v5507 = vunpack.c.0.s8 %v5506
  %v5508 = vlaneseq
  %v5509 = vshrl.u32 %v5508, 7
  %v5510 = vsub.s32 %v5507, %v5509
  %v5511 = vrot.slane %v5504, %v5510
  %v5512 = vcombine.low %v5495, %v5503
  %v5514 = vunpack.c.l.s4 1934713408
  %v5515 = vunpack.c.0.s8 %v5514
  %v5516 = vlaneseq
  %v5517 = vshrl.u32 %v5516, 7
  %v5518 = vsub.s32 %v5515, %v5517
  %v5519 = vrot.slane %v5512, %v5518
  %v5520 = vcombine.low %v5511, %v5519
  %v5521 = vcombine.high %v5511, %v5519
  %v5522 = vcombine.low %v5064, %v5071
  %v5524 = vunpack.c.l.s4 1983009808
  %v5525 = vunpack.c.0.s8 %v5524
  %v5526 = vlaneseq
  %v5527 = vshrl.u32 %v5526, 7
  %v5528 = vsub.s32 %v5525, %v5527
  %v5529 = vrot.slane %v5522, %v5528
  %v5530 = vcombine.low %v5088, %v5089
  %v5532 = vunpack.c.l.s4 1983009808
  %v5533 = vunpack.c.0.s8 %v5532
  %v5534 = vlaneseq
  %v5535 = vshrl.u32 %v5534, 7
  %v5536 = vsub.s32 %v5533, %v5535
  %v5537 = vrot.slane %v5530, %v5536
  %v5538 = vcombine.low %v5080, %v5087
  %v5540 = vunpack.c.l.s4 1983009808
  %v5541 = vunpack.c.0.s8 %v5540
  %v5542 = vlaneseq
  %v5543 = vshrl.u32 %v5542, 7
  %v5544 = vsub.s32 %v5541, %v5543
  %v5545 = vrot.slane %v5538, %v5544
  %v5546 = vcombine.low %v5090, %v5091
  %v5548 = vunpack.c.l.s4 1983009808
  %v5549 = vunpack.c.0.s8 %v5548
  %v5550 = vlaneseq
  %v5551 = vshrl.u32 %v5550, 7
  %v5552 = vsub.s32 %v5549, %v5551
  %v5553 = vrot.slane %v5546, %v5552
  %v5554 = vcombine.low %v5529, %v5537
  %v5556 = vunpack.c.l.s4 1934713408
  %v5557 = vunpack.c.0.s8 %v5556
  %v5558 = vlaneseq
  %v5559 = vshrl.u32 %v5558, 7
  %v5560 = vsub.s32 %v5557, %v5559
  %v5561 = vrot.slane %v5554, %v5560
  %v5562 = vcombine.low %v5545, %v5553
  %v5564 = vunpack.c.l.s4 1934713408
  %v5565 = vunpack.c.0.s8 %v5564
  %v5566 = vlaneseq
  %v5567 = vshrl.u32 %v5566, 7
  %v5568 = vsub.s32 %v5565, %v5567
  %v5569 = vrot.slane %v5562, %v5568
  %v5570 = vcombine.low %v5561, %v5569
  %v5571 = vcombine.high %v5561, %v5569
  %v5572 = vcombine.low %v5130, %v5137
  %v5574 = vunpack.c.l.s4 1983009808
  %v5575 = vunpack.c.0.s8 %v5574
  %v5576 = vlaneseq
  %v5577 = vshrl.u32 %v5576, 7
  %v5578 = vsub.s32 %v5575, %v5577
  %v5579 = vrot.slane %v5572, %v5578
  %v5580 = vcombine.low %v5154, %v5155
  %v5582 = vunpack.c.l.s4 1983009808
  %v5583 = vunpack.c.0.s8 %v5582
  %v5584 = vlaneseq
  %v5585 = vshrl.u32 %v5584, 7
  %v5586 = vsub.s32 %v5583, %v5585
  %v5587 = vrot.slane %v5580, %v5586
  %v5588 = vcombine.low %v5146, %v5153
  %v5590 = vunpack.c.l.s4 1983009808
  %v5591 = vunpack.c.0.s8 %v5590
  %v5592 = vlaneseq
  %v5593 = vshrl.u32 %v5592, 7
  %v5594 = vsub.s32 %v5591, %v5593
  %v5595 = vrot.slane %v5588, %v5594
  %v5596 = vcombine.low %v5156, %v5157
  %v5598 = vunpack.c.l.s4 1983009808
  %v5599 = vunpack.c.0.s8 %v5598
  %v5600 = vlaneseq
  %v5601 = vshrl.u32 %v5600, 7
  %v5602 = vsub.s32 %v5599, %v5601
  %v5603 = vrot.slane %v5596, %v5602
  %v5604 = vcombine.low %v5579, %v5587
  %v5606 = vunpack.c.l.s4 1934713408
  %v5607 = vunpack.c.0.s8 %v5606
  %v5608 = vlaneseq
  %v5609 = vshrl.u32 %v5608, 7
  %v5610 = vsub.s32 %v5607, %v5609
  %v5611 = vrot.slane %v5604, %v5610
  %v5612 = vcombine.low %v5595, %v5603
  %v5614 = vunpack.c.l.s4 1934713408
  %v5615 = vunpack.c.0.s8 %v5614
  %v5616 = vlaneseq
  %v5617 = vshrl.u32 %v5616, 7
  %v5618 = vsub.s32 %v5615, %v5617
  %v5619 = vrot.slane %v5612, %v5618
  %v5620 = vcombine.low %v5611, %v5619
  %v5621 = vcombine.high %v5611, %v5619
  %v5622 = vcombine.low %v5196, %v5203
  %v5624 = vunpack.c.l.s4 1983009808
  %v5625 = vunpack.c.0.s8 %v5624
  %v5626 = vlaneseq
  %v5627 = vshrl.u32 %v5626, 7
  %v5628 = vsub.s32 %v5625, %v5627
  %v5629 = vrot.slane %v5622, %v5628
  %v5630 = vcombine.low %v5220, %v5221
  %v5632 = vunpack.c.l.s4 1983009808
  %v5633 = vunpack.c.0.s8 %v5632
  %v5634 = vlaneseq
  %v5635 = vshrl.u32 %v5634, 7
  %v5636 = vsub.s32 %v5633, %v5635
  %v5637 = vrot.slane %v5630, %v5636
  %v5638 = vcombine.low %v5212, %v5219
  %v5640 = vunpack.c.l.s4 1983009808
  %v5641 = vunpack.c.0.s8 %v5640
  %v5642 = vlaneseq
  %v5643 = vshrl.u32 %v5642, 7
  %v5644 = vsub.s32 %v5641, %v5643
  %v5645 = vrot.slane %v5638, %v5644
  %v5646 = vcombine.low %v5222, %v5223
  %v5648 = vunpack.c.l.s4 1983009808
  %v5649 = vunpack.c.0.s8 %v5648
  %v5650 = vlaneseq
  %v5651 = vshrl.u32 %v5650, 7
  %v5652 = vsub.s32 %v5649, %v5651
  %v5653 = vrot.slane %v5646, %v5652
  %v5654 = vcombine.low %v5629, %v5637
  %v5656 = vunpack.c.l.s4 1934713408
  %v5657 = vunpack.c.0.s8 %v5656
  %v5658 = vlaneseq
  %v5659 = vshrl.u32 %v5658, 7
  %v5660 = vsub.s32 %v5657, %v5659
  %v5661 = vrot.slane %v5654, %v5660
  %v5662 = vcombine.low %v5645, %v5653
  %v5664 = vunpack.c.l.s4 1934713408
  %v5665 = vunpack.c.0.s8 %v5664
  %v5666 = vlaneseq
  %v5667 = vshrl.u32 %v5666, 7
  %v5668 = vsub.s32 %v5665, %v5667
  %v5669 = vrot.slane %v5662, %v5668
  %v5670 = vcombine.low %v5661, %v5669
  %v5671 = vcombine.high %v5661, %v5669
  %v5672 = vcombine.low %v5262, %v5269
  %v5674 = vunpack.c.l.s4 1983009808
  %v5675 = vunpack.c.0.s8 %v5674
  %v5676 = vlaneseq
  %v5677 = vshrl.u32 %v5676, 7
  %v5678 = vsub.s32 %v5675, %v5677
  %v5679 = vrot.slane %v5672, %v5678
  %v5680 = vcombine.low %v5286, %v5287
  %v5682 = vunpack.c.l.s4 1983009808
  %v5683 = vunpack.c.0.s8 %v5682
  %v5684 = vlaneseq
  %v5685 = vshrl.u32 %v5684, 7
  %v5686 = vsub.s32 %v5683, %v5685
  %v5687 = vrot.slane %v5680, %v5686
  %v5688 = vcombine.low %v5278, %v5285
  %v5690 = vunpack.c.l.s4 1983009808
  %v5691 = vunpack.c.0.s8 %v5690
  %v5692 = vlaneseq
  %v5693 = vshrl.u32 %v5692, 7
  %v5694 = vsub.s32 %v5691, %v5693
  %v5695 = vrot.slane %v5688, %v5694
  %v5696 = vcombine.low %v5288, %v5289
  %v5698 = vunpack.c.l.s4 1983009808
  %v5699 = vunpack.c.0.s8 %v5698
  %v5700 = vlaneseq
  %v5701 = vshrl.u32 %v5700, 7
  %v5702 = vsub.s32 %v5699, %v5701
  %v5703 = vrot.slane %v5696, %v5702
  %v5704 = vcombine.low %v5679, %v5687
  %v5706 = vunpack.c.l.s4 1934713408
  %v5707 = vunpack.c.0.s8 %v5706
  %v5708 = vlaneseq
  %v5709 = vshrl.u32 %v5708, 7
  %v5710 = vsub.s32 %v5707, %v5709
  %v5711 = vrot.slane %v5704, %v5710
  %v5712 = vcombine.low %v5695, %v5703
  %v5714 = vunpack.c.l.s4 1934713408
  %v5715 = vunpack.c.0.s8 %v5714
  %v5716 = vlaneseq
  %v5717 = vshrl.u32 %v5716, 7
  %v5718 = vsub.s32 %v5715, %v5717
  %v5719 = vrot.slane %v5712, %v5718
  %v5720 = vcombine.low %v5711, %v5719
  %v5721 = vcombine.high %v5711, %v5719
  %v5722 = vcombine.low %v5328, %v5335
  %v5724 = vunpack.c.l.s4 1983009808
  %v5725 = vunpack.c.0.s8 %v5724
  %v5726 = vlaneseq
  %v5727 = vshrl.u32 %v5726, 7
  %v5728 = vsub.s32 %v5725, %v5727
  %v5729 = vrot.slane %v5722, %v5728
  %v5730 = vcombine.low %v5352, %v5353
  %v5732 = vunpack.c.l.s4 1983009808
  %v5733 = vunpack.c.0.s8 %v5732
  %v5734 = vlaneseq
  %v5735 = vshrl.u32 %v5734, 7
  %v5736 = vsub.s32 %v5733, %v5735
  %v5737 = vrot.slane %v5730, %v5736
  %v5738 = vcombine.low %v5344, %v5351
  %v5740 = vunpack.c.l.s4 1983009808
  %v5741 = vunpack.c.0.s8 %v5740
  %v5742 = vlaneseq
  %v5743 = vshrl.u32 %v5742, 7
  %v5744 = vsub.s32 %v5741, %v5743
  %v5745 = vrot.slane %v5738, %v5744
  %v5746 = vcombine.low %v5354, %v5355
  %v5748 = vunpack.c.l.s4 1983009808
  %v5749 = vunpack.c.0.s8 %v5748
  %v5750 = vlaneseq
  %v5751 = vshrl.u32 %v5750, 7
  %v5752 = vsub.s32 %v5749, %v5751
  %v5753 = vrot.slane %v5746, %v5752
  %v5754 = vcombine.low %v5729, %v5737
  %v5756 = vunpack.c.l.s4 1934713408
  %v5757 = vunpack.c.0.s8 %v5756
  %v5758 = vlaneseq
  %v5759 = vshrl.u32 %v5758, 7
  %v5760 = vsub.s32 %v5757, %v5759
  %v5761 = vrot.slane %v5754, %v5760
  %v5762 = vcombine.low %v5745, %v5753
  %v5764 = vunpack.c.l.s4 1934713408
  %v5765 = vunpack.c.0.s8 %v5764
  %v5766 = vlaneseq
  %v5767 = vshrl.u32 %v5766, 7
  %v5768 = vsub.s32 %v5765, %v5767
  %v5769 = vrot.slane %v5762, %v5768
  %v5770 = vcombine.low %v5761, %v5769
  %v5771 = vcombine.high %v5761, %v5769
  %v5772 = vcombine.low %v5394, %v5401
  %v5774 = vunpack.c.l.s4 1983009808
  %v5775 = vunpack.c.0.s8 %v5774
  %v5776 = vlaneseq
  %v5777 = vshrl.u32 %v5776, 7
  %v5778 = vsub.s32 %v5775, %v5777
  %v5779 = vrot.slane %v5772, %v5778
  %v5780 = vcombine.low %v5418, %v5419
  %v5782 = vunpack.c.l.s4 1983009808
  %v5783 = vunpack.c.0.s8 %v5782
  %v5784 = vlaneseq
  %v5785 = vshrl.u32 %v5784, 7
  %v5786 = vsub.s32 %v5783, %v5785
  %v5787 = vrot.slane %v5780, %v5786
  %v5788 = vcombine.low %v5410, %v5417
  %v5790 = vunpack.c.l.s4 1983009808
  %v5791 = vunpack.c.0.s8 %v5790
  %v5792 = vlaneseq
  %v5793 = vshrl.u32 %v5792, 7
  %v5794 = vsub.s32 %v5791, %v5793
  %v5795 = vrot.slane %v5788, %v5794
  %v5796 = vcombine.low %v5420, %v5421
  %v5798 = vunpack.c.l.s4 1983009808
  %v5799 = vunpack.c.0.s8 %v5798
  %v5800 = vlaneseq
  %v5801 = vshrl.u32 %v5800, 7
  %v5802 = vsub.s32 %v5799, %v5801
  %v5803 = vrot.slane %v5796, %v5802
  %v5804 = vcombine.low %v5779, %v5787
  %v5806 = vunpack.c.l.s4 1934713408
  %v5807 = vunpack.c.0.s8 %v5806
  %v5808 = vlaneseq
  %v5809 = vshrl.u32 %v5808, 7
  %v5810 = vsub.s32 %v5807, %v5809
  %v5811 = vrot.slane %v5804, %v5810
  %v5812 = vcombine.low %v5795, %v5803
  %v5814 = vunpack.c.l.s4 1934713408
  %v5815 = vunpack.c.0.s8 %v5814
  %v5816 = vlaneseq
  %v5817 = vshrl.u32 %v5816, 7
  %v5818 = vsub.s32 %v5815, %v5817
  %v5819 = vrot.slane %v5812, %v5818
  %v5820 = vcombine.low %v5811, %v5819
  %v5821 = vcombine.high %v5811, %v5819
  %v5822 = vpack.c.bf16 %v5470, %v5470
  %v5823 = vpack.c.bf16 %v5471, %v5471
  %v5824 = vpack.c.bf16 %v5520, %v5520
  %v5825 = vpack.c.bf16 %v5521, %v5521
  %v5826 = vpack.c.bf16 %v5570, %v5570
  %v5827 = vpack.c.bf16 %v5571, %v5571
  %v5828 = vpack.c.bf16 %v5620, %v5620
  %v5829 = vpack.c.bf16 %v5621, %v5621
  %v5830 = vpack.c.bf16 %v5670, %v5670
  %v5831 = vpack.c.bf16 %v5671, %v5671
  %v5832 = vpack.c.bf16 %v5720, %v5720
  %v5833 = vpack.c.bf16 %v5721, %v5721
  %v5834 = vpack.c.bf16 %v5770, %v5770
  %v5835 = vpack.c.bf16 %v5771, %v5771
  %v5836 = vpack.c.bf16 %v5820, %v5820
  %v5837 = vpack.c.bf16 %v5821, %v5821
  %5839 = vrot.lane.b32.xlu0 %v5822, 112
  %v5840 = vpop.permute.xlu0 %5839
  %v5842 = vsel %vm1382, %v5822, 0
  %v5845 = vsel %vm1382, %v5840, 0
  %5847 = vmatprep.subr.bf16.mxu0 0
  %5848 = vmatpush1.bf16.xpose.msra.mxu0 %v5845
  %5849 = vmatprep.subr.bf16.mxu0 0
  %5850 = vmatpush1.bf16.xpose.msra.mxu0 0
  %5851 = vmatprep.subr.bf16.mxu0 0
  %5852 = vmatpush1.bf16.xpose.msra.mxu0 0
  %5853 = vmatprep.subr.bf16.mxu0 0
  %5854 = vmatpush1.bf16.xpose.msra.mxu0 0
  %5855 = vmatprep.subr.bf16.mxu0 0
  %5856 = vmatpush1.bf16.xpose.msra.mxu0 0
  %5857 = vmatprep.subr.bf16.mxu0 0
  %5858 = vmatpush1.bf16.xpose.msra.mxu0 0
  %5859 = vmatprep.subr.bf16.mxu0 0
  %5860 = vmatpush1.bf16.xpose.msra.mxu0 0
  %5861 = vmatprep.subr.bf16.mxu0 0
  %5862 = vmatpush1.bf16.xpose.msra.mxu0 0
  %5863 = vmatprep.subr.bf16.mxu0 0
  %5864 = vmatpush1.bf16.xpose.msra.mxu0 0
  %5865 = vmatprep.subr.bf16.mxu0 0
  %5866 = vmatpush1.bf16.xpose.msra.mxu0 0
  %5867 = vmatprep.subr.bf16.mxu0 0
  %5868 = vmatpush1.bf16.xpose.msra.mxu0 0
  %5869 = vmatprep.subr.bf16.mxu0 0
  %5870 = vmatpush1.bf16.xpose.msra.mxu0 0
  %5871 = vmatprep.subr.bf16.mxu0 0
  %5872 = vmatpush1.bf16.xpose.msra.mxu0 0
  %5873 = vmatprep.subr.bf16.mxu0 0
  %5874 = vmatpush1.bf16.xpose.msra.mxu0 0
  %5875 = vmatprep.subr.bf16.mxu0 0
  %5876 = vmatpush1.bf16.xpose.msra.mxu0 0
  %5877 = vmatprep.subr.bf16.mxu0 0
  %5878 = vmatpush1.bf16.xpose.msra.mxu0 0
  %5879 = vmatprep.mubr.bf16.mxu0 0
  %5880 = vmatmul.mubr.bf16.gmra.mrb[0].mxu0 %v5842
  %v5881 = vpop.f32.mrb[0].mxu0
  %v5882 = vadd.f32 %v1302, %v5881
  %v5883 = vpop.f32.mrb[0].mxu0
  %v5884 = vpop.f32.mrb[0].mxu0
  %v5885 = vpop.f32.mrb[0].mxu0
  %5886 = vdwg.mxu0
  %5888 = vrot.lane.b32.xlu0 %v5823, 112
  %v5889 = vpop.permute.xlu0 %5888
  %v5891 = vsel %vm1382, %v5823, 0
  %v5894 = vsel %vm1382, %v5889, 0
  %5896 = vmatprep.subr.bf16.mxu0 0
  %5897 = vmatpush1.bf16.xpose.msra.mxu0 %v5894
  %5898 = vmatprep.subr.bf16.mxu0 0
  %5899 = vmatpush1.bf16.xpose.msra.mxu0 0
  %5900 = vmatprep.subr.bf16.mxu0 0
  %5901 = vmatpush1.bf16.xpose.msra.mxu0 0
  %5902 = vmatprep.subr.bf16.mxu0 0
  %5903 = vmatpush1.bf16.xpose.msra.mxu0 0
  %5904 = vmatprep.subr.bf16.mxu0 0
  %5905 = vmatpush1.bf16.xpose.msra.mxu0 0
  %5906 = vmatprep.subr.bf16.mxu0 0
  %5907 = vmatpush1.bf16.xpose.msra.mxu0 0
  %5908 = vmatprep.subr.bf16.mxu0 0
  %5909 = vmatpush1.bf16.xpose.msra.mxu0 0
  %5910 = vmatprep.subr.bf16.mxu0 0
  %5911 = vmatpush1.bf16.xpose.msra.mxu0 0
  %5912 = vmatprep.subr.bf16.mxu0 0
  %5913 = vmatpush1.bf16.xpose.msra.mxu0 0
  %5914 = vmatprep.subr.bf16.mxu0 0
  %5915 = vmatpush1.bf16.xpose.msra.mxu0 0
  %5916 = vmatprep.subr.bf16.mxu0 0
  %5917 = vmatpush1.bf16.xpose.msra.mxu0 0
  %5918 = vmatprep.subr.bf16.mxu0 0
  %5919 = vmatpush1.bf16.xpose.msra.mxu0 0
  %5920 = vmatprep.subr.bf16.mxu0 0
  %5921 = vmatpush1.bf16.xpose.msra.mxu0 0
  %5922 = vmatprep.subr.bf16.mxu0 0
  %5923 = vmatpush1.bf16.xpose.msra.mxu0 0
  %5924 = vmatprep.subr.bf16.mxu0 0
  %5925 = vmatpush1.bf16.xpose.msra.mxu0 0
  %5926 = vmatprep.subr.bf16.mxu0 0
  %5927 = vmatpush1.bf16.xpose.msra.mxu0 0
  %5928 = vmatprep.mubr.bf16.mxu0 0
  %5929 = vmatmul.mubr.bf16.gmra.mrb[0].mxu0 %v5891
  %v5930 = vpop.f32.mrb[0].mxu0
  %v5931 = vadd.f32 %v1306, %v5930
  %v5932 = vpop.f32.mrb[0].mxu0
  %v5933 = vpop.f32.mrb[0].mxu0
  %v5934 = vpop.f32.mrb[0].mxu0
  %5935 = vdwg.mxu0
  %5937 = vrot.lane.b32.xlu0 %v5824, 112
  %v5938 = vpop.permute.xlu0 %5937
  %v5940 = vsel %vm1382, %v5824, 0
  %v5943 = vsel %vm1382, %v5938, 0
  %5945 = vmatprep.subr.bf16.mxu0 0
  %5946 = vmatpush1.bf16.xpose.msra.mxu0 %v5943
  %5947 = vmatprep.subr.bf16.mxu0 0
  %5948 = vmatpush1.bf16.xpose.msra.mxu0 0
  %5949 = vmatprep.subr.bf16.mxu0 0
  %5950 = vmatpush1.bf16.xpose.msra.mxu0 0
  %5951 = vmatprep.subr.bf16.mxu0 0
  %5952 = vmatpush1.bf16.xpose.msra.mxu0 0
  %5953 = vmatprep.subr.bf16.mxu0 0
  %5954 = vmatpush1.bf16.xpose.msra.mxu0 0
  %5955 = vmatprep.subr.bf16.mxu0 0
  %5956 = vmatpush1.bf16.xpose.msra.mxu0 0
  %5957 = vmatprep.subr.bf16.mxu0 0
  %5958 = vmatpush1.bf16.xpose.msra.mxu0 0
  %5959 = vmatprep.subr.bf16.mxu0 0
  %5960 = vmatpush1.bf16.xpose.msra.mxu0 0
  %5961 = vmatprep.subr.bf16.mxu0 0
  %5962 = vmatpush1.bf16.xpose.msra.mxu0 0
  %5963 = vmatprep.subr.bf16.mxu0 0
  %5964 = vmatpush1.bf16.xpose.msra.mxu0 0
  %5965 = vmatprep.subr.bf16.mxu0 0
  %5966 = vmatpush1.bf16.xpose.msra.mxu0 0
  %5967 = vmatprep.subr.bf16.mxu0 0
  %5968 = vmatpush1.bf16.xpose.msra.mxu0 0
  %5969 = vmatprep.subr.bf16.mxu0 0
  %5970 = vmatpush1.bf16.xpose.msra.mxu0 0
  %5971 = vmatprep.subr.bf16.mxu0 0
  %5972 = vmatpush1.bf16.xpose.msra.mxu0 0
  %5973 = vmatprep.subr.bf16.mxu0 0
  %5974 = vmatpush1.bf16.xpose.msra.mxu0 0
  %5975 = vmatprep.subr.bf16.mxu0 0
  %5976 = vmatpush1.bf16.xpose.msra.mxu0 0
  %5977 = vmatprep.mubr.bf16.mxu0 0
  %5978 = vmatmul.mubr.bf16.gmra.mrb[0].mxu0 %v5940
  %v5979 = vpop.f32.mrb[0].mxu0
  %v5980 = vadd.f32 %v1310, %v5979
  %v5981 = vpop.f32.mrb[0].mxu0
  %v5982 = vpop.f32.mrb[0].mxu0
  %v5983 = vpop.f32.mrb[0].mxu0
  %5984 = vdwg.mxu0
  %5986 = vrot.lane.b32.xlu0 %v5825, 112
  %v5987 = vpop.permute.xlu0 %5986
  %v5989 = vsel %vm1382, %v5825, 0
  %v5992 = vsel %vm1382, %v5987, 0
  %5994 = vmatprep.subr.bf16.mxu0 0
  %5995 = vmatpush1.bf16.xpose.msra.mxu0 %v5992
  %5996 = vmatprep.subr.bf16.mxu0 0
  %5997 = vmatpush1.bf16.xpose.msra.mxu0 0
  %5998 = vmatprep.subr.bf16.mxu0 0
  %5999 = vmatpush1.bf16.xpose.msra.mxu0 0
  %6000 = vmatprep.subr.bf16.mxu0 0
  %6001 = vmatpush1.bf16.xpose.msra.mxu0 0
  %6002 = vmatprep.subr.bf16.mxu0 0
  %6003 = vmatpush1.bf16.xpose.msra.mxu0 0
  %6004 = vmatprep.subr.bf16.mxu0 0
  %6005 = vmatpush1.bf16.xpose.msra.mxu0 0
  %6006 = vmatprep.subr.bf16.mxu0 0
  %6007 = vmatpush1.bf16.xpose.msra.mxu0 0
  %6008 = vmatprep.subr.bf16.mxu0 0
  %6009 = vmatpush1.bf16.xpose.msra.mxu0 0
  %6010 = vmatprep.subr.bf16.mxu0 0
  %6011 = vmatpush1.bf16.xpose.msra.mxu0 0
  %6012 = vmatprep.subr.bf16.mxu0 0
  %6013 = vmatpush1.bf16.xpose.msra.mxu0 0
  %6014 = vmatprep.subr.bf16.mxu0 0
  %6015 = vmatpush1.bf16.xpose.msra.mxu0 0
  %6016 = vmatprep.subr.bf16.mxu0 0
  %6017 = vmatpush1.bf16.xpose.msra.mxu0 0
  %6018 = vmatprep.subr.bf16.mxu0 0
  %6019 = vmatpush1.bf16.xpose.msra.mxu0 0
  %6020 = vmatprep.subr.bf16.mxu0 0
  %6021 = vmatpush1.bf16.xpose.msra.mxu0 0
  %6022 = vmatprep.subr.bf16.mxu0 0
  %6023 = vmatpush1.bf16.xpose.msra.mxu0 0
  %6024 = vmatprep.subr.bf16.mxu0 0
  %6025 = vmatpush1.bf16.xpose.msra.mxu0 0
  %6026 = vmatprep.mubr.bf16.mxu0 0
  %6027 = vmatmul.mubr.bf16.gmra.mrb[0].mxu0 %v5989
  %v6028 = vpop.f32.mrb[0].mxu0
  %v6029 = vadd.f32 %v1314, %v6028
  %v6030 = vpop.f32.mrb[0].mxu0
  %v6031 = vpop.f32.mrb[0].mxu0
  %v6032 = vpop.f32.mrb[0].mxu0
  %6033 = vdwg.mxu0
  %6035 = vrot.lane.b32.xlu0 %v5826, 112
  %v6036 = vpop.permute.xlu0 %6035
  %v6038 = vsel %vm1382, %v5826, 0
  %v6041 = vsel %vm1382, %v6036, 0
  %6043 = vmatprep.subr.bf16.mxu0 0
  %6044 = vmatpush1.bf16.xpose.msra.mxu0 %v6041
  %6045 = vmatprep.subr.bf16.mxu0 0
  %6046 = vmatpush1.bf16.xpose.msra.mxu0 0
  %6047 = vmatprep.subr.bf16.mxu0 0
  %6048 = vmatpush1.bf16.xpose.msra.mxu0 0
  %6049 = vmatprep.subr.bf16.mxu0 0
  %6050 = vmatpush1.bf16.xpose.msra.mxu0 0
  %6051 = vmatprep.subr.bf16.mxu0 0
  %6052 = vmatpush1.bf16.xpose.msra.mxu0 0
  %6053 = vmatprep.subr.bf16.mxu0 0
  %6054 = vmatpush1.bf16.xpose.msra.mxu0 0
  %6055 = vmatprep.subr.bf16.mxu0 0
  %6056 = vmatpush1.bf16.xpose.msra.mxu0 0
  %6057 = vmatprep.subr.bf16.mxu0 0
  %6058 = vmatpush1.bf16.xpose.msra.mxu0 0
  %6059 = vmatprep.subr.bf16.mxu0 0
  %6060 = vmatpush1.bf16.xpose.msra.mxu0 0
  %6061 = vmatprep.subr.bf16.mxu0 0
  %6062 = vmatpush1.bf16.xpose.msra.mxu0 0
  %6063 = vmatprep.subr.bf16.mxu0 0
  %6064 = vmatpush1.bf16.xpose.msra.mxu0 0
  %6065 = vmatprep.subr.bf16.mxu0 0
  %6066 = vmatpush1.bf16.xpose.msra.mxu0 0
  %6067 = vmatprep.subr.bf16.mxu0 0
  %6068 = vmatpush1.bf16.xpose.msra.mxu0 0
  %6069 = vmatprep.subr.bf16.mxu0 0
  %6070 = vmatpush1.bf16.xpose.msra.mxu0 0
  %6071 = vmatprep.subr.bf16.mxu0 0
  %6072 = vmatpush1.bf16.xpose.msra.mxu0 0
  %6073 = vmatprep.subr.bf16.mxu0 0
  %6074 = vmatpush1.bf16.xpose.msra.mxu0 0
  %6075 = vmatprep.mubr.bf16.mxu0 0
  %6076 = vmatmul.mubr.bf16.gmra.mrb[0].mxu0 %v6038
  %v6077 = vpop.f32.mrb[0].mxu0
  %v6078 = vadd.f32 %v1318, %v6077
  %v6079 = vpop.f32.mrb[0].mxu0
  %v6080 = vpop.f32.mrb[0].mxu0
  %v6081 = vpop.f32.mrb[0].mxu0
  %6082 = vdwg.mxu0
  %6084 = vrot.lane.b32.xlu0 %v5827, 112
  %v6085 = vpop.permute.xlu0 %6084
  %v6087 = vsel %vm1382, %v5827, 0
  %v6090 = vsel %vm1382, %v6085, 0
  %6092 = vmatprep.subr.bf16.mxu0 0
  %6093 = vmatpush1.bf16.xpose.msra.mxu0 %v6090
  %6094 = vmatprep.subr.bf16.mxu0 0
  %6095 = vmatpush1.bf16.xpose.msra.mxu0 0
  %6096 = vmatprep.subr.bf16.mxu0 0
  %6097 = vmatpush1.bf16.xpose.msra.mxu0 0
  %6098 = vmatprep.subr.bf16.mxu0 0
  %6099 = vmatpush1.bf16.xpose.msra.mxu0 0
  %6100 = vmatprep.subr.bf16.mxu0 0
  %6101 = vmatpush1.bf16.xpose.msra.mxu0 0
  %6102 = vmatprep.subr.bf16.mxu0 0
  %6103 = vmatpush1.bf16.xpose.msra.mxu0 0
  %6104 = vmatprep.subr.bf16.mxu0 0
  %6105 = vmatpush1.bf16.xpose.msra.mxu0 0
  %6106 = vmatprep.subr.bf16.mxu0 0
  %6107 = vmatpush1.bf16.xpose.msra.mxu0 0
  %6108 = vmatprep.subr.bf16.mxu0 0
  %6109 = vmatpush1.bf16.xpose.msra.mxu0 0
  %6110 = vmatprep.subr.bf16.mxu0 0
  %6111 = vmatpush1.bf16.xpose.msra.mxu0 0
  %6112 = vmatprep.subr.bf16.mxu0 0
  %6113 = vmatpush1.bf16.xpose.msra.mxu0 0
  %6114 = vmatprep.subr.bf16.mxu0 0
  %6115 = vmatpush1.bf16.xpose.msra.mxu0 0
  %6116 = vmatprep.subr.bf16.mxu0 0
  %6117 = vmatpush1.bf16.xpose.msra.mxu0 0
  %6118 = vmatprep.subr.bf16.mxu0 0
  %6119 = vmatpush1.bf16.xpose.msra.mxu0 0
  %6120 = vmatprep.subr.bf16.mxu0 0
  %6121 = vmatpush1.bf16.xpose.msra.mxu0 0
  %6122 = vmatprep.subr.bf16.mxu0 0
  %6123 = vmatpush1.bf16.xpose.msra.mxu0 0
  %6124 = vmatprep.mubr.bf16.mxu0 0
  %6125 = vmatmul.mubr.bf16.gmra.mrb[0].mxu0 %v6087
  %v6126 = vpop.f32.mrb[0].mxu0
  %v6127 = vadd.f32 %v1322, %v6126
  %v6128 = vpop.f32.mrb[0].mxu0
  %v6129 = vpop.f32.mrb[0].mxu0
  %v6130 = vpop.f32.mrb[0].mxu0
  %6131 = vdwg.mxu0
  %6133 = vrot.lane.b32.xlu0 %v5828, 112
  %v6134 = vpop.permute.xlu0 %6133
  %v6136 = vsel %vm1382, %v5828, 0
  %v6139 = vsel %vm1382, %v6134, 0
  %6141 = vmatprep.subr.bf16.mxu0 0
  %6142 = vmatpush1.bf16.xpose.msra.mxu0 %v6139
  %6143 = vmatprep.subr.bf16.mxu0 0
  %6144 = vmatpush1.bf16.xpose.msra.mxu0 0
  %6145 = vmatprep.subr.bf16.mxu0 0
  %6146 = vmatpush1.bf16.xpose.msra.mxu0 0
  %6147 = vmatprep.subr.bf16.mxu0 0
  %6148 = vmatpush1.bf16.xpose.msra.mxu0 0
  %6149 = vmatprep.subr.bf16.mxu0 0
  %6150 = vmatpush1.bf16.xpose.msra.mxu0 0
  %6151 = vmatprep.subr.bf16.mxu0 0
  %6152 = vmatpush1.bf16.xpose.msra.mxu0 0
  %6153 = vmatprep.subr.bf16.mxu0 0
  %6154 = vmatpush1.bf16.xpose.msra.mxu0 0
  %6155 = vmatprep.subr.bf16.mxu0 0
  %6156 = vmatpush1.bf16.xpose.msra.mxu0 0
  %6157 = vmatprep.subr.bf16.mxu0 0
  %6158 = vmatpush1.bf16.xpose.msra.mxu0 0
  %6159 = vmatprep.subr.bf16.mxu0 0
  %6160 = vmatpush1.bf16.xpose.msra.mxu0 0
  %6161 = vmatprep.subr.bf16.mxu0 0
  %6162 = vmatpush1.bf16.xpose.msra.mxu0 0
  %6163 = vmatprep.subr.bf16.mxu0 0
  %6164 = vmatpush1.bf16.xpose.msra.mxu0 0
  %6165 = vmatprep.subr.bf16.mxu0 0
  %6166 = vmatpush1.bf16.xpose.msra.mxu0 0
  %6167 = vmatprep.subr.bf16.mxu0 0
  %6168 = vmatpush1.bf16.xpose.msra.mxu0 0
  %6169 = vmatprep.subr.bf16.mxu0 0
  %6170 = vmatpush1.bf16.xpose.msra.mxu0 0
  %6171 = vmatprep.subr.bf16.mxu0 0
  %6172 = vmatpush1.bf16.xpose.msra.mxu0 0
  %6173 = vmatprep.mubr.bf16.mxu0 0
  %6174 = vmatmul.mubr.bf16.gmra.mrb[0].mxu0 %v6136
  %v6175 = vpop.f32.mrb[0].mxu0
  %v6176 = vadd.f32 %v1326, %v6175
  %v6177 = vpop.f32.mrb[0].mxu0
  %v6178 = vpop.f32.mrb[0].mxu0
  %v6179 = vpop.f32.mrb[0].mxu0
  %6180 = vdwg.mxu0
  %6182 = vrot.lane.b32.xlu0 %v5829, 112
  %v6183 = vpop.permute.xlu0 %6182
  %v6185 = vsel %vm1382, %v5829, 0
  %v6188 = vsel %vm1382, %v6183, 0
  %6190 = vmatprep.subr.bf16.mxu0 0
  %6191 = vmatpush1.bf16.xpose.msra.mxu0 %v6188
  %6192 = vmatprep.subr.bf16.mxu0 0
  %6193 = vmatpush1.bf16.xpose.msra.mxu0 0
  %6194 = vmatprep.subr.bf16.mxu0 0
  %6195 = vmatpush1.bf16.xpose.msra.mxu0 0
  %6196 = vmatprep.subr.bf16.mxu0 0
  %6197 = vmatpush1.bf16.xpose.msra.mxu0 0
  %6198 = vmatprep.subr.bf16.mxu0 0
  %6199 = vmatpush1.bf16.xpose.msra.mxu0 0
  %6200 = vmatprep.subr.bf16.mxu0 0
  %6201 = vmatpush1.bf16.xpose.msra.mxu0 0
  %6202 = vmatprep.subr.bf16.mxu0 0
  %6203 = vmatpush1.bf16.xpose.msra.mxu0 0
  %6204 = vmatprep.subr.bf16.mxu0 0
  %6205 = vmatpush1.bf16.xpose.msra.mxu0 0
  %6206 = vmatprep.subr.bf16.mxu0 0
  %6207 = vmatpush1.bf16.xpose.msra.mxu0 0
  %6208 = vmatprep.subr.bf16.mxu0 0
  %6209 = vmatpush1.bf16.xpose.msra.mxu0 0
  %6210 = vmatprep.subr.bf16.mxu0 0
  %6211 = vmatpush1.bf16.xpose.msra.mxu0 0
  %6212 = vmatprep.subr.bf16.mxu0 0
  %6213 = vmatpush1.bf16.xpose.msra.mxu0 0
  %6214 = vmatprep.subr.bf16.mxu0 0
  %6215 = vmatpush1.bf16.xpose.msra.mxu0 0
  %6216 = vmatprep.subr.bf16.mxu0 0
  %6217 = vmatpush1.bf16.xpose.msra.mxu0 0
  %6218 = vmatprep.subr.bf16.mxu0 0
  %6219 = vmatpush1.bf16.xpose.msra.mxu0 0
  %6220 = vmatprep.subr.bf16.mxu0 0
  %6221 = vmatpush1.bf16.xpose.msra.mxu0 0
  %6222 = vmatprep.mubr.bf16.mxu0 0
  %6223 = vmatmul.mubr.bf16.gmra.mrb[0].mxu0 %v6185
  %v6224 = vpop.f32.mrb[0].mxu0
  %v6225 = vadd.f32 %v1330, %v6224
  %v6226 = vpop.f32.mrb[0].mxu0
  %v6227 = vpop.f32.mrb[0].mxu0
  %v6228 = vpop.f32.mrb[0].mxu0
  %6229 = vdwg.mxu0
  %6231 = vrot.lane.b32.xlu0 %v5830, 112
  %v6232 = vpop.permute.xlu0 %6231
  %v6234 = vsel %vm1382, %v5830, 0
  %v6237 = vsel %vm1382, %v6232, 0
  %6239 = vmatprep.subr.bf16.mxu0 0
  %6240 = vmatpush1.bf16.xpose.msra.mxu0 %v6237
  %6241 = vmatprep.subr.bf16.mxu0 0
  %6242 = vmatpush1.bf16.xpose.msra.mxu0 0
  %6243 = vmatprep.subr.bf16.mxu0 0
  %6244 = vmatpush1.bf16.xpose.msra.mxu0 0
  %6245 = vmatprep.subr.bf16.mxu0 0
  %6246 = vmatpush1.bf16.xpose.msra.mxu0 0
  %6247 = vmatprep.subr.bf16.mxu0 0
  %6248 = vmatpush1.bf16.xpose.msra.mxu0 0
  %6249 = vmatprep.subr.bf16.mxu0 0
  %6250 = vmatpush1.bf16.xpose.msra.mxu0 0
  %6251 = vmatprep.subr.bf16.mxu0 0
  %6252 = vmatpush1.bf16.xpose.msra.mxu0 0
  %6253 = vmatprep.subr.bf16.mxu0 0
  %6254 = vmatpush1.bf16.xpose.msra.mxu0 0
  %6255 = vmatprep.subr.bf16.mxu0 0
  %6256 = vmatpush1.bf16.xpose.msra.mxu0 0
  %6257 = vmatprep.subr.bf16.mxu0 0
  %6258 = vmatpush1.bf16.xpose.msra.mxu0 0
  %6259 = vmatprep.subr.bf16.mxu0 0
  %6260 = vmatpush1.bf16.xpose.msra.mxu0 0
  %6261 = vmatprep.subr.bf16.mxu0 0
  %6262 = vmatpush1.bf16.xpose.msra.mxu0 0
  %6263 = vmatprep.subr.bf16.mxu0 0
  %6264 = vmatpush1.bf16.xpose.msra.mxu0 0
  %6265 = vmatprep.subr.bf16.mxu0 0
  %6266 = vmatpush1.bf16.xpose.msra.mxu0 0
  %6267 = vmatprep.subr.bf16.mxu0 0
  %6268 = vmatpush1.bf16.xpose.msra.mxu0 0
  %6269 = vmatprep.subr.bf16.mxu0 0
  %6270 = vmatpush1.bf16.xpose.msra.mxu0 0
  %6271 = vmatprep.mubr.bf16.mxu0 0
  %6272 = vmatmul.mubr.bf16.gmra.mrb[0].mxu0 %v6234
  %v6273 = vpop.f32.mrb[0].mxu0
  %v6274 = vadd.f32 %v1334, %v6273
  %v6275 = vpop.f32.mrb[0].mxu0
  %v6276 = vpop.f32.mrb[0].mxu0
  %v6277 = vpop.f32.mrb[0].mxu0
  %6278 = vdwg.mxu0
  %6280 = vrot.lane.b32.xlu0 %v5831, 112
  %v6281 = vpop.permute.xlu0 %6280
  %v6283 = vsel %vm1382, %v5831, 0
  %v6286 = vsel %vm1382, %v6281, 0
  %6288 = vmatprep.subr.bf16.mxu0 0
  %6289 = vmatpush1.bf16.xpose.msra.mxu0 %v6286
  %6290 = vmatprep.subr.bf16.mxu0 0
  %6291 = vmatpush1.bf16.xpose.msra.mxu0 0
  %6292 = vmatprep.subr.bf16.mxu0 0
  %6293 = vmatpush1.bf16.xpose.msra.mxu0 0
  %6294 = vmatprep.subr.bf16.mxu0 0
  %6295 = vmatpush1.bf16.xpose.msra.mxu0 0
  %6296 = vmatprep.subr.bf16.mxu0 0
  %6297 = vmatpush1.bf16.xpose.msra.mxu0 0
  %6298 = vmatprep.subr.bf16.mxu0 0
  %6299 = vmatpush1.bf16.xpose.msra.mxu0 0
  %6300 = vmatprep.subr.bf16.mxu0 0
  %6301 = vmatpush1.bf16.xpose.msra.mxu0 0
  %6302 = vmatprep.subr.bf16.mxu0 0
  %6303 = vmatpush1.bf16.xpose.msra.mxu0 0
  %6304 = vmatprep.subr.bf16.mxu0 0
  %6305 = vmatpush1.bf16.xpose.msra.mxu0 0
  %6306 = vmatprep.subr.bf16.mxu0 0
  %6307 = vmatpush1.bf16.xpose.msra.mxu0 0
  %6308 = vmatprep.subr.bf16.mxu0 0
  %6309 = vmatpush1.bf16.xpose.msra.mxu0 0
  %6310 = vmatprep.subr.bf16.mxu0 0
  %6311 = vmatpush1.bf16.xpose.msra.mxu0 0
  %6312 = vmatprep.subr.bf16.mxu0 0
  %6313 = vmatpush1.bf16.xpose.msra.mxu0 0
  %6314 = vmatprep.subr.bf16.mxu0 0
  %6315 = vmatpush1.bf16.xpose.msra.mxu0 0
  %6316 = vmatprep.subr.bf16.mxu0 0
  %6317 = vmatpush1.bf16.xpose.msra.mxu0 0
  %6318 = vmatprep.subr.bf16.mxu0 0
  %6319 = vmatpush1.bf16.xpose.msra.mxu0 0
  %6320 = vmatprep.mubr.bf16.mxu0 0
  %6321 = vmatmul.mubr.bf16.gmra.mrb[0].mxu0 %v6283
  %v6322 = vpop.f32.mrb[0].mxu0
  %v6323 = vadd.f32 %v1338, %v6322
  %v6324 = vpop.f32.mrb[0].mxu0
  %v6325 = vpop.f32.mrb[0].mxu0
  %v6326 = vpop.f32.mrb[0].mxu0
  %6327 = vdwg.mxu0
  %6329 = vrot.lane.b32.xlu0 %v5832, 112
  %v6330 = vpop.permute.xlu0 %6329
  %v6332 = vsel %vm1382, %v5832, 0
  %v6335 = vsel %vm1382, %v6330, 0
  %6337 = vmatprep.subr.bf16.mxu0 0
  %6338 = vmatpush1.bf16.xpose.msra.mxu0 %v6335
  %6339 = vmatprep.subr.bf16.mxu0 0
  %6340 = vmatpush1.bf16.xpose.msra.mxu0 0
  %6341 = vmatprep.subr.bf16.mxu0 0
  %6342 = vmatpush1.bf16.xpose.msra.mxu0 0
  %6343 = vmatprep.subr.bf16.mxu0 0
  %6344 = vmatpush1.bf16.xpose.msra.mxu0 0
  %6345 = vmatprep.subr.bf16.mxu0 0
  %6346 = vmatpush1.bf16.xpose.msra.mxu0 0
  %6347 = vmatprep.subr.bf16.mxu0 0
  %6348 = vmatpush1.bf16.xpose.msra.mxu0 0
  %6349 = vmatprep.subr.bf16.mxu0 0
  %6350 = vmatpush1.bf16.xpose.msra.mxu0 0
  %6351 = vmatprep.subr.bf16.mxu0 0
  %6352 = vmatpush1.bf16.xpose.msra.mxu0 0
  %6353 = vmatprep.subr.bf16.mxu0 0
  %6354 = vmatpush1.bf16.xpose.msra.mxu0 0
  %6355 = vmatprep.subr.bf16.mxu0 0
  %6356 = vmatpush1.bf16.xpose.msra.mxu0 0
  %6357 = vmatprep.subr.bf16.mxu0 0
  %6358 = vmatpush1.bf16.xpose.msra.mxu0 0
  %6359 = vmatprep.subr.bf16.mxu0 0
  %6360 = vmatpush1.bf16.xpose.msra.mxu0 0
  %6361 = vmatprep.subr.bf16.mxu0 0
  %6362 = vmatpush1.bf16.xpose.msra.mxu0 0
  %6363 = vmatprep.subr.bf16.mxu0 0
  %6364 = vmatpush1.bf16.xpose.msra.mxu0 0
  %6365 = vmatprep.subr.bf16.mxu0 0
  %6366 = vmatpush1.bf16.xpose.msra.mxu0 0
  %6367 = vmatprep.subr.bf16.mxu0 0
  %6368 = vmatpush1.bf16.xpose.msra.mxu0 0
  %6369 = vmatprep.mubr.bf16.mxu0 0
  %6370 = vmatmul.mubr.bf16.gmra.mrb[0].mxu0 %v6332
  %v6371 = vpop.f32.mrb[0].mxu0
  %v6372 = vadd.f32 %v1342, %v6371
  %v6373 = vpop.f32.mrb[0].mxu0
  %v6374 = vpop.f32.mrb[0].mxu0
  %v6375 = vpop.f32.mrb[0].mxu0
  %6376 = vdwg.mxu0
  %6378 = vrot.lane.b32.xlu0 %v5833, 112
  %v6379 = vpop.permute.xlu0 %6378
  %v6381 = vsel %vm1382, %v5833, 0
  %v6384 = vsel %vm1382, %v6379, 0
  %6386 = vmatprep.subr.bf16.mxu0 0
  %6387 = vmatpush1.bf16.xpose.msra.mxu0 %v6384
  %6388 = vmatprep.subr.bf16.mxu0 0
  %6389 = vmatpush1.bf16.xpose.msra.mxu0 0
  %6390 = vmatprep.subr.bf16.mxu0 0
  %6391 = vmatpush1.bf16.xpose.msra.mxu0 0
  %6392 = vmatprep.subr.bf16.mxu0 0
  %6393 = vmatpush1.bf16.xpose.msra.mxu0 0
  %6394 = vmatprep.subr.bf16.mxu0 0
  %6395 = vmatpush1.bf16.xpose.msra.mxu0 0
  %6396 = vmatprep.subr.bf16.mxu0 0
  %6397 = vmatpush1.bf16.xpose.msra.mxu0 0
  %6398 = vmatprep.subr.bf16.mxu0 0
  %6399 = vmatpush1.bf16.xpose.msra.mxu0 0
  %6400 = vmatprep.subr.bf16.mxu0 0
  %6401 = vmatpush1.bf16.xpose.msra.mxu0 0
  %6402 = vmatprep.subr.bf16.mxu0 0
  %6403 = vmatpush1.bf16.xpose.msra.mxu0 0
  %6404 = vmatprep.subr.bf16.mxu0 0
  %6405 = vmatpush1.bf16.xpose.msra.mxu0 0
  %6406 = vmatprep.subr.bf16.mxu0 0
  %6407 = vmatpush1.bf16.xpose.msra.mxu0 0
  %6408 = vmatprep.subr.bf16.mxu0 0
  %6409 = vmatpush1.bf16.xpose.msra.mxu0 0
  %6410 = vmatprep.subr.bf16.mxu0 0
  %6411 = vmatpush1.bf16.xpose.msra.mxu0 0
  %6412 = vmatprep.subr.bf16.mxu0 0
  %6413 = vmatpush1.bf16.xpose.msra.mxu0 0
  %6414 = vmatprep.subr.bf16.mxu0 0
  %6415 = vmatpush1.bf16.xpose.msra.mxu0 0
  %6416 = vmatprep.subr.bf16.mxu0 0
  %6417 = vmatpush1.bf16.xpose.msra.mxu0 0
  %6418 = vmatprep.mubr.bf16.mxu0 0
  %6419 = vmatmul.mubr.bf16.gmra.mrb[0].mxu0 %v6381
  %v6420 = vpop.f32.mrb[0].mxu0
  %v6421 = vadd.f32 %v1346, %v6420
  %v6422 = vpop.f32.mrb[0].mxu0
  %v6423 = vpop.f32.mrb[0].mxu0
  %v6424 = vpop.f32.mrb[0].mxu0
  %6425 = vdwg.mxu0
  %6427 = vrot.lane.b32.xlu0 %v5834, 112
  %v6428 = vpop.permute.xlu0 %6427
  %v6430 = vsel %vm1382, %v5834, 0
  %v6433 = vsel %vm1382, %v6428, 0
  %6435 = vmatprep.subr.bf16.mxu0 0
  %6436 = vmatpush1.bf16.xpose.msra.mxu0 %v6433
  %6437 = vmatprep.subr.bf16.mxu0 0
  %6438 = vmatpush1.bf16.xpose.msra.mxu0 0
  %6439 = vmatprep.subr.bf16.mxu0 0
  %6440 = vmatpush1.bf16.xpose.msra.mxu0 0
  %6441 = vmatprep.subr.bf16.mxu0 0
  %6442 = vmatpush1.bf16.xpose.msra.mxu0 0
  %6443 = vmatprep.subr.bf16.mxu0 0
  %6444 = vmatpush1.bf16.xpose.msra.mxu0 0
  %6445 = vmatprep.subr.bf16.mxu0 0
  %6446 = vmatpush1.bf16.xpose.msra.mxu0 0
  %6447 = vmatprep.subr.bf16.mxu0 0
  %6448 = vmatpush1.bf16.xpose.msra.mxu0 0
  %6449 = vmatprep.subr.bf16.mxu0 0
  %6450 = vmatpush1.bf16.xpose.msra.mxu0 0
  %6451 = vmatprep.subr.bf16.mxu0 0
  %6452 = vmatpush1.bf16.xpose.msra.mxu0 0
  %6453 = vmatprep.subr.bf16.mxu0 0
  %6454 = vmatpush1.bf16.xpose.msra.mxu0 0
  %6455 = vmatprep.subr.bf16.mxu0 0
  %6456 = vmatpush1.bf16.xpose.msra.mxu0 0
  %6457 = vmatprep.subr.bf16.mxu0 0
  %6458 = vmatpush1.bf16.xpose.msra.mxu0 0
  %6459 = vmatprep.subr.bf16.mxu0 0
  %6460 = vmatpush1.bf16.xpose.msra.mxu0 0
  %6461 = vmatprep.subr.bf16.mxu0 0
  %6462 = vmatpush1.bf16.xpose.msra.mxu0 0
  %6463 = vmatprep.subr.bf16.mxu0 0
  %6464 = vmatpush1.bf16.xpose.msra.mxu0 0
  %6465 = vmatprep.subr.bf16.mxu0 0
  %6466 = vmatpush1.bf16.xpose.msra.mxu0 0
  %6467 = vmatprep.mubr.bf16.mxu0 0
  %6468 = vmatmul.mubr.bf16.gmra.mrb[0].mxu0 %v6430
  %v6469 = vpop.f32.mrb[0].mxu0
  %v6470 = vadd.f32 %v1350, %v6469
  %v6471 = vpop.f32.mrb[0].mxu0
  %v6472 = vpop.f32.mrb[0].mxu0
  %v6473 = vpop.f32.mrb[0].mxu0
  %6474 = vdwg.mxu0
  %6476 = vrot.lane.b32.xlu0 %v5835, 112
  %v6477 = vpop.permute.xlu0 %6476
  %v6479 = vsel %vm1382, %v5835, 0
  %v6482 = vsel %vm1382, %v6477, 0
  %6484 = vmatprep.subr.bf16.mxu0 0
  %6485 = vmatpush1.bf16.xpose.msra.mxu0 %v6482
  %6486 = vmatprep.subr.bf16.mxu0 0
  %6487 = vmatpush1.bf16.xpose.msra.mxu0 0
  %6488 = vmatprep.subr.bf16.mxu0 0
  %6489 = vmatpush1.bf16.xpose.msra.mxu0 0
  %6490 = vmatprep.subr.bf16.mxu0 0
  %6491 = vmatpush1.bf16.xpose.msra.mxu0 0
  %6492 = vmatprep.subr.bf16.mxu0 0
  %6493 = vmatpush1.bf16.xpose.msra.mxu0 0
  %6494 = vmatprep.subr.bf16.mxu0 0
  %6495 = vmatpush1.bf16.xpose.msra.mxu0 0
  %6496 = vmatprep.subr.bf16.mxu0 0
  %6497 = vmatpush1.bf16.xpose.msra.mxu0 0
  %6498 = vmatprep.subr.bf16.mxu0 0
  %6499 = vmatpush1.bf16.xpose.msra.mxu0 0
  %6500 = vmatprep.subr.bf16.mxu0 0
  %6501 = vmatpush1.bf16.xpose.msra.mxu0 0
  %6502 = vmatprep.subr.bf16.mxu0 0
  %6503 = vmatpush1.bf16.xpose.msra.mxu0 0
  %6504 = vmatprep.subr.bf16.mxu0 0
  %6505 = vmatpush1.bf16.xpose.msra.mxu0 0
  %6506 = vmatprep.subr.bf16.mxu0 0
  %6507 = vmatpush1.bf16.xpose.msra.mxu0 0
  %6508 = vmatprep.subr.bf16.mxu0 0
  %6509 = vmatpush1.bf16.xpose.msra.mxu0 0
  %6510 = vmatprep.subr.bf16.mxu0 0
  %6511 = vmatpush1.bf16.xpose.msra.mxu0 0
  %6512 = vmatprep.subr.bf16.mxu0 0
  %6513 = vmatpush1.bf16.xpose.msra.mxu0 0
  %6514 = vmatprep.subr.bf16.mxu0 0
  %6515 = vmatpush1.bf16.xpose.msra.mxu0 0
  %6516 = vmatprep.mubr.bf16.mxu0 0
  %6517 = vmatmul.mubr.bf16.gmra.mrb[0].mxu0 %v6479
  %v6518 = vpop.f32.mrb[0].mxu0
  %v6519 = vadd.f32 %v1354, %v6518
  %v6520 = vpop.f32.mrb[0].mxu0
  %v6521 = vpop.f32.mrb[0].mxu0
  %v6522 = vpop.f32.mrb[0].mxu0
  %6523 = vdwg.mxu0
  %6525 = vrot.lane.b32.xlu0 %v5836, 112
  %v6526 = vpop.permute.xlu0 %6525
  %v6528 = vsel %vm1382, %v5836, 0
  %v6531 = vsel %vm1382, %v6526, 0
  %6533 = vmatprep.subr.bf16.mxu0 0
  %6534 = vmatpush1.bf16.xpose.msra.mxu0 %v6531
  %6535 = vmatprep.subr.bf16.mxu0 0
  %6536 = vmatpush1.bf16.xpose.msra.mxu0 0
  %6537 = vmatprep.subr.bf16.mxu0 0
  %6538 = vmatpush1.bf16.xpose.msra.mxu0 0
  %6539 = vmatprep.subr.bf16.mxu0 0
  %6540 = vmatpush1.bf16.xpose.msra.mxu0 0
  %6541 = vmatprep.subr.bf16.mxu0 0
  %6542 = vmatpush1.bf16.xpose.msra.mxu0 0
  %6543 = vmatprep.subr.bf16.mxu0 0
  %6544 = vmatpush1.bf16.xpose.msra.mxu0 0
  %6545 = vmatprep.subr.bf16.mxu0 0
  %6546 = vmatpush1.bf16.xpose.msra.mxu0 0
  %6547 = vmatprep.subr.bf16.mxu0 0
  %6548 = vmatpush1.bf16.xpose.msra.mxu0 0
  %6549 = vmatprep.subr.bf16.mxu0 0
  %6550 = vmatpush1.bf16.xpose.msra.mxu0 0
  %6551 = vmatprep.subr.bf16.mxu0 0
  %6552 = vmatpush1.bf16.xpose.msra.mxu0 0
  %6553 = vmatprep.subr.bf16.mxu0 0
  %6554 = vmatpush1.bf16.xpose.msra.mxu0 0
  %6555 = vmatprep.subr.bf16.mxu0 0
  %6556 = vmatpush1.bf16.xpose.msra.mxu0 0
  %6557 = vmatprep.subr.bf16.mxu0 0
  %6558 = vmatpush1.bf16.xpose.msra.mxu0 0
  %6559 = vmatprep.subr.bf16.mxu0 0
  %6560 = vmatpush1.bf16.xpose.msra.mxu0 0
  %6561 = vmatprep.subr.bf16.mxu0 0
  %6562 = vmatpush1.bf16.xpose.msra.mxu0 0
  %6563 = vmatprep.subr.bf16.mxu0 0
  %6564 = vmatpush1.bf16.xpose.msra.mxu0 0
  %6565 = vmatprep.mubr.bf16.mxu0 0
  %6566 = vmatmul.mubr.bf16.gmra.mrb[0].mxu0 %v6528
  %v6567 = vpop.f32.mrb[0].mxu0
  %v6568 = vadd.f32 %v1358, %v6567
  %v6569 = vpop.f32.mrb[0].mxu0
  %v6570 = vpop.f32.mrb[0].mxu0
  %v6571 = vpop.f32.mrb[0].mxu0
  %6572 = vdwg.mxu0
  %6574 = vrot.lane.b32.xlu0 %v5837, 112
  %v6575 = vpop.permute.xlu0 %6574
  %v6577 = vsel %vm1382, %v5837, 0
  %v6580 = vsel %vm1382, %v6575, 0
  %6582 = vmatprep.subr.bf16.mxu0 0
  %6583 = vmatpush1.bf16.xpose.msra.mxu0 %v6580
  %6584 = vmatprep.subr.bf16.mxu0 0
  %6585 = vmatpush1.bf16.xpose.msra.mxu0 0
  %6586 = vmatprep.subr.bf16.mxu0 0
  %6587 = vmatpush1.bf16.xpose.msra.mxu0 0
  %6588 = vmatprep.subr.bf16.mxu0 0
  %6589 = vmatpush1.bf16.xpose.msra.mxu0 0
  %6590 = vmatprep.subr.bf16.mxu0 0
  %6591 = vmatpush1.bf16.xpose.msra.mxu0 0
  %6592 = vmatprep.subr.bf16.mxu0 0
  %6593 = vmatpush1.bf16.xpose.msra.mxu0 0
  %6594 = vmatprep.subr.bf16.mxu0 0
  %6595 = vmatpush1.bf16.xpose.msra.mxu0 0
  %6596 = vmatprep.subr.bf16.mxu0 0
  %6597 = vmatpush1.bf16.xpose.msra.mxu0 0
  %6598 = vmatprep.subr.bf16.mxu0 0
  %6599 = vmatpush1.bf16.xpose.msra.mxu0 0
  %6600 = vmatprep.subr.bf16.mxu0 0
  %6601 = vmatpush1.bf16.xpose.msra.mxu0 0
  %6602 = vmatprep.subr.bf16.mxu0 0
  %6603 = vmatpush1.bf16.xpose.msra.mxu0 0
  %6604 = vmatprep.subr.bf16.mxu0 0
  %6605 = vmatpush1.bf16.xpose.msra.mxu0 0
  %6606 = vmatprep.subr.bf16.mxu0 0
  %6607 = vmatpush1.bf16.xpose.msra.mxu0 0
  %6608 = vmatprep.subr.bf16.mxu0 0
  %6609 = vmatpush1.bf16.xpose.msra.mxu0 0
  %6610 = vmatprep.subr.bf16.mxu0 0
  %6611 = vmatpush1.bf16.xpose.msra.mxu0 0
  %6612 = vmatprep.subr.bf16.mxu0 0
  %6613 = vmatpush1.bf16.xpose.msra.mxu0 0
  %6614 = vmatprep.mubr.bf16.mxu0 0
  %6615 = vmatmul.mubr.bf16.gmra.mrb[0].mxu0 %v6577
  %v6616 = vpop.f32.mrb[0].mxu0
  %v6617 = vadd.f32 %v1362, %v6616
  %v6618 = vpop.f32.mrb[0].mxu0
  %v6619 = vpop.f32.mrb[0].mxu0
  %v6620 = vpop.f32.mrb[0].mxu0
  %6621 = vdwg.mxu0
  %v6622 = vsel %vm2164, %v5882, -inf
  %6623 = vmax.xlane.f32.xlu0 %v6622
  %v6624 = vpop.xlane.xlu0 %6623
  %v6625 = vsel %vm2164, %v5931, -inf
  %6626 = vmax.xlane.f32.xlu0 %v6625
  %v6627 = vpop.xlane.xlu0 %6626
  %v6628 = vsel %vm2164, %v5980, -inf
  %6629 = vmax.xlane.f32.xlu0 %v6628
  %v6630 = vpop.xlane.xlu0 %6629
  %v6631 = vsel %vm2164, %v6029, -inf
  %6632 = vmax.xlane.f32.xlu0 %v6631
  %v6633 = vpop.xlane.xlu0 %6632
  %v6634 = vsel %vm2164, %v6078, -inf
  %6635 = vmax.xlane.f32.xlu0 %v6634
  %v6636 = vpop.xlane.xlu0 %6635
  %v6637 = vsel %vm2164, %v6127, -inf
  %6638 = vmax.xlane.f32.xlu0 %v6637
  %v6639 = vpop.xlane.xlu0 %6638
  %v6640 = vsel %vm2164, %v6176, -inf
  %6641 = vmax.xlane.f32.xlu0 %v6640
  %v6642 = vpop.xlane.xlu0 %6641
  %v6643 = vsel %vm2164, %v6225, -inf
  %6644 = vmax.xlane.f32.xlu0 %v6643
  %v6645 = vpop.xlane.xlu0 %6644
  %v6646 = vsel %vm2164, %v6274, -inf
  %6647 = vmax.xlane.f32.xlu0 %v6646
  %v6648 = vpop.xlane.xlu0 %6647
  %v6649 = vsel %vm2164, %v6323, -inf
  %6650 = vmax.xlane.f32.xlu0 %v6649
  %v6651 = vpop.xlane.xlu0 %6650
  %v6652 = vsel %vm2164, %v6372, -inf
  %6653 = vmax.xlane.f32.xlu0 %v6652
  %v6654 = vpop.xlane.xlu0 %6653
  %v6655 = vsel %vm2164, %v6421, -inf
  %6656 = vmax.xlane.f32.xlu0 %v6655
  %v6657 = vpop.xlane.xlu0 %6656
  %v6658 = vsel %vm2164, %v6470, -inf
  %6659 = vmax.xlane.f32.xlu0 %v6658
  %v6660 = vpop.xlane.xlu0 %6659
  %v6661 = vsel %vm2164, %v6519, -inf
  %6662 = vmax.xlane.f32.xlu0 %v6661
  %v6663 = vpop.xlane.xlu0 %6662
  %v6664 = vsel %vm2164, %v6568, -inf
  %6665 = vmax.xlane.f32.xlu0 %v6664
  %v6666 = vpop.xlane.xlu0 %6665
  %v6667 = vsel %vm2164, %v6617, -inf
  %6668 = vmax.xlane.f32.xlu0 %v6667
  %v6669 = vpop.xlane.xlu0 %6668
  %v6670 = vsub.f32 %v5882, %v6624
  %v6671 = vsub.f32 %v5931, %v6627
  %v6672 = vsub.f32 %v5980, %v6630
  %v6673 = vsub.f32 %v6029, %v6633
  %v6674 = vsub.f32 %v6078, %v6636
  %v6675 = vsub.f32 %v6127, %v6639
  %v6676 = vsub.f32 %v6176, %v6642
  %v6677 = vsub.f32 %v6225, %v6645
  %v6678 = vsub.f32 %v6274, %v6648
  %v6679 = vsub.f32 %v6323, %v6651
  %v6680 = vsub.f32 %v6372, %v6654
  %v6681 = vsub.f32 %v6421, %v6657
  %v6682 = vsub.f32 %v6470, %v6660
  %v6683 = vsub.f32 %v6519, %v6663
  %v6684 = vsub.f32 %v6568, %v6666
  %v6685 = vsub.f32 %v6617, %v6669
  %v6686 = vmul.f32 %v6670, 1.442695
  %v6687 = vpow.pop %v6686
  %v6688 = vmul.f32 %v6671, 1.442695
  %v6689 = vpow.pop %v6688
  %v6690 = vmul.f32 %v6672, 1.442695
  %v6691 = vpow.pop %v6690
  %v6692 = vmul.f32 %v6673, 1.442695
  %v6693 = vpow.pop %v6692
  %v6694 = vmul.f32 %v6674, 1.442695
  %v6695 = vpow.pop %v6694
  %v6696 = vmul.f32 %v6675, 1.442695
  %v6697 = vpow.pop %v6696
  %v6698 = vmul.f32 %v6676, 1.442695
  %v6699 = vpow.pop %v6698
  %v6700 = vmul.f32 %v6677, 1.442695
  %v6701 = vpow.pop %v6700
  %v6702 = vmul.f32 %v6678, 1.442695
  %v6703 = vpow.pop %v6702
  %v6704 = vmul.f32 %v6679, 1.442695
  %v6705 = vpow.pop %v6704
  %v6706 = vmul.f32 %v6680, 1.442695
  %v6707 = vpow.pop %v6706
  %v6708 = vmul.f32 %v6681, 1.442695
  %v6709 = vpow.pop %v6708
  %v6710 = vmul.f32 %v6682, 1.442695
  %v6711 = vpow.pop %v6710
  %v6712 = vmul.f32 %v6683, 1.442695
  %v6713 = vpow.pop %v6712
  %v6714 = vmul.f32 %v6684, 1.442695
  %v6715 = vpow.pop %v6714
  %v6716 = vmul.f32 %v6685, 1.442695
  %v6717 = vpow.pop %v6716
  %v6718 = vsel %vm2164, %v6687, 0.0
  %6719 = vadd.xlane.f32.xlu0 %v6718
  %v6720 = vpop.xlane.xlu0 %6719
  %v6721 = vsel %vm2164, %v6689, 0.0
  %6722 = vadd.xlane.f32.xlu0 %v6721
  %v6723 = vpop.xlane.xlu0 %6722
  %v6724 = vsel %vm2164, %v6691, 0.0
  %6725 = vadd.xlane.f32.xlu0 %v6724
  %v6726 = vpop.xlane.xlu0 %6725
  %v6727 = vsel %vm2164, %v6693, 0.0
  %6728 = vadd.xlane.f32.xlu0 %v6727
  %v6729 = vpop.xlane.xlu0 %6728
  %v6730 = vsel %vm2164, %v6695, 0.0
  %6731 = vadd.xlane.f32.xlu0 %v6730
  %v6732 = vpop.xlane.xlu0 %6731
  %v6733 = vsel %vm2164, %v6697, 0.0
  %6734 = vadd.xlane.f32.xlu0 %v6733
  %v6735 = vpop.xlane.xlu0 %6734
  %v6736 = vsel %vm2164, %v6699, 0.0
  %6737 = vadd.xlane.f32.xlu0 %v6736
  %v6738 = vpop.xlane.xlu0 %6737
  %v6739 = vsel %vm2164, %v6701, 0.0
  %6740 = vadd.xlane.f32.xlu0 %v6739
  %v6741 = vpop.xlane.xlu0 %6740
  %v6742 = vsel %vm2164, %v6703, 0.0
  %6743 = vadd.xlane.f32.xlu0 %v6742
  %v6744 = vpop.xlane.xlu0 %6743
  %v6745 = vsel %vm2164, %v6705, 0.0
  %6746 = vadd.xlane.f32.xlu0 %v6745
  %v6747 = vpop.xlane.xlu0 %6746
  %v6748 = vsel %vm2164, %v6707, 0.0
  %6749 = vadd.xlane.f32.xlu0 %v6748
  %v6750 = vpop.xlane.xlu0 %6749
  %v6751 = vsel %vm2164, %v6709, 0.0
  %6752 = vadd.xlane.f32.xlu0 %v6751
  %v6753 = vpop.xlane.xlu0 %6752
  %v6754 = vsel %vm2164, %v6711, 0.0
  %6755 = vadd.xlane.f32.xlu0 %v6754
  %v6756 = vpop.xlane.xlu0 %6755
  %v6757 = vsel %vm2164, %v6713, 0.0
  %6758 = vadd.xlane.f32.xlu0 %v6757
  %v6759 = vpop.xlane.xlu0 %6758
  %v6760 = vsel %vm2164, %v6715, 0.0
  %6761 = vadd.xlane.f32.xlu0 %v6760
  %v6762 = vpop.xlane.xlu0 %6761
  %v6763 = vsel %vm2164, %v6717, 0.0
  %6764 = vadd.xlane.f32.xlu0 %v6763
  %v6765 = vpop.xlane.xlu0 %6764
  %v6766 = vrcp.pop %v6720
  %v6767 = vrcp.pop %v6723
  %v6768 = vrcp.pop %v6726
  %v6769 = vrcp.pop %v6729
  %v6770 = vrcp.pop %v6732
  %v6771 = vrcp.pop %v6735
  %v6772 = vrcp.pop %v6738
  %v6773 = vrcp.pop %v6741
  %v6774 = vrcp.pop %v6744
  %v6775 = vrcp.pop %v6747
  %v6776 = vrcp.pop %v6750
  %v6777 = vrcp.pop %v6753
  %v6778 = vrcp.pop %v6756
  %v6779 = vrcp.pop %v6759
  %v6780 = vrcp.pop %v6762
  %v6781 = vrcp.pop %v6765
  %v6782 = vmul.f32 %v6687, %v6766
  %v6783 = vmul.f32 %v6689, %v6767
  %v6784 = vmul.f32 %v6691, %v6768
  %v6785 = vmul.f32 %v6693, %v6769
  %v6786 = vmul.f32 %v6695, %v6770
  %v6787 = vmul.f32 %v6697, %v6771
  %v6788 = vmul.f32 %v6699, %v6772
  %v6789 = vmul.f32 %v6701, %v6773
  %v6790 = vmul.f32 %v6703, %v6774
  %v6791 = vmul.f32 %v6705, %v6775
  %v6792 = vmul.f32 %v6707, %v6776
  %v6793 = vmul.f32 %v6709, %v6777
  %v6794 = vmul.f32 %v6711, %v6778
  %v6795 = vmul.f32 %v6713, %v6779
  %v6796 = vmul.f32 %v6715, %v6780
  %v6797 = vmul.f32 %v6717, %v6781
  %v6798 = vpack.c.bf16 %v6782, %v6782
  %v6799 = vpack.c.bf16 %v6783, %v6783
  %v6800 = vpack.c.bf16 %v6784, %v6784
  %v6801 = vpack.c.bf16 %v6785, %v6785
  %v6802 = vpack.c.bf16 %v6786, %v6786
  %v6803 = vpack.c.bf16 %v6787, %v6787
  %v6804 = vpack.c.bf16 %v6788, %v6788
  %v6805 = vpack.c.bf16 %v6789, %v6789
  %v6806 = vpack.c.bf16 %v6790, %v6790
  %v6807 = vpack.c.bf16 %v6791, %v6791
  %v6808 = vpack.c.bf16 %v6792, %v6792
  %v6809 = vpack.c.bf16 %v6793, %v6793
  %v6810 = vpack.c.bf16 %v6794, %v6794
  %v6811 = vpack.c.bf16 %v6795, %v6795
  %v6812 = vpack.c.bf16 %v6796, %v6796
  %v6813 = vpack.c.bf16 %v6797, %v6797
  %6814 = vrot.lane.b32.xlu0 %v5822, 96
  %v6815 = vpop.permute.xlu0 %6814
  %v6817 = vsel %vm2164, %v6798, 0
  %v6820 = vsel %vm2362, %v6815, 0
  %6822 = vmatprep.subr.bf16.mxu0 0
  %6823 = vmatpush1.bf16.msra.mxu0 %v6820
  %6824 = vmatprep.subr.bf16.mxu0 0
  %6825 = vmatpush1.bf16.msra.mxu0 0
  %6826 = vmatprep.subr.bf16.mxu0 0
  %6827 = vmatpush1.bf16.msra.mxu0 0
  %6828 = vmatprep.subr.bf16.mxu0 0
  %6829 = vmatpush1.bf16.msra.mxu0 0
  %6830 = vmatprep.subr.bf16.mxu0 0
  %6831 = vmatpush1.bf16.msra.mxu0 0
  %6832 = vmatprep.subr.bf16.mxu0 0
  %6833 = vmatpush1.bf16.msra.mxu0 0
  %6834 = vmatprep.subr.bf16.mxu0 0
  %6835 = vmatpush1.bf16.msra.mxu0 0
  %6836 = vmatprep.subr.bf16.mxu0 0
  %6837 = vmatpush1.bf16.msra.mxu0 0
  %6838 = vmatprep.subr.bf16.mxu0 0
  %6839 = vmatpush1.bf16.msra.mxu0 0
  %6840 = vmatprep.subr.bf16.mxu0 0
  %6841 = vmatpush1.bf16.msra.mxu0 0
  %6842 = vmatprep.subr.bf16.mxu0 0
  %6843 = vmatpush1.bf16.msra.mxu0 0
  %6844 = vmatprep.subr.bf16.mxu0 0
  %6845 = vmatpush1.bf16.msra.mxu0 0
  %6846 = vmatprep.subr.bf16.mxu0 0
  %6847 = vmatpush1.bf16.msra.mxu0 0
  %6848 = vmatprep.subr.bf16.mxu0 0
  %6849 = vmatpush1.bf16.msra.mxu0 0
  %6850 = vmatprep.subr.bf16.mxu0 0
  %6851 = vmatpush1.bf16.msra.mxu0 0
  %6852 = vmatprep.subr.bf16.mxu0 0
  %6853 = vmatpush1.bf16.msra.mxu0 0
  %6854 = vmatprep.mubr.bf16.mxu0 0
  %6855 = vmatmul.mubr.bf16.gmra.mrb[0].mxu0 %v6817
  %v6856 = vpop.f32.mrb[0].mxu0
  %v6857 = vadd.f32 0.0, %v6856
  %v6858 = vpop.f32.mrb[0].mxu0
  %v6859 = vpop.f32.mrb[0].mxu0
  %v6860 = vpop.f32.mrb[0].mxu0
  %6861 = vdwg.mxu0
  %6862 = vrot.lane.b32.xlu0 %v5823, 96
  %v6863 = vpop.permute.xlu0 %6862
  %v6865 = vsel %vm2164, %v6799, 0
  %v6868 = vsel %vm2362, %v6863, 0
  %6870 = vmatprep.subr.bf16.mxu0 0
  %6871 = vmatpush1.bf16.msra.mxu0 %v6868
  %6872 = vmatprep.subr.bf16.mxu0 0
  %6873 = vmatpush1.bf16.msra.mxu0 0
  %6874 = vmatprep.subr.bf16.mxu0 0
  %6875 = vmatpush1.bf16.msra.mxu0 0
  %6876 = vmatprep.subr.bf16.mxu0 0
  %6877 = vmatpush1.bf16.msra.mxu0 0
  %6878 = vmatprep.subr.bf16.mxu0 0
  %6879 = vmatpush1.bf16.msra.mxu0 0
  %6880 = vmatprep.subr.bf16.mxu0 0
  %6881 = vmatpush1.bf16.msra.mxu0 0
  %6882 = vmatprep.subr.bf16.mxu0 0
  %6883 = vmatpush1.bf16.msra.mxu0 0
  %6884 = vmatprep.subr.bf16.mxu0 0
  %6885 = vmatpush1.bf16.msra.mxu0 0
  %6886 = vmatprep.subr.bf16.mxu0 0
  %6887 = vmatpush1.bf16.msra.mxu0 0
  %6888 = vmatprep.subr.bf16.mxu0 0
  %6889 = vmatpush1.bf16.msra.mxu0 0
  %6890 = vmatprep.subr.bf16.mxu0 0
  %6891 = vmatpush1.bf16.msra.mxu0 0
  %6892 = vmatprep.subr.bf16.mxu0 0
  %6893 = vmatpush1.bf16.msra.mxu0 0
  %6894 = vmatprep.subr.bf16.mxu0 0
  %6895 = vmatpush1.bf16.msra.mxu0 0
  %6896 = vmatprep.subr.bf16.mxu0 0
  %6897 = vmatpush1.bf16.msra.mxu0 0
  %6898 = vmatprep.subr.bf16.mxu0 0
  %6899 = vmatpush1.bf16.msra.mxu0 0
  %6900 = vmatprep.subr.bf16.mxu0 0
  %6901 = vmatpush1.bf16.msra.mxu0 0
  %6902 = vmatprep.mubr.bf16.mxu0 0
  %6903 = vmatmul.mubr.bf16.gmra.mrb[0].mxu0 %v6865
  %v6904 = vpop.f32.mrb[0].mxu0
  %v6905 = vadd.f32 0.0, %v6904
  %v6906 = vpop.f32.mrb[0].mxu0
  %v6907 = vpop.f32.mrb[0].mxu0
  %v6908 = vpop.f32.mrb[0].mxu0
  %6909 = vdwg.mxu0
  %6910 = vrot.lane.b32.xlu0 %v5824, 96
  %v6911 = vpop.permute.xlu0 %6910
  %v6913 = vsel %vm2164, %v6800, 0
  %v6916 = vsel %vm2362, %v6911, 0
  %6918 = vmatprep.subr.bf16.mxu0 0
  %6919 = vmatpush1.bf16.msra.mxu0 %v6916
  %6920 = vmatprep.subr.bf16.mxu0 0
  %6921 = vmatpush1.bf16.msra.mxu0 0
  %6922 = vmatprep.subr.bf16.mxu0 0
  %6923 = vmatpush1.bf16.msra.mxu0 0
  %6924 = vmatprep.subr.bf16.mxu0 0
  %6925 = vmatpush1.bf16.msra.mxu0 0
  %6926 = vmatprep.subr.bf16.mxu0 0
  %6927 = vmatpush1.bf16.msra.mxu0 0
  %6928 = vmatprep.subr.bf16.mxu0 0
  %6929 = vmatpush1.bf16.msra.mxu0 0
  %6930 = vmatprep.subr.bf16.mxu0 0
  %6931 = vmatpush1.bf16.msra.mxu0 0
  %6932 = vmatprep.subr.bf16.mxu0 0
  %6933 = vmatpush1.bf16.msra.mxu0 0
  %6934 = vmatprep.subr.bf16.mxu0 0
  %6935 = vmatpush1.bf16.msra.mxu0 0
  %6936 = vmatprep.subr.bf16.mxu0 0
  %6937 = vmatpush1.bf16.msra.mxu0 0
  %6938 = vmatprep.subr.bf16.mxu0 0
  %6939 = vmatpush1.bf16.msra.mxu0 0
  %6940 = vmatprep.subr.bf16.mxu0 0
  %6941 = vmatpush1.bf16.msra.mxu0 0
  %6942 = vmatprep.subr.bf16.mxu0 0
  %6943 = vmatpush1.bf16.msra.mxu0 0
  %6944 = vmatprep.subr.bf16.mxu0 0
  %6945 = vmatpush1.bf16.msra.mxu0 0
  %6946 = vmatprep.subr.bf16.mxu0 0
  %6947 = vmatpush1.bf16.msra.mxu0 0
  %6948 = vmatprep.subr.bf16.mxu0 0
  %6949 = vmatpush1.bf16.msra.mxu0 0
  %6950 = vmatprep.mubr.bf16.mxu0 0
  %6951 = vmatmul.mubr.bf16.gmra.mrb[0].mxu0 %v6913
  %v6952 = vpop.f32.mrb[0].mxu0
  %v6953 = vadd.f32 0.0, %v6952
  %v6954 = vpop.f32.mrb[0].mxu0
  %v6955 = vpop.f32.mrb[0].mxu0
  %v6956 = vpop.f32.mrb[0].mxu0
  %6957 = vdwg.mxu0
  %6958 = vrot.lane.b32.xlu0 %v5825, 96
  %v6959 = vpop.permute.xlu0 %6958
  %v6961 = vsel %vm2164, %v6801, 0
  %v6964 = vsel %vm2362, %v6959, 0
  %6966 = vmatprep.subr.bf16.mxu0 0
  %6967 = vmatpush1.bf16.msra.mxu0 %v6964
  %6968 = vmatprep.subr.bf16.mxu0 0
  %6969 = vmatpush1.bf16.msra.mxu0 0
  %6970 = vmatprep.subr.bf16.mxu0 0
  %6971 = vmatpush1.bf16.msra.mxu0 0
  %6972 = vmatprep.subr.bf16.mxu0 0
  %6973 = vmatpush1.bf16.msra.mxu0 0
  %6974 = vmatprep.subr.bf16.mxu0 0
  %6975 = vmatpush1.bf16.msra.mxu0 0
  %6976 = vmatprep.subr.bf16.mxu0 0
  %6977 = vmatpush1.bf16.msra.mxu0 0
  %6978 = vmatprep.subr.bf16.mxu0 0
  %6979 = vmatpush1.bf16.msra.mxu0 0
  %6980 = vmatprep.subr.bf16.mxu0 0
  %6981 = vmatpush1.bf16.msra.mxu0 0
  %6982 = vmatprep.subr.bf16.mxu0 0
  %6983 = vmatpush1.bf16.msra.mxu0 0
  %6984 = vmatprep.subr.bf16.mxu0 0
  %6985 = vmatpush1.bf16.msra.mxu0 0
  %6986 = vmatprep.subr.bf16.mxu0 0
  %6987 = vmatpush1.bf16.msra.mxu0 0
  %6988 = vmatprep.subr.bf16.mxu0 0
  %6989 = vmatpush1.bf16.msra.mxu0 0
  %6990 = vmatprep.subr.bf16.mxu0 0
  %6991 = vmatpush1.bf16.msra.mxu0 0
  %6992 = vmatprep.subr.bf16.mxu0 0
  %6993 = vmatpush1.bf16.msra.mxu0 0
  %6994 = vmatprep.subr.bf16.mxu0 0
  %6995 = vmatpush1.bf16.msra.mxu0 0
  %6996 = vmatprep.subr.bf16.mxu0 0
  %6997 = vmatpush1.bf16.msra.mxu0 0
  %6998 = vmatprep.mubr.bf16.mxu0 0
  %6999 = vmatmul.mubr.bf16.gmra.mrb[0].mxu0 %v6961
  %v7000 = vpop.f32.mrb[0].mxu0
  %v7001 = vadd.f32 0.0, %v7000
  %v7002 = vpop.f32.mrb[0].mxu0
  %v7003 = vpop.f32.mrb[0].mxu0
  %v7004 = vpop.f32.mrb[0].mxu0
  %7005 = vdwg.mxu0
  %7006 = vrot.lane.b32.xlu0 %v5826, 96
  %v7007 = vpop.permute.xlu0 %7006
  %v7009 = vsel %vm2164, %v6802, 0
  %v7012 = vsel %vm2362, %v7007, 0
  %7014 = vmatprep.subr.bf16.mxu0 0
  %7015 = vmatpush1.bf16.msra.mxu0 %v7012
  %7016 = vmatprep.subr.bf16.mxu0 0
  %7017 = vmatpush1.bf16.msra.mxu0 0
  %7018 = vmatprep.subr.bf16.mxu0 0
  %7019 = vmatpush1.bf16.msra.mxu0 0
  %7020 = vmatprep.subr.bf16.mxu0 0
  %7021 = vmatpush1.bf16.msra.mxu0 0
  %7022 = vmatprep.subr.bf16.mxu0 0
  %7023 = vmatpush1.bf16.msra.mxu0 0
  %7024 = vmatprep.subr.bf16.mxu0 0
  %7025 = vmatpush1.bf16.msra.mxu0 0
  %7026 = vmatprep.subr.bf16.mxu0 0
  %7027 = vmatpush1.bf16.msra.mxu0 0
  %7028 = vmatprep.subr.bf16.mxu0 0
  %7029 = vmatpush1.bf16.msra.mxu0 0
  %7030 = vmatprep.subr.bf16.mxu0 0
  %7031 = vmatpush1.bf16.msra.mxu0 0
  %7032 = vmatprep.subr.bf16.mxu0 0
  %7033 = vmatpush1.bf16.msra.mxu0 0
  %7034 = vmatprep.subr.bf16.mxu0 0
  %7035 = vmatpush1.bf16.msra.mxu0 0
  %7036 = vmatprep.subr.bf16.mxu0 0
  %7037 = vmatpush1.bf16.msra.mxu0 0
  %7038 = vmatprep.subr.bf16.mxu0 0
  %7039 = vmatpush1.bf16.msra.mxu0 0
  %7040 = vmatprep.subr.bf16.mxu0 0
  %7041 = vmatpush1.bf16.msra.mxu0 0
  %7042 = vmatprep.subr.bf16.mxu0 0
  %7043 = vmatpush1.bf16.msra.mxu0 0
  %7044 = vmatprep.subr.bf16.mxu0 0
  %7045 = vmatpush1.bf16.msra.mxu0 0
  %7046 = vmatprep.mubr.bf16.mxu0 0
  %7047 = vmatmul.mubr.bf16.gmra.mrb[0].mxu0 %v7009
  %v7048 = vpop.f32.mrb[0].mxu0
  %v7049 = vadd.f32 0.0, %v7048
  %v7050 = vpop.f32.mrb[0].mxu0
  %v7051 = vpop.f32.mrb[0].mxu0
  %v7052 = vpop.f32.mrb[0].mxu0
  %7053 = vdwg.mxu0
  %7054 = vrot.lane.b32.xlu0 %v5827, 96
  %v7055 = vpop.permute.xlu0 %7054
  %v7057 = vsel %vm2164, %v6803, 0
  %v7060 = vsel %vm2362, %v7055, 0
  %7062 = vmatprep.subr.bf16.mxu0 0
  %7063 = vmatpush1.bf16.msra.mxu0 %v7060
  %7064 = vmatprep.subr.bf16.mxu0 0
  %7065 = vmatpush1.bf16.msra.mxu0 0
  %7066 = vmatprep.subr.bf16.mxu0 0
  %7067 = vmatpush1.bf16.msra.mxu0 0
  %7068 = vmatprep.subr.bf16.mxu0 0
  %7069 = vmatpush1.bf16.msra.mxu0 0
  %7070 = vmatprep.subr.bf16.mxu0 0
  %7071 = vmatpush1.bf16.msra.mxu0 0
  %7072 = vmatprep.subr.bf16.mxu0 0
  %7073 = vmatpush1.bf16.msra.mxu0 0
  %7074 = vmatprep.subr.bf16.mxu0 0
  %7075 = vmatpush1.bf16.msra.mxu0 0
  %7076 = vmatprep.subr.bf16.mxu0 0
  %7077 = vmatpush1.bf16.msra.mxu0 0
  %7078 = vmatprep.subr.bf16.mxu0 0
  %7079 = vmatpush1.bf16.msra.mxu0 0
  %7080 = vmatprep.subr.bf16.mxu0 0
  %7081 = vmatpush1.bf16.msra.mxu0 0
  %7082 = vmatprep.subr.bf16.mxu0 0
  %7083 = vmatpush1.bf16.msra.mxu0 0
  %7084 = vmatprep.subr.bf16.mxu0 0
  %7085 = vmatpush1.bf16.msra.mxu0 0
  %7086 = vmatprep.subr.bf16.mxu0 0
  %7087 = vmatpush1.bf16.msra.mxu0 0
  %7088 = vmatprep.subr.bf16.mxu0 0
  %7089 = vmatpush1.bf16.msra.mxu0 0
  %7090 = vmatprep.subr.bf16.mxu0 0
  %7091 = vmatpush1.bf16.msra.mxu0 0
  %7092 = vmatprep.subr.bf16.mxu0 0
  %7093 = vmatpush1.bf16.msra.mxu0 0
  %7094 = vmatprep.mubr.bf16.mxu0 0
  %7095 = vmatmul.mubr.bf16.gmra.mrb[0].mxu0 %v7057
  %v7096 = vpop.f32.mrb[0].mxu0
  %v7097 = vadd.f32 0.0, %v7096
  %v7098 = vpop.f32.mrb[0].mxu0
  %v7099 = vpop.f32.mrb[0].mxu0
  %v7100 = vpop.f32.mrb[0].mxu0
  %7101 = vdwg.mxu0
  %7102 = vrot.lane.b32.xlu0 %v5828, 96
  %v7103 = vpop.permute.xlu0 %7102
  %v7105 = vsel %vm2164, %v6804, 0
  %v7108 = vsel %vm2362, %v7103, 0
  %7110 = vmatprep.subr.bf16.mxu0 0
  %7111 = vmatpush1.bf16.msra.mxu0 %v7108
  %7112 = vmatprep.subr.bf16.mxu0 0
  %7113 = vmatpush1.bf16.msra.mxu0 0
  %7114 = vmatprep.subr.bf16.mxu0 0
  %7115 = vmatpush1.bf16.msra.mxu0 0
  %7116 = vmatprep.subr.bf16.mxu0 0
  %7117 = vmatpush1.bf16.msra.mxu0 0
  %7118 = vmatprep.subr.bf16.mxu0 0
  %7119 = vmatpush1.bf16.msra.mxu0 0
  %7120 = vmatprep.subr.bf16.mxu0 0
  %7121 = vmatpush1.bf16.msra.mxu0 0
  %7122 = vmatprep.subr.bf16.mxu0 0
  %7123 = vmatpush1.bf16.msra.mxu0 0
  %7124 = vmatprep.subr.bf16.mxu0 0
  %7125 = vmatpush1.bf16.msra.mxu0 0
  %7126 = vmatprep.subr.bf16.mxu0 0
  %7127 = vmatpush1.bf16.msra.mxu0 0
  %7128 = vmatprep.subr.bf16.mxu0 0
  %7129 = vmatpush1.bf16.msra.mxu0 0
  %7130 = vmatprep.subr.bf16.mxu0 0
  %7131 = vmatpush1.bf16.msra.mxu0 0
  %7132 = vmatprep.subr.bf16.mxu0 0
  %7133 = vmatpush1.bf16.msra.mxu0 0
  %7134 = vmatprep.subr.bf16.mxu0 0
  %7135 = vmatpush1.bf16.msra.mxu0 0
  %7136 = vmatprep.subr.bf16.mxu0 0
  %7137 = vmatpush1.bf16.msra.mxu0 0
  %7138 = vmatprep.subr.bf16.mxu0 0
  %7139 = vmatpush1.bf16.msra.mxu0 0
  %7140 = vmatprep.subr.bf16.mxu0 0
  %7141 = vmatpush1.bf16.msra.mxu0 0
  %7142 = vmatprep.mubr.bf16.mxu0 0
  %7143 = vmatmul.mubr.bf16.gmra.mrb[0].mxu0 %v7105
  %v7144 = vpop.f32.mrb[0].mxu0
  %v7145 = vadd.f32 0.0, %v7144
  %v7146 = vpop.f32.mrb[0].mxu0
  %v7147 = vpop.f32.mrb[0].mxu0
  %v7148 = vpop.f32.mrb[0].mxu0
  %7149 = vdwg.mxu0
  %7150 = vrot.lane.b32.xlu0 %v5829, 96
  %v7151 = vpop.permute.xlu0 %7150
  %v7153 = vsel %vm2164, %v6805, 0
  %v7156 = vsel %vm2362, %v7151, 0
  %7158 = vmatprep.subr.bf16.mxu0 0
  %7159 = vmatpush1.bf16.msra.mxu0 %v7156
  %7160 = vmatprep.subr.bf16.mxu0 0
  %7161 = vmatpush1.bf16.msra.mxu0 0
  %7162 = vmatprep.subr.bf16.mxu0 0
  %7163 = vmatpush1.bf16.msra.mxu0 0
  %7164 = vmatprep.subr.bf16.mxu0 0
  %7165 = vmatpush1.bf16.msra.mxu0 0
  %7166 = vmatprep.subr.bf16.mxu0 0
  %7167 = vmatpush1.bf16.msra.mxu0 0
  %7168 = vmatprep.subr.bf16.mxu0 0
  %7169 = vmatpush1.bf16.msra.mxu0 0
  %7170 = vmatprep.subr.bf16.mxu0 0
  %7171 = vmatpush1.bf16.msra.mxu0 0
  %7172 = vmatprep.subr.bf16.mxu0 0
  %7173 = vmatpush1.bf16.msra.mxu0 0
  %7174 = vmatprep.subr.bf16.mxu0 0
  %7175 = vmatpush1.bf16.msra.mxu0 0
  %7176 = vmatprep.subr.bf16.mxu0 0
  %7177 = vmatpush1.bf16.msra.mxu0 0
  %7178 = vmatprep.subr.bf16.mxu0 0
  %7179 = vmatpush1.bf16.msra.mxu0 0
  %7180 = vmatprep.subr.bf16.mxu0 0
  %7181 = vmatpush1.bf16.msra.mxu0 0
  %7182 = vmatprep.subr.bf16.mxu0 0
  %7183 = vmatpush1.bf16.msra.mxu0 0
  %7184 = vmatprep.subr.bf16.mxu0 0
  %7185 = vmatpush1.bf16.msra.mxu0 0
  %7186 = vmatprep.subr.bf16.mxu0 0
  %7187 = vmatpush1.bf16.msra.mxu0 0
  %7188 = vmatprep.subr.bf16.mxu0 0
  %7189 = vmatpush1.bf16.msra.mxu0 0
  %7190 = vmatprep.mubr.bf16.mxu0 0
  %7191 = vmatmul.mubr.bf16.gmra.mrb[0].mxu0 %v7153
  %v7192 = vpop.f32.mrb[0].mxu0
  %v7193 = vadd.f32 0.0, %v7192
  %v7194 = vpop.f32.mrb[0].mxu0
  %v7195 = vpop.f32.mrb[0].mxu0
  %v7196 = vpop.f32.mrb[0].mxu0
  %7197 = vdwg.mxu0
  %7198 = vrot.lane.b32.xlu0 %v5830, 96
  %v7199 = vpop.permute.xlu0 %7198
  %v7201 = vsel %vm2164, %v6806, 0
  %v7204 = vsel %vm2362, %v7199, 0
  %7206 = vmatprep.subr.bf16.mxu0 0
  %7207 = vmatpush1.bf16.msra.mxu0 %v7204
  %7208 = vmatprep.subr.bf16.mxu0 0
  %7209 = vmatpush1.bf16.msra.mxu0 0
  %7210 = vmatprep.subr.bf16.mxu0 0
  %7211 = vmatpush1.bf16.msra.mxu0 0
  %7212 = vmatprep.subr.bf16.mxu0 0
  %7213 = vmatpush1.bf16.msra.mxu0 0
  %7214 = vmatprep.subr.bf16.mxu0 0
  %7215 = vmatpush1.bf16.msra.mxu0 0
  %7216 = vmatprep.subr.bf16.mxu0 0
  %7217 = vmatpush1.bf16.msra.mxu0 0
  %7218 = vmatprep.subr.bf16.mxu0 0
  %7219 = vmatpush1.bf16.msra.mxu0 0
  %7220 = vmatprep.subr.bf16.mxu0 0
  %7221 = vmatpush1.bf16.msra.mxu0 0
  %7222 = vmatprep.subr.bf16.mxu0 0
  %7223 = vmatpush1.bf16.msra.mxu0 0
  %7224 = vmatprep.subr.bf16.mxu0 0
  %7225 = vmatpush1.bf16.msra.mxu0 0
  %7226 = vmatprep.subr.bf16.mxu0 0
  %7227 = vmatpush1.bf16.msra.mxu0 0
  %7228 = vmatprep.subr.bf16.mxu0 0
  %7229 = vmatpush1.bf16.msra.mxu0 0
  %7230 = vmatprep.subr.bf16.mxu0 0
  %7231 = vmatpush1.bf16.msra.mxu0 0
  %7232 = vmatprep.subr.bf16.mxu0 0
  %7233 = vmatpush1.bf16.msra.mxu0 0
  %7234 = vmatprep.subr.bf16.mxu0 0
  %7235 = vmatpush1.bf16.msra.mxu0 0
  %7236 = vmatprep.subr.bf16.mxu0 0
  %7237 = vmatpush1.bf16.msra.mxu0 0
  %7238 = vmatprep.mubr.bf16.mxu0 0
  %7239 = vmatmul.mubr.bf16.gmra.mrb[0].mxu0 %v7201
  %v7240 = vpop.f32.mrb[0].mxu0
  %v7241 = vadd.f32 0.0, %v7240
  %v7242 = vpop.f32.mrb[0].mxu0
  %v7243 = vpop.f32.mrb[0].mxu0
  %v7244 = vpop.f32.mrb[0].mxu0
  %7245 = vdwg.mxu0
  %7246 = vrot.lane.b32.xlu0 %v5831, 96
  %v7247 = vpop.permute.xlu0 %7246
  %v7249 = vsel %vm2164, %v6807, 0
  %v7252 = vsel %vm2362, %v7247, 0
  %7254 = vmatprep.subr.bf16.mxu0 0
  %7255 = vmatpush1.bf16.msra.mxu0 %v7252
  %7256 = vmatprep.subr.bf16.mxu0 0
  %7257 = vmatpush1.bf16.msra.mxu0 0
  %7258 = vmatprep.subr.bf16.mxu0 0
  %7259 = vmatpush1.bf16.msra.mxu0 0
  %7260 = vmatprep.subr.bf16.mxu0 0
  %7261 = vmatpush1.bf16.msra.mxu0 0
  %7262 = vmatprep.subr.bf16.mxu0 0
  %7263 = vmatpush1.bf16.msra.mxu0 0
  %7264 = vmatprep.subr.bf16.mxu0 0
  %7265 = vmatpush1.bf16.msra.mxu0 0
  %7266 = vmatprep.subr.bf16.mxu0 0
  %7267 = vmatpush1.bf16.msra.mxu0 0
  %7268 = vmatprep.subr.bf16.mxu0 0
  %7269 = vmatpush1.bf16.msra.mxu0 0
  %7270 = vmatprep.subr.bf16.mxu0 0
  %7271 = vmatpush1.bf16.msra.mxu0 0
  %7272 = vmatprep.subr.bf16.mxu0 0
  %7273 = vmatpush1.bf16.msra.mxu0 0
  %7274 = vmatprep.subr.bf16.mxu0 0
  %7275 = vmatpush1.bf16.msra.mxu0 0
  %7276 = vmatprep.subr.bf16.mxu0 0
  %7277 = vmatpush1.bf16.msra.mxu0 0
  %7278 = vmatprep.subr.bf16.mxu0 0
  %7279 = vmatpush1.bf16.msra.mxu0 0
  %7280 = vmatprep.subr.bf16.mxu0 0
  %7281 = vmatpush1.bf16.msra.mxu0 0
  %7282 = vmatprep.subr.bf16.mxu0 0
  %7283 = vmatpush1.bf16.msra.mxu0 0
  %7284 = vmatprep.subr.bf16.mxu0 0
  %7285 = vmatpush1.bf16.msra.mxu0 0
  %7286 = vmatprep.mubr.bf16.mxu0 0
  %7287 = vmatmul.mubr.bf16.gmra.mrb[0].mxu0 %v7249
  %v7288 = vpop.f32.mrb[0].mxu0
  %v7289 = vadd.f32 0.0, %v7288
  %v7290 = vpop.f32.mrb[0].mxu0
  %v7291 = vpop.f32.mrb[0].mxu0
  %v7292 = vpop.f32.mrb[0].mxu0
  %7293 = vdwg.mxu0
  %7294 = vrot.lane.b32.xlu0 %v5832, 96
  %v7295 = vpop.permute.xlu0 %7294
  %v7297 = vsel %vm2164, %v6808, 0
  %v7300 = vsel %vm2362, %v7295, 0
  %7302 = vmatprep.subr.bf16.mxu0 0
  %7303 = vmatpush1.bf16.msra.mxu0 %v7300
  %7304 = vmatprep.subr.bf16.mxu0 0
  %7305 = vmatpush1.bf16.msra.mxu0 0
  %7306 = vmatprep.subr.bf16.mxu0 0
  %7307 = vmatpush1.bf16.msra.mxu0 0
  %7308 = vmatprep.subr.bf16.mxu0 0
  %7309 = vmatpush1.bf16.msra.mxu0 0
  %7310 = vmatprep.subr.bf16.mxu0 0
  %7311 = vmatpush1.bf16.msra.mxu0 0
  %7312 = vmatprep.subr.bf16.mxu0 0
  %7313 = vmatpush1.bf16.msra.mxu0 0
  %7314 = vmatprep.subr.bf16.mxu0 0
  %7315 = vmatpush1.bf16.msra.mxu0 0
  %7316 = vmatprep.subr.bf16.mxu0 0
  %7317 = vmatpush1.bf16.msra.mxu0 0
  %7318 = vmatprep.subr.bf16.mxu0 0
  %7319 = vmatpush1.bf16.msra.mxu0 0
  %7320 = vmatprep.subr.bf16.mxu0 0
  %7321 = vmatpush1.bf16.msra.mxu0 0
  %7322 = vmatprep.subr.bf16.mxu0 0
  %7323 = vmatpush1.bf16.msra.mxu0 0
  %7324 = vmatprep.subr.bf16.mxu0 0
  %7325 = vmatpush1.bf16.msra.mxu0 0
  %7326 = vmatprep.subr.bf16.mxu0 0
  %7327 = vmatpush1.bf16.msra.mxu0 0
  %7328 = vmatprep.subr.bf16.mxu0 0
  %7329 = vmatpush1.bf16.msra.mxu0 0
  %7330 = vmatprep.subr.bf16.mxu0 0
  %7331 = vmatpush1.bf16.msra.mxu0 0
  %7332 = vmatprep.subr.bf16.mxu0 0
  %7333 = vmatpush1.bf16.msra.mxu0 0
  %7334 = vmatprep.mubr.bf16.mxu0 0
  %7335 = vmatmul.mubr.bf16.gmra.mrb[0].mxu0 %v7297
  %v7336 = vpop.f32.mrb[0].mxu0
  %v7337 = vadd.f32 0.0, %v7336
  %v7338 = vpop.f32.mrb[0].mxu0
  %v7339 = vpop.f32.mrb[0].mxu0
  %v7340 = vpop.f32.mrb[0].mxu0
  %7341 = vdwg.mxu0
  %7342 = vrot.lane.b32.xlu0 %v5833, 96
  %v7343 = vpop.permute.xlu0 %7342
  %v7345 = vsel %vm2164, %v6809, 0
  %v7348 = vsel %vm2362, %v7343, 0
  %7350 = vmatprep.subr.bf16.mxu0 0
  %7351 = vmatpush1.bf16.msra.mxu0 %v7348
  %7352 = vmatprep.subr.bf16.mxu0 0
  %7353 = vmatpush1.bf16.msra.mxu0 0
  %7354 = vmatprep.subr.bf16.mxu0 0
  %7355 = vmatpush1.bf16.msra.mxu0 0
  %7356 = vmatprep.subr.bf16.mxu0 0
  %7357 = vmatpush1.bf16.msra.mxu0 0
  %7358 = vmatprep.subr.bf16.mxu0 0
  %7359 = vmatpush1.bf16.msra.mxu0 0
  %7360 = vmatprep.subr.bf16.mxu0 0
  %7361 = vmatpush1.bf16.msra.mxu0 0
  %7362 = vmatprep.subr.bf16.mxu0 0
  %7363 = vmatpush1.bf16.msra.mxu0 0
  %7364 = vmatprep.subr.bf16.mxu0 0
  %7365 = vmatpush1.bf16.msra.mxu0 0
  %7366 = vmatprep.subr.bf16.mxu0 0
  %7367 = vmatpush1.bf16.msra.mxu0 0
  %7368 = vmatprep.subr.bf16.mxu0 0
  %7369 = vmatpush1.bf16.msra.mxu0 0
  %7370 = vmatprep.subr.bf16.mxu0 0
  %7371 = vmatpush1.bf16.msra.mxu0 0
  %7372 = vmatprep.subr.bf16.mxu0 0
  %7373 = vmatpush1.bf16.msra.mxu0 0
  %7374 = vmatprep.subr.bf16.mxu0 0
  %7375 = vmatpush1.bf16.msra.mxu0 0
  %7376 = vmatprep.subr.bf16.mxu0 0
  %7377 = vmatpush1.bf16.msra.mxu0 0
  %7378 = vmatprep.subr.bf16.mxu0 0
  %7379 = vmatpush1.bf16.msra.mxu0 0
  %7380 = vmatprep.subr.bf16.mxu0 0
  %7381 = vmatpush1.bf16.msra.mxu0 0
  %7382 = vmatprep.mubr.bf16.mxu0 0
  %7383 = vmatmul.mubr.bf16.gmra.mrb[0].mxu0 %v7345
  %v7384 = vpop.f32.mrb[0].mxu0
  %v7385 = vadd.f32 0.0, %v7384
  %v7386 = vpop.f32.mrb[0].mxu0
  %v7387 = vpop.f32.mrb[0].mxu0
  %v7388 = vpop.f32.mrb[0].mxu0
  %7389 = vdwg.mxu0
  %7390 = vrot.lane.b32.xlu0 %v5834, 96
  %v7391 = vpop.permute.xlu0 %7390
  %v7393 = vsel %vm2164, %v6810, 0
  %v7396 = vsel %vm2362, %v7391, 0
  %7398 = vmatprep.subr.bf16.mxu0 0
  %7399 = vmatpush1.bf16.msra.mxu0 %v7396
  %7400 = vmatprep.subr.bf16.mxu0 0
  %7401 = vmatpush1.bf16.msra.mxu0 0
  %7402 = vmatprep.subr.bf16.mxu0 0
  %7403 = vmatpush1.bf16.msra.mxu0 0
  %7404 = vmatprep.subr.bf16.mxu0 0
  %7405 = vmatpush1.bf16.msra.mxu0 0
  %7406 = vmatprep.subr.bf16.mxu0 0
  %7407 = vmatpush1.bf16.msra.mxu0 0
  %7408 = vmatprep.subr.bf16.mxu0 0
  %7409 = vmatpush1.bf16.msra.mxu0 0
  %7410 = vmatprep.subr.bf16.mxu0 0
  %7411 = vmatpush1.bf16.msra.mxu0 0
  %7412 = vmatprep.subr.bf16.mxu0 0
  %7413 = vmatpush1.bf16.msra.mxu0 0
  %7414 = vmatprep.subr.bf16.mxu0 0
  %7415 = vmatpush1.bf16.msra.mxu0 0
  %7416 = vmatprep.subr.bf16.mxu0 0
  %7417 = vmatpush1.bf16.msra.mxu0 0
  %7418 = vmatprep.subr.bf16.mxu0 0
  %7419 = vmatpush1.bf16.msra.mxu0 0
  %7420 = vmatprep.subr.bf16.mxu0 0
  %7421 = vmatpush1.bf16.msra.mxu0 0
  %7422 = vmatprep.subr.bf16.mxu0 0
  %7423 = vmatpush1.bf16.msra.mxu0 0
  %7424 = vmatprep.subr.bf16.mxu0 0
  %7425 = vmatpush1.bf16.msra.mxu0 0
  %7426 = vmatprep.subr.bf16.mxu0 0
  %7427 = vmatpush1.bf16.msra.mxu0 0
  %7428 = vmatprep.subr.bf16.mxu0 0
  %7429 = vmatpush1.bf16.msra.mxu0 0
  %7430 = vmatprep.mubr.bf16.mxu0 0
  %7431 = vmatmul.mubr.bf16.gmra.mrb[0].mxu0 %v7393
  %v7432 = vpop.f32.mrb[0].mxu0
  %v7433 = vadd.f32 0.0, %v7432
  %v7434 = vpop.f32.mrb[0].mxu0
  %v7435 = vpop.f32.mrb[0].mxu0
  %v7436 = vpop.f32.mrb[0].mxu0
  %7437 = vdwg.mxu0
  %7438 = vrot.lane.b32.xlu0 %v5835, 96
  %v7439 = vpop.permute.xlu0 %7438
  %v7441 = vsel %vm2164, %v6811, 0
  %v7444 = vsel %vm2362, %v7439, 0
  %7446 = vmatprep.subr.bf16.mxu0 0
  %7447 = vmatpush1.bf16.msra.mxu0 %v7444
  %7448 = vmatprep.subr.bf16.mxu0 0
  %7449 = vmatpush1.bf16.msra.mxu0 0
  %7450 = vmatprep.subr.bf16.mxu0 0
  %7451 = vmatpush1.bf16.msra.mxu0 0
  %7452 = vmatprep.subr.bf16.mxu0 0
  %7453 = vmatpush1.bf16.msra.mxu0 0
  %7454 = vmatprep.subr.bf16.mxu0 0
  %7455 = vmatpush1.bf16.msra.mxu0 0
  %7456 = vmatprep.subr.bf16.mxu0 0
  %7457 = vmatpush1.bf16.msra.mxu0 0
  %7458 = vmatprep.subr.bf16.mxu0 0
  %7459 = vmatpush1.bf16.msra.mxu0 0
  %7460 = vmatprep.subr.bf16.mxu0 0
  %7461 = vmatpush1.bf16.msra.mxu0 0
  %7462 = vmatprep.subr.bf16.mxu0 0
  %7463 = vmatpush1.bf16.msra.mxu0 0
  %7464 = vmatprep.subr.bf16.mxu0 0
  %7465 = vmatpush1.bf16.msra.mxu0 0
  %7466 = vmatprep.subr.bf16.mxu0 0
  %7467 = vmatpush1.bf16.msra.mxu0 0
  %7468 = vmatprep.subr.bf16.mxu0 0
  %7469 = vmatpush1.bf16.msra.mxu0 0
  %7470 = vmatprep.subr.bf16.mxu0 0
  %7471 = vmatpush1.bf16.msra.mxu0 0
  %7472 = vmatprep.subr.bf16.mxu0 0
  %7473 = vmatpush1.bf16.msra.mxu0 0
  %7474 = vmatprep.subr.bf16.mxu0 0
  %7475 = vmatpush1.bf16.msra.mxu0 0
  %7476 = vmatprep.subr.bf16.mxu0 0
  %7477 = vmatpush1.bf16.msra.mxu0 0
  %7478 = vmatprep.mubr.bf16.mxu0 0
  %7479 = vmatmul.mubr.bf16.gmra.mrb[0].mxu0 %v7441
  %v7480 = vpop.f32.mrb[0].mxu0
  %v7481 = vadd.f32 0.0, %v7480
  %v7482 = vpop.f32.mrb[0].mxu0
  %v7483 = vpop.f32.mrb[0].mxu0
  %v7484 = vpop.f32.mrb[0].mxu0
  %7485 = vdwg.mxu0
  %7486 = vrot.lane.b32.xlu0 %v5836, 96
  %v7487 = vpop.permute.xlu0 %7486
  %v7489 = vsel %vm2164, %v6812, 0
  %v7492 = vsel %vm2362, %v7487, 0
  %7494 = vmatprep.subr.bf16.mxu0 0
  %7495 = vmatpush1.bf16.msra.mxu0 %v7492
  %7496 = vmatprep.subr.bf16.mxu0 0
  %7497 = vmatpush1.bf16.msra.mxu0 0
  %7498 = vmatprep.subr.bf16.mxu0 0
  %7499 = vmatpush1.bf16.msra.mxu0 0
  %7500 = vmatprep.subr.bf16.mxu0 0
  %7501 = vmatpush1.bf16.msra.mxu0 0
  %7502 = vmatprep.subr.bf16.mxu0 0
  %7503 = vmatpush1.bf16.msra.mxu0 0
  %7504 = vmatprep.subr.bf16.mxu0 0
  %7505 = vmatpush1.bf16.msra.mxu0 0
  %7506 = vmatprep.subr.bf16.mxu0 0
  %7507 = vmatpush1.bf16.msra.mxu0 0
  %7508 = vmatprep.subr.bf16.mxu0 0
  %7509 = vmatpush1.bf16.msra.mxu0 0
  %7510 = vmatprep.subr.bf16.mxu0 0
  %7511 = vmatpush1.bf16.msra.mxu0 0
  %7512 = vmatprep.subr.bf16.mxu0 0
  %7513 = vmatpush1.bf16.msra.mxu0 0
  %7514 = vmatprep.subr.bf16.mxu0 0
  %7515 = vmatpush1.bf16.msra.mxu0 0
  %7516 = vmatprep.subr.bf16.mxu0 0
  %7517 = vmatpush1.bf16.msra.mxu0 0
  %7518 = vmatprep.subr.bf16.mxu0 0
  %7519 = vmatpush1.bf16.msra.mxu0 0
  %7520 = vmatprep.subr.bf16.mxu0 0
  %7521 = vmatpush1.bf16.msra.mxu0 0
  %7522 = vmatprep.subr.bf16.mxu0 0
  %7523 = vmatpush1.bf16.msra.mxu0 0
  %7524 = vmatprep.subr.bf16.mxu0 0
  %7525 = vmatpush1.bf16.msra.mxu0 0
  %7526 = vmatprep.mubr.bf16.mxu0 0
  %7527 = vmatmul.mubr.bf16.gmra.mrb[0].mxu0 %v7489
  %v7528 = vpop.f32.mrb[0].mxu0
  %v7529 = vadd.f32 0.0, %v7528
  %v7530 = vpop.f32.mrb[0].mxu0
  %v7531 = vpop.f32.mrb[0].mxu0
  %v7532 = vpop.f32.mrb[0].mxu0
  %7533 = vdwg.mxu0
  %7534 = vrot.lane.b32.xlu0 %v5837, 96
  %v7535 = vpop.permute.xlu0 %7534
  %v7537 = vsel %vm2164, %v6813, 0
  %v7540 = vsel %vm2362, %v7535, 0
  %7542 = vmatprep.subr.bf16.mxu0 0
  %7543 = vmatpush1.bf16.msra.mxu0 %v7540
  %7544 = vmatprep.subr.bf16.mxu0 0
  %7545 = vmatpush1.bf16.msra.mxu0 0
  %7546 = vmatprep.subr.bf16.mxu0 0
  %7547 = vmatpush1.bf16.msra.mxu0 0
  %7548 = vmatprep.subr.bf16.mxu0 0
  %7549 = vmatpush1.bf16.msra.mxu0 0
  %7550 = vmatprep.subr.bf16.mxu0 0
  %7551 = vmatpush1.bf16.msra.mxu0 0
  %7552 = vmatprep.subr.bf16.mxu0 0
  %7553 = vmatpush1.bf16.msra.mxu0 0
  %7554 = vmatprep.subr.bf16.mxu0 0
  %7555 = vmatpush1.bf16.msra.mxu0 0
  %7556 = vmatprep.subr.bf16.mxu0 0
  %7557 = vmatpush1.bf16.msra.mxu0 0
  %7558 = vmatprep.subr.bf16.mxu0 0
  %7559 = vmatpush1.bf16.msra.mxu0 0
  %7560 = vmatprep.subr.bf16.mxu0 0
  %7561 = vmatpush1.bf16.msra.mxu0 0
  %7562 = vmatprep.subr.bf16.mxu0 0
  %7563 = vmatpush1.bf16.msra.mxu0 0
  %7564 = vmatprep.subr.bf16.mxu0 0
  %7565 = vmatpush1.bf16.msra.mxu0 0
  %7566 = vmatprep.subr.bf16.mxu0 0
  %7567 = vmatpush1.bf16.msra.mxu0 0
  %7568 = vmatprep.subr.bf16.mxu0 0
  %7569 = vmatpush1.bf16.msra.mxu0 0
  %7570 = vmatprep.subr.bf16.mxu0 0
  %7571 = vmatpush1.bf16.msra.mxu0 0
  %7572 = vmatprep.subr.bf16.mxu0 0
  %7573 = vmatpush1.bf16.msra.mxu0 0
  %7574 = vmatprep.mubr.bf16.mxu0 0
  %7575 = vmatmul.mubr.bf16.gmra.mrb[0].mxu0 %v7537
  %v7576 = vpop.f32.mrb[0].mxu0
  %v7577 = vadd.f32 0.0, %v7576
  %v7578 = vpop.f32.mrb[0].mxu0
  %v7579 = vpop.f32.mrb[0].mxu0
  %v7580 = vpop.f32.mrb[0].mxu0
  %7581 = vdwg.mxu0
  %v7582 = vcombine.high %v6857, 0.0
  %v7584 = vunpack.c.l.s4 1983009808
  %v7585 = vunpack.c.0.s8 %v7584
  %v7586 = vlaneseq
  %v7587 = vshrl.u32 %v7586, 7
  %v7588 = vsub.s32 %v7585, %v7587
  %v7589 = vrot.slane %v6857, %v7588
  %v7591 = vunpack.c.l.s4 1983009808
  %v7592 = vunpack.c.0.s8 %v7591
  %v7593 = vlaneseq
  %v7594 = vshrl.u32 %v7593, 7
  %v7595 = vsub.s32 %v7592, %v7594
  %v7596 = vrot.slane %v7582, %v7595
  %v7597 = vcombine.high %v6905, 0.0
  %v7599 = vunpack.c.l.s4 1983009808
  %v7600 = vunpack.c.0.s8 %v7599
  %v7601 = vlaneseq
  %v7602 = vshrl.u32 %v7601, 7
  %v7603 = vsub.s32 %v7600, %v7602
  %v7604 = vrot.slane %v6905, %v7603
  %v7606 = vunpack.c.l.s4 1983009808
  %v7607 = vunpack.c.0.s8 %v7606
  %v7608 = vlaneseq
  %v7609 = vshrl.u32 %v7608, 7
  %v7610 = vsub.s32 %v7607, %v7609
  %v7611 = vrot.slane %v7597, %v7610
  %v7612 = vcombine.low %v7589, %v7604
  %v7613 = vcombine.high %v7589, %v7604
  %v7615 = vunpack.c.l.s4 1934713408
  %v7616 = vunpack.c.0.s8 %v7615
  %v7617 = vlaneseq
  %v7618 = vshrl.u32 %v7617, 7
  %v7619 = vsub.s32 %v7616, %v7618
  %v7620 = vrot.slane %v7612, %v7619
  %v7622 = vunpack.c.l.s4 1934713408
  %v7623 = vunpack.c.0.s8 %v7622
  %v7624 = vlaneseq
  %v7625 = vshrl.u32 %v7624, 7
  %v7626 = vsub.s32 %v7623, %v7625
  %v7627 = vrot.slane %v7613, %v7626
  %v7628 = vcombine.low %v7596, %v7611
  %v7629 = vcombine.high %v7596, %v7611
  %v7631 = vunpack.c.l.s4 1934713408
  %v7632 = vunpack.c.0.s8 %v7631
  %v7633 = vlaneseq
  %v7634 = vshrl.u32 %v7633, 7
  %v7635 = vsub.s32 %v7632, %v7634
  %v7636 = vrot.slane %v7628, %v7635
  %v7638 = vunpack.c.l.s4 1934713408
  %v7639 = vunpack.c.0.s8 %v7638
  %v7640 = vlaneseq
  %v7641 = vshrl.u32 %v7640, 7
  %v7642 = vsub.s32 %v7639, %v7641
  %v7643 = vrot.slane %v7629, %v7642
  %v7644 = vcombine.high %v7620, 0.0
  %v7645 = vcombine.high %v7627, 0.0
  %v7646 = vcombine.high %v7636, 0.0
  %v7647 = vcombine.high %v7643, 0.0
  %v7648 = vcombine.high %v6953, 0.0
  %v7650 = vunpack.c.l.s4 1983009808
  %v7651 = vunpack.c.0.s8 %v7650
  %v7652 = vlaneseq
  %v7653 = vshrl.u32 %v7652, 7
  %v7654 = vsub.s32 %v7651, %v7653
  %v7655 = vrot.slane %v6953, %v7654
  %v7657 = vunpack.c.l.s4 1983009808
  %v7658 = vunpack.c.0.s8 %v7657
  %v7659 = vlaneseq
  %v7660 = vshrl.u32 %v7659, 7
  %v7661 = vsub.s32 %v7658, %v7660
  %v7662 = vrot.slane %v7648, %v7661
  %v7663 = vcombine.high %v7001, 0.0
  %v7665 = vunpack.c.l.s4 1983009808
  %v7666 = vunpack.c.0.s8 %v7665
  %v7667 = vlaneseq
  %v7668 = vshrl.u32 %v7667, 7
  %v7669 = vsub.s32 %v7666, %v7668
  %v7670 = vrot.slane %v7001, %v7669
  %v7672 = vunpack.c.l.s4 1983009808
  %v7673 = vunpack.c.0.s8 %v7672
  %v7674 = vlaneseq
  %v7675 = vshrl.u32 %v7674, 7
  %v7676 = vsub.s32 %v7673, %v7675
  %v7677 = vrot.slane %v7663, %v7676
  %v7678 = vcombine.low %v7655, %v7670
  %v7679 = vcombine.high %v7655, %v7670
  %v7681 = vunpack.c.l.s4 1934713408
  %v7682 = vunpack.c.0.s8 %v7681
  %v7683 = vlaneseq
  %v7684 = vshrl.u32 %v7683, 7
  %v7685 = vsub.s32 %v7682, %v7684
  %v7686 = vrot.slane %v7678, %v7685
  %v7688 = vunpack.c.l.s4 1934713408
  %v7689 = vunpack.c.0.s8 %v7688
  %v7690 = vlaneseq
  %v7691 = vshrl.u32 %v7690, 7
  %v7692 = vsub.s32 %v7689, %v7691
  %v7693 = vrot.slane %v7679, %v7692
  %v7694 = vcombine.low %v7662, %v7677
  %v7695 = vcombine.high %v7662, %v7677
  %v7697 = vunpack.c.l.s4 1934713408
  %v7698 = vunpack.c.0.s8 %v7697
  %v7699 = vlaneseq
  %v7700 = vshrl.u32 %v7699, 7
  %v7701 = vsub.s32 %v7698, %v7700
  %v7702 = vrot.slane %v7694, %v7701
  %v7704 = vunpack.c.l.s4 1934713408
  %v7705 = vunpack.c.0.s8 %v7704
  %v7706 = vlaneseq
  %v7707 = vshrl.u32 %v7706, 7
  %v7708 = vsub.s32 %v7705, %v7707
  %v7709 = vrot.slane %v7695, %v7708
  %v7710 = vcombine.high %v7686, 0.0
  %v7711 = vcombine.high %v7693, 0.0
  %v7712 = vcombine.high %v7702, 0.0
  %v7713 = vcombine.high %v7709, 0.0
  %v7714 = vcombine.high %v7049, 0.0
  %v7716 = vunpack.c.l.s4 1983009808
  %v7717 = vunpack.c.0.s8 %v7716
  %v7718 = vlaneseq
  %v7719 = vshrl.u32 %v7718, 7
  %v7720 = vsub.s32 %v7717, %v7719
  %v7721 = vrot.slane %v7049, %v7720
  %v7723 = vunpack.c.l.s4 1983009808
  %v7724 = vunpack.c.0.s8 %v7723
  %v7725 = vlaneseq
  %v7726 = vshrl.u32 %v7725, 7
  %v7727 = vsub.s32 %v7724, %v7726
  %v7728 = vrot.slane %v7714, %v7727
  %v7729 = vcombine.high %v7097, 0.0
  %v7731 = vunpack.c.l.s4 1983009808
  %v7732 = vunpack.c.0.s8 %v7731
  %v7733 = vlaneseq
  %v7734 = vshrl.u32 %v7733, 7
  %v7735 = vsub.s32 %v7732, %v7734
  %v7736 = vrot.slane %v7097, %v7735
  %v7738 = vunpack.c.l.s4 1983009808
  %v7739 = vunpack.c.0.s8 %v7738
  %v7740 = vlaneseq
  %v7741 = vshrl.u32 %v7740, 7
  %v7742 = vsub.s32 %v7739, %v7741
  %v7743 = vrot.slane %v7729, %v7742
  %v7744 = vcombine.low %v7721, %v7736
  %v7745 = vcombine.high %v7721, %v7736
  %v7747 = vunpack.c.l.s4 1934713408
  %v7748 = vunpack.c.0.s8 %v7747
  %v7749 = vlaneseq
  %v7750 = vshrl.u32 %v7749, 7
  %v7751 = vsub.s32 %v7748, %v7750
  %v7752 = vrot.slane %v7744, %v7751
  %v7754 = vunpack.c.l.s4 1934713408
  %v7755 = vunpack.c.0.s8 %v7754
  %v7756 = vlaneseq
  %v7757 = vshrl.u32 %v7756, 7
  %v7758 = vsub.s32 %v7755, %v7757
  %v7759 = vrot.slane %v7745, %v7758
  %v7760 = vcombine.low %v7728, %v7743
  %v7761 = vcombine.high %v7728, %v7743
  %v7763 = vunpack.c.l.s4 1934713408
  %v7764 = vunpack.c.0.s8 %v7763
  %v7765 = vlaneseq
  %v7766 = vshrl.u32 %v7765, 7
  %v7767 = vsub.s32 %v7764, %v7766
  %v7768 = vrot.slane %v7760, %v7767
  %v7770 = vunpack.c.l.s4 1934713408
  %v7771 = vunpack.c.0.s8 %v7770
  %v7772 = vlaneseq
  %v7773 = vshrl.u32 %v7772, 7
  %v7774 = vsub.s32 %v7771, %v7773
  %v7775 = vrot.slane %v7761, %v7774
  %v7776 = vcombine.high %v7752, 0.0
  %v7777 = vcombine.high %v7759, 0.0
  %v7778 = vcombine.high %v7768, 0.0
  %v7779 = vcombine.high %v7775, 0.0
  %v7780 = vcombine.high %v7145, 0.0
  %v7782 = vunpack.c.l.s4 1983009808
  %v7783 = vunpack.c.0.s8 %v7782
  %v7784 = vlaneseq
  %v7785 = vshrl.u32 %v7784, 7
  %v7786 = vsub.s32 %v7783, %v7785
  %v7787 = vrot.slane %v7145, %v7786
  %v7789 = vunpack.c.l.s4 1983009808
  %v7790 = vunpack.c.0.s8 %v7789
  %v7791 = vlaneseq
  %v7792 = vshrl.u32 %v7791, 7
  %v7793 = vsub.s32 %v7790, %v7792
  %v7794 = vrot.slane %v7780, %v7793
  %v7795 = vcombine.high %v7193, 0.0
  %v7797 = vunpack.c.l.s4 1983009808
  %v7798 = vunpack.c.0.s8 %v7797
  %v7799 = vlaneseq
  %v7800 = vshrl.u32 %v7799, 7
  %v7801 = vsub.s32 %v7798, %v7800
  %v7802 = vrot.slane %v7193, %v7801
  %v7804 = vunpack.c.l.s4 1983009808
  %v7805 = vunpack.c.0.s8 %v7804
  %v7806 = vlaneseq
  %v7807 = vshrl.u32 %v7806, 7
  %v7808 = vsub.s32 %v7805, %v7807
  %v7809 = vrot.slane %v7795, %v7808
  %v7810 = vcombine.low %v7787, %v7802
  %v7811 = vcombine.high %v7787, %v7802
  %v7813 = vunpack.c.l.s4 1934713408
  %v7814 = vunpack.c.0.s8 %v7813
  %v7815 = vlaneseq
  %v7816 = vshrl.u32 %v7815, 7
  %v7817 = vsub.s32 %v7814, %v7816
  %v7818 = vrot.slane %v7810, %v7817
  %v7820 = vunpack.c.l.s4 1934713408
  %v7821 = vunpack.c.0.s8 %v7820
  %v7822 = vlaneseq
  %v7823 = vshrl.u32 %v7822, 7
  %v7824 = vsub.s32 %v7821, %v7823
  %v7825 = vrot.slane %v7811, %v7824
  %v7826 = vcombine.low %v7794, %v7809
  %v7827 = vcombine.high %v7794, %v7809
  %v7829 = vunpack.c.l.s4 1934713408
  %v7830 = vunpack.c.0.s8 %v7829
  %v7831 = vlaneseq
  %v7832 = vshrl.u32 %v7831, 7
  %v7833 = vsub.s32 %v7830, %v7832
  %v7834 = vrot.slane %v7826, %v7833
  %v7836 = vunpack.c.l.s4 1934713408
  %v7837 = vunpack.c.0.s8 %v7836
  %v7838 = vlaneseq
  %v7839 = vshrl.u32 %v7838, 7
  %v7840 = vsub.s32 %v7837, %v7839
  %v7841 = vrot.slane %v7827, %v7840
  %v7842 = vcombine.high %v7818, 0.0
  %v7843 = vcombine.high %v7825, 0.0
  %v7844 = vcombine.high %v7834, 0.0
  %v7845 = vcombine.high %v7841, 0.0
  %v7846 = vcombine.high %v7241, 0.0
  %v7848 = vunpack.c.l.s4 1983009808
  %v7849 = vunpack.c.0.s8 %v7848
  %v7850 = vlaneseq
  %v7851 = vshrl.u32 %v7850, 7
  %v7852 = vsub.s32 %v7849, %v7851
  %v7853 = vrot.slane %v7241, %v7852
  %v7855 = vunpack.c.l.s4 1983009808
  %v7856 = vunpack.c.0.s8 %v7855
  %v7857 = vlaneseq
  %v7858 = vshrl.u32 %v7857, 7
  %v7859 = vsub.s32 %v7856, %v7858
  %v7860 = vrot.slane %v7846, %v7859
  %v7861 = vcombine.high %v7289, 0.0
  %v7863 = vunpack.c.l.s4 1983009808
  %v7864 = vunpack.c.0.s8 %v7863
  %v7865 = vlaneseq
  %v7866 = vshrl.u32 %v7865, 7
  %v7867 = vsub.s32 %v7864, %v7866
  %v7868 = vrot.slane %v7289, %v7867
  %v7870 = vunpack.c.l.s4 1983009808
  %v7871 = vunpack.c.0.s8 %v7870
  %v7872 = vlaneseq
  %v7873 = vshrl.u32 %v7872, 7
  %v7874 = vsub.s32 %v7871, %v7873
  %v7875 = vrot.slane %v7861, %v7874
  %v7876 = vcombine.low %v7853, %v7868
  %v7877 = vcombine.high %v7853, %v7868
  %v7879 = vunpack.c.l.s4 1934713408
  %v7880 = vunpack.c.0.s8 %v7879
  %v7881 = vlaneseq
  %v7882 = vshrl.u32 %v7881, 7
  %v7883 = vsub.s32 %v7880, %v7882
  %v7884 = vrot.slane %v7876, %v7883
  %v7886 = vunpack.c.l.s4 1934713408
  %v7887 = vunpack.c.0.s8 %v7886
  %v7888 = vlaneseq
  %v7889 = vshrl.u32 %v7888, 7
  %v7890 = vsub.s32 %v7887, %v7889
  %v7891 = vrot.slane %v7877, %v7890
  %v7892 = vcombine.low %v7860, %v7875
  %v7893 = vcombine.high %v7860, %v7875
  %v7895 = vunpack.c.l.s4 1934713408
  %v7896 = vunpack.c.0.s8 %v7895
  %v7897 = vlaneseq
  %v7898 = vshrl.u32 %v7897, 7
  %v7899 = vsub.s32 %v7896, %v7898
  %v7900 = vrot.slane %v7892, %v7899
  %v7902 = vunpack.c.l.s4 1934713408
  %v7903 = vunpack.c.0.s8 %v7902
  %v7904 = vlaneseq
  %v7905 = vshrl.u32 %v7904, 7
  %v7906 = vsub.s32 %v7903, %v7905
  %v7907 = vrot.slane %v7893, %v7906
  %v7908 = vcombine.high %v7884, 0.0
  %v7909 = vcombine.high %v7891, 0.0
  %v7910 = vcombine.high %v7900, 0.0
  %v7911 = vcombine.high %v7907, 0.0
  %v7912 = vcombine.high %v7337, 0.0
  %v7914 = vunpack.c.l.s4 1983009808
  %v7915 = vunpack.c.0.s8 %v7914
  %v7916 = vlaneseq
  %v7917 = vshrl.u32 %v7916, 7
  %v7918 = vsub.s32 %v7915, %v7917
  %v7919 = vrot.slane %v7337, %v7918
  %v7921 = vunpack.c.l.s4 1983009808
  %v7922 = vunpack.c.0.s8 %v7921
  %v7923 = vlaneseq
  %v7924 = vshrl.u32 %v7923, 7
  %v7925 = vsub.s32 %v7922, %v7924
  %v7926 = vrot.slane %v7912, %v7925
  %v7927 = vcombine.high %v7385, 0.0
  %v7929 = vunpack.c.l.s4 1983009808
  %v7930 = vunpack.c.0.s8 %v7929
  %v7931 = vlaneseq
  %v7932 = vshrl.u32 %v7931, 7
  %v7933 = vsub.s32 %v7930, %v7932
  %v7934 = vrot.slane %v7385, %v7933
  %v7936 = vunpack.c.l.s4 1983009808
  %v7937 = vunpack.c.0.s8 %v7936
  %v7938 = vlaneseq
  %v7939 = vshrl.u32 %v7938, 7
  %v7940 = vsub.s32 %v7937, %v7939
  %v7941 = vrot.slane %v7927, %v7940
  %v7942 = vcombine.low %v7919, %v7934
  %v7943 = vcombine.high %v7919, %v7934
  %v7945 = vunpack.c.l.s4 1934713408
  %v7946 = vunpack.c.0.s8 %v7945
  %v7947 = vlaneseq
  %v7948 = vshrl.u32 %v7947, 7
  %v7949 = vsub.s32 %v7946, %v7948
  %v7950 = vrot.slane %v7942, %v7949
  %v7952 = vunpack.c.l.s4 1934713408
  %v7953 = vunpack.c.0.s8 %v7952
  %v7954 = vlaneseq
  %v7955 = vshrl.u32 %v7954, 7
  %v7956 = vsub.s32 %v7953, %v7955
  %v7957 = vrot.slane %v7943, %v7956
  %v7958 = vcombine.low %v7926, %v7941
  %v7959 = vcombine.high %v7926, %v7941
  %v7961 = vunpack.c.l.s4 1934713408
  %v7962 = vunpack.c.0.s8 %v7961
  %v7963 = vlaneseq
  %v7964 = vshrl.u32 %v7963, 7
  %v7965 = vsub.s32 %v7962, %v7964
  %v7966 = vrot.slane %v7958, %v7965
  %v7968 = vunpack.c.l.s4 1934713408
  %v7969 = vunpack.c.0.s8 %v7968
  %v7970 = vlaneseq
  %v7971 = vshrl.u32 %v7970, 7
  %v7972 = vsub.s32 %v7969, %v7971
  %v7973 = vrot.slane %v7959, %v7972
  %v7974 = vcombine.high %v7950, 0.0
  %v7975 = vcombine.high %v7957, 0.0
  %v7976 = vcombine.high %v7966, 0.0
  %v7977 = vcombine.high %v7973, 0.0
  %v7978 = vcombine.high %v7433, 0.0
  %v7980 = vunpack.c.l.s4 1983009808
  %v7981 = vunpack.c.0.s8 %v7980
  %v7982 = vlaneseq
  %v7983 = vshrl.u32 %v7982, 7
  %v7984 = vsub.s32 %v7981, %v7983
  %v7985 = vrot.slane %v7433, %v7984
  %v7987 = vunpack.c.l.s4 1983009808
  %v7988 = vunpack.c.0.s8 %v7987
  %v7989 = vlaneseq
  %v7990 = vshrl.u32 %v7989, 7
  %v7991 = vsub.s32 %v7988, %v7990
  %v7992 = vrot.slane %v7978, %v7991
  %v7993 = vcombine.high %v7481, 0.0
  %v7995 = vunpack.c.l.s4 1983009808
  %v7996 = vunpack.c.0.s8 %v7995
  %v7997 = vlaneseq
  %v7998 = vshrl.u32 %v7997, 7
  %v7999 = vsub.s32 %v7996, %v7998
  %v8000 = vrot.slane %v7481, %v7999
  %v8002 = vunpack.c.l.s4 1983009808
  %v8003 = vunpack.c.0.s8 %v8002
  %v8004 = vlaneseq
  %v8005 = vshrl.u32 %v8004, 7
  %v8006 = vsub.s32 %v8003, %v8005
  %v8007 = vrot.slane %v7993, %v8006
  %v8008 = vcombine.low %v7985, %v8000
  %v8009 = vcombine.high %v7985, %v8000
  %v8011 = vunpack.c.l.s4 1934713408
  %v8012 = vunpack.c.0.s8 %v8011
  %v8013 = vlaneseq
  %v8014 = vshrl.u32 %v8013, 7
  %v8015 = vsub.s32 %v8012, %v8014
  %v8016 = vrot.slane %v8008, %v8015
  %v8018 = vunpack.c.l.s4 1934713408
  %v8019 = vunpack.c.0.s8 %v8018
  %v8020 = vlaneseq
  %v8021 = vshrl.u32 %v8020, 7
  %v8022 = vsub.s32 %v8019, %v8021
  %v8023 = vrot.slane %v8009, %v8022
  %v8024 = vcombine.low %v7992, %v8007
  %v8025 = vcombine.high %v7992, %v8007
  %v8027 = vunpack.c.l.s4 1934713408
  %v8028 = vunpack.c.0.s8 %v8027
  %v8029 = vlaneseq
  %v8030 = vshrl.u32 %v8029, 7
  %v8031 = vsub.s32 %v8028, %v8030
  %v8032 = vrot.slane %v8024, %v8031
  %v8034 = vunpack.c.l.s4 1934713408
  %v8035 = vunpack.c.0.s8 %v8034
  %v8036 = vlaneseq
  %v8037 = vshrl.u32 %v8036, 7
  %v8038 = vsub.s32 %v8035, %v8037
  %v8039 = vrot.slane %v8025, %v8038
  %v8040 = vcombine.high %v8016, 0.0
  %v8041 = vcombine.high %v8023, 0.0
  %v8042 = vcombine.high %v8032, 0.0
  %v8043 = vcombine.high %v8039, 0.0
  %v8044 = vcombine.high %v7529, 0.0
  %v8046 = vunpack.c.l.s4 1983009808
  %v8047 = vunpack.c.0.s8 %v8046
  %v8048 = vlaneseq
  %v8049 = vshrl.u32 %v8048, 7
  %v8050 = vsub.s32 %v8047, %v8049
  %v8051 = vrot.slane %v7529, %v8050
  %v8053 = vunpack.c.l.s4 1983009808
  %v8054 = vunpack.c.0.s8 %v8053
  %v8055 = vlaneseq
  %v8056 = vshrl.u32 %v8055, 7
  %v8057 = vsub.s32 %v8054, %v8056
  %v8058 = vrot.slane %v8044, %v8057
  %v8059 = vcombine.high %v7577, 0.0
  %v8061 = vunpack.c.l.s4 1983009808
  %v8062 = vunpack.c.0.s8 %v8061
  %v8063 = vlaneseq
  %v8064 = vshrl.u32 %v8063, 7
  %v8065 = vsub.s32 %v8062, %v8064
  %v8066 = vrot.slane %v7577, %v8065
  %v8068 = vunpack.c.l.s4 1983009808
  %v8069 = vunpack.c.0.s8 %v8068
  %v8070 = vlaneseq
  %v8071 = vshrl.u32 %v8070, 7
  %v8072 = vsub.s32 %v8069, %v8071
  %v8073 = vrot.slane %v8059, %v8072
  %v8074 = vcombine.low %v8051, %v8066
  %v8075 = vcombine.high %v8051, %v8066
  %v8077 = vunpack.c.l.s4 1934713408
  %v8078 = vunpack.c.0.s8 %v8077
  %v8079 = vlaneseq
  %v8080 = vshrl.u32 %v8079, 7
  %v8081 = vsub.s32 %v8078, %v8080
  %v8082 = vrot.slane %v8074, %v8081
  %v8084 = vunpack.c.l.s4 1934713408
  %v8085 = vunpack.c.0.s8 %v8084
  %v8086 = vlaneseq
  %v8087 = vshrl.u32 %v8086, 7
  %v8088 = vsub.s32 %v8085, %v8087
  %v8089 = vrot.slane %v8075, %v8088
  %v8090 = vcombine.low %v8058, %v8073
  %v8091 = vcombine.high %v8058, %v8073
  %v8093 = vunpack.c.l.s4 1934713408
  %v8094 = vunpack.c.0.s8 %v8093
  %v8095 = vlaneseq
  %v8096 = vshrl.u32 %v8095, 7
  %v8097 = vsub.s32 %v8094, %v8096
  %v8098 = vrot.slane %v8090, %v8097
  %v8100 = vunpack.c.l.s4 1934713408
  %v8101 = vunpack.c.0.s8 %v8100
  %v8102 = vlaneseq
  %v8103 = vshrl.u32 %v8102, 7
  %v8104 = vsub.s32 %v8101, %v8103
  %v8105 = vrot.slane %v8091, %v8104
  %v8106 = vcombine.high %v8082, 0.0
  %v8107 = vcombine.high %v8089, 0.0
  %v8108 = vcombine.high %v8098, 0.0
  %v8109 = vcombine.high %v8105, 0.0
  %v8110 = vcombine.low %v7620, %v7627
  %v8112 = vunpack.c.l.s4 1983009808
  %v8113 = vunpack.c.0.s8 %v8112
  %v8114 = vlaneseq
  %v8115 = vshrl.u32 %v8114, 7
  %v8116 = vsub.s32 %v8113, %v8115
  %v8117 = vrot.slane %v8110, %v8116
  %v8118 = vcombine.low %v7644, %v7645
  %v8120 = vunpack.c.l.s4 1983009808
  %v8121 = vunpack.c.0.s8 %v8120
  %v8122 = vlaneseq
  %v8123 = vshrl.u32 %v8122, 7
  %v8124 = vsub.s32 %v8121, %v8123
  %v8125 = vrot.slane %v8118, %v8124
  %v8126 = vcombine.low %v7636, %v7643
  %v8128 = vunpack.c.l.s4 1983009808
  %v8129 = vunpack.c.0.s8 %v8128
  %v8130 = vlaneseq
  %v8131 = vshrl.u32 %v8130, 7
  %v8132 = vsub.s32 %v8129, %v8131
  %v8133 = vrot.slane %v8126, %v8132
  %v8134 = vcombine.low %v7646, %v7647
  %v8136 = vunpack.c.l.s4 1983009808
  %v8137 = vunpack.c.0.s8 %v8136
  %v8138 = vlaneseq
  %v8139 = vshrl.u32 %v8138, 7
  %v8140 = vsub.s32 %v8137, %v8139
  %v8141 = vrot.slane %v8134, %v8140
  %v8142 = vcombine.low %v8117, %v8125
  %v8144 = vunpack.c.l.s4 1934713408
  %v8145 = vunpack.c.0.s8 %v8144
  %v8146 = vlaneseq
  %v8147 = vshrl.u32 %v8146, 7
  %v8148 = vsub.s32 %v8145, %v8147
  %v8149 = vrot.slane %v8142, %v8148
  %v8150 = vcombine.low %v8133, %v8141
  %v8152 = vunpack.c.l.s4 1934713408
  %v8153 = vunpack.c.0.s8 %v8152
  %v8154 = vlaneseq
  %v8155 = vshrl.u32 %v8154, 7
  %v8156 = vsub.s32 %v8153, %v8155
  %v8157 = vrot.slane %v8150, %v8156
  %v8158 = vcombine.low %v8149, %v8157
  %v8159 = vcombine.high %v8149, %v8157
  %v8160 = vcombine.low %v7686, %v7693
  %v8162 = vunpack.c.l.s4 1983009808
  %v8163 = vunpack.c.0.s8 %v8162
  %v8164 = vlaneseq
  %v8165 = vshrl.u32 %v8164, 7
  %v8166 = vsub.s32 %v8163, %v8165
  %v8167 = vrot.slane %v8160, %v8166
  %v8168 = vcombine.low %v7710, %v7711
  %v8170 = vunpack.c.l.s4 1983009808
  %v8171 = vunpack.c.0.s8 %v8170
  %v8172 = vlaneseq
  %v8173 = vshrl.u32 %v8172, 7
  %v8174 = vsub.s32 %v8171, %v8173
  %v8175 = vrot.slane %v8168, %v8174
  %v8176 = vcombine.low %v7702, %v7709
  %v8178 = vunpack.c.l.s4 1983009808
  %v8179 = vunpack.c.0.s8 %v8178
  %v8180 = vlaneseq
  %v8181 = vshrl.u32 %v8180, 7
  %v8182 = vsub.s32 %v8179, %v8181
  %v8183 = vrot.slane %v8176, %v8182
  %v8184 = vcombine.low %v7712, %v7713
  %v8186 = vunpack.c.l.s4 1983009808
  %v8187 = vunpack.c.0.s8 %v8186
  %v8188 = vlaneseq
  %v8189 = vshrl.u32 %v8188, 7
  %v8190 = vsub.s32 %v8187, %v8189
  %v8191 = vrot.slane %v8184, %v8190
  %v8192 = vcombine.low %v8167, %v8175
  %v8194 = vunpack.c.l.s4 1934713408
  %v8195 = vunpack.c.0.s8 %v8194
  %v8196 = vlaneseq
  %v8197 = vshrl.u32 %v8196, 7
  %v8198 = vsub.s32 %v8195, %v8197
  %v8199 = vrot.slane %v8192, %v8198
  %v8200 = vcombine.low %v8183, %v8191
  %v8202 = vunpack.c.l.s4 1934713408
  %v8203 = vunpack.c.0.s8 %v8202
  %v8204 = vlaneseq
  %v8205 = vshrl.u32 %v8204, 7
  %v8206 = vsub.s32 %v8203, %v8205
  %v8207 = vrot.slane %v8200, %v8206
  %v8208 = vcombine.low %v8199, %v8207
  %v8209 = vcombine.high %v8199, %v8207
  %v8210 = vcombine.low %v7752, %v7759
  %v8212 = vunpack.c.l.s4 1983009808
  %v8213 = vunpack.c.0.s8 %v8212
  %v8214 = vlaneseq
  %v8215 = vshrl.u32 %v8214, 7
  %v8216 = vsub.s32 %v8213, %v8215
  %v8217 = vrot.slane %v8210, %v8216
  %v8218 = vcombine.low %v7776, %v7777
  %v8220 = vunpack.c.l.s4 1983009808
  %v8221 = vunpack.c.0.s8 %v8220
  %v8222 = vlaneseq
  %v8223 = vshrl.u32 %v8222, 7
  %v8224 = vsub.s32 %v8221, %v8223
  %v8225 = vrot.slane %v8218, %v8224
  %v8226 = vcombine.low %v7768, %v7775
  %v8228 = vunpack.c.l.s4 1983009808
  %v8229 = vunpack.c.0.s8 %v8228
  %v8230 = vlaneseq
  %v8231 = vshrl.u32 %v8230, 7
  %v8232 = vsub.s32 %v8229, %v8231
  %v8233 = vrot.slane %v8226, %v8232
  %v8234 = vcombine.low %v7778, %v7779
  %v8236 = vunpack.c.l.s4 1983009808
  %v8237 = vunpack.c.0.s8 %v8236
  %v8238 = vlaneseq
  %v8239 = vshrl.u32 %v8238, 7
  %v8240 = vsub.s32 %v8237, %v8239
  %v8241 = vrot.slane %v8234, %v8240
  %v8242 = vcombine.low %v8217, %v8225
  %v8244 = vunpack.c.l.s4 1934713408
  %v8245 = vunpack.c.0.s8 %v8244
  %v8246 = vlaneseq
  %v8247 = vshrl.u32 %v8246, 7
  %v8248 = vsub.s32 %v8245, %v8247
  %v8249 = vrot.slane %v8242, %v8248
  %v8250 = vcombine.low %v8233, %v8241
  %v8252 = vunpack.c.l.s4 1934713408
  %v8253 = vunpack.c.0.s8 %v8252
  %v8254 = vlaneseq
  %v8255 = vshrl.u32 %v8254, 7
  %v8256 = vsub.s32 %v8253, %v8255
  %v8257 = vrot.slane %v8250, %v8256
  %v8258 = vcombine.low %v8249, %v8257
  %v8259 = vcombine.high %v8249, %v8257
  %v8260 = vcombine.low %v7818, %v7825
  %v8262 = vunpack.c.l.s4 1983009808
  %v8263 = vunpack.c.0.s8 %v8262
  %v8264 = vlaneseq
  %v8265 = vshrl.u32 %v8264, 7
  %v8266 = vsub.s32 %v8263, %v8265
  %v8267 = vrot.slane %v8260, %v8266
  %v8268 = vcombine.low %v7842, %v7843
  %v8270 = vunpack.c.l.s4 1983009808
  %v8271 = vunpack.c.0.s8 %v8270
  %v8272 = vlaneseq
  %v8273 = vshrl.u32 %v8272, 7
  %v8274 = vsub.s32 %v8271, %v8273
  %v8275 = vrot.slane %v8268, %v8274
  %v8276 = vcombine.low %v7834, %v7841
  %v8278 = vunpack.c.l.s4 1983009808
  %v8279 = vunpack.c.0.s8 %v8278
  %v8280 = vlaneseq
  %v8281 = vshrl.u32 %v8280, 7
  %v8282 = vsub.s32 %v8279, %v8281
  %v8283 = vrot.slane %v8276, %v8282
  %v8284 = vcombine.low %v7844, %v7845
  %v8286 = vunpack.c.l.s4 1983009808
  %v8287 = vunpack.c.0.s8 %v8286
  %v8288 = vlaneseq
  %v8289 = vshrl.u32 %v8288, 7
  %v8290 = vsub.s32 %v8287, %v8289
  %v8291 = vrot.slane %v8284, %v8290
  %v8292 = vcombine.low %v8267, %v8275
  %v8294 = vunpack.c.l.s4 1934713408
  %v8295 = vunpack.c.0.s8 %v8294
  %v8296 = vlaneseq
  %v8297 = vshrl.u32 %v8296, 7
  %v8298 = vsub.s32 %v8295, %v8297
  %v8299 = vrot.slane %v8292, %v8298
  %v8300 = vcombine.low %v8283, %v8291
  %v8302 = vunpack.c.l.s4 1934713408
  %v8303 = vunpack.c.0.s8 %v8302
  %v8304 = vlaneseq
  %v8305 = vshrl.u32 %v8304, 7
  %v8306 = vsub.s32 %v8303, %v8305
  %v8307 = vrot.slane %v8300, %v8306
  %v8308 = vcombine.low %v8299, %v8307
  %v8309 = vcombine.high %v8299, %v8307
  %v8310 = vcombine.low %v7884, %v7891
  %v8312 = vunpack.c.l.s4 1983009808
  %v8313 = vunpack.c.0.s8 %v8312
  %v8314 = vlaneseq
  %v8315 = vshrl.u32 %v8314, 7
  %v8316 = vsub.s32 %v8313, %v8315
  %v8317 = vrot.slane %v8310, %v8316
  %v8318 = vcombine.low %v7908, %v7909
  %v8320 = vunpack.c.l.s4 1983009808
  %v8321 = vunpack.c.0.s8 %v8320
  %v8322 = vlaneseq
  %v8323 = vshrl.u32 %v8322, 7
  %v8324 = vsub.s32 %v8321, %v8323
  %v8325 = vrot.slane %v8318, %v8324
  %v8326 = vcombine.low %v7900, %v7907
  %v8328 = vunpack.c.l.s4 1983009808
  %v8329 = vunpack.c.0.s8 %v8328
  %v8330 = vlaneseq
  %v8331 = vshrl.u32 %v8330, 7
  %v8332 = vsub.s32 %v8329, %v8331
  %v8333 = vrot.slane %v8326, %v8332
  %v8334 = vcombine.low %v7910, %v7911
  %v8336 = vunpack.c.l.s4 1983009808
  %v8337 = vunpack.c.0.s8 %v8336
  %v8338 = vlaneseq
  %v8339 = vshrl.u32 %v8338, 7
  %v8340 = vsub.s32 %v8337, %v8339
  %v8341 = vrot.slane %v8334, %v8340
  %v8342 = vcombine.low %v8317, %v8325
  %v8344 = vunpack.c.l.s4 1934713408
  %v8345 = vunpack.c.0.s8 %v8344
  %v8346 = vlaneseq
  %v8347 = vshrl.u32 %v8346, 7
  %v8348 = vsub.s32 %v8345, %v8347
  %v8349 = vrot.slane %v8342, %v8348
  %v8350 = vcombine.low %v8333, %v8341
  %v8352 = vunpack.c.l.s4 1934713408
  %v8353 = vunpack.c.0.s8 %v8352
  %v8354 = vlaneseq
  %v8355 = vshrl.u32 %v8354, 7
  %v8356 = vsub.s32 %v8353, %v8355
  %v8357 = vrot.slane %v8350, %v8356
  %v8358 = vcombine.low %v8349, %v8357
  %v8359 = vcombine.high %v8349, %v8357
  %v8360 = vcombine.low %v7950, %v7957
  %v8362 = vunpack.c.l.s4 1983009808
  %v8363 = vunpack.c.0.s8 %v8362
  %v8364 = vlaneseq
  %v8365 = vshrl.u32 %v8364, 7
  %v8366 = vsub.s32 %v8363, %v8365
  %v8367 = vrot.slane %v8360, %v8366
  %v8368 = vcombine.low %v7974, %v7975
  %v8370 = vunpack.c.l.s4 1983009808
  %v8371 = vunpack.c.0.s8 %v8370
  %v8372 = vlaneseq
  %v8373 = vshrl.u32 %v8372, 7
  %v8374 = vsub.s32 %v8371, %v8373
  %v8375 = vrot.slane %v8368, %v8374
  %v8376 = vcombine.low %v7966, %v7973
  %v8378 = vunpack.c.l.s4 1983009808
  %v8379 = vunpack.c.0.s8 %v8378
  %v8380 = vlaneseq
  %v8381 = vshrl.u32 %v8380, 7
  %v8382 = vsub.s32 %v8379, %v8381
  %v8383 = vrot.slane %v8376, %v8382
  %v8384 = vcombine.low %v7976, %v7977
  %v8386 = vunpack.c.l.s4 1983009808
  %v8387 = vunpack.c.0.s8 %v8386
  %v8388 = vlaneseq
  %v8389 = vshrl.u32 %v8388, 7
  %v8390 = vsub.s32 %v8387, %v8389
  %v8391 = vrot.slane %v8384, %v8390
  %v8392 = vcombine.low %v8367, %v8375
  %v8394 = vunpack.c.l.s4 1934713408
  %v8395 = vunpack.c.0.s8 %v8394
  %v8396 = vlaneseq
  %v8397 = vshrl.u32 %v8396, 7
  %v8398 = vsub.s32 %v8395, %v8397
  %v8399 = vrot.slane %v8392, %v8398
  %v8400 = vcombine.low %v8383, %v8391
  %v8402 = vunpack.c.l.s4 1934713408
  %v8403 = vunpack.c.0.s8 %v8402
  %v8404 = vlaneseq
  %v8405 = vshrl.u32 %v8404, 7
  %v8406 = vsub.s32 %v8403, %v8405
  %v8407 = vrot.slane %v8400, %v8406
  %v8408 = vcombine.low %v8399, %v8407
  %v8409 = vcombine.high %v8399, %v8407
  %v8410 = vcombine.low %v8016, %v8023
  %v8412 = vunpack.c.l.s4 1983009808
  %v8413 = vunpack.c.0.s8 %v8412
  %v8414 = vlaneseq
  %v8415 = vshrl.u32 %v8414, 7
  %v8416 = vsub.s32 %v8413, %v8415
  %v8417 = vrot.slane %v8410, %v8416
  %v8418 = vcombine.low %v8040, %v8041
  %v8420 = vunpack.c.l.s4 1983009808
  %v8421 = vunpack.c.0.s8 %v8420
  %v8422 = vlaneseq
  %v8423 = vshrl.u32 %v8422, 7
  %v8424 = vsub.s32 %v8421, %v8423
  %v8425 = vrot.slane %v8418, %v8424
  %v8426 = vcombine.low %v8032, %v8039
  %v8428 = vunpack.c.l.s4 1983009808
  %v8429 = vunpack.c.0.s8 %v8428
  %v8430 = vlaneseq
  %v8431 = vshrl.u32 %v8430, 7
  %v8432 = vsub.s32 %v8429, %v8431
  %v8433 = vrot.slane %v8426, %v8432
  %v8434 = vcombine.low %v8042, %v8043
  %v8436 = vunpack.c.l.s4 1983009808
  %v8437 = vunpack.c.0.s8 %v8436
  %v8438 = vlaneseq
  %v8439 = vshrl.u32 %v8438, 7
  %v8440 = vsub.s32 %v8437, %v8439
  %v8441 = vrot.slane %v8434, %v8440
  %v8442 = vcombine.low %v8417, %v8425
  %v8444 = vunpack.c.l.s4 1934713408
  %v8445 = vunpack.c.0.s8 %v8444
  %v8446 = vlaneseq
  %v8447 = vshrl.u32 %v8446, 7
  %v8448 = vsub.s32 %v8445, %v8447
  %v8449 = vrot.slane %v8442, %v8448
  %v8450 = vcombine.low %v8433, %v8441
  %v8452 = vunpack.c.l.s4 1934713408
  %v8453 = vunpack.c.0.s8 %v8452
  %v8454 = vlaneseq
  %v8455 = vshrl.u32 %v8454, 7
  %v8456 = vsub.s32 %v8453, %v8455
  %v8457 = vrot.slane %v8450, %v8456
  %v8458 = vcombine.low %v8449, %v8457
  %v8459 = vcombine.high %v8449, %v8457
  %v8460 = vcombine.low %v8082, %v8089
  %v8462 = vunpack.c.l.s4 1983009808
  %v8463 = vunpack.c.0.s8 %v8462
  %v8464 = vlaneseq
  %v8465 = vshrl.u32 %v8464, 7
  %v8466 = vsub.s32 %v8463, %v8465
  %v8467 = vrot.slane %v8460, %v8466
  %v8468 = vcombine.low %v8106, %v8107
  %v8470 = vunpack.c.l.s4 1983009808
  %v8471 = vunpack.c.0.s8 %v8470
  %v8472 = vlaneseq
  %v8473 = vshrl.u32 %v8472, 7
  %v8474 = vsub.s32 %v8471, %v8473
  %v8475 = vrot.slane %v8468, %v8474
  %v8476 = vcombine.low %v8098, %v8105
  %v8478 = vunpack.c.l.s4 1983009808
  %v8479 = vunpack.c.0.s8 %v8478
  %v8480 = vlaneseq
  %v8481 = vshrl.u32 %v8480, 7
  %v8482 = vsub.s32 %v8479, %v8481
  %v8483 = vrot.slane %v8476, %v8482
  %v8484 = vcombine.low %v8108, %v8109
  %v8486 = vunpack.c.l.s4 1983009808
  %v8487 = vunpack.c.0.s8 %v8486
  %v8488 = vlaneseq
  %v8489 = vshrl.u32 %v8488, 7
  %v8490 = vsub.s32 %v8487, %v8489
  %v8491 = vrot.slane %v8484, %v8490
  %v8492 = vcombine.low %v8467, %v8475
  %v8494 = vunpack.c.l.s4 1934713408
  %v8495 = vunpack.c.0.s8 %v8494
  %v8496 = vlaneseq
  %v8497 = vshrl.u32 %v8496, 7
  %v8498 = vsub.s32 %v8495, %v8497
  %v8499 = vrot.slane %v8492, %v8498
  %v8500 = vcombine.low %v8483, %v8491
  %v8502 = vunpack.c.l.s4 1934713408
  %v8503 = vunpack.c.0.s8 %v8502
  %v8504 = vlaneseq
  %v8505 = vshrl.u32 %v8504, 7
  %v8506 = vsub.s32 %v8503, %v8505
  %v8507 = vrot.slane %v8500, %v8506
  %v8508 = vcombine.low %v8499, %v8507
  %v8509 = vcombine.high %v8499, %v8507
  %8518 = vrot.lane.b32.xlu0 %v8159, 16
  %v8519 = vpop.permute.xlu0 %8518
  %8520 = vrot.lane.b32.xlu0 %v8209, 16
  %v8521 = vpop.permute.xlu0 %8520
  %8522 = vrot.lane.b32.xlu0 %v8259, 16
  %v8523 = vpop.permute.xlu0 %8522
  %8524 = vrot.lane.b32.xlu0 %v8309, 16
  %v8525 = vpop.permute.xlu0 %8524
  %8526 = vrot.lane.b32.xlu0 %v8359, 16
  %v8527 = vpop.permute.xlu0 %8526
  %8528 = vrot.lane.b32.xlu0 %v8409, 16
  %v8529 = vpop.permute.xlu0 %8528
  %8530 = vrot.lane.b32.xlu0 %v8459, 16
  %v8531 = vpop.permute.xlu0 %8530
  %8532 = vrot.lane.b32.xlu0 %v8509, 16
  %v8533 = vpop.permute.xlu0 %8532
  %v8542 = vsel %vm1382, %v8158, %v8519
  %v8543 = vsel %vm1382, %v8208, %v8521
  %v8544 = vsel %vm1382, %v8258, %v8523
  %v8545 = vsel %vm1382, %v8308, %v8525
  %v8546 = vsel %vm1382, %v8358, %v8527
  %v8547 = vsel %vm1382, %v8408, %v8529
  %v8548 = vsel %vm1382, %v8458, %v8531
  %v8549 = vsel %vm1382, %v8508, %v8533
  %v8550 = vpack.c.bf16 %v8543, %v8542
  %v8551 = vpack.c.bf16 %v8545, %v8544
  %v8552 = vpack.c.bf16 %v8547, %v8546
  %v8553 = vpack.c.bf16 %v8549, %v8548
  %s8554 = scalar_lea.vmem %s5, 16
  %v8555 = vld [vmem:[%s8554] sm:$0xf]
  %v8556 = vld [vmem:[%s8554 + $0x4] sm:$0xf]
  %v8557 = vld [vmem:[%s8554 + $0x8] sm:$0xf]
  %v8558 = vld [vmem:[%s8554 + $0xc] sm:$0xf]
  %v8559 = vlaneseq
  %v8560 = vshrl.u32 %v8559, 7
  %v8561 = vsub.s32 1, %v8560
  %v8562 = vrot.slane %v4759, %v8561
  %v8567 = vunpack.c.l.b16 %v8555
  %v8568 = vunpack.c.l.b16 %v8556
  %v8569 = vunpack.c.l.b16 %v8557
  %v8570 = vunpack.c.l.b16 %v8558
  %v8571 = vpack.c.b16 %v8568, %v8567
  %v8572 = vpack.c.b16 %v8570, %v8569
  %v8576 = vsel %vm55, %v8550, 0
  %v8579 = vsel %vm55, %v8551, 0
  %v8582 = vsel %vm55, %v8552, 0
  %v8585 = vsel %vm55, %v8553, 0
  %8587 = vmatprep.subr.bf16.mxu0 0
  %8588 = vmatpush1.bf16.msra.mxu0 %v8571
  %8589 = vmatprep.subr.bf16.mxu0 0
  %8590 = vmatpush1.bf16.msra.mxu0 %v8572
  %8591 = vmatprep.subr.bf16.mxu0 0
  %8592 = vmatpush1.bf16.msra.mxu0 0
  %8593 = vmatprep.subr.bf16.mxu0 0
  %8594 = vmatpush1.bf16.msra.mxu0 0
  %8595 = vmatprep.subr.bf16.mxu0 0
  %8596 = vmatpush1.bf16.msra.mxu0 0
  %8597 = vmatprep.subr.bf16.mxu0 0
  %8598 = vmatpush1.bf16.msra.mxu0 0
  %8599 = vmatprep.subr.bf16.mxu0 0
  %8600 = vmatpush1.bf16.msra.mxu0 0
  %8601 = vmatprep.subr.bf16.mxu0 0
  %8602 = vmatpush1.bf16.msra.mxu0 0
  %8603 = vmatprep.subr.bf16.mxu0 0
  %8604 = vmatpush1.bf16.msra.mxu0 0
  %8605 = vmatprep.subr.bf16.mxu0 0
  %8606 = vmatpush1.bf16.msra.mxu0 0
  %8607 = vmatprep.subr.bf16.mxu0 0
  %8608 = vmatpush1.bf16.msra.mxu0 0
  %8609 = vmatprep.subr.bf16.mxu0 0
  %8610 = vmatpush1.bf16.msra.mxu0 0
  %8611 = vmatprep.subr.bf16.mxu0 0
  %8612 = vmatpush1.bf16.msra.mxu0 0
  %8613 = vmatprep.subr.bf16.mxu0 0
  %8614 = vmatpush1.bf16.msra.mxu0 0
  %8615 = vmatprep.subr.bf16.mxu0 0
  %8616 = vmatpush1.bf16.msra.mxu0 0
  %8617 = vmatprep.subr.bf16.mxu0 0
  %8618 = vmatpush1.bf16.msra.mxu0 0
  %8619 = vmatprep.mubr.bf16.mxu0 0
  %8620 = vmatmul.mubr.bf16.gmra.mrb[0].mxu0 %v8576
  %v8621 = vpop.f32.mrb[0].mxu0
  %v8622 = vadd.f32 %v8562, %v8621
  %v8623 = vpop.f32.mrb[0].mxu0
  %v8624 = vpop.f32.mrb[0].mxu0
  %v8625 = vadd.f32 %v8562, %v8624
  %v8626 = vpop.f32.mrb[0].mxu0
  %8627 = vmatprep.mubr.bf16.mxu0 0
  %8628 = vmatmul.mubr.bf16.gmra.mrb[0].mxu0 %v8579
  %v8629 = vpop.f32.mrb[0].mxu0
  %v8630 = vadd.f32 %v8562, %v8629
  %v8631 = vpop.f32.mrb[0].mxu0
  %v8632 = vpop.f32.mrb[0].mxu0
  %v8633 = vadd.f32 %v8562, %v8632
  %v8634 = vpop.f32.mrb[0].mxu0
  %8635 = vmatprep.mubr.bf16.mxu0 0
  %8636 = vmatmul.mubr.bf16.gmra.mrb[0].mxu0 %v8582
  %v8637 = vpop.f32.mrb[0].mxu0
  %v8638 = vadd.f32 %v8562, %v8637
  %v8639 = vpop.f32.mrb[0].mxu0
  %v8640 = vpop.f32.mrb[0].mxu0
  %v8641 = vadd.f32 %v8562, %v8640
  %v8642 = vpop.f32.mrb[0].mxu0
  %8643 = vmatprep.mubr.bf16.mxu0 0
  %8644 = vmatmul.mubr.bf16.gmra.mrb[0].mxu0 %v8585
  %v8645 = vpop.f32.mrb[0].mxu0
  %v8646 = vadd.f32 %v8562, %v8645
  %v8647 = vpop.f32.mrb[0].mxu0
  %v8648 = vpop.f32.mrb[0].mxu0
  %v8649 = vadd.f32 %v8562, %v8648
  %v8650 = vpop.f32.mrb[0].mxu0
  %8651 = vdwg.mxu0
  %v8652 = vadd.f32 %v4750, %v8622
  %v8653 = vadd.f32 %v4751, %v8625
  %v8654 = vadd.f32 %v4752, %v8630
  %v8655 = vadd.f32 %v4753, %v8633
  %v8656 = vadd.f32 %v4754, %v8638
  %v8657 = vadd.f32 %v4755, %v8641
  %v8658 = vadd.f32 %v4756, %v8646
  %v8659 = vadd.f32 %v4757, %v8649
  %v8660 = vsel %vm55, %v8652, 0.0
  %8661 = vadd.xlane.f32.xlu0 %v8660
  %v8662 = vpop.xlane.xlu0 %8661
  %v8663 = vsel %vm55, %v8653, 0.0
  %8664 = vadd.xlane.f32.xlu0 %v8663
  %v8665 = vpop.xlane.xlu0 %8664
  %v8666 = vsel %vm55, %v8654, 0.0
  %8667 = vadd.xlane.f32.xlu0 %v8666
  %v8668 = vpop.xlane.xlu0 %8667
  %v8669 = vsel %vm55, %v8655, 0.0
  %8670 = vadd.xlane.f32.xlu0 %v8669
  %v8671 = vpop.xlane.xlu0 %8670
  %v8672 = vsel %vm55, %v8656, 0.0
  %8673 = vadd.xlane.f32.xlu0 %v8672
  %v8674 = vpop.xlane.xlu0 %8673
  %v8675 = vsel %vm55, %v8657, 0.0
  %8676 = vadd.xlane.f32.xlu0 %v8675
  %v8677 = vpop.xlane.xlu0 %8676
  %v8678 = vsel %vm55, %v8658, 0.0
  %8679 = vadd.xlane.f32.xlu0 %v8678
  %v8680 = vpop.xlane.xlu0 %8679
  %v8681 = vsel %vm55, %v8659, 0.0
  %8682 = vadd.xlane.f32.xlu0 %v8681
  %v8683 = vpop.xlane.xlu0 %8682
  %v8684 = vmul.f32 %v8662, %v80
  %v8685 = vmul.f32 %v8665, %v80
  %v8686 = vmul.f32 %v8668, %v80
  %v8687 = vmul.f32 %v8671, %v80
  %v8688 = vmul.f32 %v8674, %v80
  %v8689 = vmul.f32 %v8677, %v80
  %v8690 = vmul.f32 %v8680, %v80
  %v8691 = vmul.f32 %v8683, %v80
  %v8692 = vsub.f32 %v8652, %v8684
  %v8693 = vsub.f32 %v8653, %v8685
  %v8694 = vsub.f32 %v8654, %v8686
  %v8695 = vsub.f32 %v8655, %v8687
  %v8696 = vsub.f32 %v8656, %v8688
  %v8697 = vsub.f32 %v8657, %v8689
  %v8698 = vsub.f32 %v8658, %v8690
  %v8699 = vsub.f32 %v8659, %v8691
  %v8700 = vmul.f32 %v8692, %v8692
  %v8701 = vmul.f32 %v8693, %v8693
  %v8702 = vmul.f32 %v8694, %v8694
  %v8703 = vmul.f32 %v8695, %v8695
  %v8704 = vmul.f32 %v8696, %v8696
  %v8705 = vmul.f32 %v8697, %v8697
  %v8706 = vmul.f32 %v8698, %v8698
  %v8707 = vmul.f32 %v8699, %v8699
  %v8708 = vsel %vm55, %v8700, 0.0
  %8709 = vadd.xlane.f32.xlu0 %v8708
  %v8710 = vpop.xlane.xlu0 %8709
  %v8711 = vsel %vm55, %v8701, 0.0
  %8712 = vadd.xlane.f32.xlu0 %v8711
  %v8713 = vpop.xlane.xlu0 %8712
  %v8714 = vsel %vm55, %v8702, 0.0
  %8715 = vadd.xlane.f32.xlu0 %v8714
  %v8716 = vpop.xlane.xlu0 %8715
  %v8717 = vsel %vm55, %v8703, 0.0
  %8718 = vadd.xlane.f32.xlu0 %v8717
  %v8719 = vpop.xlane.xlu0 %8718
  %v8720 = vsel %vm55, %v8704, 0.0
  %8721 = vadd.xlane.f32.xlu0 %v8720
  %v8722 = vpop.xlane.xlu0 %8721
  %v8723 = vsel %vm55, %v8705, 0.0
  %8724 = vadd.xlane.f32.xlu0 %v8723
  %v8725 = vpop.xlane.xlu0 %8724
  %v8726 = vsel %vm55, %v8706, 0.0
  %8727 = vadd.xlane.f32.xlu0 %v8726
  %v8728 = vpop.xlane.xlu0 %8727
  %v8729 = vsel %vm55, %v8707, 0.0
  %8730 = vadd.xlane.f32.xlu0 %v8729
  %v8731 = vpop.xlane.xlu0 %8730
  %v8732 = vmul.f32 %v8710, %v80
  %v8733 = vmul.f32 %v8713, %v80
  %v8734 = vmul.f32 %v8716, %v80
  %v8735 = vmul.f32 %v8719, %v80
  %v8736 = vmul.f32 %v8722, %v80
  %v8737 = vmul.f32 %v8725, %v80
  %v8738 = vmul.f32 %v8728, %v80
  %v8739 = vmul.f32 %v8731, %v80
  %v8740 = vadd.f32 %v8732, 1e-12
  %v8741 = vadd.f32 %v8733, 1e-12
  %v8742 = vadd.f32 %v8734, 1e-12
  %v8743 = vadd.f32 %v8735, 1e-12
  %v8744 = vadd.f32 %v8736, 1e-12
  %v8745 = vadd.f32 %v8737, 1e-12
  %v8746 = vadd.f32 %v8738, 1e-12
  %v8747 = vadd.f32 %v8739, 1e-12
  %v8748 = vrsqrt.pop %v8740
  %v8749 = vrsqrt.pop %v8741
  %v8750 = vrsqrt.pop %v8742
  %v8751 = vrsqrt.pop %v8743
  %v8752 = vrsqrt.pop %v8744
  %v8753 = vrsqrt.pop %v8745
  %v8754 = vrsqrt.pop %v8746
  %v8755 = vrsqrt.pop %v8747
  %v8756 = vmul.f32 %v8692, %v8748
  %v8757 = vmul.f32 %v8693, %v8749
  %v8758 = vmul.f32 %v8694, %v8750
  %v8759 = vmul.f32 %v8695, %v8751
  %v8760 = vmul.f32 %v8696, %v8752
  %v8761 = vmul.f32 %v8697, %v8753
  %v8762 = vmul.f32 %v8698, %v8754
  %v8763 = vmul.f32 %v8699, %v8755
  %v8764 = vlaneseq
  %v8765 = vshrl.u32 %v8764, 7
  %v8766 = vsub.s32 2, %v8765
  %v8767 = vrot.slane %v4759, %v8766
  %v8768 = vmul.f32 %v8756, %v8767
  %v8769 = vmul.f32 %v8757, %v8767
  %v8770 = vmul.f32 %v8758, %v8767
  %v8771 = vmul.f32 %v8759, %v8767
  %v8772 = vmul.f32 %v8760, %v8767
  %v8773 = vmul.f32 %v8761, %v8767
  %v8774 = vmul.f32 %v8762, %v8767
  %v8775 = vmul.f32 %v8763, %v8767
  %v8776 = vlaneseq
  %v8777 = vshrl.u32 %v8776, 7
  %v8778 = vsub.s32 3, %v8777
  %v8779 = vrot.slane %v4759, %v8778
  %v8780 = vadd.f32 %v8768, %v8779
  %v8781 = vadd.f32 %v8769, %v8779
  %v8782 = vadd.f32 %v8770, %v8779
  %v8783 = vadd.f32 %v8771, %v8779
  %v8784 = vadd.f32 %v8772, %v8779
  %v8785 = vadd.f32 %v8773, %v8779
  %v8786 = vadd.f32 %v8774, %v8779
  %v8787 = vadd.f32 %v8775, %v8779
  %v8788 = vpack.c.bf16 %v8781, %v8780
  %v8789 = vpack.c.bf16 %v8783, %v8782
  %v8790 = vpack.c.bf16 %v8785, %v8784
  %v8791 = vpack.c.bf16 %v8787, %v8786
  %s8792 = scalar_lea.vmem %s6, 16
  %v8793 = vld [vmem:[%s8792] sm:$0xf]
  %v8794 = vld [vmem:[%s8792 + $0x4] sm:$0xf]
  %v8795 = vld [vmem:[%s8792 + $0x8] sm:$0xf]
  %v8796 = vld [vmem:[%s8792 + $0xc] sm:$0xf]
  %v8797 = vlaneseq
  %v8798 = vshrl.u32 %v8797, 7
  %v8799 = vsub.s32 4, %v8798
  %v8800 = vrot.slane %v4759, %v8799
  %v8805 = vunpack.c.l.b16 %v8793
  %v8806 = vunpack.c.l.b16 %v8794
  %v8807 = vunpack.c.l.b16 %v8795
  %v8808 = vunpack.c.l.b16 %v8796
  %v8809 = vpack.c.b16 %v8806, %v8805
  %v8810 = vpack.c.b16 %v8808, %v8807
  %v8814 = vsel %vm55, %v8788, 0
  %v8817 = vsel %vm55, %v8789, 0
  %v8820 = vsel %vm55, %v8790, 0
  %v8823 = vsel %vm55, %v8791, 0
  %8825 = vmatprep.subr.bf16.mxu0 0
  %8826 = vmatpush1.bf16.msra.mxu0 %v8809
  %8827 = vmatprep.subr.bf16.mxu0 0
  %8828 = vmatpush1.bf16.msra.mxu0 %v8810
  %8829 = vmatprep.subr.bf16.mxu0 0
  %8830 = vmatpush1.bf16.msra.mxu0 0
  %8831 = vmatprep.subr.bf16.mxu0 0
  %8832 = vmatpush1.bf16.msra.mxu0 0
  %8833 = vmatprep.subr.bf16.mxu0 0
  %8834 = vmatpush1.bf16.msra.mxu0 0
  %8835 = vmatprep.subr.bf16.mxu0 0
  %8836 = vmatpush1.bf16.msra.mxu0 0
  %8837 = vmatprep.subr.bf16.mxu0 0
  %8838 = vmatpush1.bf16.msra.mxu0 0
  %8839 = vmatprep.subr.bf16.mxu0 0
  %8840 = vmatpush1.bf16.msra.mxu0 0
  %8841 = vmatprep.subr.bf16.mxu0 0
  %8842 = vmatpush1.bf16.msra.mxu0 0
  %8843 = vmatprep.subr.bf16.mxu0 0
  %8844 = vmatpush1.bf16.msra.mxu0 0
  %8845 = vmatprep.subr.bf16.mxu0 0
  %8846 = vmatpush1.bf16.msra.mxu0 0
  %8847 = vmatprep.subr.bf16.mxu0 0
  %8848 = vmatpush1.bf16.msra.mxu0 0
  %8849 = vmatprep.subr.bf16.mxu0 0
  %8850 = vmatpush1.bf16.msra.mxu0 0
  %8851 = vmatprep.subr.bf16.mxu0 0
  %8852 = vmatpush1.bf16.msra.mxu0 0
  %8853 = vmatprep.subr.bf16.mxu0 0
  %8854 = vmatpush1.bf16.msra.mxu0 0
  %8855 = vmatprep.subr.bf16.mxu0 0
  %8856 = vmatpush1.bf16.msra.mxu0 0
  %8857 = vmatprep.mubr.bf16.mxu0 0
  %8858 = vmatmul.mubr.bf16.gmra.mrb[0].mxu0 %v8814
  %v8859 = vpop.f32.mrb[0].mxu0
  %v8860 = vadd.f32 %v8800, %v8859
  %v8861 = vpop.f32.mrb[0].mxu0
  %v8862 = vpop.f32.mrb[0].mxu0
  %v8863 = vadd.f32 %v8800, %v8862
  %v8864 = vpop.f32.mrb[0].mxu0
  %8865 = vmatprep.mubr.bf16.mxu0 0
  %8866 = vmatmul.mubr.bf16.gmra.mrb[0].mxu0 %v8817
  %v8867 = vpop.f32.mrb[0].mxu0
  %v8868 = vadd.f32 %v8800, %v8867
  %v8869 = vpop.f32.mrb[0].mxu0
  %v8870 = vpop.f32.mrb[0].mxu0
  %v8871 = vadd.f32 %v8800, %v8870
  %v8872 = vpop.f32.mrb[0].mxu0
  %8873 = vmatprep.mubr.bf16.mxu0 0
  %8874 = vmatmul.mubr.bf16.gmra.mrb[0].mxu0 %v8820
  %v8875 = vpop.f32.mrb[0].mxu0
  %v8876 = vadd.f32 %v8800, %v8875
  %v8877 = vpop.f32.mrb[0].mxu0
  %v8878 = vpop.f32.mrb[0].mxu0
  %v8879 = vadd.f32 %v8800, %v8878
  %v8880 = vpop.f32.mrb[0].mxu0
  %8881 = vmatprep.mubr.bf16.mxu0 0
  %8882 = vmatmul.mubr.bf16.gmra.mrb[0].mxu0 %v8823
  %v8883 = vpop.f32.mrb[0].mxu0
  %v8884 = vadd.f32 %v8800, %v8883
  %v8885 = vpop.f32.mrb[0].mxu0
  %v8886 = vpop.f32.mrb[0].mxu0
  %v8887 = vadd.f32 %v8800, %v8886
  %v8888 = vpop.f32.mrb[0].mxu0
  %8889 = vdwg.mxu0
  %v8890 = vmul.f32 %v8860, %v8860
  %v8891 = vmul.f32 %v8863, %v8863
  %v8892 = vmul.f32 %v8868, %v8868
  %v8893 = vmul.f32 %v8871, %v8871
  %v8894 = vmul.f32 %v8876, %v8876
  %v8895 = vmul.f32 %v8879, %v8879
  %v8896 = vmul.f32 %v8884, %v8884
  %v8897 = vmul.f32 %v8887, %v8887
  %v8898 = vmul.f32 %v8860, %v8890
  %v8899 = vmul.f32 %v8863, %v8891
  %v8900 = vmul.f32 %v8868, %v8892
  %v8901 = vmul.f32 %v8871, %v8893
  %v8902 = vmul.f32 %v8876, %v8894
  %v8903 = vmul.f32 %v8879, %v8895
  %v8904 = vmul.f32 %v8884, %v8896
  %v8905 = vmul.f32 %v8887, %v8897
  %v8906 = vmul.f32 %v8898, 0.044715
  %v8907 = vmul.f32 %v8899, 0.044715
  %v8908 = vmul.f32 %v8900, 0.044715
  %v8909 = vmul.f32 %v8901, 0.044715
  %v8910 = vmul.f32 %v8902, 0.044715
  %v8911 = vmul.f32 %v8903, 0.044715
  %v8912 = vmul.f32 %v8904, 0.044715
  %v8913 = vmul.f32 %v8905, 0.044715
  %v8914 = vadd.f32 %v8860, %v8906
  %v8915 = vadd.f32 %v8863, %v8907
  %v8916 = vadd.f32 %v8868, %v8908
  %v8917 = vadd.f32 %v8871, %v8909
  %v8918 = vadd.f32 %v8876, %v8910
  %v8919 = vadd.f32 %v8879, %v8911
  %v8920 = vadd.f32 %v8884, %v8912
  %v8921 = vadd.f32 %v8887, %v8913
  %v8922 = vmul.f32 %v8914, 0.7978846
  %v8923 = vmul.f32 %v8915, 0.7978846
  %v8924 = vmul.f32 %v8916, 0.7978846
  %v8925 = vmul.f32 %v8917, 0.7978846
  %v8926 = vmul.f32 %v8918, 0.7978846
  %v8927 = vmul.f32 %v8919, 0.7978846
  %v8928 = vmul.f32 %v8920, 0.7978846
  %v8929 = vmul.f32 %v8921, 0.7978846
  %v8930 = vtanh.pop %v8922
  %v8931 = vtanh.pop %v8923
  %v8932 = vtanh.pop %v8924
  %v8933 = vtanh.pop %v8925
  %v8934 = vtanh.pop %v8926
  %v8935 = vtanh.pop %v8927
  %v8936 = vtanh.pop %v8928
  %v8937 = vtanh.pop %v8929
  %v8938 = vadd.f32 %v8930, 1.0
  %v8939 = vadd.f32 %v8931, 1.0
  %v8940 = vadd.f32 %v8932, 1.0
  %v8941 = vadd.f32 %v8933, 1.0
  %v8942 = vadd.f32 %v8934, 1.0
  %v8943 = vadd.f32 %v8935, 1.0
  %v8944 = vadd.f32 %v8936, 1.0
  %v8945 = vadd.f32 %v8937, 1.0
  %v8946 = vmul.f32 %v8938, 0.5
  %v8947 = vmul.f32 %v8939, 0.5
  %v8948 = vmul.f32 %v8940, 0.5
  %v8949 = vmul.f32 %v8941, 0.5
  %v8950 = vmul.f32 %v8942, 0.5
  %v8951 = vmul.f32 %v8943, 0.5
  %v8952 = vmul.f32 %v8944, 0.5
  %v8953 = vmul.f32 %v8945, 0.5
  %v8954 = vmul.f32 %v8860, %v8946
  %v8955 = vmul.f32 %v8863, %v8947
  %v8956 = vmul.f32 %v8868, %v8948
  %v8957 = vmul.f32 %v8871, %v8949
  %v8958 = vmul.f32 %v8876, %v8950
  %v8959 = vmul.f32 %v8879, %v8951
  %v8960 = vmul.f32 %v8884, %v8952
  %v8961 = vmul.f32 %v8887, %v8953
  %v8962 = vpack.c.bf16 %v8955, %v8954
  %v8963 = vpack.c.bf16 %v8957, %v8956
  %v8964 = vpack.c.bf16 %v8959, %v8958
  %v8965 = vpack.c.bf16 %v8961, %v8960
  %s8966 = scalar_lea.vmem %s7, 32
  %v8967 = vld [vmem:[%s8966] sm:$0xf]
  %v8968 = vld [vmem:[%s8966 + $0x4] sm:$0xf]
  %v8969 = vld [vmem:[%s8966 + $0x8] sm:$0xf]
  %v8970 = vld [vmem:[%s8966 + $0xc] sm:$0xf]
  %v8971 = vld [vmem:[%s8966 + $0x10] sm:$0xf]
  %v8972 = vld [vmem:[%s8966 + $0x14] sm:$0xf]
  %v8973 = vld [vmem:[%s8966 + $0x18] sm:$0xf]
  %v8974 = vld [vmem:[%s8966 + $0x1c] sm:$0xf]
  %v8975 = vlaneseq
  %v8976 = vshrl.u32 %v8975, 7
  %v8977 = vsub.s32 5, %v8976
  %v8978 = vrot.slane %v4759, %v8977
  %v8987 = vunpack.c.l.b16 %v8967
  %v8988 = vunpack.c.l.b16 %v8968
  %v8989 = vunpack.c.l.b16 %v8969
  %v8990 = vunpack.c.l.b16 %v8970
  %v8991 = vunpack.c.l.b16 %v8971
  %v8992 = vunpack.c.l.b16 %v8972
  %v8993 = vunpack.c.l.b16 %v8973
  %v8994 = vunpack.c.l.b16 %v8974
  %v8995 = vpack.c.b16 %v8988, %v8987
  %v8996 = vpack.c.b16 %v8990, %v8989
  %v8997 = vpack.c.b16 %v8992, %v8991
  %v8998 = vpack.c.b16 %v8994, %v8993
  %v9004 = vsel %vm4544, %v8962, 0
  %v9007 = vsel %vm4544, %v8963, 0
  %v9010 = vsel %vm4544, %v8964, 0
  %v9013 = vsel %vm4544, %v8965, 0
  %9015 = vmatprep.subr.bf16.mxu0 0
  %9016 = vmatpush1.bf16.msra.mxu0 %v8995
  %9017 = vmatprep.subr.bf16.mxu0 0
  %9018 = vmatpush1.bf16.msra.mxu0 %v8996
  %9019 = vmatprep.subr.bf16.mxu0 0
  %9020 = vmatpush1.bf16.msra.mxu0 %v8997
  %9021 = vmatprep.subr.bf16.mxu0 0
  %9022 = vmatpush1.bf16.msra.mxu0 %v8998
  %9023 = vmatprep.subr.bf16.mxu0 0
  %9024 = vmatpush1.bf16.msra.mxu0 0
  %9025 = vmatprep.subr.bf16.mxu0 0
  %9026 = vmatpush1.bf16.msra.mxu0 0
  %9027 = vmatprep.subr.bf16.mxu0 0
  %9028 = vmatpush1.bf16.msra.mxu0 0
  %9029 = vmatprep.subr.bf16.mxu0 0
  %9030 = vmatpush1.bf16.msra.mxu0 0
  %9031 = vmatprep.subr.bf16.mxu0 0
  %9032 = vmatpush1.bf16.msra.mxu0 0
  %9033 = vmatprep.subr.bf16.mxu0 0
  %9034 = vmatpush1.bf16.msra.mxu0 0
  %9035 = vmatprep.subr.bf16.mxu0 0
  %9036 = vmatpush1.bf16.msra.mxu0 0
  %9037 = vmatprep.subr.bf16.mxu0 0
  %9038 = vmatpush1.bf16.msra.mxu0 0
  %9039 = vmatprep.subr.bf16.mxu0 0
  %9040 = vmatpush1.bf16.msra.mxu0 0
  %9041 = vmatprep.subr.bf16.mxu0 0
  %9042 = vmatpush1.bf16.msra.mxu0 0
  %9043 = vmatprep.subr.bf16.mxu0 0
  %9044 = vmatpush1.bf16.msra.mxu0 0
  %9045 = vmatprep.subr.bf16.mxu0 0
  %9046 = vmatpush1.bf16.msra.mxu0 0
  %9047 = vmatprep.mubr.bf16.mxu0 0
  %9048 = vmatmul.mubr.bf16.gmra.mrb[0].mxu0 %v9004
  %v9049 = vpop.f32.mrb[0].mxu0
  %v9050 = vadd.f32 %v8978, %v9049
  %v9051 = vpop.f32.mrb[0].mxu0
  %v9052 = vpop.f32.mrb[0].mxu0
  %v9053 = vadd.f32 %v8978, %v9052
  %v9054 = vpop.f32.mrb[0].mxu0
  %9055 = vmatprep.mubr.bf16.mxu0 0
  %9056 = vmatmul.mubr.bf16.gmra.mrb[0].mxu0 %v9007
  %v9057 = vpop.f32.mrb[0].mxu0
  %v9058 = vadd.f32 %v8978, %v9057
  %v9059 = vpop.f32.mrb[0].mxu0
  %v9060 = vpop.f32.mrb[0].mxu0
  %v9061 = vadd.f32 %v8978, %v9060
  %v9062 = vpop.f32.mrb[0].mxu0
  %9063 = vmatprep.mubr.bf16.mxu0 0
  %9064 = vmatmul.mubr.bf16.gmra.mrb[0].mxu0 %v9010
  %v9065 = vpop.f32.mrb[0].mxu0
  %v9066 = vadd.f32 %v8978, %v9065
  %v9067 = vpop.f32.mrb[0].mxu0
  %v9068 = vpop.f32.mrb[0].mxu0
  %v9069 = vadd.f32 %v8978, %v9068
  %v9070 = vpop.f32.mrb[0].mxu0
  %9071 = vmatprep.mubr.bf16.mxu0 0
  %9072 = vmatmul.mubr.bf16.gmra.mrb[0].mxu0 %v9013
  %v9073 = vpop.f32.mrb[0].mxu0
  %v9074 = vadd.f32 %v8978, %v9073
  %v9075 = vpop.f32.mrb[0].mxu0
  %v9076 = vpop.f32.mrb[0].mxu0
  %v9077 = vadd.f32 %v8978, %v9076
  %v9078 = vpop.f32.mrb[0].mxu0
  %9079 = vdwg.mxu0
  %v9080 = vadd.f32 %v8780, %v9050
  %v9081 = vadd.f32 %v8781, %v9053
  %v9082 = vadd.f32 %v8782, %v9058
  %v9083 = vadd.f32 %v8783, %v9061
  %v9084 = vadd.f32 %v8784, %v9066
  %v9085 = vadd.f32 %v8785, %v9069
  %v9086 = vadd.f32 %v8786, %v9074
  %v9087 = vadd.f32 %v8787, %v9077
  %v9088 = vsel %vm55, %v9080, 0.0
  %9089 = vadd.xlane.f32.xlu0 %v9088
  %v9090 = vpop.xlane.xlu0 %9089
  %v9091 = vsel %vm55, %v9081, 0.0
  %9092 = vadd.xlane.f32.xlu0 %v9091
  %v9093 = vpop.xlane.xlu0 %9092
  %v9094 = vsel %vm55, %v9082, 0.0
  %9095 = vadd.xlane.f32.xlu0 %v9094
  %v9096 = vpop.xlane.xlu0 %9095
  %v9097 = vsel %vm55, %v9083, 0.0
  %9098 = vadd.xlane.f32.xlu0 %v9097
  %v9099 = vpop.xlane.xlu0 %9098
  %v9100 = vsel %vm55, %v9084, 0.0
  %9101 = vadd.xlane.f32.xlu0 %v9100
  %v9102 = vpop.xlane.xlu0 %9101
  %v9103 = vsel %vm55, %v9085, 0.0
  %9104 = vadd.xlane.f32.xlu0 %v9103
  %v9105 = vpop.xlane.xlu0 %9104
  %v9106 = vsel %vm55, %v9086, 0.0
  %9107 = vadd.xlane.f32.xlu0 %v9106
  %v9108 = vpop.xlane.xlu0 %9107
  %v9109 = vsel %vm55, %v9087, 0.0
  %9110 = vadd.xlane.f32.xlu0 %v9109
  %v9111 = vpop.xlane.xlu0 %9110
  %v9112 = vmul.f32 %v9090, %v80
  %v9113 = vmul.f32 %v9093, %v80
  %v9114 = vmul.f32 %v9096, %v80
  %v9115 = vmul.f32 %v9099, %v80
  %v9116 = vmul.f32 %v9102, %v80
  %v9117 = vmul.f32 %v9105, %v80
  %v9118 = vmul.f32 %v9108, %v80
  %v9119 = vmul.f32 %v9111, %v80
  %v9120 = vsub.f32 %v9080, %v9112
  %v9121 = vsub.f32 %v9081, %v9113
  %v9122 = vsub.f32 %v9082, %v9114
  %v9123 = vsub.f32 %v9083, %v9115
  %v9124 = vsub.f32 %v9084, %v9116
  %v9125 = vsub.f32 %v9085, %v9117
  %v9126 = vsub.f32 %v9086, %v9118
  %v9127 = vsub.f32 %v9087, %v9119
  %v9128 = vmul.f32 %v9120, %v9120
  %v9129 = vmul.f32 %v9121, %v9121
  %v9130 = vmul.f32 %v9122, %v9122
  %v9131 = vmul.f32 %v9123, %v9123
  %v9132 = vmul.f32 %v9124, %v9124
  %v9133 = vmul.f32 %v9125, %v9125
  %v9134 = vmul.f32 %v9126, %v9126
  %v9135 = vmul.f32 %v9127, %v9127
  %v9136 = vsel %vm55, %v9128, 0.0
  %9137 = vadd.xlane.f32.xlu0 %v9136
  %v9138 = vpop.xlane.xlu0 %9137
  %v9139 = vsel %vm55, %v9129, 0.0
  %9140 = vadd.xlane.f32.xlu0 %v9139
  %v9141 = vpop.xlane.xlu0 %9140
  %v9142 = vsel %vm55, %v9130, 0.0
  %9143 = vadd.xlane.f32.xlu0 %v9142
  %v9144 = vpop.xlane.xlu0 %9143
  %v9145 = vsel %vm55, %v9131, 0.0
  %9146 = vadd.xlane.f32.xlu0 %v9145
  %v9147 = vpop.xlane.xlu0 %9146
  %v9148 = vsel %vm55, %v9132, 0.0
  %9149 = vadd.xlane.f32.xlu0 %v9148
  %v9150 = vpop.xlane.xlu0 %9149
  %v9151 = vsel %vm55, %v9133, 0.0
  %9152 = vadd.xlane.f32.xlu0 %v9151
  %v9153 = vpop.xlane.xlu0 %9152
  %v9154 = vsel %vm55, %v9134, 0.0
  %9155 = vadd.xlane.f32.xlu0 %v9154
  %v9156 = vpop.xlane.xlu0 %9155
  %v9157 = vsel %vm55, %v9135, 0.0
  %9158 = vadd.xlane.f32.xlu0 %v9157
  %v9159 = vpop.xlane.xlu0 %9158
  %v9160 = vmul.f32 %v9138, %v80
  %v9161 = vmul.f32 %v9141, %v80
  %v9162 = vmul.f32 %v9144, %v80
  %v9163 = vmul.f32 %v9147, %v80
  %v9164 = vmul.f32 %v9150, %v80
  %v9165 = vmul.f32 %v9153, %v80
  %v9166 = vmul.f32 %v9156, %v80
  %v9167 = vmul.f32 %v9159, %v80
  %v9168 = vadd.f32 %v9160, 1e-12
  %v9169 = vadd.f32 %v9161, 1e-12
  %v9170 = vadd.f32 %v9162, 1e-12
  %v9171 = vadd.f32 %v9163, 1e-12
  %v9172 = vadd.f32 %v9164, 1e-12
  %v9173 = vadd.f32 %v9165, 1e-12
  %v9174 = vadd.f32 %v9166, 1e-12
  %v9175 = vadd.f32 %v9167, 1e-12
  %v9176 = vrsqrt.pop %v9168
  %v9177 = vrsqrt.pop %v9169
  %v9178 = vrsqrt.pop %v9170
  %v9179 = vrsqrt.pop %v9171
  %v9180 = vrsqrt.pop %v9172
  %v9181 = vrsqrt.pop %v9173
  %v9182 = vrsqrt.pop %v9174
  %v9183 = vrsqrt.pop %v9175
  %v9184 = vmul.f32 %v9120, %v9176
  %v9185 = vmul.f32 %v9121, %v9177
  %v9186 = vmul.f32 %v9122, %v9178
  %v9187 = vmul.f32 %v9123, %v9179
  %v9188 = vmul.f32 %v9124, %v9180
  %v9189 = vmul.f32 %v9125, %v9181
  %v9190 = vmul.f32 %v9126, %v9182
  %v9191 = vmul.f32 %v9127, %v9183
  %v9192 = vlaneseq
  %v9193 = vshrl.u32 %v9192, 7
  %v9194 = vsub.s32 6, %v9193
  %v9195 = vrot.slane %v4759, %v9194
  %v9196 = vmul.f32 %v9184, %v9195
  %v9197 = vmul.f32 %v9185, %v9195
  %v9198 = vmul.f32 %v9186, %v9195
  %v9199 = vmul.f32 %v9187, %v9195
  %v9200 = vmul.f32 %v9188, %v9195
  %v9201 = vmul.f32 %v9189, %v9195
  %v9202 = vmul.f32 %v9190, %v9195
  %v9203 = vmul.f32 %v9191, %v9195
  %v9204 = vlaneseq
  %v9205 = vshrl.u32 %v9204, 7
  %v9206 = vsub.s32 7, %v9205
  %v9207 = vrot.slane %v4759, %v9206
  %v9208 = vadd.f32 %v9196, %v9207
  %v9209 = vadd.f32 %v9197, %v9207
  %v9210 = vadd.f32 %v9198, %v9207
  %v9211 = vadd.f32 %v9199, %v9207
  %v9212 = vadd.f32 %v9200, %v9207
  %v9213 = vadd.f32 %v9201, %v9207
  %v9214 = vadd.f32 %v9202, %v9207
  %v9215 = vadd.f32 %v9203, %v9207
  %v9216 = vpack.c.bf16 %v9208, %v9208
  %v9217 = vpack.c.bf16 %v9209, %v9209
  %v9218 = vpack.c.bf16 %v9210, %v9210
  %v9219 = vpack.c.bf16 %v9211, %v9211
  %v9220 = vpack.c.bf16 %v9212, %v9212
  %v9221 = vpack.c.bf16 %v9213, %v9213
  %v9222 = vpack.c.bf16 %v9214, %v9214
  %v9223 = vpack.c.bf16 %v9215, %v9215
  %v9224 = vld [vmem:[%s9] sm:$0xf]
  %v9225 = vld [vmem:[%s9 + $0x4] sm:$0xf]
  %v9226 = vld [vmem:[%s9 + $0x8] sm:$0xf]
  %v9227 = vld [vmem:[%s9 + $0xc] sm:$0xf]
  %v9228 = vld [vmem:[%s10] sm:$0x1]
  %v9230 = vlaneseq
  %v9231 = vshrl.u32 %v9230, 7
  %v9232 = vsub.s32 0, %v9231
  %v9233 = vrot.slane %v9228, %v9232
  %v9243 = vunpack.c.l.b16 %v9216
  %v9244 = vunpack.c.l.b16 %v9217
  %v9245 = vunpack.c.l.b16 %v9218
  %v9246 = vunpack.c.l.b16 %v9219
  %v9247 = vunpack.c.l.b16 %v9220
  %v9248 = vunpack.c.l.b16 %v9221
  %v9249 = vunpack.c.l.b16 %v9222
  %v9250 = vunpack.c.l.b16 %v9223
  %v9251 = vrot.slane %v9244, 7
  %vm9252 = vcmask 1041409
  %v9253 = vsel %vm9252, %v9251, %v9243
  %v9254 = vrot.slane %v9245, 6
  %vm9255 = vcmask 1042434
  %v9256 = vsel %vm9255, %v9254, %v9253
  %v9257 = vrot.slane %v9246, 5
  %vm9258 = vcmask 1043459
  %v9259 = vsel %vm9258, %v9257, %v9256
  %v9260 = vrot.slane %v9247, 4
  %vm9261 = vcmask 1044484
  %v9262 = vsel %vm9261, %v9260, %v9259
  %v9263 = vrot.slane %v9248, 3
  %vm9264 = vcmask 1045509
  %v9265 = vsel %vm9264, %v9263, %v9262
  %v9266 = vrot.slane %v9249, 2
  %vm9267 = vcmask 1046534
  %v9268 = vsel %vm9267, %v9266, %v9265
  %v9269 = vrot.slane %v9250, 1
  %vm9270 = vcmask 1047559
  %v9271 = vsel %vm9270, %v9269, %v9268
  %v9272 = vpack.c.b16 %v9271, %v9271
  %v9277 = vunpack.c.l.b16 %v9224
  %v9278 = vunpack.c.l.b16 %v9225
  %v9279 = vunpack.c.l.b16 %v9226
  %v9280 = vunpack.c.l.b16 %v9227
  %v9281 = vpack.c.b16 %v9278, %v9277
  %v9282 = vpack.c.b16 %v9280, %v9279
  %v9286 = vsel %vm55, %v9272, 0
  %9288 = vmatprep.subr.bf16.mxu0 0
  %9289 = vmatpush1.bf16.msra.mxu0 %v9281
  %9290 = vmatprep.subr.bf16.mxu0 0
  %9291 = vmatpush1.bf16.msra.mxu0 %v9282
  %9292 = vmatprep.subr.bf16.mxu0 0
  %9293 = vmatpush1.bf16.msra.mxu0 0
  %9294 = vmatprep.subr.bf16.mxu0 0
  %9295 = vmatpush1.bf16.msra.mxu0 0
  %9296 = vmatprep.subr.bf16.mxu0 0
  %9297 = vmatpush1.bf16.msra.mxu0 0
  %9298 = vmatprep.subr.bf16.mxu0 0
  %9299 = vmatpush1.bf16.msra.mxu0 0
  %9300 = vmatprep.subr.bf16.mxu0 0
  %9301 = vmatpush1.bf16.msra.mxu0 0
  %9302 = vmatprep.subr.bf16.mxu0 0
  %9303 = vmatpush1.bf16.msra.mxu0 0
  %9304 = vmatprep.subr.bf16.mxu0 0
  %9305 = vmatpush1.bf16.msra.mxu0 0
  %9306 = vmatprep.subr.bf16.mxu0 0
  %9307 = vmatpush1.bf16.msra.mxu0 0
  %9308 = vmatprep.subr.bf16.mxu0 0
  %9309 = vmatpush1.bf16.msra.mxu0 0
  %9310 = vmatprep.subr.bf16.mxu0 0
  %9311 = vmatpush1.bf16.msra.mxu0 0
  %9312 = vmatprep.subr.bf16.mxu0 0
  %9313 = vmatpush1.bf16.msra.mxu0 0
  %9314 = vmatprep.subr.bf16.mxu0 0
  %9315 = vmatpush1.bf16.msra.mxu0 0
  %9316 = vmatprep.subr.bf16.mxu0 0
  %9317 = vmatpush1.bf16.msra.mxu0 0
  %9318 = vmatprep.subr.bf16.mxu0 0
  %9319 = vmatpush1.bf16.msra.mxu0 0
  %9320 = vmatprep.mubr.bf16.mxu0 0
  %9321 = vmatmul.mubr.bf16.gmra.mrb[0].mxu0 %v9286
  %v9322 = vpop.f32.mrb[0].mxu0
  %v9323 = vadd.f32 %v9233, %v9322
  %v9324 = vpop.f32.mrb[0].mxu0
  %v9325 = vpop.f32.mrb[0].mxu0
  %v9326 = vpop.f32.mrb[0].mxu0
  %9327 = vdwg.mxu0
  %v9328 = vtanh.pop %v9323
  %v9329 = vpack.c.bf16 %v9328, %v9328
  %v9330 = vld [vmem:[%s11] sm:$0xf]
  %v9331 = vld [vmem:[%s11 + $0x4] sm:$0xf]
  %v9332 = vld [vmem:[%s11 + $0x8] sm:$0xf]
  %v9333 = vld [vmem:[%s11 + $0xc] sm:$0xf]
  %v9334 = vld [vmem:[%s12] sm:$0x1]
  %v9336 = vlaneseq
  %v9337 = vshrl.u32 %v9336, 7
  %v9338 = vsub.s32 0, %v9337
  %v9339 = vrot.slane %v9334, %v9338
  %v9345 = vunpack.c.l.b16 %v9330
  %v9346 = vunpack.c.l.b16 %v9331
  %v9347 = vunpack.c.l.b16 %v9332
  %v9348 = vunpack.c.l.b16 %v9333
  %v9349 = vpack.c.b16 %v9346, %v9345
  %v9350 = vpack.c.b16 %v9348, %v9347
  %v9354 = vsel %vm55, %v9329, 0
  %9356 = vmatprep.subr.bf16.mxu0 0
  %9357 = vmatpush1.bf16.msra.mxu0 %v9349
  %9358 = vmatprep.subr.bf16.mxu0 0
  %9359 = vmatpush1.bf16.msra.mxu0 %v9350
  %9360 = vmatprep.subr.bf16.mxu0 0
  %9361 = vmatpush1.bf16.msra.mxu0 0
  %9362 = vmatprep.subr.bf16.mxu0 0
  %9363 = vmatpush1.bf16.msra.mxu0 0
  %9364 = vmatprep.subr.bf16.mxu0 0
  %9365 = vmatpush1.bf16.msra.mxu0 0
  %9366 = vmatprep.subr.bf16.mxu0 0
  %9367 = vmatpush1.bf16.msra.mxu0 0
  %9368 = vmatprep.subr.bf16.mxu0 0
  %9369 = vmatpush1.bf16.msra.mxu0 0
  %9370 = vmatprep.subr.bf16.mxu0 0
  %9371 = vmatpush1.bf16.msra.mxu0 0
  %9372 = vmatprep.subr.bf16.mxu0 0
  %9373 = vmatpush1.bf16.msra.mxu0 0
  %9374 = vmatprep.subr.bf16.mxu0 0
  %9375 = vmatpush1.bf16.msra.mxu0 0
  %9376 = vmatprep.subr.bf16.mxu0 0
  %9377 = vmatpush1.bf16.msra.mxu0 0
  %9378 = vmatprep.subr.bf16.mxu0 0
  %9379 = vmatpush1.bf16.msra.mxu0 0
  %9380 = vmatprep.subr.bf16.mxu0 0
  %9381 = vmatpush1.bf16.msra.mxu0 0
  %9382 = vmatprep.subr.bf16.mxu0 0
  %9383 = vmatpush1.bf16.msra.mxu0 0
  %9384 = vmatprep.subr.bf16.mxu0 0
  %9385 = vmatpush1.bf16.msra.mxu0 0
  %9386 = vmatprep.subr.bf16.mxu0 0
  %9387 = vmatpush1.bf16.msra.mxu0 0
  %9388 = vmatprep.mubr.bf16.mxu0 0
  %9389 = vmatmul.mubr.bf16.gmra.mrb[0].mxu0 %v9354
  %v9390 = vpop.f32.mrb[0].mxu0
  %v9391 = vadd.f32 %v9339, %v9390
  %v9392 = vpop.f32.mrb[0].mxu0
  %v9393 = vpop.f32.mrb[0].mxu0
  %v9394 = vpop.f32.mrb[0].mxu0
  %9395 = vdwg.mxu0
  %9396 = vst [vmem:[%s13] sm:$0xff] %v9391
  // Predicated region
  $region54: #{multiple_choice_forward.1} parent=0 // pred_check
    _
  $region55: #{multiple_choice_forward.1} parent=0 // pred_check_branch
    %9398 = sbr.rel (0) target = $region57
  $region56: #{multiple_choice_forward.1} parent=0 // pred_region
    _
  $region57: #{multiple_choice_forward.1} parent=0 // pred_fallthru
    _
  // Predicated region
  $region58: #{multiple_choice_forward.1} parent=0 // pred_check
    _
  $region59: #{multiple_choice_forward.1} parent=0 // pred_check_branch
    %9400 = sbr.rel (0) target = $region61
  $region60: #{multiple_choice_forward.1} parent=0 // pred_region
    _
  $region61: #{multiple_choice_forward.1} parent=0 // pred_fallthru
    _

</llo_original>
